<compile_context>
chip_gen: v7x
topology: tpu7x:2x2x1
jax: 0.10.0
libtpu: 0.0.40
codegen_flags: <defaults>
</compile_context>

<pallas_src>
import functools

import jax
import jax.numpy as jnp
from jax.experimental import pallas as pl
from jax.experimental.pallas import tpu as pltpu

_NC_PAD = 128  # classifier / output width padded to one full lane register


def _chestxray_head_kernel(feat_ref, wt_ref, wc_ref, bc_ref, out_ref, *, bt_blk, hw, inv_r, eps):
    # feat_ref: [1, Bt*HW, C_in] f32   (one batch block, NHWC with batch*spatial flattened)
    # wt_ref  : [C_in, C_mid]    bf16  (r * transition_weight^T; resident in VMEM)
    # wc_ref  : [C_mid, 128]     f32   (classifier weight^T, zero-padded to 128 lanes; resident)
    # bc_ref  : [1, 128]         f32   (classifier bias with transition bias folded in; resident)
    # out_ref : [1, Bt, 128]     f32
    c_mid = wt_ref.shape[1]

    # --- transition 1x1 conv: one dense MXU pass with C_mid on the lane axis ---
    feat = feat_ref[0].astype(jnp.bfloat16)                               # [Bt*HW, C_in]
    z = jnp.dot(feat, wt_ref[...], preferred_element_type=jnp.float32)    # [Bt*HW, C_mid] = r*y

    # --- LSE pooling over spatial positions (sublane axis), per batch element ---
    # Computed in the r-scaled domain (r is folded into wt) and divided by r once at the end.
    # The conv bias is constant over HW so it cancels inside the exp; its contribution is folded
    # into bc_ref in the wrapper.
    z = z.reshape(bt_blk, hw, c_mid)                                      # [Bt, HW, C_mid]
    z_max = jnp.max(z, axis=1, keepdims=True)                             # [Bt, 1, C_mid]
    mean_exp = jnp.mean(jnp.exp(z - z_max), axis=1, keepdims=True)        # [Bt, 1, C_mid]
    pooled = inv_r * (z_max + jnp.log(eps + mean_exp))[:, 0, :]           # [Bt, C_mid]

    # --- classifier (+ folded transition bias) + sigmoid: skinny MXU pass, lane-dense store ---
    logits = jnp.dot(pooled, wc_ref[...], preferred_element_type=jnp.float32) + bc_ref[...]
    out_ref[0] = jax.nn.sigmoid(logits)                                   # [Bt, 128]


def _pick_batch_block(batch, hw, c_in, c_mid, vmem_limit):
    """Largest power-of-two batch block (<= 8) whose per-step working set fits the VMEM budget."""
    resident = c_in * c_mid * 2 + c_mid * _NC_PAD * 4 + _NC_PAD * 4   # single-buffered weights
    bt = 8
    while bt > 1:
        feat_blk = 2 * bt * hw * c_in * 4    # f32 feature tile, double-buffered by the pipeline
        interm = 3 * bt * hw * c_mid * 4     # z, exp(z - z_max), headroom
        if resident + feat_blk + interm <= 0.75 * vmem_limit:
            break
        bt //= 2
    return max(1, min(bt, batch))


def chestxray_head(feat_bhwc, w_trans, b_trans, w_cls, b_cls, *, r=10, eps=1e-6,
                   vmem_limit=32 * 1024 * 1024):
    """feat_bhwc: [B, H, W, C_in] backbone output (NHWC, as XLA TPU convolutions emit)."""
    B, H, W, C_in = feat_bhwc.shape
    C_mid = w_trans.shape[0]          # torch conv weight [C_mid, C_in, 1, 1]
    num_classes = w_cls.shape[0]      # torch linear weight [num_classes, C_mid]
    HW = H * W

    Bt = _pick_batch_block(B, HW, C_in, C_mid, vmem_limit)
    G = pl.cdiv(B, Bt)                # grid size over batch blocks
    B_pad = G * Bt

    # [B, H, W, C] -> [B, HW, C] is a pure metadata reshape in HBM (no relayout).  The feature
    # map stays f32 here; the bf16 cast happens inside the kernel (saves a full XLA cast pass).
    feat = feat_bhwc.reshape(B, HW, C_in)
    if B_pad != B:
        feat = jnp.concatenate([feat, jnp.zeros((B_pad - B, HW, C_in), feat.dtype)], axis=0)
    feat = feat.reshape(G, Bt * HW, C_in)

    # Transition weight: fold the LSE temperature r in (f32), transpose, then cast to bf16.
    wt = (float(r) * w_trans.reshape(C_mid, C_in).astype(jnp.float32)).T.astype(jnp.bfloat16)
    # Classifier weight transposed + zero-padded to 128 lanes (lane-dense output path).
    wc = jnp.zeros((C_mid, _NC_PAD), jnp.float32).at[:, :num_classes].set(
        w_cls.astype(jnp.float32).T)
    # Classifier bias with the transition bias folded in (exact): the conv bias is constant over
    # HW so it passes straight through the LSE, hence logits = pooled @ Wc^T + (bt @ Wc^T + bc).
    bc = jnp.zeros((1, _NC_PAD), jnp.float32).at[:, :num_classes].set(b_cls.astype(jnp.float32))
    bc = bc + b_trans.reshape(1, C_mid).astype(jnp.float32) @ wc

    kernel = functools.partial(_chestxray_head_kernel, bt_blk=Bt, hw=HW,
                               inv_r=1.0 / float(r), eps=float(eps))

    out = pl.pallas_call(
        kernel,
        out_shape=jax.ShapeDtypeStruct((G, Bt, _NC_PAD), jnp.float32),
        grid=(G,),
        in_specs=[
            # one batch block's feature tile per step (double-buffered by the pipeline)
            pl.BlockSpec((1, Bt * HW, C_in), lambda g: (g, 0, 0)),
            # weights/biases: whole-array VMEM residents -> DMA'd once, single-buffered
            pl.BlockSpec(memory_space=pltpu.MemorySpace.VMEM),
            pl.BlockSpec(memory_space=pltpu.MemorySpace.VMEM),
            pl.BlockSpec(memory_space=pltpu.MemorySpace.VMEM),
        ],
        out_specs=pl.BlockSpec((1, Bt, _NC_PAD), lambda g: (g, 0, 0)),
        compiler_params=pltpu.CompilerParams(
            dimension_semantics=("parallel",),     # batch blocks are independent (megacore on v7x)
            vmem_limit_bytes=int(vmem_limit),      # 32 MiB default fits v5e/v6e/v7x;
                                                   # raise to 64-96 MiB on v5e/v6e for larger Bt
        ),
    )(feat, wt, wc, bc)

    return out.reshape(B_pad, _NC_PAD)[:B, :num_classes]


def _reference(feat_bhwc, w_trans, b_trans, w_cls, b_cls, r=10, eps=1e-6):
    """Pure-JAX f32 reference mirroring the PyTorch forward (post-backbone), NHWC features."""
    B, H, W, C_in = feat_bhwc.shape
    C_mid = w_trans.shape[0]
    # 1x1 conv (per-position linear)
    x = jnp.einsum('bhwc,oc->bhwo', feat_bhwc, w_trans.reshape(C_mid, C_in)) + b_trans
    # LSE pooling over spatial positions
    xf = x.reshape(B, H * W, C_mid)
    x_max = jnp.max(xf, axis=1, keepdims=True)
    x_exp = jnp.exp(r * (xf - x_max))
    x_lse = (x_max + 1.0 / r * jnp.log(eps + jnp.mean(x_exp, axis=1, keepdims=True)))[:, 0, :]
    # classifier + sigmoid
    logits = x_lse @ w_cls.T + b_cls
    return jax.nn.sigmoid(logits)


if __name__ == "__main__":
    # Small shapes consistent with the module: 2048-channel backbone features, 1024-channel
    # transition, 8 classes; spatial kept tiny (4x4), batch=2.
    B, C_in, C_mid, H, W, NUM_CLASSES, R = 2, 2048, 1024, 4, 4, 8, 10

    key = jax.random.PRNGKey(0)
    k_feat, k_wt, k_bt, k_wc, k_bc = jax.random.split(key, 5)

    feat = jax.random.normal(k_feat, (B, H, W, C_in), dtype=jnp.float32) * 0.1   # NHWC features
    w_trans = jax.random.normal(k_wt, (C_mid, C_in, 1, 1), dtype=jnp.float32) * 0.02
    b_trans = jax.random.normal(k_bt, (C_mid,), dtype=jnp.float32) * 0.01
    w_cls = jax.random.normal(k_wc, (NUM_CLASSES, C_mid), dtype=jnp.float32) * 0.02
    b_cls = jax.random.normal(k_bc, (NUM_CLASSES,), dtype=jnp.float32) * 0.01

    out = chestxray_head(feat, w_trans, b_trans, w_cls, b_cls, r=R, eps=1e-6)
    out = jax.block_until_ready(out)

    ref = _reference(feat, w_trans, b_trans, w_cls, b_cls, r=R, eps=1e-6)
    assert out.shape == (B, NUM_CLASSES)
    # bf16 inputs on the big matmul (f32 accumulation) -> slightly looser tolerance than pure f32.
    assert jnp.allclose(out, ref, atol=2e-3, rtol=2e-3), "Pallas kernel mismatch vs reference"

    print("KERNEL_OK")
</pallas_src>

<mosaic_0001>
module attributes {stable_mosaic.version = 11 : i64} {
  func.func @_chestxray_head_kernel(%arg0: i32, %arg1: memref<1x32x2048xf32, #tpu.memory_space<vmem>>, %arg2: memref<2048x1024xbf16, #tpu.memory_space<vmem>>, %arg3: memref<1024x128xf32, #tpu.memory_space<vmem>>, %arg4: memref<1x128xf32, #tpu.memory_space<vmem>>, %arg5: memref<1x2x128xf32, #tpu.memory_space<vmem>>) attributes {dimension_semantics = [#tpu.dimension_semantics<parallel>], iteration_bounds = array<i64: 1>, scalar_prefetch = 0 : i64, scratch_operands = 0 : i64, tpu.core_type = #tpu.core_type<tc>, window_params = [{transform_indices = @transform_0, window_bounds = array<i64: 1, 32, 2048>}, {pipeline_mode = #tpu.pipeline_mode<synchronous>, transform_indices = @transform_1, window_bounds = array<i64: 2048, 1024>}, {pipeline_mode = #tpu.pipeline_mode<synchronous>, transform_indices = @transform_2, window_bounds = array<i64: 1024, 128>}, {pipeline_mode = #tpu.pipeline_mode<synchronous>, transform_indices = @transform_3, window_bounds = array<i64: 1, 128>}, {transform_indices = @transform_4, window_bounds = array<i64: 1, 2, 128>}]} {
    %c0 = arith.constant 0 : index
    %c0_0 = arith.constant 0 : index
    %c0_1 = arith.constant 0 : index
    %0 = vector.load %arg1[%c0, %c0_0, %c0_1] : memref<1x32x2048xf32, #tpu.memory_space<vmem>>, vector<1x32x2048xf32>
    %1 = vector.shape_cast %0 : vector<1x32x2048xf32> to vector<32x2048xf32>
    %2 = arith.truncf %1 : vector<32x2048xf32> to vector<32x2048xbf16>
    %c0_2 = arith.constant 0 : index
    %c0_3 = arith.constant 0 : index
    %3 = vector.load %arg2[%c0_2, %c0_3] : memref<2048x1024xbf16, #tpu.memory_space<vmem>>, vector<2048x1024xbf16>
    %cst = arith.constant dense<0.000000e+00> : vector<32x1024xf32>
    %4 = tpu.matmul %2, %3, %cst {dimension_numbers = #tpu.dot_dimension_numbers<[1], [0], [0], [1], [0, 0, 1, 1], [], []>} : vector<32x2048xbf16>, vector<2048x1024xbf16>, vector<32x1024xf32> -> vector<32x1024xf32>
    %5 = vector.shape_cast %4 : vector<32x1024xf32> to vector<2x16x1024xf32>
    %cst_4 = arith.constant dense<0xFF800000> : vector<2x1024xf32>
    %6 = vector.multi_reduction <maximumf>, %5, %cst_4 [1] : vector<2x16x1024xf32> to vector<2x1024xf32>
    %7 = vector.shape_cast %6 : vector<2x1024xf32> to vector<2x1x1024xf32>
    %8 = vector.broadcast %7 : vector<2x1x1024xf32> to vector<2x16x1024xf32>
    %9 = arith.subf %5, %8 : vector<2x16x1024xf32>
    %10 = math.exp %9 : vector<2x16x1024xf32>
    %cst_5 = arith.constant dense<0.000000e+00> : vector<2x1024xf32>
    %11 = vector.multi_reduction <add>, %10, %cst_5 [1] : vector<2x16x1024xf32> to vector<2x1024xf32>
    %12 = vector.shape_cast %11 : vector<2x1024xf32> to vector<2x1x1024xf32>
    %cst_6 = arith.constant 1.600000e+01 : f32
    %13 = vector.broadcast %cst_6 : f32 to vector<2x1x1024xf32>
    %14 = arith.divf %12, %13 : vector<2x1x1024xf32>
    %cst_7 = arith.constant 9.99999997E-7 : f32
    %15 = vector.broadcast %cst_7 : f32 to vector<2x1x1024xf32>
    %16 = arith.addf %15, %14 : vector<2x1x1024xf32>
    %17 = math.log %16 : vector<2x1x1024xf32>
    %18 = arith.addf %7, %17 : vector<2x1x1024xf32>
    %19 = vector.shape_cast %18 : vector<2x1x1024xf32> to vector<2x1024xf32>
    %cst_8 = arith.constant 1.000000e-01 : f32
    %20 = vector.broadcast %cst_8 : f32 to vector<2x1024xf32>
    %21 = arith.mulf %20, %19 : vector<2x1024xf32>
    %c0_9 = arith.constant 0 : index
    %c0_10 = arith.constant 0 : index
    %22 = vector.load %arg3[%c0_9, %c0_10] : memref<1024x128xf32, #tpu.memory_space<vmem>>, vector<1024x128xf32>
    %cst_11 = arith.constant dense<0.000000e+00> : vector<2x128xf32>
    %23 = tpu.matmul %21, %22, %cst_11 {dimension_numbers = #tpu.dot_dimension_numbers<[1], [0], [0], [1], [0, 0, 1, 1], [], []>} : vector<2x1024xf32>, vector<1024x128xf32>, vector<2x128xf32> -> vector<2x128xf32>
    %c0_12 = arith.constant 0 : index
    %c0_13 = arith.constant 0 : index
    %24 = vector.load %arg4[%c0_12, %c0_13] : memref<1x128xf32, #tpu.memory_space<vmem>>, vector<1x128xf32>
    %25 = vector.broadcast %24 : vector<1x128xf32> to vector<2x128xf32>
    %26 = arith.addf %23, %25 : vector<2x128xf32>
    %27 = arith.negf %26 : vector<2x128xf32>
    %28 = math.exp %27 : vector<2x128xf32>
    %cst_14 = arith.constant 1.000000e+00 : f32
    %29 = vector.broadcast %cst_14 : f32 to vector<2x128xf32>
    %30 = arith.addf %29, %28 : vector<2x128xf32>
    %31 = arith.divf %29, %30 : vector<2x128xf32>
    %c0_15 = arith.constant 0 : index
    %c0_16 = arith.constant 0 : index
    %c0_17 = arith.constant 0 : index
    %32 = vector.load %arg5[%c0_15, %c0_16, %c0_17] : memref<1x2x128xf32, #tpu.memory_space<vmem>>, vector<1x2x128xf32>
    %33 = vector.shape_cast %32 : vector<1x2x128xf32> to vector<2x128xf32>
    %34 = vector.shape_cast %31 : vector<2x128xf32> to vector<1x2x128xf32>
    tpu.vector_store %arg5[%c0_15, %c0_16, %c0_17], %34 {strides = array<i32>} : memref<1x2x128xf32, #tpu.memory_space<vmem>>, vector<1x2x128xf32>,
    return
  }
  func.func @transform_0(%arg0: i32) -> (i32, i32, i32) {
    %c0_i32 = arith.constant 0 : i32
    %c0_i32_0 = arith.constant 0 : i32
    %c0_i32_1 = arith.constant 0 : i32
    return %arg0, %c0_i32, %c0_i32_0 : i32, i32, i32
  }
  func.func @transform_1(%arg0: i32) -> (i32, i32) {
    %c0_i32 = arith.constant 0 : i32
    %c0_i32_0 = arith.constant 0 : i32
    %c0_i32_1 = arith.constant 0 : i32
    return %c0_i32, %c0_i32_0 : i32, i32
  }
  func.func @transform_2(%arg0: i32) -> (i32, i32) {
    %c0_i32 = arith.constant 0 : i32
    %c0_i32_0 = arith.constant 0 : i32
    %c0_i32_1 = arith.constant 0 : i32
    return %c0_i32, %c0_i32_0 : i32, i32
  }
  func.func @transform_3(%arg0: i32) -> (i32, i32) {
    %c0_i32 = arith.constant 0 : i32
    %c0_i32_0 = arith.constant 0 : i32
    %c0_i32_1 = arith.constant 0 : i32
    return %c0_i32, %c0_i32_0 : i32, i32
  }
  func.func @transform_4(%arg0: i32) -> (i32, i32, i32) {
    %c0_i32 = arith.constant 0 : i32
    %c0_i32_0 = arith.constant 0 : i32
    %c0_i32_1 = arith.constant 0 : i32
    return %arg0, %c0_i32, %c0_i32_0 : i32, i32, i32
  }
}

</mosaic_0001>

<llo_original>
// kernel: tpu_custom_call.1
$region0: #{tpu_custom_call.1}
  #allocation0 [shape = 'u32[]', space=smem, size = 0x4, offset = 0x4, fixed_abs, tag = 'smem constant byte address 0x4 - core index']
  #allocation1 [shape = 'u32[144,128]{1,0:T(1,128)}', space=vmem, size = 0x12000, scoped, tag = 'internal scratch']
  %s0 = inlined_call_operand.hbm [shape: f32[1,32,2048], index: 0, kind: input, shape index: {}]
  %s1 = inlined_call_operand.hbm [shape: bf16[2048,1024], index: 1, kind: input, shape index: {}]
  %s2 = inlined_call_operand.hbm [shape: f32[1024,128], index: 2, kind: input, shape index: {}]
  %s3 = inlined_call_operand.hbm [shape: f32[1,128], index: 3, kind: input, shape index: {}]
  %s4 = inlined_call_operand.hbm [shape: f32[1,2,128], index: 4, kind: output, shape index: {}]
  %s5 = sld [smem:[#allocation0]]
  $region42: #{tpu_custom_call.1} parent=0
    _
  %s7 = ssub.s32 1, %s5
  %s8 = scalar_select 0, %s7, %s5
  $region1: #{tpu_custom_call.1} parent=0
    #allocation2 [shape = 'u8[262144]{0}', space=vmem, size = 0x40000, scoped, tag = 'input window, operand 0, single buffered']
    #allocation3 [shape = 's32[1]{0}', space=sflag, size = 0x4, scoped, tag = 'scoped memory for tpu_custom_call.1']
    #allocation4 [shape = 's32[1]{0}', space=sflag, size = 0x4, scoped, tag = 'scoped memory for tpu_custom_call.1']
    #allocation5 [shape = 'u8[4194304]{0}', space=vmem, size = 0x400000, scoped, tag = 'input window, operand 1, single buffered']
    #allocation6 [shape = 's32[1]{0}', space=sflag, size = 0x4, scoped, tag = 'scoped memory for tpu_custom_call.1']
    #allocation7 [shape = 'u8[524288]{0}', space=vmem, size = 0x80000, scoped, tag = 'input window, operand 2, single buffered']
    #allocation8 [shape = 'u8[512]{0}', space=vmem, size = 0x400, scoped, tag = 'input window, operand 3, single buffered']
    #allocation9 [shape = 's32[1]{0}', space=sflag, size = 0x4, scoped, tag = 'scoped memory for tpu_custom_call.1']
    #allocation10 [shape = 'u8[1024]{0}', space=vmem, size = 0x400, scoped, tag = 'output window, operand 0, single buffered']
    %9 = vsyncpa [#allocation3], 0
    %10 = vsyncpa [#allocation6], 0
    %11 = vsyncpa [#allocation9], 0
    %12 = vsyncpa [#allocation4], 0
    // Predicated region
    $region2: #{tpu_custom_call.1} parent=1 // pred_check
      _
    $region3: #{tpu_custom_call.1} parent=1 // pred_check_branch
      %14 = sbr.rel (0) target = $region5
    $region4: #{tpu_custom_call.1} parent=1 // pred_region
      %s16 = ssub.s32 8192, 8192
      %17 = vsyncadd [#allocation3], %s16
      %s18 = sshll.u32 [#allocation2], 4
      %s19 = int_to_ptr.vmem [resolvable:$true] %s18
      %24 = dma.hbm_to_vmem [thread:$0]  %s0, 8192, %s19, [#allocation3], 2048, 2048, 128
    $region5: #{tpu_custom_call.1} parent=1 // pred_fallthru
      _
    // Predicated region
    $region6: #{tpu_custom_call.1} parent=1 // pred_check
      _
    $region7: #{tpu_custom_call.1} parent=1 // pred_check_branch
      %26 = sbr.rel (0) target = $region9
    $region8: #{tpu_custom_call.1} parent=1 // pred_region
      %s28 = ssub.s32 131072, 131072
      %29 = vsyncadd [#allocation6], %s28
      %s30 = sshll.u32 [#allocation5], 4
      %s31 = int_to_ptr.vmem [resolvable:$true] %s30
      %36 = dma.hbm_to_vmem [thread:$0]  %s1, 131072, %s31, [#allocation6], 512, 512, 32
    $region9: #{tpu_custom_call.1} parent=1 // pred_fallthru
      _
    // Predicated region
    $region10: #{tpu_custom_call.1} parent=1 // pred_check
      _
    $region11: #{tpu_custom_call.1} parent=1 // pred_check_branch
      %38 = sbr.rel (0) target = $region13
    $region12: #{tpu_custom_call.1} parent=1 // pred_region
      %s40 = ssub.s32 16384, 16384
      %41 = vsyncadd [#allocation6], %s40
      %s42 = sshll.u32 [#allocation7], 4
      %s43 = int_to_ptr.vmem [resolvable:$true] %s42
      %48 = dma.hbm_to_vmem [thread:$0]  %s2, 16384, %s43, [#allocation6], 128, 128, 8
    $region13: #{tpu_custom_call.1} parent=1 // pred_fallthru
      _
    // Predicated region
    $region14: #{tpu_custom_call.1} parent=1 // pred_check
      _
    $region15: #{tpu_custom_call.1} parent=1 // pred_check_branch
      %50 = sbr.rel (0) target = $region17
    $region16: #{tpu_custom_call.1} parent=1 // pred_region
      %s52 = ssub.s32 16, 16
      %53 = vsyncadd [#allocation9], %s52
      %s55 = sshll.u32 [#allocation8], 4
      %s56 = int_to_ptr.vmem [resolvable:$true] %s55
      %58 = dma.hbm_to_vmem [thread:$0]  %s3, 16, %s56, [#allocation9]
    $region17: #{tpu_custom_call.1} parent=1 // pred_fallthru
      _
    // Predicated region
    $region18: #{tpu_custom_call.1} parent=1 // pred_check
      _
    $region19: #{tpu_custom_call.1} parent=1 // pred_check_branch
      %60 = sbr.rel (0) target = $region21
    $region20: #{tpu_custom_call.1} parent=1 // pred_region
      %61 = dma.done [#allocation3], 8192
    $region21: #{tpu_custom_call.1} parent=1 // pred_fallthru
      _
    // Predicated region
    $region22: #{tpu_custom_call.1} parent=1 // pred_check
      _
    $region23: #{tpu_custom_call.1} parent=1 // pred_check_branch
      %63 = sbr.rel (0) target = $region25
    $region24: #{tpu_custom_call.1} parent=1 // pred_region
      %64 = dma.done [#allocation6], 131072
    $region25: #{tpu_custom_call.1} parent=1 // pred_fallthru
      _
    // Predicated region
    $region26: #{tpu_custom_call.1} parent=1 // pred_check
      _
    $region27: #{tpu_custom_call.1} parent=1 // pred_check_branch
      %66 = sbr.rel (0) target = $region29
    $region28: #{tpu_custom_call.1} parent=1 // pred_region
      %67 = dma.done [#allocation6], 16384
    $region29: #{tpu_custom_call.1} parent=1 // pred_fallthru
      _
    // Predicated region
    $region30: #{tpu_custom_call.1} parent=1 // pred_check
      _
    $region31: #{tpu_custom_call.1} parent=1 // pred_check_branch
      %69 = sbr.rel (0) target = $region33
    $region32: #{tpu_custom_call.1} parent=1 // pred_region
      %70 = dma.done [#allocation9], 16
    $region33: #{tpu_custom_call.1} parent=1 // pred_fallthru
      _
    %v71 = vld [vmem:[#allocation2] sm:$0xff]
    %v72 = vld [vmem:[#allocation2 + $0x8] sm:$0xff]
    %v73 = vld [vmem:[#allocation2 + $0x10] sm:$0xff]
    %v74 = vld [vmem:[#allocation2 + $0x18] sm:$0xff]
    %v75 = vld [vmem:[#allocation2 + $0x20] sm:$0xff]
    %v76 = vld [vmem:[#allocation2 + $0x28] sm:$0xff]
    %v77 = vld [vmem:[#allocation2 + $0x30] sm:$0xff]
    %v78 = vld [vmem:[#allocation2 + $0x38] sm:$0xff]
    %v79 = vld [vmem:[#allocation2 + $0x40] sm:$0xff]
    %v80 = vld [vmem:[#allocation2 + $0x48] sm:$0xff]
    %v81 = vld [vmem:[#allocation2 + $0x50] sm:$0xff]
    %v82 = vld [vmem:[#allocation2 + $0x58] sm:$0xff]
    %v83 = vld [vmem:[#allocation2 + $0x60] sm:$0xff]
    %v84 = vld [vmem:[#allocation2 + $0x68] sm:$0xff]
    %v85 = vld [vmem:[#allocation2 + $0x70] sm:$0xff]
    %v86 = vld [vmem:[#allocation2 + $0x78] sm:$0xff]
    %v87 = vld [vmem:[#allocation2 + $0x80] sm:$0xff]
    %v88 = vld [vmem:[#allocation2 + $0x88] sm:$0xff]
    %v89 = vld [vmem:[#allocation2 + $0x90] sm:$0xff]
    %v90 = vld [vmem:[#allocation2 + $0x98] sm:$0xff]
    %v91 = vld [vmem:[#allocation2 + $0xa0] sm:$0xff]
    %v92 = vld [vmem:[#allocation2 + $0xa8] sm:$0xff]
    %v93 = vld [vmem:[#allocation2 + $0xb0] sm:$0xff]
    %v94 = vld [vmem:[#allocation2 + $0xb8] sm:$0xff]
    %v95 = vld [vmem:[#allocation2 + $0xc0] sm:$0xff]
    %v96 = vld [vmem:[#allocation2 + $0xc8] sm:$0xff]
    %v97 = vld [vmem:[#allocation2 + $0xd0] sm:$0xff]
    %v98 = vld [vmem:[#allocation2 + $0xd8] sm:$0xff]
    %v99 = vld [vmem:[#allocation2 + $0xe0] sm:$0xff]
    %v100 = vld [vmem:[#allocation2 + $0xe8] sm:$0xff]
    %v101 = vld [vmem:[#allocation2 + $0xf0] sm:$0xff]
    %v102 = vld [vmem:[#allocation2 + $0xf8] sm:$0xff]
    %v103 = vld [vmem:[#allocation2 + $0x100] sm:$0xff]
    %v104 = vld [vmem:[#allocation2 + $0x108] sm:$0xff]
    %v105 = vld [vmem:[#allocation2 + $0x110] sm:$0xff]
    %v106 = vld [vmem:[#allocation2 + $0x118] sm:$0xff]
    %v107 = vld [vmem:[#allocation2 + $0x120] sm:$0xff]
    %v108 = vld [vmem:[#allocation2 + $0x128] sm:$0xff]
    %v109 = vld [vmem:[#allocation2 + $0x130] sm:$0xff]
    %v110 = vld [vmem:[#allocation2 + $0x138] sm:$0xff]
    %v111 = vld [vmem:[#allocation2 + $0x140] sm:$0xff]
    %v112 = vld [vmem:[#allocation2 + $0x148] sm:$0xff]
    %v113 = vld [vmem:[#allocation2 + $0x150] sm:$0xff]
    %v114 = vld [vmem:[#allocation2 + $0x158] sm:$0xff]
    %v115 = vld [vmem:[#allocation2 + $0x160] sm:$0xff]
    %v116 = vld [vmem:[#allocation2 + $0x168] sm:$0xff]
    %v117 = vld [vmem:[#allocation2 + $0x170] sm:$0xff]
    %v118 = vld [vmem:[#allocation2 + $0x178] sm:$0xff]
    %v119 = vld [vmem:[#allocation2 + $0x180] sm:$0xff]
    %v120 = vld [vmem:[#allocation2 + $0x188] sm:$0xff]
    %v121 = vld [vmem:[#allocation2 + $0x190] sm:$0xff]
    %v122 = vld [vmem:[#allocation2 + $0x198] sm:$0xff]
    %v123 = vld [vmem:[#allocation2 + $0x1a0] sm:$0xff]
    %v124 = vld [vmem:[#allocation2 + $0x1a8] sm:$0xff]
    %v125 = vld [vmem:[#allocation2 + $0x1b0] sm:$0xff]
    %v126 = vld [vmem:[#allocation2 + $0x1b8] sm:$0xff]
    %v127 = vld [vmem:[#allocation2 + $0x1c0] sm:$0xff]
    %v128 = vld [vmem:[#allocation2 + $0x1c8] sm:$0xff]
    %v129 = vld [vmem:[#allocation2 + $0x1d0] sm:$0xff]
    %v130 = vld [vmem:[#allocation2 + $0x1d8] sm:$0xff]
    %v131 = vld [vmem:[#allocation2 + $0x1e0] sm:$0xff]
    %v132 = vld [vmem:[#allocation2 + $0x1e8] sm:$0xff]
    %v133 = vld [vmem:[#allocation2 + $0x1f0] sm:$0xff]
    %v134 = vld [vmem:[#allocation2 + $0x1f8] sm:$0xff]
    %v135 = vpack.c.bf16 %v87, %v71
    %v136 = vpack.c.bf16 %v88, %v72
    %v137 = vpack.c.bf16 %v89, %v73
    %v138 = vpack.c.bf16 %v90, %v74
    %v139 = vpack.c.bf16 %v91, %v75
    %v140 = vpack.c.bf16 %v92, %v76
    %v141 = vpack.c.bf16 %v93, %v77
    %v142 = vpack.c.bf16 %v94, %v78
    %v143 = vpack.c.bf16 %v95, %v79
    %v144 = vpack.c.bf16 %v96, %v80
    %v145 = vpack.c.bf16 %v97, %v81
    %v146 = vpack.c.bf16 %v98, %v82
    %v147 = vpack.c.bf16 %v99, %v83
    %v148 = vpack.c.bf16 %v100, %v84
    %v149 = vpack.c.bf16 %v101, %v85
    %v150 = vpack.c.bf16 %v102, %v86
    %v151 = vpack.c.bf16 %v119, %v103
    %v152 = vpack.c.bf16 %v120, %v104
    %v153 = vpack.c.bf16 %v121, %v105
    %v154 = vpack.c.bf16 %v122, %v106
    %v155 = vpack.c.bf16 %v123, %v107
    %v156 = vpack.c.bf16 %v124, %v108
    %v157 = vpack.c.bf16 %v125, %v109
    %v158 = vpack.c.bf16 %v126, %v110
    %v159 = vpack.c.bf16 %v127, %v111
    %v160 = vpack.c.bf16 %v128, %v112
    %v161 = vpack.c.bf16 %v129, %v113
    %v162 = vpack.c.bf16 %v130, %v114
    %v163 = vpack.c.bf16 %v131, %v115
    %v164 = vpack.c.bf16 %v132, %v116
    %v165 = vpack.c.bf16 %v133, %v117
    %v166 = vpack.c.bf16 %v134, %v118
    %v167 = vld [vmem:[#allocation5] sm:$0xff]
    %v168 = vld [vmem:[#allocation5 + $0x8] sm:$0xff]
    %v169 = vld [vmem:[#allocation5 + $0x10] sm:$0xff]
    %v170 = vld [vmem:[#allocation5 + $0x18] sm:$0xff]
    %v171 = vld [vmem:[#allocation5 + $0x20] sm:$0xff]
    %v172 = vld [vmem:[#allocation5 + $0x28] sm:$0xff]
    %v173 = vld [vmem:[#allocation5 + $0x30] sm:$0xff]
    %v174 = vld [vmem:[#allocation5 + $0x38] sm:$0xff]
    %v175 = vld [vmem:[#allocation5 + $0x40] sm:$0xff]
    %v176 = vld [vmem:[#allocation5 + $0x48] sm:$0xff]
    %v177 = vld [vmem:[#allocation5 + $0x50] sm:$0xff]
    %v178 = vld [vmem:[#allocation5 + $0x58] sm:$0xff]
    %v179 = vld [vmem:[#allocation5 + $0x60] sm:$0xff]
    %v180 = vld [vmem:[#allocation5 + $0x68] sm:$0xff]
    %v181 = vld [vmem:[#allocation5 + $0x70] sm:$0xff]
    %v182 = vld [vmem:[#allocation5 + $0x78] sm:$0xff]
    %v183 = vld [vmem:[#allocation5 + $0x80] sm:$0xff]
    %v184 = vld [vmem:[#allocation5 + $0x88] sm:$0xff]
    %v185 = vld [vmem:[#allocation5 + $0x90] sm:$0xff]
    %v186 = vld [vmem:[#allocation5 + $0x98] sm:$0xff]
    %v187 = vld [vmem:[#allocation5 + $0xa0] sm:$0xff]
    %v188 = vld [vmem:[#allocation5 + $0xa8] sm:$0xff]
    %v189 = vld [vmem:[#allocation5 + $0xb0] sm:$0xff]
    %v190 = vld [vmem:[#allocation5 + $0xb8] sm:$0xff]
    %v191 = vld [vmem:[#allocation5 + $0xc0] sm:$0xff]
    %v192 = vld [vmem:[#allocation5 + $0xc8] sm:$0xff]
    %v193 = vld [vmem:[#allocation5 + $0xd0] sm:$0xff]
    %v194 = vld [vmem:[#allocation5 + $0xd8] sm:$0xff]
    %v195 = vld [vmem:[#allocation5 + $0xe0] sm:$0xff]
    %v196 = vld [vmem:[#allocation5 + $0xe8] sm:$0xff]
    %v197 = vld [vmem:[#allocation5 + $0xf0] sm:$0xff]
    %v198 = vld [vmem:[#allocation5 + $0xf8] sm:$0xff]
    %v199 = vld [vmem:[#allocation5 + $0x100] sm:$0xff]
    %v200 = vld [vmem:[#allocation5 + $0x108] sm:$0xff]
    %v201 = vld [vmem:[#allocation5 + $0x110] sm:$0xff]
    %v202 = vld [vmem:[#allocation5 + $0x118] sm:$0xff]
    %v203 = vld [vmem:[#allocation5 + $0x120] sm:$0xff]
    %v204 = vld [vmem:[#allocation5 + $0x128] sm:$0xff]
    %v205 = vld [vmem:[#allocation5 + $0x130] sm:$0xff]
    %v206 = vld [vmem:[#allocation5 + $0x138] sm:$0xff]
    %v207 = vld [vmem:[#allocation5 + $0x140] sm:$0xff]
    %v208 = vld [vmem:[#allocation5 + $0x148] sm:$0xff]
    %v209 = vld [vmem:[#allocation5 + $0x150] sm:$0xff]
    %v210 = vld [vmem:[#allocation5 + $0x158] sm:$0xff]
    %v211 = vld [vmem:[#allocation5 + $0x160] sm:$0xff]
    %v212 = vld [vmem:[#allocation5 + $0x168] sm:$0xff]
    %v213 = vld [vmem:[#allocation5 + $0x170] sm:$0xff]
    %v214 = vld [vmem:[#allocation5 + $0x178] sm:$0xff]
    %v215 = vld [vmem:[#allocation5 + $0x180] sm:$0xff]
    %v216 = vld [vmem:[#allocation5 + $0x188] sm:$0xff]
    %v217 = vld [vmem:[#allocation5 + $0x190] sm:$0xff]
    %v218 = vld [vmem:[#allocation5 + $0x198] sm:$0xff]
    %v219 = vld [vmem:[#allocation5 + $0x1a0] sm:$0xff]
    %v220 = vld [vmem:[#allocation5 + $0x1a8] sm:$0xff]
    %v221 = vld [vmem:[#allocation5 + $0x1b0] sm:$0xff]
    %v222 = vld [vmem:[#allocation5 + $0x1b8] sm:$0xff]
    %v223 = vld [vmem:[#allocation5 + $0x1c0] sm:$0xff]
    %v224 = vld [vmem:[#allocation5 + $0x1c8] sm:$0xff]
    %v225 = vld [vmem:[#allocation5 + $0x1d0] sm:$0xff]
    %v226 = vld [vmem:[#allocation5 + $0x1d8] sm:$0xff]
    %v227 = vld [vmem:[#allocation5 + $0x1e0] sm:$0xff]
    %v228 = vld [vmem:[#allocation5 + $0x1e8] sm:$0xff]
    %v229 = vld [vmem:[#allocation5 + $0x1f0] sm:$0xff]
    %v230 = vld [vmem:[#allocation5 + $0x1f8] sm:$0xff]
    %v231 = vld [vmem:[#allocation5 + $0x200] sm:$0xff]
    %v232 = vld [vmem:[#allocation5 + $0x208] sm:$0xff]
    %v233 = vld [vmem:[#allocation5 + $0x210] sm:$0xff]
    %v234 = vld [vmem:[#allocation5 + $0x218] sm:$0xff]
    %v235 = vld [vmem:[#allocation5 + $0x220] sm:$0xff]
    %v236 = vld [vmem:[#allocation5 + $0x228] sm:$0xff]
    %v237 = vld [vmem:[#allocation5 + $0x230] sm:$0xff]
    %v238 = vld [vmem:[#allocation5 + $0x238] sm:$0xff]
    %v239 = vld [vmem:[#allocation5 + $0x240] sm:$0xff]
    %v240 = vld [vmem:[#allocation5 + $0x248] sm:$0xff]
    %v241 = vld [vmem:[#allocation5 + $0x250] sm:$0xff]
    %v242 = vld [vmem:[#allocation5 + $0x258] sm:$0xff]
    %v243 = vld [vmem:[#allocation5 + $0x260] sm:$0xff]
    %v244 = vld [vmem:[#allocation5 + $0x268] sm:$0xff]
    %v245 = vld [vmem:[#allocation5 + $0x270] sm:$0xff]
    %v246 = vld [vmem:[#allocation5 + $0x278] sm:$0xff]
    %v247 = vld [vmem:[#allocation5 + $0x280] sm:$0xff]
    %v248 = vld [vmem:[#allocation5 + $0x288] sm:$0xff]
    %v249 = vld [vmem:[#allocation5 + $0x290] sm:$0xff]
    %v250 = vld [vmem:[#allocation5 + $0x298] sm:$0xff]
    %v251 = vld [vmem:[#allocation5 + $0x2a0] sm:$0xff]
    %v252 = vld [vmem:[#allocation5 + $0x2a8] sm:$0xff]
    %v253 = vld [vmem:[#allocation5 + $0x2b0] sm:$0xff]
    %v254 = vld [vmem:[#allocation5 + $0x2b8] sm:$0xff]
    %v255 = vld [vmem:[#allocation5 + $0x2c0] sm:$0xff]
    %v256 = vld [vmem:[#allocation5 + $0x2c8] sm:$0xff]
    %v257 = vld [vmem:[#allocation5 + $0x2d0] sm:$0xff]
    %v258 = vld [vmem:[#allocation5 + $0x2d8] sm:$0xff]
    %v259 = vld [vmem:[#allocation5 + $0x2e0] sm:$0xff]
    %v260 = vld [vmem:[#allocation5 + $0x2e8] sm:$0xff]
    %v261 = vld [vmem:[#allocation5 + $0x2f0] sm:$0xff]
    %v262 = vld [vmem:[#allocation5 + $0x2f8] sm:$0xff]
    %v263 = vld [vmem:[#allocation5 + $0x300] sm:$0xff]
    %v264 = vld [vmem:[#allocation5 + $0x308] sm:$0xff]
    %v265 = vld [vmem:[#allocation5 + $0x310] sm:$0xff]
    %v266 = vld [vmem:[#allocation5 + $0x318] sm:$0xff]
    %v267 = vld [vmem:[#allocation5 + $0x320] sm:$0xff]
    %v268 = vld [vmem:[#allocation5 + $0x328] sm:$0xff]
    %v269 = vld [vmem:[#allocation5 + $0x330] sm:$0xff]
    %v270 = vld [vmem:[#allocation5 + $0x338] sm:$0xff]
    %v271 = vld [vmem:[#allocation5 + $0x340] sm:$0xff]
    %v272 = vld [vmem:[#allocation5 + $0x348] sm:$0xff]
    %v273 = vld [vmem:[#allocation5 + $0x350] sm:$0xff]
    %v274 = vld [vmem:[#allocation5 + $0x358] sm:$0xff]
    %v275 = vld [vmem:[#allocation5 + $0x360] sm:$0xff]
    %v276 = vld [vmem:[#allocation5 + $0x368] sm:$0xff]
    %v277 = vld [vmem:[#allocation5 + $0x370] sm:$0xff]
    %v278 = vld [vmem:[#allocation5 + $0x378] sm:$0xff]
    %v279 = vld [vmem:[#allocation5 + $0x380] sm:$0xff]
    %v280 = vld [vmem:[#allocation5 + $0x388] sm:$0xff]
    %v281 = vld [vmem:[#allocation5 + $0x390] sm:$0xff]
    %v282 = vld [vmem:[#allocation5 + $0x398] sm:$0xff]
    %v283 = vld [vmem:[#allocation5 + $0x3a0] sm:$0xff]
    %v284 = vld [vmem:[#allocation5 + $0x3a8] sm:$0xff]
    %v285 = vld [vmem:[#allocation5 + $0x3b0] sm:$0xff]
    %v286 = vld [vmem:[#allocation5 + $0x3b8] sm:$0xff]
    %v287 = vld [vmem:[#allocation5 + $0x3c0] sm:$0xff]
    %v288 = vld [vmem:[#allocation5 + $0x3c8] sm:$0xff]
    %v289 = vld [vmem:[#allocation5 + $0x3d0] sm:$0xff]
    %v290 = vld [vmem:[#allocation5 + $0x3d8] sm:$0xff]
    %v291 = vld [vmem:[#allocation5 + $0x3e0] sm:$0xff]
    %v292 = vld [vmem:[#allocation5 + $0x3e8] sm:$0xff]
    %v293 = vld [vmem:[#allocation5 + $0x3f0] sm:$0xff]
    %v294 = vld [vmem:[#allocation5 + $0x3f8] sm:$0xff]
    %v295 = vld [vmem:[#allocation5 + $0x400] sm:$0xff]
    %v296 = vld [vmem:[#allocation5 + $0x408] sm:$0xff]
    %v297 = vld [vmem:[#allocation5 + $0x410] sm:$0xff]
    %v298 = vld [vmem:[#allocation5 + $0x418] sm:$0xff]
    %v299 = vld [vmem:[#allocation5 + $0x420] sm:$0xff]
    %v300 = vld [vmem:[#allocation5 + $0x428] sm:$0xff]
    %v301 = vld [vmem:[#allocation5 + $0x430] sm:$0xff]
    %v302 = vld [vmem:[#allocation5 + $0x438] sm:$0xff]
    %v303 = vld [vmem:[#allocation5 + $0x440] sm:$0xff]
    %v304 = vld [vmem:[#allocation5 + $0x448] sm:$0xff]
    %v305 = vld [vmem:[#allocation5 + $0x450] sm:$0xff]
    %v306 = vld [vmem:[#allocation5 + $0x458] sm:$0xff]
    %v307 = vld [vmem:[#allocation5 + $0x460] sm:$0xff]
    %v308 = vld [vmem:[#allocation5 + $0x468] sm:$0xff]
    %v309 = vld [vmem:[#allocation5 + $0x470] sm:$0xff]
    %v310 = vld [vmem:[#allocation5 + $0x478] sm:$0xff]
    %v311 = vld [vmem:[#allocation5 + $0x480] sm:$0xff]
    %v312 = vld [vmem:[#allocation5 + $0x488] sm:$0xff]
    %v313 = vld [vmem:[#allocation5 + $0x490] sm:$0xff]
    %v314 = vld [vmem:[#allocation5 + $0x498] sm:$0xff]
    %v315 = vld [vmem:[#allocation5 + $0x4a0] sm:$0xff]
    %v316 = vld [vmem:[#allocation5 + $0x4a8] sm:$0xff]
    %v317 = vld [vmem:[#allocation5 + $0x4b0] sm:$0xff]
    %v318 = vld [vmem:[#allocation5 + $0x4b8] sm:$0xff]
    %v319 = vld [vmem:[#allocation5 + $0x4c0] sm:$0xff]
    %v320 = vld [vmem:[#allocation5 + $0x4c8] sm:$0xff]
    %v321 = vld [vmem:[#allocation5 + $0x4d0] sm:$0xff]
    %v322 = vld [vmem:[#allocation5 + $0x4d8] sm:$0xff]
    %v323 = vld [vmem:[#allocation5 + $0x4e0] sm:$0xff]
    %v324 = vld [vmem:[#allocation5 + $0x4e8] sm:$0xff]
    %v325 = vld [vmem:[#allocation5 + $0x4f0] sm:$0xff]
    %v326 = vld [vmem:[#allocation5 + $0x4f8] sm:$0xff]
    %v327 = vld [vmem:[#allocation5 + $0x500] sm:$0xff]
    %v328 = vld [vmem:[#allocation5 + $0x508] sm:$0xff]
    %v329 = vld [vmem:[#allocation5 + $0x510] sm:$0xff]
    %v330 = vld [vmem:[#allocation5 + $0x518] sm:$0xff]
    %v331 = vld [vmem:[#allocation5 + $0x520] sm:$0xff]
    %v332 = vld [vmem:[#allocation5 + $0x528] sm:$0xff]
    %v333 = vld [vmem:[#allocation5 + $0x530] sm:$0xff]
    %v334 = vld [vmem:[#allocation5 + $0x538] sm:$0xff]
    %v335 = vld [vmem:[#allocation5 + $0x540] sm:$0xff]
    %v336 = vld [vmem:[#allocation5 + $0x548] sm:$0xff]
    %v337 = vld [vmem:[#allocation5 + $0x550] sm:$0xff]
    %v338 = vld [vmem:[#allocation5 + $0x558] sm:$0xff]
    %v339 = vld [vmem:[#allocation5 + $0x560] sm:$0xff]
    %v340 = vld [vmem:[#allocation5 + $0x568] sm:$0xff]
    %v341 = vld [vmem:[#allocation5 + $0x570] sm:$0xff]
    %v342 = vld [vmem:[#allocation5 + $0x578] sm:$0xff]
    %v343 = vld [vmem:[#allocation5 + $0x580] sm:$0xff]
    %v344 = vld [vmem:[#allocation5 + $0x588] sm:$0xff]
    %v345 = vld [vmem:[#allocation5 + $0x590] sm:$0xff]
    %v346 = vld [vmem:[#allocation5 + $0x598] sm:$0xff]
    %v347 = vld [vmem:[#allocation5 + $0x5a0] sm:$0xff]
    %v348 = vld [vmem:[#allocation5 + $0x5a8] sm:$0xff]
    %v349 = vld [vmem:[#allocation5 + $0x5b0] sm:$0xff]
    %v350 = vld [vmem:[#allocation5 + $0x5b8] sm:$0xff]
    %v351 = vld [vmem:[#allocation5 + $0x5c0] sm:$0xff]
    %v352 = vld [vmem:[#allocation5 + $0x5c8] sm:$0xff]
    %v353 = vld [vmem:[#allocation5 + $0x5d0] sm:$0xff]
    %v354 = vld [vmem:[#allocation5 + $0x5d8] sm:$0xff]
    %v355 = vld [vmem:[#allocation5 + $0x5e0] sm:$0xff]
    %v356 = vld [vmem:[#allocation5 + $0x5e8] sm:$0xff]
    %v357 = vld [vmem:[#allocation5 + $0x5f0] sm:$0xff]
    %v358 = vld [vmem:[#allocation5 + $0x5f8] sm:$0xff]
    %v359 = vld [vmem:[#allocation5 + $0x600] sm:$0xff]
    %v360 = vld [vmem:[#allocation5 + $0x608] sm:$0xff]
    %v361 = vld [vmem:[#allocation5 + $0x610] sm:$0xff]
    %v362 = vld [vmem:[#allocation5 + $0x618] sm:$0xff]
    %v363 = vld [vmem:[#allocation5 + $0x620] sm:$0xff]
    %v364 = vld [vmem:[#allocation5 + $0x628] sm:$0xff]
    %v365 = vld [vmem:[#allocation5 + $0x630] sm:$0xff]
    %v366 = vld [vmem:[#allocation5 + $0x638] sm:$0xff]
    %v367 = vld [vmem:[#allocation5 + $0x640] sm:$0xff]
    %v368 = vld [vmem:[#allocation5 + $0x648] sm:$0xff]
    %v369 = vld [vmem:[#allocation5 + $0x650] sm:$0xff]
    %v370 = vld [vmem:[#allocation5 + $0x658] sm:$0xff]
    %v371 = vld [vmem:[#allocation5 + $0x660] sm:$0xff]
    %v372 = vld [vmem:[#allocation5 + $0x668] sm:$0xff]
    %v373 = vld [vmem:[#allocation5 + $0x670] sm:$0xff]
    %v374 = vld [vmem:[#allocation5 + $0x678] sm:$0xff]
    %v375 = vld [vmem:[#allocation5 + $0x680] sm:$0xff]
    %v376 = vld [vmem:[#allocation5 + $0x688] sm:$0xff]
    %v377 = vld [vmem:[#allocation5 + $0x690] sm:$0xff]
    %v378 = vld [vmem:[#allocation5 + $0x698] sm:$0xff]
    %v379 = vld [vmem:[#allocation5 + $0x6a0] sm:$0xff]
    %v380 = vld [vmem:[#allocation5 + $0x6a8] sm:$0xff]
    %v381 = vld [vmem:[#allocation5 + $0x6b0] sm:$0xff]
    %v382 = vld [vmem:[#allocation5 + $0x6b8] sm:$0xff]
    %v383 = vld [vmem:[#allocation5 + $0x6c0] sm:$0xff]
    %v384 = vld [vmem:[#allocation5 + $0x6c8] sm:$0xff]
    %v385 = vld [vmem:[#allocation5 + $0x6d0] sm:$0xff]
    %v386 = vld [vmem:[#allocation5 + $0x6d8] sm:$0xff]
    %v387 = vld [vmem:[#allocation5 + $0x6e0] sm:$0xff]
    %v388 = vld [vmem:[#allocation5 + $0x6e8] sm:$0xff]
    %v389 = vld [vmem:[#allocation5 + $0x6f0] sm:$0xff]
    %v390 = vld [vmem:[#allocation5 + $0x6f8] sm:$0xff]
    %v391 = vld [vmem:[#allocation5 + $0x700] sm:$0xff]
    %v392 = vld [vmem:[#allocation5 + $0x708] sm:$0xff]
    %v393 = vld [vmem:[#allocation5 + $0x710] sm:$0xff]
    %v394 = vld [vmem:[#allocation5 + $0x718] sm:$0xff]
    %v395 = vld [vmem:[#allocation5 + $0x720] sm:$0xff]
    %v396 = vld [vmem:[#allocation5 + $0x728] sm:$0xff]
    %v397 = vld [vmem:[#allocation5 + $0x730] sm:$0xff]
    %v398 = vld [vmem:[#allocation5 + $0x738] sm:$0xff]
    %v399 = vld [vmem:[#allocation5 + $0x740] sm:$0xff]
    %v400 = vld [vmem:[#allocation5 + $0x748] sm:$0xff]
    %v401 = vld [vmem:[#allocation5 + $0x750] sm:$0xff]
    %v402 = vld [vmem:[#allocation5 + $0x758] sm:$0xff]
    %v403 = vld [vmem:[#allocation5 + $0x760] sm:$0xff]
    %v404 = vld [vmem:[#allocation5 + $0x768] sm:$0xff]
    %v405 = vld [vmem:[#allocation5 + $0x770] sm:$0xff]
    %v406 = vld [vmem:[#allocation5 + $0x778] sm:$0xff]
    %v407 = vld [vmem:[#allocation5 + $0x780] sm:$0xff]
    %v408 = vld [vmem:[#allocation5 + $0x788] sm:$0xff]
    %v409 = vld [vmem:[#allocation5 + $0x790] sm:$0xff]
    %v410 = vld [vmem:[#allocation5 + $0x798] sm:$0xff]
    %v411 = vld [vmem:[#allocation5 + $0x7a0] sm:$0xff]
    %v412 = vld [vmem:[#allocation5 + $0x7a8] sm:$0xff]
    %v413 = vld [vmem:[#allocation5 + $0x7b0] sm:$0xff]
    %v414 = vld [vmem:[#allocation5 + $0x7b8] sm:$0xff]
    %v415 = vld [vmem:[#allocation5 + $0x7c0] sm:$0xff]
    %v416 = vld [vmem:[#allocation5 + $0x7c8] sm:$0xff]
    %v417 = vld [vmem:[#allocation5 + $0x7d0] sm:$0xff]
    %v418 = vld [vmem:[#allocation5 + $0x7d8] sm:$0xff]
    %v419 = vld [vmem:[#allocation5 + $0x7e0] sm:$0xff]
    %v420 = vld [vmem:[#allocation5 + $0x7e8] sm:$0xff]
    %v421 = vld [vmem:[#allocation5 + $0x7f0] sm:$0xff]
    %v422 = vld [vmem:[#allocation5 + $0x7f8] sm:$0xff]
    %v423 = vld [vmem:[#allocation5 + $0x800] sm:$0xff]
    %v424 = vld [vmem:[#allocation5 + $0x808] sm:$0xff]
    %v425 = vld [vmem:[#allocation5 + $0x810] sm:$0xff]
    %v426 = vld [vmem:[#allocation5 + $0x818] sm:$0xff]
    %v427 = vld [vmem:[#allocation5 + $0x820] sm:$0xff]
    %v428 = vld [vmem:[#allocation5 + $0x828] sm:$0xff]
    %v429 = vld [vmem:[#allocation5 + $0x830] sm:$0xff]
    %v430 = vld [vmem:[#allocation5 + $0x838] sm:$0xff]
    %v431 = vld [vmem:[#allocation5 + $0x840] sm:$0xff]
    %v432 = vld [vmem:[#allocation5 + $0x848] sm:$0xff]
    %v433 = vld [vmem:[#allocation5 + $0x850] sm:$0xff]
    %v434 = vld [vmem:[#allocation5 + $0x858] sm:$0xff]
    %v435 = vld [vmem:[#allocation5 + $0x860] sm:$0xff]
    %v436 = vld [vmem:[#allocation5 + $0x868] sm:$0xff]
    %v437 = vld [vmem:[#allocation5 + $0x870] sm:$0xff]
    %v438 = vld [vmem:[#allocation5 + $0x878] sm:$0xff]
    %v439 = vld [vmem:[#allocation5 + $0x880] sm:$0xff]
    %v440 = vld [vmem:[#allocation5 + $0x888] sm:$0xff]
    %v441 = vld [vmem:[#allocation5 + $0x890] sm:$0xff]
    %v442 = vld [vmem:[#allocation5 + $0x898] sm:$0xff]
    %v443 = vld [vmem:[#allocation5 + $0x8a0] sm:$0xff]
    %v444 = vld [vmem:[#allocation5 + $0x8a8] sm:$0xff]
    %v445 = vld [vmem:[#allocation5 + $0x8b0] sm:$0xff]
    %v446 = vld [vmem:[#allocation5 + $0x8b8] sm:$0xff]
    %v447 = vld [vmem:[#allocation5 + $0x8c0] sm:$0xff]
    %v448 = vld [vmem:[#allocation5 + $0x8c8] sm:$0xff]
    %v449 = vld [vmem:[#allocation5 + $0x8d0] sm:$0xff]
    %v450 = vld [vmem:[#allocation5 + $0x8d8] sm:$0xff]
    %v451 = vld [vmem:[#allocation5 + $0x8e0] sm:$0xff]
    %v452 = vld [vmem:[#allocation5 + $0x8e8] sm:$0xff]
    %v453 = vld [vmem:[#allocation5 + $0x8f0] sm:$0xff]
    %v454 = vld [vmem:[#allocation5 + $0x8f8] sm:$0xff]
    %v455 = vld [vmem:[#allocation5 + $0x900] sm:$0xff]
    %v456 = vld [vmem:[#allocation5 + $0x908] sm:$0xff]
    %v457 = vld [vmem:[#allocation5 + $0x910] sm:$0xff]
    %v458 = vld [vmem:[#allocation5 + $0x918] sm:$0xff]
    %v459 = vld [vmem:[#allocation5 + $0x920] sm:$0xff]
    %v460 = vld [vmem:[#allocation5 + $0x928] sm:$0xff]
    %v461 = vld [vmem:[#allocation5 + $0x930] sm:$0xff]
    %v462 = vld [vmem:[#allocation5 + $0x938] sm:$0xff]
    %v463 = vld [vmem:[#allocation5 + $0x940] sm:$0xff]
    %v464 = vld [vmem:[#allocation5 + $0x948] sm:$0xff]
    %v465 = vld [vmem:[#allocation5 + $0x950] sm:$0xff]
    %v466 = vld [vmem:[#allocation5 + $0x958] sm:$0xff]
    %v467 = vld [vmem:[#allocation5 + $0x960] sm:$0xff]
    %v468 = vld [vmem:[#allocation5 + $0x968] sm:$0xff]
    %v469 = vld [vmem:[#allocation5 + $0x970] sm:$0xff]
    %v470 = vld [vmem:[#allocation5 + $0x978] sm:$0xff]
    %v471 = vld [vmem:[#allocation5 + $0x980] sm:$0xff]
    %v472 = vld [vmem:[#allocation5 + $0x988] sm:$0xff]
    %v473 = vld [vmem:[#allocation5 + $0x990] sm:$0xff]
    %v474 = vld [vmem:[#allocation5 + $0x998] sm:$0xff]
    %v475 = vld [vmem:[#allocation5 + $0x9a0] sm:$0xff]
    %v476 = vld [vmem:[#allocation5 + $0x9a8] sm:$0xff]
    %v477 = vld [vmem:[#allocation5 + $0x9b0] sm:$0xff]
    %v478 = vld [vmem:[#allocation5 + $0x9b8] sm:$0xff]
    %v479 = vld [vmem:[#allocation5 + $0x9c0] sm:$0xff]
    %v480 = vld [vmem:[#allocation5 + $0x9c8] sm:$0xff]
    %v481 = vld [vmem:[#allocation5 + $0x9d0] sm:$0xff]
    %v482 = vld [vmem:[#allocation5 + $0x9d8] sm:$0xff]
    %v483 = vld [vmem:[#allocation5 + $0x9e0] sm:$0xff]
    %v484 = vld [vmem:[#allocation5 + $0x9e8] sm:$0xff]
    %v485 = vld [vmem:[#allocation5 + $0x9f0] sm:$0xff]
    %v486 = vld [vmem:[#allocation5 + $0x9f8] sm:$0xff]
    %v487 = vld [vmem:[#allocation5 + $0xa00] sm:$0xff]
    %v488 = vld [vmem:[#allocation5 + $0xa08] sm:$0xff]
    %v489 = vld [vmem:[#allocation5 + $0xa10] sm:$0xff]
    %v490 = vld [vmem:[#allocation5 + $0xa18] sm:$0xff]
    %v491 = vld [vmem:[#allocation5 + $0xa20] sm:$0xff]
    %v492 = vld [vmem:[#allocation5 + $0xa28] sm:$0xff]
    %v493 = vld [vmem:[#allocation5 + $0xa30] sm:$0xff]
    %v494 = vld [vmem:[#allocation5 + $0xa38] sm:$0xff]
    %v495 = vld [vmem:[#allocation5 + $0xa40] sm:$0xff]
    %v496 = vld [vmem:[#allocation5 + $0xa48] sm:$0xff]
    %v497 = vld [vmem:[#allocation5 + $0xa50] sm:$0xff]
    %v498 = vld [vmem:[#allocation5 + $0xa58] sm:$0xff]
    %v499 = vld [vmem:[#allocation5 + $0xa60] sm:$0xff]
    %v500 = vld [vmem:[#allocation5 + $0xa68] sm:$0xff]
    %v501 = vld [vmem:[#allocation5 + $0xa70] sm:$0xff]
    %v502 = vld [vmem:[#allocation5 + $0xa78] sm:$0xff]
    %v503 = vld [vmem:[#allocation5 + $0xa80] sm:$0xff]
    %v504 = vld [vmem:[#allocation5 + $0xa88] sm:$0xff]
    %v505 = vld [vmem:[#allocation5 + $0xa90] sm:$0xff]
    %v506 = vld [vmem:[#allocation5 + $0xa98] sm:$0xff]
    %v507 = vld [vmem:[#allocation5 + $0xaa0] sm:$0xff]
    %v508 = vld [vmem:[#allocation5 + $0xaa8] sm:$0xff]
    %v509 = vld [vmem:[#allocation5 + $0xab0] sm:$0xff]
    %v510 = vld [vmem:[#allocation5 + $0xab8] sm:$0xff]
    %v511 = vld [vmem:[#allocation5 + $0xac0] sm:$0xff]
    %v512 = vld [vmem:[#allocation5 + $0xac8] sm:$0xff]
    %v513 = vld [vmem:[#allocation5 + $0xad0] sm:$0xff]
    %v514 = vld [vmem:[#allocation5 + $0xad8] sm:$0xff]
    %v515 = vld [vmem:[#allocation5 + $0xae0] sm:$0xff]
    %v516 = vld [vmem:[#allocation5 + $0xae8] sm:$0xff]
    %v517 = vld [vmem:[#allocation5 + $0xaf0] sm:$0xff]
    %v518 = vld [vmem:[#allocation5 + $0xaf8] sm:$0xff]
    %v519 = vld [vmem:[#allocation5 + $0xb00] sm:$0xff]
    %v520 = vld [vmem:[#allocation5 + $0xb08] sm:$0xff]
    %v521 = vld [vmem:[#allocation5 + $0xb10] sm:$0xff]
    %v522 = vld [vmem:[#allocation5 + $0xb18] sm:$0xff]
    %v523 = vld [vmem:[#allocation5 + $0xb20] sm:$0xff]
    %v524 = vld [vmem:[#allocation5 + $0xb28] sm:$0xff]
    %v525 = vld [vmem:[#allocation5 + $0xb30] sm:$0xff]
    %v526 = vld [vmem:[#allocation5 + $0xb38] sm:$0xff]
    %v527 = vld [vmem:[#allocation5 + $0xb40] sm:$0xff]
    %v528 = vld [vmem:[#allocation5 + $0xb48] sm:$0xff]
    %v529 = vld [vmem:[#allocation5 + $0xb50] sm:$0xff]
    %v530 = vld [vmem:[#allocation5 + $0xb58] sm:$0xff]
    %v531 = vld [vmem:[#allocation5 + $0xb60] sm:$0xff]
    %v532 = vld [vmem:[#allocation5 + $0xb68] sm:$0xff]
    %v533 = vld [vmem:[#allocation5 + $0xb70] sm:$0xff]
    %v534 = vld [vmem:[#allocation5 + $0xb78] sm:$0xff]
    %v535 = vld [vmem:[#allocation5 + $0xb80] sm:$0xff]
    %v536 = vld [vmem:[#allocation5 + $0xb88] sm:$0xff]
    %v537 = vld [vmem:[#allocation5 + $0xb90] sm:$0xff]
    %v538 = vld [vmem:[#allocation5 + $0xb98] sm:$0xff]
    %v539 = vld [vmem:[#allocation5 + $0xba0] sm:$0xff]
    %v540 = vld [vmem:[#allocation5 + $0xba8] sm:$0xff]
    %v541 = vld [vmem:[#allocation5 + $0xbb0] sm:$0xff]
    %v542 = vld [vmem:[#allocation5 + $0xbb8] sm:$0xff]
    %v543 = vld [vmem:[#allocation5 + $0xbc0] sm:$0xff]
    %v544 = vld [vmem:[#allocation5 + $0xbc8] sm:$0xff]
    %v545 = vld [vmem:[#allocation5 + $0xbd0] sm:$0xff]
    %v546 = vld [vmem:[#allocation5 + $0xbd8] sm:$0xff]
    %v547 = vld [vmem:[#allocation5 + $0xbe0] sm:$0xff]
    %v548 = vld [vmem:[#allocation5 + $0xbe8] sm:$0xff]
    %v549 = vld [vmem:[#allocation5 + $0xbf0] sm:$0xff]
    %v550 = vld [vmem:[#allocation5 + $0xbf8] sm:$0xff]
    %v551 = vld [vmem:[#allocation5 + $0xc00] sm:$0xff]
    %v552 = vld [vmem:[#allocation5 + $0xc08] sm:$0xff]
    %v553 = vld [vmem:[#allocation5 + $0xc10] sm:$0xff]
    %v554 = vld [vmem:[#allocation5 + $0xc18] sm:$0xff]
    %v555 = vld [vmem:[#allocation5 + $0xc20] sm:$0xff]
    %v556 = vld [vmem:[#allocation5 + $0xc28] sm:$0xff]
    %v557 = vld [vmem:[#allocation5 + $0xc30] sm:$0xff]
    %v558 = vld [vmem:[#allocation5 + $0xc38] sm:$0xff]
    %v559 = vld [vmem:[#allocation5 + $0xc40] sm:$0xff]
    %v560 = vld [vmem:[#allocation5 + $0xc48] sm:$0xff]
    %v561 = vld [vmem:[#allocation5 + $0xc50] sm:$0xff]
    %v562 = vld [vmem:[#allocation5 + $0xc58] sm:$0xff]
    %v563 = vld [vmem:[#allocation5 + $0xc60] sm:$0xff]
    %v564 = vld [vmem:[#allocation5 + $0xc68] sm:$0xff]
    %v565 = vld [vmem:[#allocation5 + $0xc70] sm:$0xff]
    %v566 = vld [vmem:[#allocation5 + $0xc78] sm:$0xff]
    %v567 = vld [vmem:[#allocation5 + $0xc80] sm:$0xff]
    %v568 = vld [vmem:[#allocation5 + $0xc88] sm:$0xff]
    %v569 = vld [vmem:[#allocation5 + $0xc90] sm:$0xff]
    %v570 = vld [vmem:[#allocation5 + $0xc98] sm:$0xff]
    %v571 = vld [vmem:[#allocation5 + $0xca0] sm:$0xff]
    %v572 = vld [vmem:[#allocation5 + $0xca8] sm:$0xff]
    %v573 = vld [vmem:[#allocation5 + $0xcb0] sm:$0xff]
    %v574 = vld [vmem:[#allocation5 + $0xcb8] sm:$0xff]
    %v575 = vld [vmem:[#allocation5 + $0xcc0] sm:$0xff]
    %v576 = vld [vmem:[#allocation5 + $0xcc8] sm:$0xff]
    %v577 = vld [vmem:[#allocation5 + $0xcd0] sm:$0xff]
    %v578 = vld [vmem:[#allocation5 + $0xcd8] sm:$0xff]
    %v579 = vld [vmem:[#allocation5 + $0xce0] sm:$0xff]
    %v580 = vld [vmem:[#allocation5 + $0xce8] sm:$0xff]
    %v581 = vld [vmem:[#allocation5 + $0xcf0] sm:$0xff]
    %v582 = vld [vmem:[#allocation5 + $0xcf8] sm:$0xff]
    %v583 = vld [vmem:[#allocation5 + $0xd00] sm:$0xff]
    %v584 = vld [vmem:[#allocation5 + $0xd08] sm:$0xff]
    %v585 = vld [vmem:[#allocation5 + $0xd10] sm:$0xff]
    %v586 = vld [vmem:[#allocation5 + $0xd18] sm:$0xff]
    %v587 = vld [vmem:[#allocation5 + $0xd20] sm:$0xff]
    %v588 = vld [vmem:[#allocation5 + $0xd28] sm:$0xff]
    %v589 = vld [vmem:[#allocation5 + $0xd30] sm:$0xff]
    %v590 = vld [vmem:[#allocation5 + $0xd38] sm:$0xff]
    %v591 = vld [vmem:[#allocation5 + $0xd40] sm:$0xff]
    %v592 = vld [vmem:[#allocation5 + $0xd48] sm:$0xff]
    %v593 = vld [vmem:[#allocation5 + $0xd50] sm:$0xff]
    %v594 = vld [vmem:[#allocation5 + $0xd58] sm:$0xff]
    %v595 = vld [vmem:[#allocation5 + $0xd60] sm:$0xff]
    %v596 = vld [vmem:[#allocation5 + $0xd68] sm:$0xff]
    %v597 = vld [vmem:[#allocation5 + $0xd70] sm:$0xff]
    %v598 = vld [vmem:[#allocation5 + $0xd78] sm:$0xff]
    %v599 = vld [vmem:[#allocation5 + $0xd80] sm:$0xff]
    %v600 = vld [vmem:[#allocation5 + $0xd88] sm:$0xff]
    %v601 = vld [vmem:[#allocation5 + $0xd90] sm:$0xff]
    %v602 = vld [vmem:[#allocation5 + $0xd98] sm:$0xff]
    %v603 = vld [vmem:[#allocation5 + $0xda0] sm:$0xff]
    %v604 = vld [vmem:[#allocation5 + $0xda8] sm:$0xff]
    %v605 = vld [vmem:[#allocation5 + $0xdb0] sm:$0xff]
    %v606 = vld [vmem:[#allocation5 + $0xdb8] sm:$0xff]
    %v607 = vld [vmem:[#allocation5 + $0xdc0] sm:$0xff]
    %v608 = vld [vmem:[#allocation5 + $0xdc8] sm:$0xff]
    %v609 = vld [vmem:[#allocation5 + $0xdd0] sm:$0xff]
    %v610 = vld [vmem:[#allocation5 + $0xdd8] sm:$0xff]
    %v611 = vld [vmem:[#allocation5 + $0xde0] sm:$0xff]
    %v612 = vld [vmem:[#allocation5 + $0xde8] sm:$0xff]
    %v613 = vld [vmem:[#allocation5 + $0xdf0] sm:$0xff]
    %v614 = vld [vmem:[#allocation5 + $0xdf8] sm:$0xff]
    %v615 = vld [vmem:[#allocation5 + $0xe00] sm:$0xff]
    %v616 = vld [vmem:[#allocation5 + $0xe08] sm:$0xff]
    %v617 = vld [vmem:[#allocation5 + $0xe10] sm:$0xff]
    %v618 = vld [vmem:[#allocation5 + $0xe18] sm:$0xff]
    %v619 = vld [vmem:[#allocation5 + $0xe20] sm:$0xff]
    %v620 = vld [vmem:[#allocation5 + $0xe28] sm:$0xff]
    %v621 = vld [vmem:[#allocation5 + $0xe30] sm:$0xff]
    %v622 = vld [vmem:[#allocation5 + $0xe38] sm:$0xff]
    %v623 = vld [vmem:[#allocation5 + $0xe40] sm:$0xff]
    %v624 = vld [vmem:[#allocation5 + $0xe48] sm:$0xff]
    %v625 = vld [vmem:[#allocation5 + $0xe50] sm:$0xff]
    %v626 = vld [vmem:[#allocation5 + $0xe58] sm:$0xff]
    %v627 = vld [vmem:[#allocation5 + $0xe60] sm:$0xff]
    %v628 = vld [vmem:[#allocation5 + $0xe68] sm:$0xff]
    %v629 = vld [vmem:[#allocation5 + $0xe70] sm:$0xff]
    %v630 = vld [vmem:[#allocation5 + $0xe78] sm:$0xff]
    %v631 = vld [vmem:[#allocation5 + $0xe80] sm:$0xff]
    %v632 = vld [vmem:[#allocation5 + $0xe88] sm:$0xff]
    %v633 = vld [vmem:[#allocation5 + $0xe90] sm:$0xff]
    %v634 = vld [vmem:[#allocation5 + $0xe98] sm:$0xff]
    %v635 = vld [vmem:[#allocation5 + $0xea0] sm:$0xff]
    %v636 = vld [vmem:[#allocation5 + $0xea8] sm:$0xff]
    %v637 = vld [vmem:[#allocation5 + $0xeb0] sm:$0xff]
    %v638 = vld [vmem:[#allocation5 + $0xeb8] sm:$0xff]
    %v639 = vld [vmem:[#allocation5 + $0xec0] sm:$0xff]
    %v640 = vld [vmem:[#allocation5 + $0xec8] sm:$0xff]
    %v641 = vld [vmem:[#allocation5 + $0xed0] sm:$0xff]
    %v642 = vld [vmem:[#allocation5 + $0xed8] sm:$0xff]
    %v643 = vld [vmem:[#allocation5 + $0xee0] sm:$0xff]
    %v644 = vld [vmem:[#allocation5 + $0xee8] sm:$0xff]
    %v645 = vld [vmem:[#allocation5 + $0xef0] sm:$0xff]
    %v646 = vld [vmem:[#allocation5 + $0xef8] sm:$0xff]
    %v647 = vld [vmem:[#allocation5 + $0xf00] sm:$0xff]
    %v648 = vld [vmem:[#allocation5 + $0xf08] sm:$0xff]
    %v649 = vld [vmem:[#allocation5 + $0xf10] sm:$0xff]
    %v650 = vld [vmem:[#allocation5 + $0xf18] sm:$0xff]
    %v651 = vld [vmem:[#allocation5 + $0xf20] sm:$0xff]
    %v652 = vld [vmem:[#allocation5 + $0xf28] sm:$0xff]
    %v653 = vld [vmem:[#allocation5 + $0xf30] sm:$0xff]
    %v654 = vld [vmem:[#allocation5 + $0xf38] sm:$0xff]
    %v655 = vld [vmem:[#allocation5 + $0xf40] sm:$0xff]
    %v656 = vld [vmem:[#allocation5 + $0xf48] sm:$0xff]
    %v657 = vld [vmem:[#allocation5 + $0xf50] sm:$0xff]
    %v658 = vld [vmem:[#allocation5 + $0xf58] sm:$0xff]
    %v659 = vld [vmem:[#allocation5 + $0xf60] sm:$0xff]
    %v660 = vld [vmem:[#allocation5 + $0xf68] sm:$0xff]
    %v661 = vld [vmem:[#allocation5 + $0xf70] sm:$0xff]
    %v662 = vld [vmem:[#allocation5 + $0xf78] sm:$0xff]
    %v663 = vld [vmem:[#allocation5 + $0xf80] sm:$0xff]
    %v664 = vld [vmem:[#allocation5 + $0xf88] sm:$0xff]
    %v665 = vld [vmem:[#allocation5 + $0xf90] sm:$0xff]
    %v666 = vld [vmem:[#allocation5 + $0xf98] sm:$0xff]
    %v667 = vld [vmem:[#allocation5 + $0xfa0] sm:$0xff]
    %v668 = vld [vmem:[#allocation5 + $0xfa8] sm:$0xff]
    %v669 = vld [vmem:[#allocation5 + $0xfb0] sm:$0xff]
    %v670 = vld [vmem:[#allocation5 + $0xfb8] sm:$0xff]
    %v671 = vld [vmem:[#allocation5 + $0xfc0] sm:$0xff]
    %v672 = vld [vmem:[#allocation5 + $0xfc8] sm:$0xff]
    %v673 = vld [vmem:[#allocation5 + $0xfd0] sm:$0xff]
    %v674 = vld [vmem:[#allocation5 + $0xfd8] sm:$0xff]
    %v675 = vld [vmem:[#allocation5 + $0xfe0] sm:$0xff]
    %v676 = vld [vmem:[#allocation5 + $0xfe8] sm:$0xff]
    %v677 = vld [vmem:[#allocation5 + $0xff0] sm:$0xff]
    %v678 = vld [vmem:[#allocation5 + $0xff8] sm:$0xff]
    %v679 = vld [vmem:[#allocation5 + $0x1000] sm:$0xff]
    %v680 = vld [vmem:[#allocation5 + $0x1008] sm:$0xff]
    %v681 = vld [vmem:[#allocation5 + $0x1010] sm:$0xff]
    %v682 = vld [vmem:[#allocation5 + $0x1018] sm:$0xff]
    %v683 = vld [vmem:[#allocation5 + $0x1020] sm:$0xff]
    %v684 = vld [vmem:[#allocation5 + $0x1028] sm:$0xff]
    %v685 = vld [vmem:[#allocation5 + $0x1030] sm:$0xff]
    %v686 = vld [vmem:[#allocation5 + $0x1038] sm:$0xff]
    %v687 = vld [vmem:[#allocation5 + $0x1040] sm:$0xff]
    %v688 = vld [vmem:[#allocation5 + $0x1048] sm:$0xff]
    %v689 = vld [vmem:[#allocation5 + $0x1050] sm:$0xff]
    %v690 = vld [vmem:[#allocation5 + $0x1058] sm:$0xff]
    %v691 = vld [vmem:[#allocation5 + $0x1060] sm:$0xff]
    %v692 = vld [vmem:[#allocation5 + $0x1068] sm:$0xff]
    %v693 = vld [vmem:[#allocation5 + $0x1070] sm:$0xff]
    %v694 = vld [vmem:[#allocation5 + $0x1078] sm:$0xff]
    %v695 = vld [vmem:[#allocation5 + $0x1080] sm:$0xff]
    %v696 = vld [vmem:[#allocation5 + $0x1088] sm:$0xff]
    %v697 = vld [vmem:[#allocation5 + $0x1090] sm:$0xff]
    %v698 = vld [vmem:[#allocation5 + $0x1098] sm:$0xff]
    %v699 = vld [vmem:[#allocation5 + $0x10a0] sm:$0xff]
    %v700 = vld [vmem:[#allocation5 + $0x10a8] sm:$0xff]
    %v701 = vld [vmem:[#allocation5 + $0x10b0] sm:$0xff]
    %v702 = vld [vmem:[#allocation5 + $0x10b8] sm:$0xff]
    %v703 = vld [vmem:[#allocation5 + $0x10c0] sm:$0xff]
    %v704 = vld [vmem:[#allocation5 + $0x10c8] sm:$0xff]
    %v705 = vld [vmem:[#allocation5 + $0x10d0] sm:$0xff]
    %v706 = vld [vmem:[#allocation5 + $0x10d8] sm:$0xff]
    %v707 = vld [vmem:[#allocation5 + $0x10e0] sm:$0xff]
    %v708 = vld [vmem:[#allocation5 + $0x10e8] sm:$0xff]
    %v709 = vld [vmem:[#allocation5 + $0x10f0] sm:$0xff]
    %v710 = vld [vmem:[#allocation5 + $0x10f8] sm:$0xff]
    %v711 = vld [vmem:[#allocation5 + $0x1100] sm:$0xff]
    %v712 = vld [vmem:[#allocation5 + $0x1108] sm:$0xff]
    %v713 = vld [vmem:[#allocation5 + $0x1110] sm:$0xff]
    %v714 = vld [vmem:[#allocation5 + $0x1118] sm:$0xff]
    %v715 = vld [vmem:[#allocation5 + $0x1120] sm:$0xff]
    %v716 = vld [vmem:[#allocation5 + $0x1128] sm:$0xff]
    %v717 = vld [vmem:[#allocation5 + $0x1130] sm:$0xff]
    %v718 = vld [vmem:[#allocation5 + $0x1138] sm:$0xff]
    %v719 = vld [vmem:[#allocation5 + $0x1140] sm:$0xff]
    %v720 = vld [vmem:[#allocation5 + $0x1148] sm:$0xff]
    %v721 = vld [vmem:[#allocation5 + $0x1150] sm:$0xff]
    %v722 = vld [vmem:[#allocation5 + $0x1158] sm:$0xff]
    %v723 = vld [vmem:[#allocation5 + $0x1160] sm:$0xff]
    %v724 = vld [vmem:[#allocation5 + $0x1168] sm:$0xff]
    %v725 = vld [vmem:[#allocation5 + $0x1170] sm:$0xff]
    %v726 = vld [vmem:[#allocation5 + $0x1178] sm:$0xff]
    %v727 = vld [vmem:[#allocation5 + $0x1180] sm:$0xff]
    %v728 = vld [vmem:[#allocation5 + $0x1188] sm:$0xff]
    %v729 = vld [vmem:[#allocation5 + $0x1190] sm:$0xff]
    %v730 = vld [vmem:[#allocation5 + $0x1198] sm:$0xff]
    %v731 = vld [vmem:[#allocation5 + $0x11a0] sm:$0xff]
    %v732 = vld [vmem:[#allocation5 + $0x11a8] sm:$0xff]
    %v733 = vld [vmem:[#allocation5 + $0x11b0] sm:$0xff]
    %v734 = vld [vmem:[#allocation5 + $0x11b8] sm:$0xff]
    %v735 = vld [vmem:[#allocation5 + $0x11c0] sm:$0xff]
    %v736 = vld [vmem:[#allocation5 + $0x11c8] sm:$0xff]
    %v737 = vld [vmem:[#allocation5 + $0x11d0] sm:$0xff]
    %v738 = vld [vmem:[#allocation5 + $0x11d8] sm:$0xff]
    %v739 = vld [vmem:[#allocation5 + $0x11e0] sm:$0xff]
    %v740 = vld [vmem:[#allocation5 + $0x11e8] sm:$0xff]
    %v741 = vld [vmem:[#allocation5 + $0x11f0] sm:$0xff]
    %v742 = vld [vmem:[#allocation5 + $0x11f8] sm:$0xff]
    %v743 = vld [vmem:[#allocation5 + $0x1200] sm:$0xff]
    %v744 = vld [vmem:[#allocation5 + $0x1208] sm:$0xff]
    %v745 = vld [vmem:[#allocation5 + $0x1210] sm:$0xff]
    %v746 = vld [vmem:[#allocation5 + $0x1218] sm:$0xff]
    %v747 = vld [vmem:[#allocation5 + $0x1220] sm:$0xff]
    %v748 = vld [vmem:[#allocation5 + $0x1228] sm:$0xff]
    %v749 = vld [vmem:[#allocation5 + $0x1230] sm:$0xff]
    %v750 = vld [vmem:[#allocation5 + $0x1238] sm:$0xff]
    %v751 = vld [vmem:[#allocation5 + $0x1240] sm:$0xff]
    %v752 = vld [vmem:[#allocation5 + $0x1248] sm:$0xff]
    %v753 = vld [vmem:[#allocation5 + $0x1250] sm:$0xff]
    %v754 = vld [vmem:[#allocation5 + $0x1258] sm:$0xff]
    %v755 = vld [vmem:[#allocation5 + $0x1260] sm:$0xff]
    %v756 = vld [vmem:[#allocation5 + $0x1268] sm:$0xff]
    %v757 = vld [vmem:[#allocation5 + $0x1270] sm:$0xff]
    %v758 = vld [vmem:[#allocation5 + $0x1278] sm:$0xff]
    %v759 = vld [vmem:[#allocation5 + $0x1280] sm:$0xff]
    %v760 = vld [vmem:[#allocation5 + $0x1288] sm:$0xff]
    %v761 = vld [vmem:[#allocation5 + $0x1290] sm:$0xff]
    %v762 = vld [vmem:[#allocation5 + $0x1298] sm:$0xff]
    %v763 = vld [vmem:[#allocation5 + $0x12a0] sm:$0xff]
    %v764 = vld [vmem:[#allocation5 + $0x12a8] sm:$0xff]
    %v765 = vld [vmem:[#allocation5 + $0x12b0] sm:$0xff]
    %v766 = vld [vmem:[#allocation5 + $0x12b8] sm:$0xff]
    %v767 = vld [vmem:[#allocation5 + $0x12c0] sm:$0xff]
    %v768 = vld [vmem:[#allocation5 + $0x12c8] sm:$0xff]
    %v769 = vld [vmem:[#allocation5 + $0x12d0] sm:$0xff]
    %v770 = vld [vmem:[#allocation5 + $0x12d8] sm:$0xff]
    %v771 = vld [vmem:[#allocation5 + $0x12e0] sm:$0xff]
    %v772 = vld [vmem:[#allocation5 + $0x12e8] sm:$0xff]
    %v773 = vld [vmem:[#allocation5 + $0x12f0] sm:$0xff]
    %v774 = vld [vmem:[#allocation5 + $0x12f8] sm:$0xff]
    %v775 = vld [vmem:[#allocation5 + $0x1300] sm:$0xff]
    %v776 = vld [vmem:[#allocation5 + $0x1308] sm:$0xff]
    %v777 = vld [vmem:[#allocation5 + $0x1310] sm:$0xff]
    %v778 = vld [vmem:[#allocation5 + $0x1318] sm:$0xff]
    %v779 = vld [vmem:[#allocation5 + $0x1320] sm:$0xff]
    %v780 = vld [vmem:[#allocation5 + $0x1328] sm:$0xff]
    %v781 = vld [vmem:[#allocation5 + $0x1330] sm:$0xff]
    %v782 = vld [vmem:[#allocation5 + $0x1338] sm:$0xff]
    %v783 = vld [vmem:[#allocation5 + $0x1340] sm:$0xff]
    %v784 = vld [vmem:[#allocation5 + $0x1348] sm:$0xff]
    %v785 = vld [vmem:[#allocation5 + $0x1350] sm:$0xff]
    %v786 = vld [vmem:[#allocation5 + $0x1358] sm:$0xff]
    %v787 = vld [vmem:[#allocation5 + $0x1360] sm:$0xff]
    %v788 = vld [vmem:[#allocation5 + $0x1368] sm:$0xff]
    %v789 = vld [vmem:[#allocation5 + $0x1370] sm:$0xff]
    %v790 = vld [vmem:[#allocation5 + $0x1378] sm:$0xff]
    %v791 = vld [vmem:[#allocation5 + $0x1380] sm:$0xff]
    %v792 = vld [vmem:[#allocation5 + $0x1388] sm:$0xff]
    %v793 = vld [vmem:[#allocation5 + $0x1390] sm:$0xff]
    %v794 = vld [vmem:[#allocation5 + $0x1398] sm:$0xff]
    %v795 = vld [vmem:[#allocation5 + $0x13a0] sm:$0xff]
    %v796 = vld [vmem:[#allocation5 + $0x13a8] sm:$0xff]
    %v797 = vld [vmem:[#allocation5 + $0x13b0] sm:$0xff]
    %v798 = vld [vmem:[#allocation5 + $0x13b8] sm:$0xff]
    %v799 = vld [vmem:[#allocation5 + $0x13c0] sm:$0xff]
    %v800 = vld [vmem:[#allocation5 + $0x13c8] sm:$0xff]
    %v801 = vld [vmem:[#allocation5 + $0x13d0] sm:$0xff]
    %v802 = vld [vmem:[#allocation5 + $0x13d8] sm:$0xff]
    %v803 = vld [vmem:[#allocation5 + $0x13e0] sm:$0xff]
    %v804 = vld [vmem:[#allocation5 + $0x13e8] sm:$0xff]
    %v805 = vld [vmem:[#allocation5 + $0x13f0] sm:$0xff]
    %v806 = vld [vmem:[#allocation5 + $0x13f8] sm:$0xff]
    %v807 = vld [vmem:[#allocation5 + $0x1400] sm:$0xff]
    %v808 = vld [vmem:[#allocation5 + $0x1408] sm:$0xff]
    %v809 = vld [vmem:[#allocation5 + $0x1410] sm:$0xff]
    %v810 = vld [vmem:[#allocation5 + $0x1418] sm:$0xff]
    %v811 = vld [vmem:[#allocation5 + $0x1420] sm:$0xff]
    %v812 = vld [vmem:[#allocation5 + $0x1428] sm:$0xff]
    %v813 = vld [vmem:[#allocation5 + $0x1430] sm:$0xff]
    %v814 = vld [vmem:[#allocation5 + $0x1438] sm:$0xff]
    %v815 = vld [vmem:[#allocation5 + $0x1440] sm:$0xff]
    %v816 = vld [vmem:[#allocation5 + $0x1448] sm:$0xff]
    %v817 = vld [vmem:[#allocation5 + $0x1450] sm:$0xff]
    %v818 = vld [vmem:[#allocation5 + $0x1458] sm:$0xff]
    %v819 = vld [vmem:[#allocation5 + $0x1460] sm:$0xff]
    %v820 = vld [vmem:[#allocation5 + $0x1468] sm:$0xff]
    %v821 = vld [vmem:[#allocation5 + $0x1470] sm:$0xff]
    %v822 = vld [vmem:[#allocation5 + $0x1478] sm:$0xff]
    %v823 = vld [vmem:[#allocation5 + $0x1480] sm:$0xff]
    %v824 = vld [vmem:[#allocation5 + $0x1488] sm:$0xff]
    %v825 = vld [vmem:[#allocation5 + $0x1490] sm:$0xff]
    %v826 = vld [vmem:[#allocation5 + $0x1498] sm:$0xff]
    %v827 = vld [vmem:[#allocation5 + $0x14a0] sm:$0xff]
    %v828 = vld [vmem:[#allocation5 + $0x14a8] sm:$0xff]
    %v829 = vld [vmem:[#allocation5 + $0x14b0] sm:$0xff]
    %v830 = vld [vmem:[#allocation5 + $0x14b8] sm:$0xff]
    %v831 = vld [vmem:[#allocation5 + $0x14c0] sm:$0xff]
    %v832 = vld [vmem:[#allocation5 + $0x14c8] sm:$0xff]
    %v833 = vld [vmem:[#allocation5 + $0x14d0] sm:$0xff]
    %v834 = vld [vmem:[#allocation5 + $0x14d8] sm:$0xff]
    %v835 = vld [vmem:[#allocation5 + $0x14e0] sm:$0xff]
    %v836 = vld [vmem:[#allocation5 + $0x14e8] sm:$0xff]
    %v837 = vld [vmem:[#allocation5 + $0x14f0] sm:$0xff]
    %v838 = vld [vmem:[#allocation5 + $0x14f8] sm:$0xff]
    %v839 = vld [vmem:[#allocation5 + $0x1500] sm:$0xff]
    %v840 = vld [vmem:[#allocation5 + $0x1508] sm:$0xff]
    %v841 = vld [vmem:[#allocation5 + $0x1510] sm:$0xff]
    %v842 = vld [vmem:[#allocation5 + $0x1518] sm:$0xff]
    %v843 = vld [vmem:[#allocation5 + $0x1520] sm:$0xff]
    %v844 = vld [vmem:[#allocation5 + $0x1528] sm:$0xff]
    %v845 = vld [vmem:[#allocation5 + $0x1530] sm:$0xff]
    %v846 = vld [vmem:[#allocation5 + $0x1538] sm:$0xff]
    %v847 = vld [vmem:[#allocation5 + $0x1540] sm:$0xff]
    %v848 = vld [vmem:[#allocation5 + $0x1548] sm:$0xff]
    %v849 = vld [vmem:[#allocation5 + $0x1550] sm:$0xff]
    %v850 = vld [vmem:[#allocation5 + $0x1558] sm:$0xff]
    %v851 = vld [vmem:[#allocation5 + $0x1560] sm:$0xff]
    %v852 = vld [vmem:[#allocation5 + $0x1568] sm:$0xff]
    %v853 = vld [vmem:[#allocation5 + $0x1570] sm:$0xff]
    %v854 = vld [vmem:[#allocation5 + $0x1578] sm:$0xff]
    %v855 = vld [vmem:[#allocation5 + $0x1580] sm:$0xff]
    %v856 = vld [vmem:[#allocation5 + $0x1588] sm:$0xff]
    %v857 = vld [vmem:[#allocation5 + $0x1590] sm:$0xff]
    %v858 = vld [vmem:[#allocation5 + $0x1598] sm:$0xff]
    %v859 = vld [vmem:[#allocation5 + $0x15a0] sm:$0xff]
    %v860 = vld [vmem:[#allocation5 + $0x15a8] sm:$0xff]
    %v861 = vld [vmem:[#allocation5 + $0x15b0] sm:$0xff]
    %v862 = vld [vmem:[#allocation5 + $0x15b8] sm:$0xff]
    %v863 = vld [vmem:[#allocation5 + $0x15c0] sm:$0xff]
    %v864 = vld [vmem:[#allocation5 + $0x15c8] sm:$0xff]
    %v865 = vld [vmem:[#allocation5 + $0x15d0] sm:$0xff]
    %v866 = vld [vmem:[#allocation5 + $0x15d8] sm:$0xff]
    %v867 = vld [vmem:[#allocation5 + $0x15e0] sm:$0xff]
    %v868 = vld [vmem:[#allocation5 + $0x15e8] sm:$0xff]
    %v869 = vld [vmem:[#allocation5 + $0x15f0] sm:$0xff]
    %v870 = vld [vmem:[#allocation5 + $0x15f8] sm:$0xff]
    %v871 = vld [vmem:[#allocation5 + $0x1600] sm:$0xff]
    %v872 = vld [vmem:[#allocation5 + $0x1608] sm:$0xff]
    %v873 = vld [vmem:[#allocation5 + $0x1610] sm:$0xff]
    %v874 = vld [vmem:[#allocation5 + $0x1618] sm:$0xff]
    %v875 = vld [vmem:[#allocation5 + $0x1620] sm:$0xff]
    %v876 = vld [vmem:[#allocation5 + $0x1628] sm:$0xff]
    %v877 = vld [vmem:[#allocation5 + $0x1630] sm:$0xff]
    %v878 = vld [vmem:[#allocation5 + $0x1638] sm:$0xff]
    %v879 = vld [vmem:[#allocation5 + $0x1640] sm:$0xff]
    %v880 = vld [vmem:[#allocation5 + $0x1648] sm:$0xff]
    %v881 = vld [vmem:[#allocation5 + $0x1650] sm:$0xff]
    %v882 = vld [vmem:[#allocation5 + $0x1658] sm:$0xff]
    %v883 = vld [vmem:[#allocation5 + $0x1660] sm:$0xff]
    %v884 = vld [vmem:[#allocation5 + $0x1668] sm:$0xff]
    %v885 = vld [vmem:[#allocation5 + $0x1670] sm:$0xff]
    %v886 = vld [vmem:[#allocation5 + $0x1678] sm:$0xff]
    %v887 = vld [vmem:[#allocation5 + $0x1680] sm:$0xff]
    %v888 = vld [vmem:[#allocation5 + $0x1688] sm:$0xff]
    %v889 = vld [vmem:[#allocation5 + $0x1690] sm:$0xff]
    %v890 = vld [vmem:[#allocation5 + $0x1698] sm:$0xff]
    %v891 = vld [vmem:[#allocation5 + $0x16a0] sm:$0xff]
    %v892 = vld [vmem:[#allocation5 + $0x16a8] sm:$0xff]
    %v893 = vld [vmem:[#allocation5 + $0x16b0] sm:$0xff]
    %v894 = vld [vmem:[#allocation5 + $0x16b8] sm:$0xff]
    %v895 = vld [vmem:[#allocation5 + $0x16c0] sm:$0xff]
    %v896 = vld [vmem:[#allocation5 + $0x16c8] sm:$0xff]
    %v897 = vld [vmem:[#allocation5 + $0x16d0] sm:$0xff]
    %v898 = vld [vmem:[#allocation5 + $0x16d8] sm:$0xff]
    %v899 = vld [vmem:[#allocation5 + $0x16e0] sm:$0xff]
    %v900 = vld [vmem:[#allocation5 + $0x16e8] sm:$0xff]
    %v901 = vld [vmem:[#allocation5 + $0x16f0] sm:$0xff]
    %v902 = vld [vmem:[#allocation5 + $0x16f8] sm:$0xff]
    %v903 = vld [vmem:[#allocation5 + $0x1700] sm:$0xff]
    %v904 = vld [vmem:[#allocation5 + $0x1708] sm:$0xff]
    %v905 = vld [vmem:[#allocation5 + $0x1710] sm:$0xff]
    %v906 = vld [vmem:[#allocation5 + $0x1718] sm:$0xff]
    %v907 = vld [vmem:[#allocation5 + $0x1720] sm:$0xff]
    %v908 = vld [vmem:[#allocation5 + $0x1728] sm:$0xff]
    %v909 = vld [vmem:[#allocation5 + $0x1730] sm:$0xff]
    %v910 = vld [vmem:[#allocation5 + $0x1738] sm:$0xff]
    %v911 = vld [vmem:[#allocation5 + $0x1740] sm:$0xff]
    %v912 = vld [vmem:[#allocation5 + $0x1748] sm:$0xff]
    %v913 = vld [vmem:[#allocation5 + $0x1750] sm:$0xff]
    %v914 = vld [vmem:[#allocation5 + $0x1758] sm:$0xff]
    %v915 = vld [vmem:[#allocation5 + $0x1760] sm:$0xff]
    %v916 = vld [vmem:[#allocation5 + $0x1768] sm:$0xff]
    %v917 = vld [vmem:[#allocation5 + $0x1770] sm:$0xff]
    %v918 = vld [vmem:[#allocation5 + $0x1778] sm:$0xff]
    %v919 = vld [vmem:[#allocation5 + $0x1780] sm:$0xff]
    %v920 = vld [vmem:[#allocation5 + $0x1788] sm:$0xff]
    %v921 = vld [vmem:[#allocation5 + $0x1790] sm:$0xff]
    %v922 = vld [vmem:[#allocation5 + $0x1798] sm:$0xff]
    %v923 = vld [vmem:[#allocation5 + $0x17a0] sm:$0xff]
    %v924 = vld [vmem:[#allocation5 + $0x17a8] sm:$0xff]
    %v925 = vld [vmem:[#allocation5 + $0x17b0] sm:$0xff]
    %v926 = vld [vmem:[#allocation5 + $0x17b8] sm:$0xff]
    %v927 = vld [vmem:[#allocation5 + $0x17c0] sm:$0xff]
    %v928 = vld [vmem:[#allocation5 + $0x17c8] sm:$0xff]
    %v929 = vld [vmem:[#allocation5 + $0x17d0] sm:$0xff]
    %v930 = vld [vmem:[#allocation5 + $0x17d8] sm:$0xff]
    %v931 = vld [vmem:[#allocation5 + $0x17e0] sm:$0xff]
    %v932 = vld [vmem:[#allocation5 + $0x17e8] sm:$0xff]
    %v933 = vld [vmem:[#allocation5 + $0x17f0] sm:$0xff]
    %v934 = vld [vmem:[#allocation5 + $0x17f8] sm:$0xff]
    %v935 = vld [vmem:[#allocation5 + $0x1800] sm:$0xff]
    %v936 = vld [vmem:[#allocation5 + $0x1808] sm:$0xff]
    %v937 = vld [vmem:[#allocation5 + $0x1810] sm:$0xff]
    %v938 = vld [vmem:[#allocation5 + $0x1818] sm:$0xff]
    %v939 = vld [vmem:[#allocation5 + $0x1820] sm:$0xff]
    %v940 = vld [vmem:[#allocation5 + $0x1828] sm:$0xff]
    %v941 = vld [vmem:[#allocation5 + $0x1830] sm:$0xff]
    %v942 = vld [vmem:[#allocation5 + $0x1838] sm:$0xff]
    %v943 = vld [vmem:[#allocation5 + $0x1840] sm:$0xff]
    %v944 = vld [vmem:[#allocation5 + $0x1848] sm:$0xff]
    %v945 = vld [vmem:[#allocation5 + $0x1850] sm:$0xff]
    %v946 = vld [vmem:[#allocation5 + $0x1858] sm:$0xff]
    %v947 = vld [vmem:[#allocation5 + $0x1860] sm:$0xff]
    %v948 = vld [vmem:[#allocation5 + $0x1868] sm:$0xff]
    %v949 = vld [vmem:[#allocation5 + $0x1870] sm:$0xff]
    %v950 = vld [vmem:[#allocation5 + $0x1878] sm:$0xff]
    %v951 = vld [vmem:[#allocation5 + $0x1880] sm:$0xff]
    %v952 = vld [vmem:[#allocation5 + $0x1888] sm:$0xff]
    %v953 = vld [vmem:[#allocation5 + $0x1890] sm:$0xff]
    %v954 = vld [vmem:[#allocation5 + $0x1898] sm:$0xff]
    %v955 = vld [vmem:[#allocation5 + $0x18a0] sm:$0xff]
    %v956 = vld [vmem:[#allocation5 + $0x18a8] sm:$0xff]
    %v957 = vld [vmem:[#allocation5 + $0x18b0] sm:$0xff]
    %v958 = vld [vmem:[#allocation5 + $0x18b8] sm:$0xff]
    %v959 = vld [vmem:[#allocation5 + $0x18c0] sm:$0xff]
    %v960 = vld [vmem:[#allocation5 + $0x18c8] sm:$0xff]
    %v961 = vld [vmem:[#allocation5 + $0x18d0] sm:$0xff]
    %v962 = vld [vmem:[#allocation5 + $0x18d8] sm:$0xff]
    %v963 = vld [vmem:[#allocation5 + $0x18e0] sm:$0xff]
    %v964 = vld [vmem:[#allocation5 + $0x18e8] sm:$0xff]
    %v965 = vld [vmem:[#allocation5 + $0x18f0] sm:$0xff]
    %v966 = vld [vmem:[#allocation5 + $0x18f8] sm:$0xff]
    %v967 = vld [vmem:[#allocation5 + $0x1900] sm:$0xff]
    %v968 = vld [vmem:[#allocation5 + $0x1908] sm:$0xff]
    %v969 = vld [vmem:[#allocation5 + $0x1910] sm:$0xff]
    %v970 = vld [vmem:[#allocation5 + $0x1918] sm:$0xff]
    %v971 = vld [vmem:[#allocation5 + $0x1920] sm:$0xff]
    %v972 = vld [vmem:[#allocation5 + $0x1928] sm:$0xff]
    %v973 = vld [vmem:[#allocation5 + $0x1930] sm:$0xff]
    %v974 = vld [vmem:[#allocation5 + $0x1938] sm:$0xff]
    %v975 = vld [vmem:[#allocation5 + $0x1940] sm:$0xff]
    %v976 = vld [vmem:[#allocation5 + $0x1948] sm:$0xff]
    %v977 = vld [vmem:[#allocation5 + $0x1950] sm:$0xff]
    %v978 = vld [vmem:[#allocation5 + $0x1958] sm:$0xff]
    %v979 = vld [vmem:[#allocation5 + $0x1960] sm:$0xff]
    %v980 = vld [vmem:[#allocation5 + $0x1968] sm:$0xff]
    %v981 = vld [vmem:[#allocation5 + $0x1970] sm:$0xff]
    %v982 = vld [vmem:[#allocation5 + $0x1978] sm:$0xff]
    %v983 = vld [vmem:[#allocation5 + $0x1980] sm:$0xff]
    %v984 = vld [vmem:[#allocation5 + $0x1988] sm:$0xff]
    %v985 = vld [vmem:[#allocation5 + $0x1990] sm:$0xff]
    %v986 = vld [vmem:[#allocation5 + $0x1998] sm:$0xff]
    %v987 = vld [vmem:[#allocation5 + $0x19a0] sm:$0xff]
    %v988 = vld [vmem:[#allocation5 + $0x19a8] sm:$0xff]
    %v989 = vld [vmem:[#allocation5 + $0x19b0] sm:$0xff]
    %v990 = vld [vmem:[#allocation5 + $0x19b8] sm:$0xff]
    %v991 = vld [vmem:[#allocation5 + $0x19c0] sm:$0xff]
    %v992 = vld [vmem:[#allocation5 + $0x19c8] sm:$0xff]
    %v993 = vld [vmem:[#allocation5 + $0x19d0] sm:$0xff]
    %v994 = vld [vmem:[#allocation5 + $0x19d8] sm:$0xff]
    %v995 = vld [vmem:[#allocation5 + $0x19e0] sm:$0xff]
    %v996 = vld [vmem:[#allocation5 + $0x19e8] sm:$0xff]
    %v997 = vld [vmem:[#allocation5 + $0x19f0] sm:$0xff]
    %v998 = vld [vmem:[#allocation5 + $0x19f8] sm:$0xff]
    %v999 = vld [vmem:[#allocation5 + $0x1a00] sm:$0xff]
    %v1000 = vld [vmem:[#allocation5 + $0x1a08] sm:$0xff]
    %v1001 = vld [vmem:[#allocation5 + $0x1a10] sm:$0xff]
    %v1002 = vld [vmem:[#allocation5 + $0x1a18] sm:$0xff]
    %v1003 = vld [vmem:[#allocation5 + $0x1a20] sm:$0xff]
    %v1004 = vld [vmem:[#allocation5 + $0x1a28] sm:$0xff]
    %v1005 = vld [vmem:[#allocation5 + $0x1a30] sm:$0xff]
    %v1006 = vld [vmem:[#allocation5 + $0x1a38] sm:$0xff]
    %v1007 = vld [vmem:[#allocation5 + $0x1a40] sm:$0xff]
    %v1008 = vld [vmem:[#allocation5 + $0x1a48] sm:$0xff]
    %v1009 = vld [vmem:[#allocation5 + $0x1a50] sm:$0xff]
    %v1010 = vld [vmem:[#allocation5 + $0x1a58] sm:$0xff]
    %v1011 = vld [vmem:[#allocation5 + $0x1a60] sm:$0xff]
    %v1012 = vld [vmem:[#allocation5 + $0x1a68] sm:$0xff]
    %v1013 = vld [vmem:[#allocation5 + $0x1a70] sm:$0xff]
    %v1014 = vld [vmem:[#allocation5 + $0x1a78] sm:$0xff]
    %v1015 = vld [vmem:[#allocation5 + $0x1a80] sm:$0xff]
    %v1016 = vld [vmem:[#allocation5 + $0x1a88] sm:$0xff]
    %v1017 = vld [vmem:[#allocation5 + $0x1a90] sm:$0xff]
    %v1018 = vld [vmem:[#allocation5 + $0x1a98] sm:$0xff]
    %v1019 = vld [vmem:[#allocation5 + $0x1aa0] sm:$0xff]
    %v1020 = vld [vmem:[#allocation5 + $0x1aa8] sm:$0xff]
    %v1021 = vld [vmem:[#allocation5 + $0x1ab0] sm:$0xff]
    %v1022 = vld [vmem:[#allocation5 + $0x1ab8] sm:$0xff]
    %v1023 = vld [vmem:[#allocation5 + $0x1ac0] sm:$0xff]
    %v1024 = vld [vmem:[#allocation5 + $0x1ac8] sm:$0xff]
    %v1025 = vld [vmem:[#allocation5 + $0x1ad0] sm:$0xff]
    %v1026 = vld [vmem:[#allocation5 + $0x1ad8] sm:$0xff]
    %v1027 = vld [vmem:[#allocation5 + $0x1ae0] sm:$0xff]
    %v1028 = vld [vmem:[#allocation5 + $0x1ae8] sm:$0xff]
    %v1029 = vld [vmem:[#allocation5 + $0x1af0] sm:$0xff]
    %v1030 = vld [vmem:[#allocation5 + $0x1af8] sm:$0xff]
    %v1031 = vld [vmem:[#allocation5 + $0x1b00] sm:$0xff]
    %v1032 = vld [vmem:[#allocation5 + $0x1b08] sm:$0xff]
    %v1033 = vld [vmem:[#allocation5 + $0x1b10] sm:$0xff]
    %v1034 = vld [vmem:[#allocation5 + $0x1b18] sm:$0xff]
    %v1035 = vld [vmem:[#allocation5 + $0x1b20] sm:$0xff]
    %v1036 = vld [vmem:[#allocation5 + $0x1b28] sm:$0xff]
    %v1037 = vld [vmem:[#allocation5 + $0x1b30] sm:$0xff]
    %v1038 = vld [vmem:[#allocation5 + $0x1b38] sm:$0xff]
    %v1039 = vld [vmem:[#allocation5 + $0x1b40] sm:$0xff]
    %v1040 = vld [vmem:[#allocation5 + $0x1b48] sm:$0xff]
    %v1041 = vld [vmem:[#allocation5 + $0x1b50] sm:$0xff]
    %v1042 = vld [vmem:[#allocation5 + $0x1b58] sm:$0xff]
    %v1043 = vld [vmem:[#allocation5 + $0x1b60] sm:$0xff]
    %v1044 = vld [vmem:[#allocation5 + $0x1b68] sm:$0xff]
    %v1045 = vld [vmem:[#allocation5 + $0x1b70] sm:$0xff]
    %v1046 = vld [vmem:[#allocation5 + $0x1b78] sm:$0xff]
    %v1047 = vld [vmem:[#allocation5 + $0x1b80] sm:$0xff]
    %v1048 = vld [vmem:[#allocation5 + $0x1b88] sm:$0xff]
    %v1049 = vld [vmem:[#allocation5 + $0x1b90] sm:$0xff]
    %v1050 = vld [vmem:[#allocation5 + $0x1b98] sm:$0xff]
    %v1051 = vld [vmem:[#allocation5 + $0x1ba0] sm:$0xff]
    %v1052 = vld [vmem:[#allocation5 + $0x1ba8] sm:$0xff]
    %v1053 = vld [vmem:[#allocation5 + $0x1bb0] sm:$0xff]
    %v1054 = vld [vmem:[#allocation5 + $0x1bb8] sm:$0xff]
    %v1055 = vld [vmem:[#allocation5 + $0x1bc0] sm:$0xff]
    %v1056 = vld [vmem:[#allocation5 + $0x1bc8] sm:$0xff]
    %v1057 = vld [vmem:[#allocation5 + $0x1bd0] sm:$0xff]
    %v1058 = vld [vmem:[#allocation5 + $0x1bd8] sm:$0xff]
    %v1059 = vld [vmem:[#allocation5 + $0x1be0] sm:$0xff]
    %v1060 = vld [vmem:[#allocation5 + $0x1be8] sm:$0xff]
    %v1061 = vld [vmem:[#allocation5 + $0x1bf0] sm:$0xff]
    %v1062 = vld [vmem:[#allocation5 + $0x1bf8] sm:$0xff]
    %v1063 = vld [vmem:[#allocation5 + $0x1c00] sm:$0xff]
    %v1064 = vld [vmem:[#allocation5 + $0x1c08] sm:$0xff]
    %v1065 = vld [vmem:[#allocation5 + $0x1c10] sm:$0xff]
    %v1066 = vld [vmem:[#allocation5 + $0x1c18] sm:$0xff]
    %v1067 = vld [vmem:[#allocation5 + $0x1c20] sm:$0xff]
    %v1068 = vld [vmem:[#allocation5 + $0x1c28] sm:$0xff]
    %v1069 = vld [vmem:[#allocation5 + $0x1c30] sm:$0xff]
    %v1070 = vld [vmem:[#allocation5 + $0x1c38] sm:$0xff]
    %v1071 = vld [vmem:[#allocation5 + $0x1c40] sm:$0xff]
    %v1072 = vld [vmem:[#allocation5 + $0x1c48] sm:$0xff]
    %v1073 = vld [vmem:[#allocation5 + $0x1c50] sm:$0xff]
    %v1074 = vld [vmem:[#allocation5 + $0x1c58] sm:$0xff]
    %v1075 = vld [vmem:[#allocation5 + $0x1c60] sm:$0xff]
    %v1076 = vld [vmem:[#allocation5 + $0x1c68] sm:$0xff]
    %v1077 = vld [vmem:[#allocation5 + $0x1c70] sm:$0xff]
    %v1078 = vld [vmem:[#allocation5 + $0x1c78] sm:$0xff]
    %v1079 = vld [vmem:[#allocation5 + $0x1c80] sm:$0xff]
    %v1080 = vld [vmem:[#allocation5 + $0x1c88] sm:$0xff]
    %v1081 = vld [vmem:[#allocation5 + $0x1c90] sm:$0xff]
    %v1082 = vld [vmem:[#allocation5 + $0x1c98] sm:$0xff]
    %v1083 = vld [vmem:[#allocation5 + $0x1ca0] sm:$0xff]
    %v1084 = vld [vmem:[#allocation5 + $0x1ca8] sm:$0xff]
    %v1085 = vld [vmem:[#allocation5 + $0x1cb0] sm:$0xff]
    %v1086 = vld [vmem:[#allocation5 + $0x1cb8] sm:$0xff]
    %v1087 = vld [vmem:[#allocation5 + $0x1cc0] sm:$0xff]
    %v1088 = vld [vmem:[#allocation5 + $0x1cc8] sm:$0xff]
    %v1089 = vld [vmem:[#allocation5 + $0x1cd0] sm:$0xff]
    %v1090 = vld [vmem:[#allocation5 + $0x1cd8] sm:$0xff]
    %v1091 = vld [vmem:[#allocation5 + $0x1ce0] sm:$0xff]
    %v1092 = vld [vmem:[#allocation5 + $0x1ce8] sm:$0xff]
    %v1093 = vld [vmem:[#allocation5 + $0x1cf0] sm:$0xff]
    %v1094 = vld [vmem:[#allocation5 + $0x1cf8] sm:$0xff]
    %v1095 = vld [vmem:[#allocation5 + $0x1d00] sm:$0xff]
    %v1096 = vld [vmem:[#allocation5 + $0x1d08] sm:$0xff]
    %v1097 = vld [vmem:[#allocation5 + $0x1d10] sm:$0xff]
    %v1098 = vld [vmem:[#allocation5 + $0x1d18] sm:$0xff]
    %v1099 = vld [vmem:[#allocation5 + $0x1d20] sm:$0xff]
    %v1100 = vld [vmem:[#allocation5 + $0x1d28] sm:$0xff]
    %v1101 = vld [vmem:[#allocation5 + $0x1d30] sm:$0xff]
    %v1102 = vld [vmem:[#allocation5 + $0x1d38] sm:$0xff]
    %v1103 = vld [vmem:[#allocation5 + $0x1d40] sm:$0xff]
    %v1104 = vld [vmem:[#allocation5 + $0x1d48] sm:$0xff]
    %v1105 = vld [vmem:[#allocation5 + $0x1d50] sm:$0xff]
    %v1106 = vld [vmem:[#allocation5 + $0x1d58] sm:$0xff]
    %v1107 = vld [vmem:[#allocation5 + $0x1d60] sm:$0xff]
    %v1108 = vld [vmem:[#allocation5 + $0x1d68] sm:$0xff]
    %v1109 = vld [vmem:[#allocation5 + $0x1d70] sm:$0xff]
    %v1110 = vld [vmem:[#allocation5 + $0x1d78] sm:$0xff]
    %v1111 = vld [vmem:[#allocation5 + $0x1d80] sm:$0xff]
    %v1112 = vld [vmem:[#allocation5 + $0x1d88] sm:$0xff]
    %v1113 = vld [vmem:[#allocation5 + $0x1d90] sm:$0xff]
    %v1114 = vld [vmem:[#allocation5 + $0x1d98] sm:$0xff]
    %v1115 = vld [vmem:[#allocation5 + $0x1da0] sm:$0xff]
    %v1116 = vld [vmem:[#allocation5 + $0x1da8] sm:$0xff]
    %v1117 = vld [vmem:[#allocation5 + $0x1db0] sm:$0xff]
    %v1118 = vld [vmem:[#allocation5 + $0x1db8] sm:$0xff]
    %v1119 = vld [vmem:[#allocation5 + $0x1dc0] sm:$0xff]
    %v1120 = vld [vmem:[#allocation5 + $0x1dc8] sm:$0xff]
    %v1121 = vld [vmem:[#allocation5 + $0x1dd0] sm:$0xff]
    %v1122 = vld [vmem:[#allocation5 + $0x1dd8] sm:$0xff]
    %v1123 = vld [vmem:[#allocation5 + $0x1de0] sm:$0xff]
    %v1124 = vld [vmem:[#allocation5 + $0x1de8] sm:$0xff]
    %v1125 = vld [vmem:[#allocation5 + $0x1df0] sm:$0xff]
    %v1126 = vld [vmem:[#allocation5 + $0x1df8] sm:$0xff]
    %v1127 = vld [vmem:[#allocation5 + $0x1e00] sm:$0xff]
    %v1128 = vld [vmem:[#allocation5 + $0x1e08] sm:$0xff]
    %v1129 = vld [vmem:[#allocation5 + $0x1e10] sm:$0xff]
    %v1130 = vld [vmem:[#allocation5 + $0x1e18] sm:$0xff]
    %v1131 = vld [vmem:[#allocation5 + $0x1e20] sm:$0xff]
    %v1132 = vld [vmem:[#allocation5 + $0x1e28] sm:$0xff]
    %v1133 = vld [vmem:[#allocation5 + $0x1e30] sm:$0xff]
    %v1134 = vld [vmem:[#allocation5 + $0x1e38] sm:$0xff]
    %v1135 = vld [vmem:[#allocation5 + $0x1e40] sm:$0xff]
    %v1136 = vld [vmem:[#allocation5 + $0x1e48] sm:$0xff]
    %v1137 = vld [vmem:[#allocation5 + $0x1e50] sm:$0xff]
    %v1138 = vld [vmem:[#allocation5 + $0x1e58] sm:$0xff]
    %v1139 = vld [vmem:[#allocation5 + $0x1e60] sm:$0xff]
    %v1140 = vld [vmem:[#allocation5 + $0x1e68] sm:$0xff]
    %v1141 = vld [vmem:[#allocation5 + $0x1e70] sm:$0xff]
    %v1142 = vld [vmem:[#allocation5 + $0x1e78] sm:$0xff]
    %v1143 = vld [vmem:[#allocation5 + $0x1e80] sm:$0xff]
    %v1144 = vld [vmem:[#allocation5 + $0x1e88] sm:$0xff]
    %v1145 = vld [vmem:[#allocation5 + $0x1e90] sm:$0xff]
    %v1146 = vld [vmem:[#allocation5 + $0x1e98] sm:$0xff]
    %v1147 = vld [vmem:[#allocation5 + $0x1ea0] sm:$0xff]
    %v1148 = vld [vmem:[#allocation5 + $0x1ea8] sm:$0xff]
    %v1149 = vld [vmem:[#allocation5 + $0x1eb0] sm:$0xff]
    %v1150 = vld [vmem:[#allocation5 + $0x1eb8] sm:$0xff]
    %v1151 = vld [vmem:[#allocation5 + $0x1ec0] sm:$0xff]
    %v1152 = vld [vmem:[#allocation5 + $0x1ec8] sm:$0xff]
    %v1153 = vld [vmem:[#allocation5 + $0x1ed0] sm:$0xff]
    %v1154 = vld [vmem:[#allocation5 + $0x1ed8] sm:$0xff]
    %v1155 = vld [vmem:[#allocation5 + $0x1ee0] sm:$0xff]
    %v1156 = vld [vmem:[#allocation5 + $0x1ee8] sm:$0xff]
    %v1157 = vld [vmem:[#allocation5 + $0x1ef0] sm:$0xff]
    %v1158 = vld [vmem:[#allocation5 + $0x1ef8] sm:$0xff]
    %v1159 = vld [vmem:[#allocation5 + $0x1f00] sm:$0xff]
    %v1160 = vld [vmem:[#allocation5 + $0x1f08] sm:$0xff]
    %v1161 = vld [vmem:[#allocation5 + $0x1f10] sm:$0xff]
    %v1162 = vld [vmem:[#allocation5 + $0x1f18] sm:$0xff]
    %v1163 = vld [vmem:[#allocation5 + $0x1f20] sm:$0xff]
    %v1164 = vld [vmem:[#allocation5 + $0x1f28] sm:$0xff]
    %v1165 = vld [vmem:[#allocation5 + $0x1f30] sm:$0xff]
    %v1166 = vld [vmem:[#allocation5 + $0x1f38] sm:$0xff]
    %v1167 = vld [vmem:[#allocation5 + $0x1f40] sm:$0xff]
    %v1168 = vld [vmem:[#allocation5 + $0x1f48] sm:$0xff]
    %v1169 = vld [vmem:[#allocation5 + $0x1f50] sm:$0xff]
    %v1170 = vld [vmem:[#allocation5 + $0x1f58] sm:$0xff]
    %v1171 = vld [vmem:[#allocation5 + $0x1f60] sm:$0xff]
    %v1172 = vld [vmem:[#allocation5 + $0x1f68] sm:$0xff]
    %v1173 = vld [vmem:[#allocation5 + $0x1f70] sm:$0xff]
    %v1174 = vld [vmem:[#allocation5 + $0x1f78] sm:$0xff]
    %v1175 = vld [vmem:[#allocation5 + $0x1f80] sm:$0xff]
    %v1176 = vld [vmem:[#allocation5 + $0x1f88] sm:$0xff]
    %v1177 = vld [vmem:[#allocation5 + $0x1f90] sm:$0xff]
    %v1178 = vld [vmem:[#allocation5 + $0x1f98] sm:$0xff]
    %v1179 = vld [vmem:[#allocation5 + $0x1fa0] sm:$0xff]
    %v1180 = vld [vmem:[#allocation5 + $0x1fa8] sm:$0xff]
    %v1181 = vld [vmem:[#allocation5 + $0x1fb0] sm:$0xff]
    %v1182 = vld [vmem:[#allocation5 + $0x1fb8] sm:$0xff]
    %v1183 = vld [vmem:[#allocation5 + $0x1fc0] sm:$0xff]
    %v1184 = vld [vmem:[#allocation5 + $0x1fc8] sm:$0xff]
    %v1185 = vld [vmem:[#allocation5 + $0x1fd0] sm:$0xff]
    %v1186 = vld [vmem:[#allocation5 + $0x1fd8] sm:$0xff]
    %v1187 = vld [vmem:[#allocation5 + $0x1fe0] sm:$0xff]
    %v1188 = vld [vmem:[#allocation5 + $0x1fe8] sm:$0xff]
    %v1189 = vld [vmem:[#allocation5 + $0x1ff0] sm:$0xff]
    %v1190 = vld [vmem:[#allocation5 + $0x1ff8] sm:$0xff]
    %v2215 = vunpack.c.l.b16 %v167
    %v2216 = vunpack.c.h.b16 %v167
    %v2217 = vunpack.c.l.b16 %v168
    %v2218 = vunpack.c.h.b16 %v168
    %v2219 = vunpack.c.l.b16 %v169
    %v2220 = vunpack.c.h.b16 %v169
    %v2221 = vunpack.c.l.b16 %v170
    %v2222 = vunpack.c.h.b16 %v170
    %v2223 = vunpack.c.l.b16 %v171
    %v2224 = vunpack.c.h.b16 %v171
    %v2225 = vunpack.c.l.b16 %v172
    %v2226 = vunpack.c.h.b16 %v172
    %v2227 = vunpack.c.l.b16 %v173
    %v2228 = vunpack.c.h.b16 %v173
    %v2229 = vunpack.c.l.b16 %v174
    %v2230 = vunpack.c.h.b16 %v174
    %v2231 = vunpack.c.l.b16 %v175
    %v2232 = vunpack.c.h.b16 %v175
    %v2233 = vunpack.c.l.b16 %v176
    %v2234 = vunpack.c.h.b16 %v176
    %v2235 = vunpack.c.l.b16 %v177
    %v2236 = vunpack.c.h.b16 %v177
    %v2237 = vunpack.c.l.b16 %v178
    %v2238 = vunpack.c.h.b16 %v178
    %v2239 = vunpack.c.l.b16 %v179
    %v2240 = vunpack.c.h.b16 %v179
    %v2241 = vunpack.c.l.b16 %v180
    %v2242 = vunpack.c.h.b16 %v180
    %v2243 = vunpack.c.l.b16 %v181
    %v2244 = vunpack.c.h.b16 %v181
    %v2245 = vunpack.c.l.b16 %v182
    %v2246 = vunpack.c.h.b16 %v182
    %v2247 = vunpack.c.l.b16 %v183
    %v2248 = vunpack.c.h.b16 %v183
    %v2249 = vunpack.c.l.b16 %v184
    %v2250 = vunpack.c.h.b16 %v184
    %v2251 = vunpack.c.l.b16 %v185
    %v2252 = vunpack.c.h.b16 %v185
    %v2253 = vunpack.c.l.b16 %v186
    %v2254 = vunpack.c.h.b16 %v186
    %v2255 = vunpack.c.l.b16 %v187
    %v2256 = vunpack.c.h.b16 %v187
    %v2257 = vunpack.c.l.b16 %v188
    %v2258 = vunpack.c.h.b16 %v188
    %v2259 = vunpack.c.l.b16 %v189
    %v2260 = vunpack.c.h.b16 %v189
    %v2261 = vunpack.c.l.b16 %v190
    %v2262 = vunpack.c.h.b16 %v190
    %v2263 = vunpack.c.l.b16 %v191
    %v2264 = vunpack.c.h.b16 %v191
    %v2265 = vunpack.c.l.b16 %v192
    %v2266 = vunpack.c.h.b16 %v192
    %v2267 = vunpack.c.l.b16 %v193
    %v2268 = vunpack.c.h.b16 %v193
    %v2269 = vunpack.c.l.b16 %v194
    %v2270 = vunpack.c.h.b16 %v194
    %v2271 = vunpack.c.l.b16 %v195
    %v2272 = vunpack.c.h.b16 %v195
    %v2273 = vunpack.c.l.b16 %v196
    %v2274 = vunpack.c.h.b16 %v196
    %v2275 = vunpack.c.l.b16 %v197
    %v2276 = vunpack.c.h.b16 %v197
    %v2277 = vunpack.c.l.b16 %v198
    %v2278 = vunpack.c.h.b16 %v198
    %v2279 = vunpack.c.l.b16 %v199
    %v2280 = vunpack.c.h.b16 %v199
    %v2281 = vunpack.c.l.b16 %v200
    %v2282 = vunpack.c.h.b16 %v200
    %v2283 = vunpack.c.l.b16 %v201
    %v2284 = vunpack.c.h.b16 %v201
    %v2285 = vunpack.c.l.b16 %v202
    %v2286 = vunpack.c.h.b16 %v202
    %v2287 = vunpack.c.l.b16 %v203
    %v2288 = vunpack.c.h.b16 %v203
    %v2289 = vunpack.c.l.b16 %v204
    %v2290 = vunpack.c.h.b16 %v204
    %v2291 = vunpack.c.l.b16 %v205
    %v2292 = vunpack.c.h.b16 %v205
    %v2293 = vunpack.c.l.b16 %v206
    %v2294 = vunpack.c.h.b16 %v206
    %v2295 = vunpack.c.l.b16 %v207
    %v2296 = vunpack.c.h.b16 %v207
    %v2297 = vunpack.c.l.b16 %v208
    %v2298 = vunpack.c.h.b16 %v208
    %v2299 = vunpack.c.l.b16 %v209
    %v2300 = vunpack.c.h.b16 %v209
    %v2301 = vunpack.c.l.b16 %v210
    %v2302 = vunpack.c.h.b16 %v210
    %v2303 = vunpack.c.l.b16 %v211
    %v2304 = vunpack.c.h.b16 %v211
    %v2305 = vunpack.c.l.b16 %v212
    %v2306 = vunpack.c.h.b16 %v212
    %v2307 = vunpack.c.l.b16 %v213
    %v2308 = vunpack.c.h.b16 %v213
    %v2309 = vunpack.c.l.b16 %v214
    %v2310 = vunpack.c.h.b16 %v214
    %v2311 = vunpack.c.l.b16 %v215
    %v2312 = vunpack.c.h.b16 %v215
    %v2313 = vunpack.c.l.b16 %v216
    %v2314 = vunpack.c.h.b16 %v216
    %v2315 = vunpack.c.l.b16 %v217
    %v2316 = vunpack.c.h.b16 %v217
    %v2317 = vunpack.c.l.b16 %v218
    %v2318 = vunpack.c.h.b16 %v218
    %v2319 = vunpack.c.l.b16 %v219
    %v2320 = vunpack.c.h.b16 %v219
    %v2321 = vunpack.c.l.b16 %v220
    %v2322 = vunpack.c.h.b16 %v220
    %v2323 = vunpack.c.l.b16 %v221
    %v2324 = vunpack.c.h.b16 %v221
    %v2325 = vunpack.c.l.b16 %v222
    %v2326 = vunpack.c.h.b16 %v222
    %v2327 = vunpack.c.l.b16 %v223
    %v2328 = vunpack.c.h.b16 %v223
    %v2329 = vunpack.c.l.b16 %v224
    %v2330 = vunpack.c.h.b16 %v224
    %v2331 = vunpack.c.l.b16 %v225
    %v2332 = vunpack.c.h.b16 %v225
    %v2333 = vunpack.c.l.b16 %v226
    %v2334 = vunpack.c.h.b16 %v226
    %v2335 = vunpack.c.l.b16 %v227
    %v2336 = vunpack.c.h.b16 %v227
    %v2337 = vunpack.c.l.b16 %v228
    %v2338 = vunpack.c.h.b16 %v228
    %v2339 = vunpack.c.l.b16 %v229
    %v2340 = vunpack.c.h.b16 %v229
    %v2341 = vunpack.c.l.b16 %v230
    %v2342 = vunpack.c.h.b16 %v230
    %v2343 = vunpack.c.l.b16 %v231
    %v2344 = vunpack.c.h.b16 %v231
    %v2345 = vunpack.c.l.b16 %v232
    %v2346 = vunpack.c.h.b16 %v232
    %v2347 = vunpack.c.l.b16 %v233
    %v2348 = vunpack.c.h.b16 %v233
    %v2349 = vunpack.c.l.b16 %v234
    %v2350 = vunpack.c.h.b16 %v234
    %v2351 = vunpack.c.l.b16 %v235
    %v2352 = vunpack.c.h.b16 %v235
    %v2353 = vunpack.c.l.b16 %v236
    %v2354 = vunpack.c.h.b16 %v236
    %v2355 = vunpack.c.l.b16 %v237
    %v2356 = vunpack.c.h.b16 %v237
    %v2357 = vunpack.c.l.b16 %v238
    %v2358 = vunpack.c.h.b16 %v238
    %v2359 = vunpack.c.l.b16 %v239
    %v2360 = vunpack.c.h.b16 %v239
    %v2361 = vunpack.c.l.b16 %v240
    %v2362 = vunpack.c.h.b16 %v240
    %v2363 = vunpack.c.l.b16 %v241
    %v2364 = vunpack.c.h.b16 %v241
    %v2365 = vunpack.c.l.b16 %v242
    %v2366 = vunpack.c.h.b16 %v242
    %v2367 = vunpack.c.l.b16 %v243
    %v2368 = vunpack.c.h.b16 %v243
    %v2369 = vunpack.c.l.b16 %v244
    %v2370 = vunpack.c.h.b16 %v244
    %v2371 = vunpack.c.l.b16 %v245
    %v2372 = vunpack.c.h.b16 %v245
    %v2373 = vunpack.c.l.b16 %v246
    %v2374 = vunpack.c.h.b16 %v246
    %v2375 = vunpack.c.l.b16 %v247
    %v2376 = vunpack.c.h.b16 %v247
    %v2377 = vunpack.c.l.b16 %v248
    %v2378 = vunpack.c.h.b16 %v248
    %v2379 = vunpack.c.l.b16 %v249
    %v2380 = vunpack.c.h.b16 %v249
    %v2381 = vunpack.c.l.b16 %v250
    %v2382 = vunpack.c.h.b16 %v250
    %v2383 = vunpack.c.l.b16 %v251
    %v2384 = vunpack.c.h.b16 %v251
    %v2385 = vunpack.c.l.b16 %v252
    %v2386 = vunpack.c.h.b16 %v252
    %v2387 = vunpack.c.l.b16 %v253
    %v2388 = vunpack.c.h.b16 %v253
    %v2389 = vunpack.c.l.b16 %v254
    %v2390 = vunpack.c.h.b16 %v254
    %v2391 = vunpack.c.l.b16 %v255
    %v2392 = vunpack.c.h.b16 %v255
    %v2393 = vunpack.c.l.b16 %v256
    %v2394 = vunpack.c.h.b16 %v256
    %v2395 = vunpack.c.l.b16 %v257
    %v2396 = vunpack.c.h.b16 %v257
    %v2397 = vunpack.c.l.b16 %v258
    %v2398 = vunpack.c.h.b16 %v258
    %v2399 = vunpack.c.l.b16 %v259
    %v2400 = vunpack.c.h.b16 %v259
    %v2401 = vunpack.c.l.b16 %v260
    %v2402 = vunpack.c.h.b16 %v260
    %v2403 = vunpack.c.l.b16 %v261
    %v2404 = vunpack.c.h.b16 %v261
    %v2405 = vunpack.c.l.b16 %v262
    %v2406 = vunpack.c.h.b16 %v262
    %v2407 = vunpack.c.l.b16 %v263
    %v2408 = vunpack.c.h.b16 %v263
    %v2409 = vunpack.c.l.b16 %v264
    %v2410 = vunpack.c.h.b16 %v264
    %v2411 = vunpack.c.l.b16 %v265
    %v2412 = vunpack.c.h.b16 %v265
    %v2413 = vunpack.c.l.b16 %v266
    %v2414 = vunpack.c.h.b16 %v266
    %v2415 = vunpack.c.l.b16 %v267
    %v2416 = vunpack.c.h.b16 %v267
    %v2417 = vunpack.c.l.b16 %v268
    %v2418 = vunpack.c.h.b16 %v268
    %v2419 = vunpack.c.l.b16 %v269
    %v2420 = vunpack.c.h.b16 %v269
    %v2421 = vunpack.c.l.b16 %v270
    %v2422 = vunpack.c.h.b16 %v270
    %v2423 = vunpack.c.l.b16 %v271
    %v2424 = vunpack.c.h.b16 %v271
    %v2425 = vunpack.c.l.b16 %v272
    %v2426 = vunpack.c.h.b16 %v272
    %v2427 = vunpack.c.l.b16 %v273
    %v2428 = vunpack.c.h.b16 %v273
    %v2429 = vunpack.c.l.b16 %v274
    %v2430 = vunpack.c.h.b16 %v274
    %v2431 = vunpack.c.l.b16 %v275
    %v2432 = vunpack.c.h.b16 %v275
    %v2433 = vunpack.c.l.b16 %v276
    %v2434 = vunpack.c.h.b16 %v276
    %v2435 = vunpack.c.l.b16 %v277
    %v2436 = vunpack.c.h.b16 %v277
    %v2437 = vunpack.c.l.b16 %v278
    %v2438 = vunpack.c.h.b16 %v278
    %v2439 = vunpack.c.l.b16 %v279
    %v2440 = vunpack.c.h.b16 %v279
    %v2441 = vunpack.c.l.b16 %v280
    %v2442 = vunpack.c.h.b16 %v280
    %v2443 = vunpack.c.l.b16 %v281
    %v2444 = vunpack.c.h.b16 %v281
    %v2445 = vunpack.c.l.b16 %v282
    %v2446 = vunpack.c.h.b16 %v282
    %v2447 = vunpack.c.l.b16 %v283
    %v2448 = vunpack.c.h.b16 %v283
    %v2449 = vunpack.c.l.b16 %v284
    %v2450 = vunpack.c.h.b16 %v284
    %v2451 = vunpack.c.l.b16 %v285
    %v2452 = vunpack.c.h.b16 %v285
    %v2453 = vunpack.c.l.b16 %v286
    %v2454 = vunpack.c.h.b16 %v286
    %v2455 = vunpack.c.l.b16 %v287
    %v2456 = vunpack.c.h.b16 %v287
    %v2457 = vunpack.c.l.b16 %v288
    %v2458 = vunpack.c.h.b16 %v288
    %v2459 = vunpack.c.l.b16 %v289
    %v2460 = vunpack.c.h.b16 %v289
    %v2461 = vunpack.c.l.b16 %v290
    %v2462 = vunpack.c.h.b16 %v290
    %v2463 = vunpack.c.l.b16 %v291
    %v2464 = vunpack.c.h.b16 %v291
    %v2465 = vunpack.c.l.b16 %v292
    %v2466 = vunpack.c.h.b16 %v292
    %v2467 = vunpack.c.l.b16 %v293
    %v2468 = vunpack.c.h.b16 %v293
    %v2469 = vunpack.c.l.b16 %v294
    %v2470 = vunpack.c.h.b16 %v294
    %v2471 = vunpack.c.l.b16 %v295
    %v2472 = vunpack.c.h.b16 %v295
    %v2473 = vunpack.c.l.b16 %v296
    %v2474 = vunpack.c.h.b16 %v296
    %v2475 = vunpack.c.l.b16 %v297
    %v2476 = vunpack.c.h.b16 %v297
    %v2477 = vunpack.c.l.b16 %v298
    %v2478 = vunpack.c.h.b16 %v298
    %v2479 = vunpack.c.l.b16 %v299
    %v2480 = vunpack.c.h.b16 %v299
    %v2481 = vunpack.c.l.b16 %v300
    %v2482 = vunpack.c.h.b16 %v300
    %v2483 = vunpack.c.l.b16 %v301
    %v2484 = vunpack.c.h.b16 %v301
    %v2485 = vunpack.c.l.b16 %v302
    %v2486 = vunpack.c.h.b16 %v302
    %v2487 = vunpack.c.l.b16 %v303
    %v2488 = vunpack.c.h.b16 %v303
    %v2489 = vunpack.c.l.b16 %v304
    %v2490 = vunpack.c.h.b16 %v304
    %v2491 = vunpack.c.l.b16 %v305
    %v2492 = vunpack.c.h.b16 %v305
    %v2493 = vunpack.c.l.b16 %v306
    %v2494 = vunpack.c.h.b16 %v306
    %v2495 = vunpack.c.l.b16 %v307
    %v2496 = vunpack.c.h.b16 %v307
    %v2497 = vunpack.c.l.b16 %v308
    %v2498 = vunpack.c.h.b16 %v308
    %v2499 = vunpack.c.l.b16 %v309
    %v2500 = vunpack.c.h.b16 %v309
    %v2501 = vunpack.c.l.b16 %v310
    %v2502 = vunpack.c.h.b16 %v310
    %v2503 = vunpack.c.l.b16 %v311
    %v2504 = vunpack.c.h.b16 %v311
    %v2505 = vunpack.c.l.b16 %v312
    %v2506 = vunpack.c.h.b16 %v312
    %v2507 = vunpack.c.l.b16 %v313
    %v2508 = vunpack.c.h.b16 %v313
    %v2509 = vunpack.c.l.b16 %v314
    %v2510 = vunpack.c.h.b16 %v314
    %v2511 = vunpack.c.l.b16 %v315
    %v2512 = vunpack.c.h.b16 %v315
    %v2513 = vunpack.c.l.b16 %v316
    %v2514 = vunpack.c.h.b16 %v316
    %v2515 = vunpack.c.l.b16 %v317
    %v2516 = vunpack.c.h.b16 %v317
    %v2517 = vunpack.c.l.b16 %v318
    %v2518 = vunpack.c.h.b16 %v318
    %v2519 = vunpack.c.l.b16 %v319
    %v2520 = vunpack.c.h.b16 %v319
    %v2521 = vunpack.c.l.b16 %v320
    %v2522 = vunpack.c.h.b16 %v320
    %v2523 = vunpack.c.l.b16 %v321
    %v2524 = vunpack.c.h.b16 %v321
    %v2525 = vunpack.c.l.b16 %v322
    %v2526 = vunpack.c.h.b16 %v322
    %v2527 = vunpack.c.l.b16 %v323
    %v2528 = vunpack.c.h.b16 %v323
    %v2529 = vunpack.c.l.b16 %v324
    %v2530 = vunpack.c.h.b16 %v324
    %v2531 = vunpack.c.l.b16 %v325
    %v2532 = vunpack.c.h.b16 %v325
    %v2533 = vunpack.c.l.b16 %v326
    %v2534 = vunpack.c.h.b16 %v326
    %v2535 = vunpack.c.l.b16 %v327
    %v2536 = vunpack.c.h.b16 %v327
    %v2537 = vunpack.c.l.b16 %v328
    %v2538 = vunpack.c.h.b16 %v328
    %v2539 = vunpack.c.l.b16 %v329
    %v2540 = vunpack.c.h.b16 %v329
    %v2541 = vunpack.c.l.b16 %v330
    %v2542 = vunpack.c.h.b16 %v330
    %v2543 = vunpack.c.l.b16 %v331
    %v2544 = vunpack.c.h.b16 %v331
    %v2545 = vunpack.c.l.b16 %v332
    %v2546 = vunpack.c.h.b16 %v332
    %v2547 = vunpack.c.l.b16 %v333
    %v2548 = vunpack.c.h.b16 %v333
    %v2549 = vunpack.c.l.b16 %v334
    %v2550 = vunpack.c.h.b16 %v334
    %v2551 = vunpack.c.l.b16 %v335
    %v2552 = vunpack.c.h.b16 %v335
    %v2553 = vunpack.c.l.b16 %v336
    %v2554 = vunpack.c.h.b16 %v336
    %v2555 = vunpack.c.l.b16 %v337
    %v2556 = vunpack.c.h.b16 %v337
    %v2557 = vunpack.c.l.b16 %v338
    %v2558 = vunpack.c.h.b16 %v338
    %v2559 = vunpack.c.l.b16 %v339
    %v2560 = vunpack.c.h.b16 %v339
    %v2561 = vunpack.c.l.b16 %v340
    %v2562 = vunpack.c.h.b16 %v340
    %v2563 = vunpack.c.l.b16 %v341
    %v2564 = vunpack.c.h.b16 %v341
    %v2565 = vunpack.c.l.b16 %v342
    %v2566 = vunpack.c.h.b16 %v342
    %v2567 = vunpack.c.l.b16 %v343
    %v2568 = vunpack.c.h.b16 %v343
    %v2569 = vunpack.c.l.b16 %v344
    %v2570 = vunpack.c.h.b16 %v344
    %v2571 = vunpack.c.l.b16 %v345
    %v2572 = vunpack.c.h.b16 %v345
    %v2573 = vunpack.c.l.b16 %v346
    %v2574 = vunpack.c.h.b16 %v346
    %v2575 = vunpack.c.l.b16 %v347
    %v2576 = vunpack.c.h.b16 %v347
    %v2577 = vunpack.c.l.b16 %v348
    %v2578 = vunpack.c.h.b16 %v348
    %v2579 = vunpack.c.l.b16 %v349
    %v2580 = vunpack.c.h.b16 %v349
    %v2581 = vunpack.c.l.b16 %v350
    %v2582 = vunpack.c.h.b16 %v350
    %v2583 = vunpack.c.l.b16 %v351
    %v2584 = vunpack.c.h.b16 %v351
    %v2585 = vunpack.c.l.b16 %v352
    %v2586 = vunpack.c.h.b16 %v352
    %v2587 = vunpack.c.l.b16 %v353
    %v2588 = vunpack.c.h.b16 %v353
    %v2589 = vunpack.c.l.b16 %v354
    %v2590 = vunpack.c.h.b16 %v354
    %v2591 = vunpack.c.l.b16 %v355
    %v2592 = vunpack.c.h.b16 %v355
    %v2593 = vunpack.c.l.b16 %v356
    %v2594 = vunpack.c.h.b16 %v356
    %v2595 = vunpack.c.l.b16 %v357
    %v2596 = vunpack.c.h.b16 %v357
    %v2597 = vunpack.c.l.b16 %v358
    %v2598 = vunpack.c.h.b16 %v358
    %v2599 = vunpack.c.l.b16 %v359
    %v2600 = vunpack.c.h.b16 %v359
    %v2601 = vunpack.c.l.b16 %v360
    %v2602 = vunpack.c.h.b16 %v360
    %v2603 = vunpack.c.l.b16 %v361
    %v2604 = vunpack.c.h.b16 %v361
    %v2605 = vunpack.c.l.b16 %v362
    %v2606 = vunpack.c.h.b16 %v362
    %v2607 = vunpack.c.l.b16 %v363
    %v2608 = vunpack.c.h.b16 %v363
    %v2609 = vunpack.c.l.b16 %v364
    %v2610 = vunpack.c.h.b16 %v364
    %v2611 = vunpack.c.l.b16 %v365
    %v2612 = vunpack.c.h.b16 %v365
    %v2613 = vunpack.c.l.b16 %v366
    %v2614 = vunpack.c.h.b16 %v366
    %v2615 = vunpack.c.l.b16 %v367
    %v2616 = vunpack.c.h.b16 %v367
    %v2617 = vunpack.c.l.b16 %v368
    %v2618 = vunpack.c.h.b16 %v368
    %v2619 = vunpack.c.l.b16 %v369
    %v2620 = vunpack.c.h.b16 %v369
    %v2621 = vunpack.c.l.b16 %v370
    %v2622 = vunpack.c.h.b16 %v370
    %v2623 = vunpack.c.l.b16 %v371
    %v2624 = vunpack.c.h.b16 %v371
    %v2625 = vunpack.c.l.b16 %v372
    %v2626 = vunpack.c.h.b16 %v372
    %v2627 = vunpack.c.l.b16 %v373
    %v2628 = vunpack.c.h.b16 %v373
    %v2629 = vunpack.c.l.b16 %v374
    %v2630 = vunpack.c.h.b16 %v374
    %v2631 = vunpack.c.l.b16 %v375
    %v2632 = vunpack.c.h.b16 %v375
    %v2633 = vunpack.c.l.b16 %v376
    %v2634 = vunpack.c.h.b16 %v376
    %v2635 = vunpack.c.l.b16 %v377
    %v2636 = vunpack.c.h.b16 %v377
    %v2637 = vunpack.c.l.b16 %v378
    %v2638 = vunpack.c.h.b16 %v378
    %v2639 = vunpack.c.l.b16 %v379
    %v2640 = vunpack.c.h.b16 %v379
    %v2641 = vunpack.c.l.b16 %v380
    %v2642 = vunpack.c.h.b16 %v380
    %v2643 = vunpack.c.l.b16 %v381
    %v2644 = vunpack.c.h.b16 %v381
    %v2645 = vunpack.c.l.b16 %v382
    %v2646 = vunpack.c.h.b16 %v382
    %v2647 = vunpack.c.l.b16 %v383
    %v2648 = vunpack.c.h.b16 %v383
    %v2649 = vunpack.c.l.b16 %v384
    %v2650 = vunpack.c.h.b16 %v384
    %v2651 = vunpack.c.l.b16 %v385
    %v2652 = vunpack.c.h.b16 %v385
    %v2653 = vunpack.c.l.b16 %v386
    %v2654 = vunpack.c.h.b16 %v386
    %v2655 = vunpack.c.l.b16 %v387
    %v2656 = vunpack.c.h.b16 %v387
    %v2657 = vunpack.c.l.b16 %v388
    %v2658 = vunpack.c.h.b16 %v388
    %v2659 = vunpack.c.l.b16 %v389
    %v2660 = vunpack.c.h.b16 %v389
    %v2661 = vunpack.c.l.b16 %v390
    %v2662 = vunpack.c.h.b16 %v390
    %v2663 = vunpack.c.l.b16 %v391
    %v2664 = vunpack.c.h.b16 %v391
    %v2665 = vunpack.c.l.b16 %v392
    %v2666 = vunpack.c.h.b16 %v392
    %v2667 = vunpack.c.l.b16 %v393
    %v2668 = vunpack.c.h.b16 %v393
    %v2669 = vunpack.c.l.b16 %v394
    %v2670 = vunpack.c.h.b16 %v394
    %v2671 = vunpack.c.l.b16 %v395
    %v2672 = vunpack.c.h.b16 %v395
    %v2673 = vunpack.c.l.b16 %v396
    %v2674 = vunpack.c.h.b16 %v396
    %v2675 = vunpack.c.l.b16 %v397
    %v2676 = vunpack.c.h.b16 %v397
    %v2677 = vunpack.c.l.b16 %v398
    %v2678 = vunpack.c.h.b16 %v398
    %v2679 = vunpack.c.l.b16 %v399
    %v2680 = vunpack.c.h.b16 %v399
    %v2681 = vunpack.c.l.b16 %v400
    %v2682 = vunpack.c.h.b16 %v400
    %v2683 = vunpack.c.l.b16 %v401
    %v2684 = vunpack.c.h.b16 %v401
    %v2685 = vunpack.c.l.b16 %v402
    %v2686 = vunpack.c.h.b16 %v402
    %v2687 = vunpack.c.l.b16 %v403
    %v2688 = vunpack.c.h.b16 %v403
    %v2689 = vunpack.c.l.b16 %v404
    %v2690 = vunpack.c.h.b16 %v404
    %v2691 = vunpack.c.l.b16 %v405
    %v2692 = vunpack.c.h.b16 %v405
    %v2693 = vunpack.c.l.b16 %v406
    %v2694 = vunpack.c.h.b16 %v406
    %v2695 = vunpack.c.l.b16 %v407
    %v2696 = vunpack.c.h.b16 %v407
    %v2697 = vunpack.c.l.b16 %v408
    %v2698 = vunpack.c.h.b16 %v408
    %v2699 = vunpack.c.l.b16 %v409
    %v2700 = vunpack.c.h.b16 %v409
    %v2701 = vunpack.c.l.b16 %v410
    %v2702 = vunpack.c.h.b16 %v410
    %v2703 = vunpack.c.l.b16 %v411
    %v2704 = vunpack.c.h.b16 %v411
    %v2705 = vunpack.c.l.b16 %v412
    %v2706 = vunpack.c.h.b16 %v412
    %v2707 = vunpack.c.l.b16 %v413
    %v2708 = vunpack.c.h.b16 %v413
    %v2709 = vunpack.c.l.b16 %v414
    %v2710 = vunpack.c.h.b16 %v414
    %v2711 = vunpack.c.l.b16 %v415
    %v2712 = vunpack.c.h.b16 %v415
    %v2713 = vunpack.c.l.b16 %v416
    %v2714 = vunpack.c.h.b16 %v416
    %v2715 = vunpack.c.l.b16 %v417
    %v2716 = vunpack.c.h.b16 %v417
    %v2717 = vunpack.c.l.b16 %v418
    %v2718 = vunpack.c.h.b16 %v418
    %v2719 = vunpack.c.l.b16 %v419
    %v2720 = vunpack.c.h.b16 %v419
    %v2721 = vunpack.c.l.b16 %v420
    %v2722 = vunpack.c.h.b16 %v420
    %v2723 = vunpack.c.l.b16 %v421
    %v2724 = vunpack.c.h.b16 %v421
    %v2725 = vunpack.c.l.b16 %v422
    %v2726 = vunpack.c.h.b16 %v422
    %v2727 = vunpack.c.l.b16 %v423
    %v2728 = vunpack.c.h.b16 %v423
    %v2729 = vunpack.c.l.b16 %v424
    %v2730 = vunpack.c.h.b16 %v424
    %v2731 = vunpack.c.l.b16 %v425
    %v2732 = vunpack.c.h.b16 %v425
    %v2733 = vunpack.c.l.b16 %v426
    %v2734 = vunpack.c.h.b16 %v426
    %v2735 = vunpack.c.l.b16 %v427
    %v2736 = vunpack.c.h.b16 %v427
    %v2737 = vunpack.c.l.b16 %v428
    %v2738 = vunpack.c.h.b16 %v428
    %v2739 = vunpack.c.l.b16 %v429
    %v2740 = vunpack.c.h.b16 %v429
    %v2741 = vunpack.c.l.b16 %v430
    %v2742 = vunpack.c.h.b16 %v430
    %v2743 = vunpack.c.l.b16 %v431
    %v2744 = vunpack.c.h.b16 %v431
    %v2745 = vunpack.c.l.b16 %v432
    %v2746 = vunpack.c.h.b16 %v432
    %v2747 = vunpack.c.l.b16 %v433
    %v2748 = vunpack.c.h.b16 %v433
    %v2749 = vunpack.c.l.b16 %v434
    %v2750 = vunpack.c.h.b16 %v434
    %v2751 = vunpack.c.l.b16 %v435
    %v2752 = vunpack.c.h.b16 %v435
    %v2753 = vunpack.c.l.b16 %v436
    %v2754 = vunpack.c.h.b16 %v436
    %v2755 = vunpack.c.l.b16 %v437
    %v2756 = vunpack.c.h.b16 %v437
    %v2757 = vunpack.c.l.b16 %v438
    %v2758 = vunpack.c.h.b16 %v438
    %v2759 = vunpack.c.l.b16 %v439
    %v2760 = vunpack.c.h.b16 %v439
    %v2761 = vunpack.c.l.b16 %v440
    %v2762 = vunpack.c.h.b16 %v440
    %v2763 = vunpack.c.l.b16 %v441
    %v2764 = vunpack.c.h.b16 %v441
    %v2765 = vunpack.c.l.b16 %v442
    %v2766 = vunpack.c.h.b16 %v442
    %v2767 = vunpack.c.l.b16 %v443
    %v2768 = vunpack.c.h.b16 %v443
    %v2769 = vunpack.c.l.b16 %v444
    %v2770 = vunpack.c.h.b16 %v444
    %v2771 = vunpack.c.l.b16 %v445
    %v2772 = vunpack.c.h.b16 %v445
    %v2773 = vunpack.c.l.b16 %v446
    %v2774 = vunpack.c.h.b16 %v446
    %v2775 = vunpack.c.l.b16 %v447
    %v2776 = vunpack.c.h.b16 %v447
    %v2777 = vunpack.c.l.b16 %v448
    %v2778 = vunpack.c.h.b16 %v448
    %v2779 = vunpack.c.l.b16 %v449
    %v2780 = vunpack.c.h.b16 %v449
    %v2781 = vunpack.c.l.b16 %v450
    %v2782 = vunpack.c.h.b16 %v450
    %v2783 = vunpack.c.l.b16 %v451
    %v2784 = vunpack.c.h.b16 %v451
    %v2785 = vunpack.c.l.b16 %v452
    %v2786 = vunpack.c.h.b16 %v452
    %v2787 = vunpack.c.l.b16 %v453
    %v2788 = vunpack.c.h.b16 %v453
    %v2789 = vunpack.c.l.b16 %v454
    %v2790 = vunpack.c.h.b16 %v454
    %v2791 = vunpack.c.l.b16 %v455
    %v2792 = vunpack.c.h.b16 %v455
    %v2793 = vunpack.c.l.b16 %v456
    %v2794 = vunpack.c.h.b16 %v456
    %v2795 = vunpack.c.l.b16 %v457
    %v2796 = vunpack.c.h.b16 %v457
    %v2797 = vunpack.c.l.b16 %v458
    %v2798 = vunpack.c.h.b16 %v458
    %v2799 = vunpack.c.l.b16 %v459
    %v2800 = vunpack.c.h.b16 %v459
    %v2801 = vunpack.c.l.b16 %v460
    %v2802 = vunpack.c.h.b16 %v460
    %v2803 = vunpack.c.l.b16 %v461
    %v2804 = vunpack.c.h.b16 %v461
    %v2805 = vunpack.c.l.b16 %v462
    %v2806 = vunpack.c.h.b16 %v462
    %v2807 = vunpack.c.l.b16 %v463
    %v2808 = vunpack.c.h.b16 %v463
    %v2809 = vunpack.c.l.b16 %v464
    %v2810 = vunpack.c.h.b16 %v464
    %v2811 = vunpack.c.l.b16 %v465
    %v2812 = vunpack.c.h.b16 %v465
    %v2813 = vunpack.c.l.b16 %v466
    %v2814 = vunpack.c.h.b16 %v466
    %v2815 = vunpack.c.l.b16 %v467
    %v2816 = vunpack.c.h.b16 %v467
    %v2817 = vunpack.c.l.b16 %v468
    %v2818 = vunpack.c.h.b16 %v468
    %v2819 = vunpack.c.l.b16 %v469
    %v2820 = vunpack.c.h.b16 %v469
    %v2821 = vunpack.c.l.b16 %v470
    %v2822 = vunpack.c.h.b16 %v470
    %v2823 = vunpack.c.l.b16 %v471
    %v2824 = vunpack.c.h.b16 %v471
    %v2825 = vunpack.c.l.b16 %v472
    %v2826 = vunpack.c.h.b16 %v472
    %v2827 = vunpack.c.l.b16 %v473
    %v2828 = vunpack.c.h.b16 %v473
    %v2829 = vunpack.c.l.b16 %v474
    %v2830 = vunpack.c.h.b16 %v474
    %v2831 = vunpack.c.l.b16 %v475
    %v2832 = vunpack.c.h.b16 %v475
    %v2833 = vunpack.c.l.b16 %v476
    %v2834 = vunpack.c.h.b16 %v476
    %v2835 = vunpack.c.l.b16 %v477
    %v2836 = vunpack.c.h.b16 %v477
    %v2837 = vunpack.c.l.b16 %v478
    %v2838 = vunpack.c.h.b16 %v478
    %v2839 = vunpack.c.l.b16 %v479
    %v2840 = vunpack.c.h.b16 %v479
    %v2841 = vunpack.c.l.b16 %v480
    %v2842 = vunpack.c.h.b16 %v480
    %v2843 = vunpack.c.l.b16 %v481
    %v2844 = vunpack.c.h.b16 %v481
    %v2845 = vunpack.c.l.b16 %v482
    %v2846 = vunpack.c.h.b16 %v482
    %v2847 = vunpack.c.l.b16 %v483
    %v2848 = vunpack.c.h.b16 %v483
    %v2849 = vunpack.c.l.b16 %v484
    %v2850 = vunpack.c.h.b16 %v484
    %v2851 = vunpack.c.l.b16 %v485
    %v2852 = vunpack.c.h.b16 %v485
    %v2853 = vunpack.c.l.b16 %v486
    %v2854 = vunpack.c.h.b16 %v486
    %v2855 = vunpack.c.l.b16 %v487
    %v2856 = vunpack.c.h.b16 %v487
    %v2857 = vunpack.c.l.b16 %v488
    %v2858 = vunpack.c.h.b16 %v488
    %v2859 = vunpack.c.l.b16 %v489
    %v2860 = vunpack.c.h.b16 %v489
    %v2861 = vunpack.c.l.b16 %v490
    %v2862 = vunpack.c.h.b16 %v490
    %v2863 = vunpack.c.l.b16 %v491
    %v2864 = vunpack.c.h.b16 %v491
    %v2865 = vunpack.c.l.b16 %v492
    %v2866 = vunpack.c.h.b16 %v492
    %v2867 = vunpack.c.l.b16 %v493
    %v2868 = vunpack.c.h.b16 %v493
    %v2869 = vunpack.c.l.b16 %v494
    %v2870 = vunpack.c.h.b16 %v494
    %v2871 = vunpack.c.l.b16 %v495
    %v2872 = vunpack.c.h.b16 %v495
    %v2873 = vunpack.c.l.b16 %v496
    %v2874 = vunpack.c.h.b16 %v496
    %v2875 = vunpack.c.l.b16 %v497
    %v2876 = vunpack.c.h.b16 %v497
    %v2877 = vunpack.c.l.b16 %v498
    %v2878 = vunpack.c.h.b16 %v498
    %v2879 = vunpack.c.l.b16 %v499
    %v2880 = vunpack.c.h.b16 %v499
    %v2881 = vunpack.c.l.b16 %v500
    %v2882 = vunpack.c.h.b16 %v500
    %v2883 = vunpack.c.l.b16 %v501
    %v2884 = vunpack.c.h.b16 %v501
    %v2885 = vunpack.c.l.b16 %v502
    %v2886 = vunpack.c.h.b16 %v502
    %v2887 = vunpack.c.l.b16 %v503
    %v2888 = vunpack.c.h.b16 %v503
    %v2889 = vunpack.c.l.b16 %v504
    %v2890 = vunpack.c.h.b16 %v504
    %v2891 = vunpack.c.l.b16 %v505
    %v2892 = vunpack.c.h.b16 %v505
    %v2893 = vunpack.c.l.b16 %v506
    %v2894 = vunpack.c.h.b16 %v506
    %v2895 = vunpack.c.l.b16 %v507
    %v2896 = vunpack.c.h.b16 %v507
    %v2897 = vunpack.c.l.b16 %v508
    %v2898 = vunpack.c.h.b16 %v508
    %v2899 = vunpack.c.l.b16 %v509
    %v2900 = vunpack.c.h.b16 %v509
    %v2901 = vunpack.c.l.b16 %v510
    %v2902 = vunpack.c.h.b16 %v510
    %v2903 = vunpack.c.l.b16 %v511
    %v2904 = vunpack.c.h.b16 %v511
    %v2905 = vunpack.c.l.b16 %v512
    %v2906 = vunpack.c.h.b16 %v512
    %v2907 = vunpack.c.l.b16 %v513
    %v2908 = vunpack.c.h.b16 %v513
    %v2909 = vunpack.c.l.b16 %v514
    %v2910 = vunpack.c.h.b16 %v514
    %v2911 = vunpack.c.l.b16 %v515
    %v2912 = vunpack.c.h.b16 %v515
    %v2913 = vunpack.c.l.b16 %v516
    %v2914 = vunpack.c.h.b16 %v516
    %v2915 = vunpack.c.l.b16 %v517
    %v2916 = vunpack.c.h.b16 %v517
    %v2917 = vunpack.c.l.b16 %v518
    %v2918 = vunpack.c.h.b16 %v518
    %v2919 = vunpack.c.l.b16 %v519
    %v2920 = vunpack.c.h.b16 %v519
    %v2921 = vunpack.c.l.b16 %v520
    %v2922 = vunpack.c.h.b16 %v520
    %v2923 = vunpack.c.l.b16 %v521
    %v2924 = vunpack.c.h.b16 %v521
    %v2925 = vunpack.c.l.b16 %v522
    %v2926 = vunpack.c.h.b16 %v522
    %v2927 = vunpack.c.l.b16 %v523
    %v2928 = vunpack.c.h.b16 %v523
    %v2929 = vunpack.c.l.b16 %v524
    %v2930 = vunpack.c.h.b16 %v524
    %v2931 = vunpack.c.l.b16 %v525
    %v2932 = vunpack.c.h.b16 %v525
    %v2933 = vunpack.c.l.b16 %v526
    %v2934 = vunpack.c.h.b16 %v526
    %v2935 = vunpack.c.l.b16 %v527
    %v2936 = vunpack.c.h.b16 %v527
    %v2937 = vunpack.c.l.b16 %v528
    %v2938 = vunpack.c.h.b16 %v528
    %v2939 = vunpack.c.l.b16 %v529
    %v2940 = vunpack.c.h.b16 %v529
    %v2941 = vunpack.c.l.b16 %v530
    %v2942 = vunpack.c.h.b16 %v530
    %v2943 = vunpack.c.l.b16 %v531
    %v2944 = vunpack.c.h.b16 %v531
    %v2945 = vunpack.c.l.b16 %v532
    %v2946 = vunpack.c.h.b16 %v532
    %v2947 = vunpack.c.l.b16 %v533
    %v2948 = vunpack.c.h.b16 %v533
    %v2949 = vunpack.c.l.b16 %v534
    %v2950 = vunpack.c.h.b16 %v534
    %v2951 = vunpack.c.l.b16 %v535
    %v2952 = vunpack.c.h.b16 %v535
    %v2953 = vunpack.c.l.b16 %v536
    %v2954 = vunpack.c.h.b16 %v536
    %v2955 = vunpack.c.l.b16 %v537
    %v2956 = vunpack.c.h.b16 %v537
    %v2957 = vunpack.c.l.b16 %v538
    %v2958 = vunpack.c.h.b16 %v538
    %v2959 = vunpack.c.l.b16 %v539
    %v2960 = vunpack.c.h.b16 %v539
    %v2961 = vunpack.c.l.b16 %v540
    %v2962 = vunpack.c.h.b16 %v540
    %v2963 = vunpack.c.l.b16 %v541
    %v2964 = vunpack.c.h.b16 %v541
    %v2965 = vunpack.c.l.b16 %v542
    %v2966 = vunpack.c.h.b16 %v542
    %v2967 = vunpack.c.l.b16 %v543
    %v2968 = vunpack.c.h.b16 %v543
    %v2969 = vunpack.c.l.b16 %v544
    %v2970 = vunpack.c.h.b16 %v544
    %v2971 = vunpack.c.l.b16 %v545
    %v2972 = vunpack.c.h.b16 %v545
    %v2973 = vunpack.c.l.b16 %v546
    %v2974 = vunpack.c.h.b16 %v546
    %v2975 = vunpack.c.l.b16 %v547
    %v2976 = vunpack.c.h.b16 %v547
    %v2977 = vunpack.c.l.b16 %v548
    %v2978 = vunpack.c.h.b16 %v548
    %v2979 = vunpack.c.l.b16 %v549
    %v2980 = vunpack.c.h.b16 %v549
    %v2981 = vunpack.c.l.b16 %v550
    %v2982 = vunpack.c.h.b16 %v550
    %v2983 = vunpack.c.l.b16 %v551
    %v2984 = vunpack.c.h.b16 %v551
    %v2985 = vunpack.c.l.b16 %v552
    %v2986 = vunpack.c.h.b16 %v552
    %v2987 = vunpack.c.l.b16 %v553
    %v2988 = vunpack.c.h.b16 %v553
    %v2989 = vunpack.c.l.b16 %v554
    %v2990 = vunpack.c.h.b16 %v554
    %v2991 = vunpack.c.l.b16 %v555
    %v2992 = vunpack.c.h.b16 %v555
    %v2993 = vunpack.c.l.b16 %v556
    %v2994 = vunpack.c.h.b16 %v556
    %v2995 = vunpack.c.l.b16 %v557
    %v2996 = vunpack.c.h.b16 %v557
    %v2997 = vunpack.c.l.b16 %v558
    %v2998 = vunpack.c.h.b16 %v558
    %v2999 = vunpack.c.l.b16 %v559
    %v3000 = vunpack.c.h.b16 %v559
    %v3001 = vunpack.c.l.b16 %v560
    %v3002 = vunpack.c.h.b16 %v560
    %v3003 = vunpack.c.l.b16 %v561
    %v3004 = vunpack.c.h.b16 %v561
    %v3005 = vunpack.c.l.b16 %v562
    %v3006 = vunpack.c.h.b16 %v562
    %v3007 = vunpack.c.l.b16 %v563
    %v3008 = vunpack.c.h.b16 %v563
    %v3009 = vunpack.c.l.b16 %v564
    %v3010 = vunpack.c.h.b16 %v564
    %v3011 = vunpack.c.l.b16 %v565
    %v3012 = vunpack.c.h.b16 %v565
    %v3013 = vunpack.c.l.b16 %v566
    %v3014 = vunpack.c.h.b16 %v566
    %v3015 = vunpack.c.l.b16 %v567
    %v3016 = vunpack.c.h.b16 %v567
    %v3017 = vunpack.c.l.b16 %v568
    %v3018 = vunpack.c.h.b16 %v568
    %v3019 = vunpack.c.l.b16 %v569
    %v3020 = vunpack.c.h.b16 %v569
    %v3021 = vunpack.c.l.b16 %v570
    %v3022 = vunpack.c.h.b16 %v570
    %v3023 = vunpack.c.l.b16 %v571
    %v3024 = vunpack.c.h.b16 %v571
    %v3025 = vunpack.c.l.b16 %v572
    %v3026 = vunpack.c.h.b16 %v572
    %v3027 = vunpack.c.l.b16 %v573
    %v3028 = vunpack.c.h.b16 %v573
    %v3029 = vunpack.c.l.b16 %v574
    %v3030 = vunpack.c.h.b16 %v574
    %v3031 = vunpack.c.l.b16 %v575
    %v3032 = vunpack.c.h.b16 %v575
    %v3033 = vunpack.c.l.b16 %v576
    %v3034 = vunpack.c.h.b16 %v576
    %v3035 = vunpack.c.l.b16 %v577
    %v3036 = vunpack.c.h.b16 %v577
    %v3037 = vunpack.c.l.b16 %v578
    %v3038 = vunpack.c.h.b16 %v578
    %v3039 = vunpack.c.l.b16 %v579
    %v3040 = vunpack.c.h.b16 %v579
    %v3041 = vunpack.c.l.b16 %v580
    %v3042 = vunpack.c.h.b16 %v580
    %v3043 = vunpack.c.l.b16 %v581
    %v3044 = vunpack.c.h.b16 %v581
    %v3045 = vunpack.c.l.b16 %v582
    %v3046 = vunpack.c.h.b16 %v582
    %v3047 = vunpack.c.l.b16 %v583
    %v3048 = vunpack.c.h.b16 %v583
    %v3049 = vunpack.c.l.b16 %v584
    %v3050 = vunpack.c.h.b16 %v584
    %v3051 = vunpack.c.l.b16 %v585
    %v3052 = vunpack.c.h.b16 %v585
    %v3053 = vunpack.c.l.b16 %v586
    %v3054 = vunpack.c.h.b16 %v586
    %v3055 = vunpack.c.l.b16 %v587
    %v3056 = vunpack.c.h.b16 %v587
    %v3057 = vunpack.c.l.b16 %v588
    %v3058 = vunpack.c.h.b16 %v588
    %v3059 = vunpack.c.l.b16 %v589
    %v3060 = vunpack.c.h.b16 %v589
    %v3061 = vunpack.c.l.b16 %v590
    %v3062 = vunpack.c.h.b16 %v590
    %v3063 = vunpack.c.l.b16 %v591
    %v3064 = vunpack.c.h.b16 %v591
    %v3065 = vunpack.c.l.b16 %v592
    %v3066 = vunpack.c.h.b16 %v592
    %v3067 = vunpack.c.l.b16 %v593
    %v3068 = vunpack.c.h.b16 %v593
    %v3069 = vunpack.c.l.b16 %v594
    %v3070 = vunpack.c.h.b16 %v594
    %v3071 = vunpack.c.l.b16 %v595
    %v3072 = vunpack.c.h.b16 %v595
    %v3073 = vunpack.c.l.b16 %v596
    %v3074 = vunpack.c.h.b16 %v596
    %v3075 = vunpack.c.l.b16 %v597
    %v3076 = vunpack.c.h.b16 %v597
    %v3077 = vunpack.c.l.b16 %v598
    %v3078 = vunpack.c.h.b16 %v598
    %v3079 = vunpack.c.l.b16 %v599
    %v3080 = vunpack.c.h.b16 %v599
    %v3081 = vunpack.c.l.b16 %v600
    %v3082 = vunpack.c.h.b16 %v600
    %v3083 = vunpack.c.l.b16 %v601
    %v3084 = vunpack.c.h.b16 %v601
    %v3085 = vunpack.c.l.b16 %v602
    %v3086 = vunpack.c.h.b16 %v602
    %v3087 = vunpack.c.l.b16 %v603
    %v3088 = vunpack.c.h.b16 %v603
    %v3089 = vunpack.c.l.b16 %v604
    %v3090 = vunpack.c.h.b16 %v604
    %v3091 = vunpack.c.l.b16 %v605
    %v3092 = vunpack.c.h.b16 %v605
    %v3093 = vunpack.c.l.b16 %v606
    %v3094 = vunpack.c.h.b16 %v606
    %v3095 = vunpack.c.l.b16 %v607
    %v3096 = vunpack.c.h.b16 %v607
    %v3097 = vunpack.c.l.b16 %v608
    %v3098 = vunpack.c.h.b16 %v608
    %v3099 = vunpack.c.l.b16 %v609
    %v3100 = vunpack.c.h.b16 %v609
    %v3101 = vunpack.c.l.b16 %v610
    %v3102 = vunpack.c.h.b16 %v610
    %v3103 = vunpack.c.l.b16 %v611
    %v3104 = vunpack.c.h.b16 %v611
    %v3105 = vunpack.c.l.b16 %v612
    %v3106 = vunpack.c.h.b16 %v612
    %v3107 = vunpack.c.l.b16 %v613
    %v3108 = vunpack.c.h.b16 %v613
    %v3109 = vunpack.c.l.b16 %v614
    %v3110 = vunpack.c.h.b16 %v614
    %v3111 = vunpack.c.l.b16 %v615
    %v3112 = vunpack.c.h.b16 %v615
    %v3113 = vunpack.c.l.b16 %v616
    %v3114 = vunpack.c.h.b16 %v616
    %v3115 = vunpack.c.l.b16 %v617
    %v3116 = vunpack.c.h.b16 %v617
    %v3117 = vunpack.c.l.b16 %v618
    %v3118 = vunpack.c.h.b16 %v618
    %v3119 = vunpack.c.l.b16 %v619
    %v3120 = vunpack.c.h.b16 %v619
    %v3121 = vunpack.c.l.b16 %v620
    %v3122 = vunpack.c.h.b16 %v620
    %v3123 = vunpack.c.l.b16 %v621
    %v3124 = vunpack.c.h.b16 %v621
    %v3125 = vunpack.c.l.b16 %v622
    %v3126 = vunpack.c.h.b16 %v622
    %v3127 = vunpack.c.l.b16 %v623
    %v3128 = vunpack.c.h.b16 %v623
    %v3129 = vunpack.c.l.b16 %v624
    %v3130 = vunpack.c.h.b16 %v624
    %v3131 = vunpack.c.l.b16 %v625
    %v3132 = vunpack.c.h.b16 %v625
    %v3133 = vunpack.c.l.b16 %v626
    %v3134 = vunpack.c.h.b16 %v626
    %v3135 = vunpack.c.l.b16 %v627
    %v3136 = vunpack.c.h.b16 %v627
    %v3137 = vunpack.c.l.b16 %v628
    %v3138 = vunpack.c.h.b16 %v628
    %v3139 = vunpack.c.l.b16 %v629
    %v3140 = vunpack.c.h.b16 %v629
    %v3141 = vunpack.c.l.b16 %v630
    %v3142 = vunpack.c.h.b16 %v630
    %v3143 = vunpack.c.l.b16 %v631
    %v3144 = vunpack.c.h.b16 %v631
    %v3145 = vunpack.c.l.b16 %v632
    %v3146 = vunpack.c.h.b16 %v632
    %v3147 = vunpack.c.l.b16 %v633
    %v3148 = vunpack.c.h.b16 %v633
    %v3149 = vunpack.c.l.b16 %v634
    %v3150 = vunpack.c.h.b16 %v634
    %v3151 = vunpack.c.l.b16 %v635
    %v3152 = vunpack.c.h.b16 %v635
    %v3153 = vunpack.c.l.b16 %v636
    %v3154 = vunpack.c.h.b16 %v636
    %v3155 = vunpack.c.l.b16 %v637
    %v3156 = vunpack.c.h.b16 %v637
    %v3157 = vunpack.c.l.b16 %v638
    %v3158 = vunpack.c.h.b16 %v638
    %v3159 = vunpack.c.l.b16 %v639
    %v3160 = vunpack.c.h.b16 %v639
    %v3161 = vunpack.c.l.b16 %v640
    %v3162 = vunpack.c.h.b16 %v640
    %v3163 = vunpack.c.l.b16 %v641
    %v3164 = vunpack.c.h.b16 %v641
    %v3165 = vunpack.c.l.b16 %v642
    %v3166 = vunpack.c.h.b16 %v642
    %v3167 = vunpack.c.l.b16 %v643
    %v3168 = vunpack.c.h.b16 %v643
    %v3169 = vunpack.c.l.b16 %v644
    %v3170 = vunpack.c.h.b16 %v644
    %v3171 = vunpack.c.l.b16 %v645
    %v3172 = vunpack.c.h.b16 %v645
    %v3173 = vunpack.c.l.b16 %v646
    %v3174 = vunpack.c.h.b16 %v646
    %v3175 = vunpack.c.l.b16 %v647
    %v3176 = vunpack.c.h.b16 %v647
    %v3177 = vunpack.c.l.b16 %v648
    %v3178 = vunpack.c.h.b16 %v648
    %v3179 = vunpack.c.l.b16 %v649
    %v3180 = vunpack.c.h.b16 %v649
    %v3181 = vunpack.c.l.b16 %v650
    %v3182 = vunpack.c.h.b16 %v650
    %v3183 = vunpack.c.l.b16 %v651
    %v3184 = vunpack.c.h.b16 %v651
    %v3185 = vunpack.c.l.b16 %v652
    %v3186 = vunpack.c.h.b16 %v652
    %v3187 = vunpack.c.l.b16 %v653
    %v3188 = vunpack.c.h.b16 %v653
    %v3189 = vunpack.c.l.b16 %v654
    %v3190 = vunpack.c.h.b16 %v654
    %v3191 = vunpack.c.l.b16 %v655
    %v3192 = vunpack.c.h.b16 %v655
    %v3193 = vunpack.c.l.b16 %v656
    %v3194 = vunpack.c.h.b16 %v656
    %v3195 = vunpack.c.l.b16 %v657
    %v3196 = vunpack.c.h.b16 %v657
    %v3197 = vunpack.c.l.b16 %v658
    %v3198 = vunpack.c.h.b16 %v658
    %v3199 = vunpack.c.l.b16 %v659
    %v3200 = vunpack.c.h.b16 %v659
    %v3201 = vunpack.c.l.b16 %v660
    %v3202 = vunpack.c.h.b16 %v660
    %v3203 = vunpack.c.l.b16 %v661
    %v3204 = vunpack.c.h.b16 %v661
    %v3205 = vunpack.c.l.b16 %v662
    %v3206 = vunpack.c.h.b16 %v662
    %v3207 = vunpack.c.l.b16 %v663
    %v3208 = vunpack.c.h.b16 %v663
    %v3209 = vunpack.c.l.b16 %v664
    %v3210 = vunpack.c.h.b16 %v664
    %v3211 = vunpack.c.l.b16 %v665
    %v3212 = vunpack.c.h.b16 %v665
    %v3213 = vunpack.c.l.b16 %v666
    %v3214 = vunpack.c.h.b16 %v666
    %v3215 = vunpack.c.l.b16 %v667
    %v3216 = vunpack.c.h.b16 %v667
    %v3217 = vunpack.c.l.b16 %v668
    %v3218 = vunpack.c.h.b16 %v668
    %v3219 = vunpack.c.l.b16 %v669
    %v3220 = vunpack.c.h.b16 %v669
    %v3221 = vunpack.c.l.b16 %v670
    %v3222 = vunpack.c.h.b16 %v670
    %v3223 = vunpack.c.l.b16 %v671
    %v3224 = vunpack.c.h.b16 %v671
    %v3225 = vunpack.c.l.b16 %v672
    %v3226 = vunpack.c.h.b16 %v672
    %v3227 = vunpack.c.l.b16 %v673
    %v3228 = vunpack.c.h.b16 %v673
    %v3229 = vunpack.c.l.b16 %v674
    %v3230 = vunpack.c.h.b16 %v674
    %v3231 = vunpack.c.l.b16 %v675
    %v3232 = vunpack.c.h.b16 %v675
    %v3233 = vunpack.c.l.b16 %v676
    %v3234 = vunpack.c.h.b16 %v676
    %v3235 = vunpack.c.l.b16 %v677
    %v3236 = vunpack.c.h.b16 %v677
    %v3237 = vunpack.c.l.b16 %v678
    %v3238 = vunpack.c.h.b16 %v678
    %v3239 = vunpack.c.l.b16 %v679
    %v3240 = vunpack.c.h.b16 %v679
    %v3241 = vunpack.c.l.b16 %v680
    %v3242 = vunpack.c.h.b16 %v680
    %v3243 = vunpack.c.l.b16 %v681
    %v3244 = vunpack.c.h.b16 %v681
    %v3245 = vunpack.c.l.b16 %v682
    %v3246 = vunpack.c.h.b16 %v682
    %v3247 = vunpack.c.l.b16 %v683
    %v3248 = vunpack.c.h.b16 %v683
    %v3249 = vunpack.c.l.b16 %v684
    %v3250 = vunpack.c.h.b16 %v684
    %v3251 = vunpack.c.l.b16 %v685
    %v3252 = vunpack.c.h.b16 %v685
    %v3253 = vunpack.c.l.b16 %v686
    %v3254 = vunpack.c.h.b16 %v686
    %v3255 = vunpack.c.l.b16 %v687
    %v3256 = vunpack.c.h.b16 %v687
    %v3257 = vunpack.c.l.b16 %v688
    %v3258 = vunpack.c.h.b16 %v688
    %v3259 = vunpack.c.l.b16 %v689
    %v3260 = vunpack.c.h.b16 %v689
    %v3261 = vunpack.c.l.b16 %v690
    %v3262 = vunpack.c.h.b16 %v690
    %v3263 = vunpack.c.l.b16 %v691
    %v3264 = vunpack.c.h.b16 %v691
    %v3265 = vunpack.c.l.b16 %v692
    %v3266 = vunpack.c.h.b16 %v692
    %v3267 = vunpack.c.l.b16 %v693
    %v3268 = vunpack.c.h.b16 %v693
    %v3269 = vunpack.c.l.b16 %v694
    %v3270 = vunpack.c.h.b16 %v694
    %v3271 = vunpack.c.l.b16 %v695
    %v3272 = vunpack.c.h.b16 %v695
    %v3273 = vunpack.c.l.b16 %v696
    %v3274 = vunpack.c.h.b16 %v696
    %v3275 = vunpack.c.l.b16 %v697
    %v3276 = vunpack.c.h.b16 %v697
    %v3277 = vunpack.c.l.b16 %v698
    %v3278 = vunpack.c.h.b16 %v698
    %v3279 = vunpack.c.l.b16 %v699
    %v3280 = vunpack.c.h.b16 %v699
    %v3281 = vunpack.c.l.b16 %v700
    %v3282 = vunpack.c.h.b16 %v700
    %v3283 = vunpack.c.l.b16 %v701
    %v3284 = vunpack.c.h.b16 %v701
    %v3285 = vunpack.c.l.b16 %v702
    %v3286 = vunpack.c.h.b16 %v702
    %v3287 = vunpack.c.l.b16 %v703
    %v3288 = vunpack.c.h.b16 %v703
    %v3289 = vunpack.c.l.b16 %v704
    %v3290 = vunpack.c.h.b16 %v704
    %v3291 = vunpack.c.l.b16 %v705
    %v3292 = vunpack.c.h.b16 %v705
    %v3293 = vunpack.c.l.b16 %v706
    %v3294 = vunpack.c.h.b16 %v706
    %v3295 = vunpack.c.l.b16 %v707
    %v3296 = vunpack.c.h.b16 %v707
    %v3297 = vunpack.c.l.b16 %v708
    %v3298 = vunpack.c.h.b16 %v708
    %v3299 = vunpack.c.l.b16 %v709
    %v3300 = vunpack.c.h.b16 %v709
    %v3301 = vunpack.c.l.b16 %v710
    %v3302 = vunpack.c.h.b16 %v710
    %v3303 = vunpack.c.l.b16 %v711
    %v3304 = vunpack.c.h.b16 %v711
    %v3305 = vunpack.c.l.b16 %v712
    %v3306 = vunpack.c.h.b16 %v712
    %v3307 = vunpack.c.l.b16 %v713
    %v3308 = vunpack.c.h.b16 %v713
    %v3309 = vunpack.c.l.b16 %v714
    %v3310 = vunpack.c.h.b16 %v714
    %v3311 = vunpack.c.l.b16 %v715
    %v3312 = vunpack.c.h.b16 %v715
    %v3313 = vunpack.c.l.b16 %v716
    %v3314 = vunpack.c.h.b16 %v716
    %v3315 = vunpack.c.l.b16 %v717
    %v3316 = vunpack.c.h.b16 %v717
    %v3317 = vunpack.c.l.b16 %v718
    %v3318 = vunpack.c.h.b16 %v718
    %v3319 = vunpack.c.l.b16 %v719
    %v3320 = vunpack.c.h.b16 %v719
    %v3321 = vunpack.c.l.b16 %v720
    %v3322 = vunpack.c.h.b16 %v720
    %v3323 = vunpack.c.l.b16 %v721
    %v3324 = vunpack.c.h.b16 %v721
    %v3325 = vunpack.c.l.b16 %v722
    %v3326 = vunpack.c.h.b16 %v722
    %v3327 = vunpack.c.l.b16 %v723
    %v3328 = vunpack.c.h.b16 %v723
    %v3329 = vunpack.c.l.b16 %v724
    %v3330 = vunpack.c.h.b16 %v724
    %v3331 = vunpack.c.l.b16 %v725
    %v3332 = vunpack.c.h.b16 %v725
    %v3333 = vunpack.c.l.b16 %v726
    %v3334 = vunpack.c.h.b16 %v726
    %v3335 = vunpack.c.l.b16 %v727
    %v3336 = vunpack.c.h.b16 %v727
    %v3337 = vunpack.c.l.b16 %v728
    %v3338 = vunpack.c.h.b16 %v728
    %v3339 = vunpack.c.l.b16 %v729
    %v3340 = vunpack.c.h.b16 %v729
    %v3341 = vunpack.c.l.b16 %v730
    %v3342 = vunpack.c.h.b16 %v730
    %v3343 = vunpack.c.l.b16 %v731
    %v3344 = vunpack.c.h.b16 %v731
    %v3345 = vunpack.c.l.b16 %v732
    %v3346 = vunpack.c.h.b16 %v732
    %v3347 = vunpack.c.l.b16 %v733
    %v3348 = vunpack.c.h.b16 %v733
    %v3349 = vunpack.c.l.b16 %v734
    %v3350 = vunpack.c.h.b16 %v734
    %v3351 = vunpack.c.l.b16 %v735
    %v3352 = vunpack.c.h.b16 %v735
    %v3353 = vunpack.c.l.b16 %v736
    %v3354 = vunpack.c.h.b16 %v736
    %v3355 = vunpack.c.l.b16 %v737
    %v3356 = vunpack.c.h.b16 %v737
    %v3357 = vunpack.c.l.b16 %v738
    %v3358 = vunpack.c.h.b16 %v738
    %v3359 = vunpack.c.l.b16 %v739
    %v3360 = vunpack.c.h.b16 %v739
    %v3361 = vunpack.c.l.b16 %v740
    %v3362 = vunpack.c.h.b16 %v740
    %v3363 = vunpack.c.l.b16 %v741
    %v3364 = vunpack.c.h.b16 %v741
    %v3365 = vunpack.c.l.b16 %v742
    %v3366 = vunpack.c.h.b16 %v742
    %v3367 = vunpack.c.l.b16 %v743
    %v3368 = vunpack.c.h.b16 %v743
    %v3369 = vunpack.c.l.b16 %v744
    %v3370 = vunpack.c.h.b16 %v744
    %v3371 = vunpack.c.l.b16 %v745
    %v3372 = vunpack.c.h.b16 %v745
    %v3373 = vunpack.c.l.b16 %v746
    %v3374 = vunpack.c.h.b16 %v746
    %v3375 = vunpack.c.l.b16 %v747
    %v3376 = vunpack.c.h.b16 %v747
    %v3377 = vunpack.c.l.b16 %v748
    %v3378 = vunpack.c.h.b16 %v748
    %v3379 = vunpack.c.l.b16 %v749
    %v3380 = vunpack.c.h.b16 %v749
    %v3381 = vunpack.c.l.b16 %v750
    %v3382 = vunpack.c.h.b16 %v750
    %v3383 = vunpack.c.l.b16 %v751
    %v3384 = vunpack.c.h.b16 %v751
    %v3385 = vunpack.c.l.b16 %v752
    %v3386 = vunpack.c.h.b16 %v752
    %v3387 = vunpack.c.l.b16 %v753
    %v3388 = vunpack.c.h.b16 %v753
    %v3389 = vunpack.c.l.b16 %v754
    %v3390 = vunpack.c.h.b16 %v754
    %v3391 = vunpack.c.l.b16 %v755
    %v3392 = vunpack.c.h.b16 %v755
    %v3393 = vunpack.c.l.b16 %v756
    %v3394 = vunpack.c.h.b16 %v756
    %v3395 = vunpack.c.l.b16 %v757
    %v3396 = vunpack.c.h.b16 %v757
    %v3397 = vunpack.c.l.b16 %v758
    %v3398 = vunpack.c.h.b16 %v758
    %v3399 = vunpack.c.l.b16 %v759
    %v3400 = vunpack.c.h.b16 %v759
    %v3401 = vunpack.c.l.b16 %v760
    %v3402 = vunpack.c.h.b16 %v760
    %v3403 = vunpack.c.l.b16 %v761
    %v3404 = vunpack.c.h.b16 %v761
    %v3405 = vunpack.c.l.b16 %v762
    %v3406 = vunpack.c.h.b16 %v762
    %v3407 = vunpack.c.l.b16 %v763
    %v3408 = vunpack.c.h.b16 %v763
    %v3409 = vunpack.c.l.b16 %v764
    %v3410 = vunpack.c.h.b16 %v764
    %v3411 = vunpack.c.l.b16 %v765
    %v3412 = vunpack.c.h.b16 %v765
    %v3413 = vunpack.c.l.b16 %v766
    %v3414 = vunpack.c.h.b16 %v766
    %v3415 = vunpack.c.l.b16 %v767
    %v3416 = vunpack.c.h.b16 %v767
    %v3417 = vunpack.c.l.b16 %v768
    %v3418 = vunpack.c.h.b16 %v768
    %v3419 = vunpack.c.l.b16 %v769
    %v3420 = vunpack.c.h.b16 %v769
    %v3421 = vunpack.c.l.b16 %v770
    %v3422 = vunpack.c.h.b16 %v770
    %v3423 = vunpack.c.l.b16 %v771
    %v3424 = vunpack.c.h.b16 %v771
    %v3425 = vunpack.c.l.b16 %v772
    %v3426 = vunpack.c.h.b16 %v772
    %v3427 = vunpack.c.l.b16 %v773
    %v3428 = vunpack.c.h.b16 %v773
    %v3429 = vunpack.c.l.b16 %v774
    %v3430 = vunpack.c.h.b16 %v774
    %v3431 = vunpack.c.l.b16 %v775
    %v3432 = vunpack.c.h.b16 %v775
    %v3433 = vunpack.c.l.b16 %v776
    %v3434 = vunpack.c.h.b16 %v776
    %v3435 = vunpack.c.l.b16 %v777
    %v3436 = vunpack.c.h.b16 %v777
    %v3437 = vunpack.c.l.b16 %v778
    %v3438 = vunpack.c.h.b16 %v778
    %v3439 = vunpack.c.l.b16 %v779
    %v3440 = vunpack.c.h.b16 %v779
    %v3441 = vunpack.c.l.b16 %v780
    %v3442 = vunpack.c.h.b16 %v780
    %v3443 = vunpack.c.l.b16 %v781
    %v3444 = vunpack.c.h.b16 %v781
    %v3445 = vunpack.c.l.b16 %v782
    %v3446 = vunpack.c.h.b16 %v782
    %v3447 = vunpack.c.l.b16 %v783
    %v3448 = vunpack.c.h.b16 %v783
    %v3449 = vunpack.c.l.b16 %v784
    %v3450 = vunpack.c.h.b16 %v784
    %v3451 = vunpack.c.l.b16 %v785
    %v3452 = vunpack.c.h.b16 %v785
    %v3453 = vunpack.c.l.b16 %v786
    %v3454 = vunpack.c.h.b16 %v786
    %v3455 = vunpack.c.l.b16 %v787
    %v3456 = vunpack.c.h.b16 %v787
    %v3457 = vunpack.c.l.b16 %v788
    %v3458 = vunpack.c.h.b16 %v788
    %v3459 = vunpack.c.l.b16 %v789
    %v3460 = vunpack.c.h.b16 %v789
    %v3461 = vunpack.c.l.b16 %v790
    %v3462 = vunpack.c.h.b16 %v790
    %v3463 = vunpack.c.l.b16 %v791
    %v3464 = vunpack.c.h.b16 %v791
    %v3465 = vunpack.c.l.b16 %v792
    %v3466 = vunpack.c.h.b16 %v792
    %v3467 = vunpack.c.l.b16 %v793
    %v3468 = vunpack.c.h.b16 %v793
    %v3469 = vunpack.c.l.b16 %v794
    %v3470 = vunpack.c.h.b16 %v794
    %v3471 = vunpack.c.l.b16 %v795
    %v3472 = vunpack.c.h.b16 %v795
    %v3473 = vunpack.c.l.b16 %v796
    %v3474 = vunpack.c.h.b16 %v796
    %v3475 = vunpack.c.l.b16 %v797
    %v3476 = vunpack.c.h.b16 %v797
    %v3477 = vunpack.c.l.b16 %v798
    %v3478 = vunpack.c.h.b16 %v798
    %v3479 = vunpack.c.l.b16 %v799
    %v3480 = vunpack.c.h.b16 %v799
    %v3481 = vunpack.c.l.b16 %v800
    %v3482 = vunpack.c.h.b16 %v800
    %v3483 = vunpack.c.l.b16 %v801
    %v3484 = vunpack.c.h.b16 %v801
    %v3485 = vunpack.c.l.b16 %v802
    %v3486 = vunpack.c.h.b16 %v802
    %v3487 = vunpack.c.l.b16 %v803
    %v3488 = vunpack.c.h.b16 %v803
    %v3489 = vunpack.c.l.b16 %v804
    %v3490 = vunpack.c.h.b16 %v804
    %v3491 = vunpack.c.l.b16 %v805
    %v3492 = vunpack.c.h.b16 %v805
    %v3493 = vunpack.c.l.b16 %v806
    %v3494 = vunpack.c.h.b16 %v806
    %v3495 = vunpack.c.l.b16 %v807
    %v3496 = vunpack.c.h.b16 %v807
    %v3497 = vunpack.c.l.b16 %v808
    %v3498 = vunpack.c.h.b16 %v808
    %v3499 = vunpack.c.l.b16 %v809
    %v3500 = vunpack.c.h.b16 %v809
    %v3501 = vunpack.c.l.b16 %v810
    %v3502 = vunpack.c.h.b16 %v810
    %v3503 = vunpack.c.l.b16 %v811
    %v3504 = vunpack.c.h.b16 %v811
    %v3505 = vunpack.c.l.b16 %v812
    %v3506 = vunpack.c.h.b16 %v812
    %v3507 = vunpack.c.l.b16 %v813
    %v3508 = vunpack.c.h.b16 %v813
    %v3509 = vunpack.c.l.b16 %v814
    %v3510 = vunpack.c.h.b16 %v814
    %v3511 = vunpack.c.l.b16 %v815
    %v3512 = vunpack.c.h.b16 %v815
    %v3513 = vunpack.c.l.b16 %v816
    %v3514 = vunpack.c.h.b16 %v816
    %v3515 = vunpack.c.l.b16 %v817
    %v3516 = vunpack.c.h.b16 %v817
    %v3517 = vunpack.c.l.b16 %v818
    %v3518 = vunpack.c.h.b16 %v818
    %v3519 = vunpack.c.l.b16 %v819
    %v3520 = vunpack.c.h.b16 %v819
    %v3521 = vunpack.c.l.b16 %v820
    %v3522 = vunpack.c.h.b16 %v820
    %v3523 = vunpack.c.l.b16 %v821
    %v3524 = vunpack.c.h.b16 %v821
    %v3525 = vunpack.c.l.b16 %v822
    %v3526 = vunpack.c.h.b16 %v822
    %v3527 = vunpack.c.l.b16 %v823
    %v3528 = vunpack.c.h.b16 %v823
    %v3529 = vunpack.c.l.b16 %v824
    %v3530 = vunpack.c.h.b16 %v824
    %v3531 = vunpack.c.l.b16 %v825
    %v3532 = vunpack.c.h.b16 %v825
    %v3533 = vunpack.c.l.b16 %v826
    %v3534 = vunpack.c.h.b16 %v826
    %v3535 = vunpack.c.l.b16 %v827
    %v3536 = vunpack.c.h.b16 %v827
    %v3537 = vunpack.c.l.b16 %v828
    %v3538 = vunpack.c.h.b16 %v828
    %v3539 = vunpack.c.l.b16 %v829
    %v3540 = vunpack.c.h.b16 %v829
    %v3541 = vunpack.c.l.b16 %v830
    %v3542 = vunpack.c.h.b16 %v830
    %v3543 = vunpack.c.l.b16 %v831
    %v3544 = vunpack.c.h.b16 %v831
    %v3545 = vunpack.c.l.b16 %v832
    %v3546 = vunpack.c.h.b16 %v832
    %v3547 = vunpack.c.l.b16 %v833
    %v3548 = vunpack.c.h.b16 %v833
    %v3549 = vunpack.c.l.b16 %v834
    %v3550 = vunpack.c.h.b16 %v834
    %v3551 = vunpack.c.l.b16 %v835
    %v3552 = vunpack.c.h.b16 %v835
    %v3553 = vunpack.c.l.b16 %v836
    %v3554 = vunpack.c.h.b16 %v836
    %v3555 = vunpack.c.l.b16 %v837
    %v3556 = vunpack.c.h.b16 %v837
    %v3557 = vunpack.c.l.b16 %v838
    %v3558 = vunpack.c.h.b16 %v838
    %v3559 = vunpack.c.l.b16 %v839
    %v3560 = vunpack.c.h.b16 %v839
    %v3561 = vunpack.c.l.b16 %v840
    %v3562 = vunpack.c.h.b16 %v840
    %v3563 = vunpack.c.l.b16 %v841
    %v3564 = vunpack.c.h.b16 %v841
    %v3565 = vunpack.c.l.b16 %v842
    %v3566 = vunpack.c.h.b16 %v842
    %v3567 = vunpack.c.l.b16 %v843
    %v3568 = vunpack.c.h.b16 %v843
    %v3569 = vunpack.c.l.b16 %v844
    %v3570 = vunpack.c.h.b16 %v844
    %v3571 = vunpack.c.l.b16 %v845
    %v3572 = vunpack.c.h.b16 %v845
    %v3573 = vunpack.c.l.b16 %v846
    %v3574 = vunpack.c.h.b16 %v846
    %v3575 = vunpack.c.l.b16 %v847
    %v3576 = vunpack.c.h.b16 %v847
    %v3577 = vunpack.c.l.b16 %v848
    %v3578 = vunpack.c.h.b16 %v848
    %v3579 = vunpack.c.l.b16 %v849
    %v3580 = vunpack.c.h.b16 %v849
    %v3581 = vunpack.c.l.b16 %v850
    %v3582 = vunpack.c.h.b16 %v850
    %v3583 = vunpack.c.l.b16 %v851
    %v3584 = vunpack.c.h.b16 %v851
    %v3585 = vunpack.c.l.b16 %v852
    %v3586 = vunpack.c.h.b16 %v852
    %v3587 = vunpack.c.l.b16 %v853
    %v3588 = vunpack.c.h.b16 %v853
    %v3589 = vunpack.c.l.b16 %v854
    %v3590 = vunpack.c.h.b16 %v854
    %v3591 = vunpack.c.l.b16 %v855
    %v3592 = vunpack.c.h.b16 %v855
    %v3593 = vunpack.c.l.b16 %v856
    %v3594 = vunpack.c.h.b16 %v856
    %v3595 = vunpack.c.l.b16 %v857
    %v3596 = vunpack.c.h.b16 %v857
    %v3597 = vunpack.c.l.b16 %v858
    %v3598 = vunpack.c.h.b16 %v858
    %v3599 = vunpack.c.l.b16 %v859
    %v3600 = vunpack.c.h.b16 %v859
    %v3601 = vunpack.c.l.b16 %v860
    %v3602 = vunpack.c.h.b16 %v860
    %v3603 = vunpack.c.l.b16 %v861
    %v3604 = vunpack.c.h.b16 %v861
    %v3605 = vunpack.c.l.b16 %v862
    %v3606 = vunpack.c.h.b16 %v862
    %v3607 = vunpack.c.l.b16 %v863
    %v3608 = vunpack.c.h.b16 %v863
    %v3609 = vunpack.c.l.b16 %v864
    %v3610 = vunpack.c.h.b16 %v864
    %v3611 = vunpack.c.l.b16 %v865
    %v3612 = vunpack.c.h.b16 %v865
    %v3613 = vunpack.c.l.b16 %v866
    %v3614 = vunpack.c.h.b16 %v866
    %v3615 = vunpack.c.l.b16 %v867
    %v3616 = vunpack.c.h.b16 %v867
    %v3617 = vunpack.c.l.b16 %v868
    %v3618 = vunpack.c.h.b16 %v868
    %v3619 = vunpack.c.l.b16 %v869
    %v3620 = vunpack.c.h.b16 %v869
    %v3621 = vunpack.c.l.b16 %v870
    %v3622 = vunpack.c.h.b16 %v870
    %v3623 = vunpack.c.l.b16 %v871
    %v3624 = vunpack.c.h.b16 %v871
    %v3625 = vunpack.c.l.b16 %v872
    %v3626 = vunpack.c.h.b16 %v872
    %v3627 = vunpack.c.l.b16 %v873
    %v3628 = vunpack.c.h.b16 %v873
    %v3629 = vunpack.c.l.b16 %v874
    %v3630 = vunpack.c.h.b16 %v874
    %v3631 = vunpack.c.l.b16 %v875
    %v3632 = vunpack.c.h.b16 %v875
    %v3633 = vunpack.c.l.b16 %v876
    %v3634 = vunpack.c.h.b16 %v876
    %v3635 = vunpack.c.l.b16 %v877
    %v3636 = vunpack.c.h.b16 %v877
    %v3637 = vunpack.c.l.b16 %v878
    %v3638 = vunpack.c.h.b16 %v878
    %v3639 = vunpack.c.l.b16 %v879
    %v3640 = vunpack.c.h.b16 %v879
    %v3641 = vunpack.c.l.b16 %v880
    %v3642 = vunpack.c.h.b16 %v880
    %v3643 = vunpack.c.l.b16 %v881
    %v3644 = vunpack.c.h.b16 %v881
    %v3645 = vunpack.c.l.b16 %v882
    %v3646 = vunpack.c.h.b16 %v882
    %v3647 = vunpack.c.l.b16 %v883
    %v3648 = vunpack.c.h.b16 %v883
    %v3649 = vunpack.c.l.b16 %v884
    %v3650 = vunpack.c.h.b16 %v884
    %v3651 = vunpack.c.l.b16 %v885
    %v3652 = vunpack.c.h.b16 %v885
    %v3653 = vunpack.c.l.b16 %v886
    %v3654 = vunpack.c.h.b16 %v886
    %v3655 = vunpack.c.l.b16 %v887
    %v3656 = vunpack.c.h.b16 %v887
    %v3657 = vunpack.c.l.b16 %v888
    %v3658 = vunpack.c.h.b16 %v888
    %v3659 = vunpack.c.l.b16 %v889
    %v3660 = vunpack.c.h.b16 %v889
    %v3661 = vunpack.c.l.b16 %v890
    %v3662 = vunpack.c.h.b16 %v890
    %v3663 = vunpack.c.l.b16 %v891
    %v3664 = vunpack.c.h.b16 %v891
    %v3665 = vunpack.c.l.b16 %v892
    %v3666 = vunpack.c.h.b16 %v892
    %v3667 = vunpack.c.l.b16 %v893
    %v3668 = vunpack.c.h.b16 %v893
    %v3669 = vunpack.c.l.b16 %v894
    %v3670 = vunpack.c.h.b16 %v894
    %v3671 = vunpack.c.l.b16 %v895
    %v3672 = vunpack.c.h.b16 %v895
    %v3673 = vunpack.c.l.b16 %v896
    %v3674 = vunpack.c.h.b16 %v896
    %v3675 = vunpack.c.l.b16 %v897
    %v3676 = vunpack.c.h.b16 %v897
    %v3677 = vunpack.c.l.b16 %v898
    %v3678 = vunpack.c.h.b16 %v898
    %v3679 = vunpack.c.l.b16 %v899
    %v3680 = vunpack.c.h.b16 %v899
    %v3681 = vunpack.c.l.b16 %v900
    %v3682 = vunpack.c.h.b16 %v900
    %v3683 = vunpack.c.l.b16 %v901
    %v3684 = vunpack.c.h.b16 %v901
    %v3685 = vunpack.c.l.b16 %v902
    %v3686 = vunpack.c.h.b16 %v902
    %v3687 = vunpack.c.l.b16 %v903
    %v3688 = vunpack.c.h.b16 %v903
    %v3689 = vunpack.c.l.b16 %v904
    %v3690 = vunpack.c.h.b16 %v904
    %v3691 = vunpack.c.l.b16 %v905
    %v3692 = vunpack.c.h.b16 %v905
    %v3693 = vunpack.c.l.b16 %v906
    %v3694 = vunpack.c.h.b16 %v906
    %v3695 = vunpack.c.l.b16 %v907
    %v3696 = vunpack.c.h.b16 %v907
    %v3697 = vunpack.c.l.b16 %v908
    %v3698 = vunpack.c.h.b16 %v908
    %v3699 = vunpack.c.l.b16 %v909
    %v3700 = vunpack.c.h.b16 %v909
    %v3701 = vunpack.c.l.b16 %v910
    %v3702 = vunpack.c.h.b16 %v910
    %v3703 = vunpack.c.l.b16 %v911
    %v3704 = vunpack.c.h.b16 %v911
    %v3705 = vunpack.c.l.b16 %v912
    %v3706 = vunpack.c.h.b16 %v912
    %v3707 = vunpack.c.l.b16 %v913
    %v3708 = vunpack.c.h.b16 %v913
    %v3709 = vunpack.c.l.b16 %v914
    %v3710 = vunpack.c.h.b16 %v914
    %v3711 = vunpack.c.l.b16 %v915
    %v3712 = vunpack.c.h.b16 %v915
    %v3713 = vunpack.c.l.b16 %v916
    %v3714 = vunpack.c.h.b16 %v916
    %v3715 = vunpack.c.l.b16 %v917
    %v3716 = vunpack.c.h.b16 %v917
    %v3717 = vunpack.c.l.b16 %v918
    %v3718 = vunpack.c.h.b16 %v918
    %v3719 = vunpack.c.l.b16 %v919
    %v3720 = vunpack.c.h.b16 %v919
    %v3721 = vunpack.c.l.b16 %v920
    %v3722 = vunpack.c.h.b16 %v920
    %v3723 = vunpack.c.l.b16 %v921
    %v3724 = vunpack.c.h.b16 %v921
    %v3725 = vunpack.c.l.b16 %v922
    %v3726 = vunpack.c.h.b16 %v922
    %v3727 = vunpack.c.l.b16 %v923
    %v3728 = vunpack.c.h.b16 %v923
    %v3729 = vunpack.c.l.b16 %v924
    %v3730 = vunpack.c.h.b16 %v924
    %v3731 = vunpack.c.l.b16 %v925
    %v3732 = vunpack.c.h.b16 %v925
    %v3733 = vunpack.c.l.b16 %v926
    %v3734 = vunpack.c.h.b16 %v926
    %v3735 = vunpack.c.l.b16 %v927
    %v3736 = vunpack.c.h.b16 %v927
    %v3737 = vunpack.c.l.b16 %v928
    %v3738 = vunpack.c.h.b16 %v928
    %v3739 = vunpack.c.l.b16 %v929
    %v3740 = vunpack.c.h.b16 %v929
    %v3741 = vunpack.c.l.b16 %v930
    %v3742 = vunpack.c.h.b16 %v930
    %v3743 = vunpack.c.l.b16 %v931
    %v3744 = vunpack.c.h.b16 %v931
    %v3745 = vunpack.c.l.b16 %v932
    %v3746 = vunpack.c.h.b16 %v932
    %v3747 = vunpack.c.l.b16 %v933
    %v3748 = vunpack.c.h.b16 %v933
    %v3749 = vunpack.c.l.b16 %v934
    %v3750 = vunpack.c.h.b16 %v934
    %v3751 = vunpack.c.l.b16 %v935
    %v3752 = vunpack.c.h.b16 %v935
    %v3753 = vunpack.c.l.b16 %v936
    %v3754 = vunpack.c.h.b16 %v936
    %v3755 = vunpack.c.l.b16 %v937
    %v3756 = vunpack.c.h.b16 %v937
    %v3757 = vunpack.c.l.b16 %v938
    %v3758 = vunpack.c.h.b16 %v938
    %v3759 = vunpack.c.l.b16 %v939
    %v3760 = vunpack.c.h.b16 %v939
    %v3761 = vunpack.c.l.b16 %v940
    %v3762 = vunpack.c.h.b16 %v940
    %v3763 = vunpack.c.l.b16 %v941
    %v3764 = vunpack.c.h.b16 %v941
    %v3765 = vunpack.c.l.b16 %v942
    %v3766 = vunpack.c.h.b16 %v942
    %v3767 = vunpack.c.l.b16 %v943
    %v3768 = vunpack.c.h.b16 %v943
    %v3769 = vunpack.c.l.b16 %v944
    %v3770 = vunpack.c.h.b16 %v944
    %v3771 = vunpack.c.l.b16 %v945
    %v3772 = vunpack.c.h.b16 %v945
    %v3773 = vunpack.c.l.b16 %v946
    %v3774 = vunpack.c.h.b16 %v946
    %v3775 = vunpack.c.l.b16 %v947
    %v3776 = vunpack.c.h.b16 %v947
    %v3777 = vunpack.c.l.b16 %v948
    %v3778 = vunpack.c.h.b16 %v948
    %v3779 = vunpack.c.l.b16 %v949
    %v3780 = vunpack.c.h.b16 %v949
    %v3781 = vunpack.c.l.b16 %v950
    %v3782 = vunpack.c.h.b16 %v950
    %v3783 = vunpack.c.l.b16 %v951
    %v3784 = vunpack.c.h.b16 %v951
    %v3785 = vunpack.c.l.b16 %v952
    %v3786 = vunpack.c.h.b16 %v952
    %v3787 = vunpack.c.l.b16 %v953
    %v3788 = vunpack.c.h.b16 %v953
    %v3789 = vunpack.c.l.b16 %v954
    %v3790 = vunpack.c.h.b16 %v954
    %v3791 = vunpack.c.l.b16 %v955
    %v3792 = vunpack.c.h.b16 %v955
    %v3793 = vunpack.c.l.b16 %v956
    %v3794 = vunpack.c.h.b16 %v956
    %v3795 = vunpack.c.l.b16 %v957
    %v3796 = vunpack.c.h.b16 %v957
    %v3797 = vunpack.c.l.b16 %v958
    %v3798 = vunpack.c.h.b16 %v958
    %v3799 = vunpack.c.l.b16 %v959
    %v3800 = vunpack.c.h.b16 %v959
    %v3801 = vunpack.c.l.b16 %v960
    %v3802 = vunpack.c.h.b16 %v960
    %v3803 = vunpack.c.l.b16 %v961
    %v3804 = vunpack.c.h.b16 %v961
    %v3805 = vunpack.c.l.b16 %v962
    %v3806 = vunpack.c.h.b16 %v962
    %v3807 = vunpack.c.l.b16 %v963
    %v3808 = vunpack.c.h.b16 %v963
    %v3809 = vunpack.c.l.b16 %v964
    %v3810 = vunpack.c.h.b16 %v964
    %v3811 = vunpack.c.l.b16 %v965
    %v3812 = vunpack.c.h.b16 %v965
    %v3813 = vunpack.c.l.b16 %v966
    %v3814 = vunpack.c.h.b16 %v966
    %v3815 = vunpack.c.l.b16 %v967
    %v3816 = vunpack.c.h.b16 %v967
    %v3817 = vunpack.c.l.b16 %v968
    %v3818 = vunpack.c.h.b16 %v968
    %v3819 = vunpack.c.l.b16 %v969
    %v3820 = vunpack.c.h.b16 %v969
    %v3821 = vunpack.c.l.b16 %v970
    %v3822 = vunpack.c.h.b16 %v970
    %v3823 = vunpack.c.l.b16 %v971
    %v3824 = vunpack.c.h.b16 %v971
    %v3825 = vunpack.c.l.b16 %v972
    %v3826 = vunpack.c.h.b16 %v972
    %v3827 = vunpack.c.l.b16 %v973
    %v3828 = vunpack.c.h.b16 %v973
    %v3829 = vunpack.c.l.b16 %v974
    %v3830 = vunpack.c.h.b16 %v974
    %v3831 = vunpack.c.l.b16 %v975
    %v3832 = vunpack.c.h.b16 %v975
    %v3833 = vunpack.c.l.b16 %v976
    %v3834 = vunpack.c.h.b16 %v976
    %v3835 = vunpack.c.l.b16 %v977
    %v3836 = vunpack.c.h.b16 %v977
    %v3837 = vunpack.c.l.b16 %v978
    %v3838 = vunpack.c.h.b16 %v978
    %v3839 = vunpack.c.l.b16 %v979
    %v3840 = vunpack.c.h.b16 %v979
    %v3841 = vunpack.c.l.b16 %v980
    %v3842 = vunpack.c.h.b16 %v980
    %v3843 = vunpack.c.l.b16 %v981
    %v3844 = vunpack.c.h.b16 %v981
    %v3845 = vunpack.c.l.b16 %v982
    %v3846 = vunpack.c.h.b16 %v982
    %v3847 = vunpack.c.l.b16 %v983
    %v3848 = vunpack.c.h.b16 %v983
    %v3849 = vunpack.c.l.b16 %v984
    %v3850 = vunpack.c.h.b16 %v984
    %v3851 = vunpack.c.l.b16 %v985
    %v3852 = vunpack.c.h.b16 %v985
    %v3853 = vunpack.c.l.b16 %v986
    %v3854 = vunpack.c.h.b16 %v986
    %v3855 = vunpack.c.l.b16 %v987
    %v3856 = vunpack.c.h.b16 %v987
    %v3857 = vunpack.c.l.b16 %v988
    %v3858 = vunpack.c.h.b16 %v988
    %v3859 = vunpack.c.l.b16 %v989
    %v3860 = vunpack.c.h.b16 %v989
    %v3861 = vunpack.c.l.b16 %v990
    %v3862 = vunpack.c.h.b16 %v990
    %v3863 = vunpack.c.l.b16 %v991
    %v3864 = vunpack.c.h.b16 %v991
    %v3865 = vunpack.c.l.b16 %v992
    %v3866 = vunpack.c.h.b16 %v992
    %v3867 = vunpack.c.l.b16 %v993
    %v3868 = vunpack.c.h.b16 %v993
    %v3869 = vunpack.c.l.b16 %v994
    %v3870 = vunpack.c.h.b16 %v994
    %v3871 = vunpack.c.l.b16 %v995
    %v3872 = vunpack.c.h.b16 %v995
    %v3873 = vunpack.c.l.b16 %v996
    %v3874 = vunpack.c.h.b16 %v996
    %v3875 = vunpack.c.l.b16 %v997
    %v3876 = vunpack.c.h.b16 %v997
    %v3877 = vunpack.c.l.b16 %v998
    %v3878 = vunpack.c.h.b16 %v998
    %v3879 = vunpack.c.l.b16 %v999
    %v3880 = vunpack.c.h.b16 %v999
    %v3881 = vunpack.c.l.b16 %v1000
    %v3882 = vunpack.c.h.b16 %v1000
    %v3883 = vunpack.c.l.b16 %v1001
    %v3884 = vunpack.c.h.b16 %v1001
    %v3885 = vunpack.c.l.b16 %v1002
    %v3886 = vunpack.c.h.b16 %v1002
    %v3887 = vunpack.c.l.b16 %v1003
    %v3888 = vunpack.c.h.b16 %v1003
    %v3889 = vunpack.c.l.b16 %v1004
    %v3890 = vunpack.c.h.b16 %v1004
    %v3891 = vunpack.c.l.b16 %v1005
    %v3892 = vunpack.c.h.b16 %v1005
    %v3893 = vunpack.c.l.b16 %v1006
    %v3894 = vunpack.c.h.b16 %v1006
    %v3895 = vunpack.c.l.b16 %v1007
    %v3896 = vunpack.c.h.b16 %v1007
    %v3897 = vunpack.c.l.b16 %v1008
    %v3898 = vunpack.c.h.b16 %v1008
    %v3899 = vunpack.c.l.b16 %v1009
    %v3900 = vunpack.c.h.b16 %v1009
    %v3901 = vunpack.c.l.b16 %v1010
    %v3902 = vunpack.c.h.b16 %v1010
    %v3903 = vunpack.c.l.b16 %v1011
    %v3904 = vunpack.c.h.b16 %v1011
    %v3905 = vunpack.c.l.b16 %v1012
    %v3906 = vunpack.c.h.b16 %v1012
    %v3907 = vunpack.c.l.b16 %v1013
    %v3908 = vunpack.c.h.b16 %v1013
    %v3909 = vunpack.c.l.b16 %v1014
    %v3910 = vunpack.c.h.b16 %v1014
    %v3911 = vunpack.c.l.b16 %v1015
    %v3912 = vunpack.c.h.b16 %v1015
    %v3913 = vunpack.c.l.b16 %v1016
    %v3914 = vunpack.c.h.b16 %v1016
    %v3915 = vunpack.c.l.b16 %v1017
    %v3916 = vunpack.c.h.b16 %v1017
    %v3917 = vunpack.c.l.b16 %v1018
    %v3918 = vunpack.c.h.b16 %v1018
    %v3919 = vunpack.c.l.b16 %v1019
    %v3920 = vunpack.c.h.b16 %v1019
    %v3921 = vunpack.c.l.b16 %v1020
    %v3922 = vunpack.c.h.b16 %v1020
    %v3923 = vunpack.c.l.b16 %v1021
    %v3924 = vunpack.c.h.b16 %v1021
    %v3925 = vunpack.c.l.b16 %v1022
    %v3926 = vunpack.c.h.b16 %v1022
    %v3927 = vunpack.c.l.b16 %v1023
    %v3928 = vunpack.c.h.b16 %v1023
    %v3929 = vunpack.c.l.b16 %v1024
    %v3930 = vunpack.c.h.b16 %v1024
    %v3931 = vunpack.c.l.b16 %v1025
    %v3932 = vunpack.c.h.b16 %v1025
    %v3933 = vunpack.c.l.b16 %v1026
    %v3934 = vunpack.c.h.b16 %v1026
    %v3935 = vunpack.c.l.b16 %v1027
    %v3936 = vunpack.c.h.b16 %v1027
    %v3937 = vunpack.c.l.b16 %v1028
    %v3938 = vunpack.c.h.b16 %v1028
    %v3939 = vunpack.c.l.b16 %v1029
    %v3940 = vunpack.c.h.b16 %v1029
    %v3941 = vunpack.c.l.b16 %v1030
    %v3942 = vunpack.c.h.b16 %v1030
    %v3943 = vunpack.c.l.b16 %v1031
    %v3944 = vunpack.c.h.b16 %v1031
    %v3945 = vunpack.c.l.b16 %v1032
    %v3946 = vunpack.c.h.b16 %v1032
    %v3947 = vunpack.c.l.b16 %v1033
    %v3948 = vunpack.c.h.b16 %v1033
    %v3949 = vunpack.c.l.b16 %v1034
    %v3950 = vunpack.c.h.b16 %v1034
    %v3951 = vunpack.c.l.b16 %v1035
    %v3952 = vunpack.c.h.b16 %v1035
    %v3953 = vunpack.c.l.b16 %v1036
    %v3954 = vunpack.c.h.b16 %v1036
    %v3955 = vunpack.c.l.b16 %v1037
    %v3956 = vunpack.c.h.b16 %v1037
    %v3957 = vunpack.c.l.b16 %v1038
    %v3958 = vunpack.c.h.b16 %v1038
    %v3959 = vunpack.c.l.b16 %v1039
    %v3960 = vunpack.c.h.b16 %v1039
    %v3961 = vunpack.c.l.b16 %v1040
    %v3962 = vunpack.c.h.b16 %v1040
    %v3963 = vunpack.c.l.b16 %v1041
    %v3964 = vunpack.c.h.b16 %v1041
    %v3965 = vunpack.c.l.b16 %v1042
    %v3966 = vunpack.c.h.b16 %v1042
    %v3967 = vunpack.c.l.b16 %v1043
    %v3968 = vunpack.c.h.b16 %v1043
    %v3969 = vunpack.c.l.b16 %v1044
    %v3970 = vunpack.c.h.b16 %v1044
    %v3971 = vunpack.c.l.b16 %v1045
    %v3972 = vunpack.c.h.b16 %v1045
    %v3973 = vunpack.c.l.b16 %v1046
    %v3974 = vunpack.c.h.b16 %v1046
    %v3975 = vunpack.c.l.b16 %v1047
    %v3976 = vunpack.c.h.b16 %v1047
    %v3977 = vunpack.c.l.b16 %v1048
    %v3978 = vunpack.c.h.b16 %v1048
    %v3979 = vunpack.c.l.b16 %v1049
    %v3980 = vunpack.c.h.b16 %v1049
    %v3981 = vunpack.c.l.b16 %v1050
    %v3982 = vunpack.c.h.b16 %v1050
    %v3983 = vunpack.c.l.b16 %v1051
    %v3984 = vunpack.c.h.b16 %v1051
    %v3985 = vunpack.c.l.b16 %v1052
    %v3986 = vunpack.c.h.b16 %v1052
    %v3987 = vunpack.c.l.b16 %v1053
    %v3988 = vunpack.c.h.b16 %v1053
    %v3989 = vunpack.c.l.b16 %v1054
    %v3990 = vunpack.c.h.b16 %v1054
    %v3991 = vunpack.c.l.b16 %v1055
    %v3992 = vunpack.c.h.b16 %v1055
    %v3993 = vunpack.c.l.b16 %v1056
    %v3994 = vunpack.c.h.b16 %v1056
    %v3995 = vunpack.c.l.b16 %v1057
    %v3996 = vunpack.c.h.b16 %v1057
    %v3997 = vunpack.c.l.b16 %v1058
    %v3998 = vunpack.c.h.b16 %v1058
    %v3999 = vunpack.c.l.b16 %v1059
    %v4000 = vunpack.c.h.b16 %v1059
    %v4001 = vunpack.c.l.b16 %v1060
    %v4002 = vunpack.c.h.b16 %v1060
    %v4003 = vunpack.c.l.b16 %v1061
    %v4004 = vunpack.c.h.b16 %v1061
    %v4005 = vunpack.c.l.b16 %v1062
    %v4006 = vunpack.c.h.b16 %v1062
    %v4007 = vunpack.c.l.b16 %v1063
    %v4008 = vunpack.c.h.b16 %v1063
    %v4009 = vunpack.c.l.b16 %v1064
    %v4010 = vunpack.c.h.b16 %v1064
    %v4011 = vunpack.c.l.b16 %v1065
    %v4012 = vunpack.c.h.b16 %v1065
    %v4013 = vunpack.c.l.b16 %v1066
    %v4014 = vunpack.c.h.b16 %v1066
    %v4015 = vunpack.c.l.b16 %v1067
    %v4016 = vunpack.c.h.b16 %v1067
    %v4017 = vunpack.c.l.b16 %v1068
    %v4018 = vunpack.c.h.b16 %v1068
    %v4019 = vunpack.c.l.b16 %v1069
    %v4020 = vunpack.c.h.b16 %v1069
    %v4021 = vunpack.c.l.b16 %v1070
    %v4022 = vunpack.c.h.b16 %v1070
    %v4023 = vunpack.c.l.b16 %v1071
    %v4024 = vunpack.c.h.b16 %v1071
    %v4025 = vunpack.c.l.b16 %v1072
    %v4026 = vunpack.c.h.b16 %v1072
    %v4027 = vunpack.c.l.b16 %v1073
    %v4028 = vunpack.c.h.b16 %v1073
    %v4029 = vunpack.c.l.b16 %v1074
    %v4030 = vunpack.c.h.b16 %v1074
    %v4031 = vunpack.c.l.b16 %v1075
    %v4032 = vunpack.c.h.b16 %v1075
    %v4033 = vunpack.c.l.b16 %v1076
    %v4034 = vunpack.c.h.b16 %v1076
    %v4035 = vunpack.c.l.b16 %v1077
    %v4036 = vunpack.c.h.b16 %v1077
    %v4037 = vunpack.c.l.b16 %v1078
    %v4038 = vunpack.c.h.b16 %v1078
    %v4039 = vunpack.c.l.b16 %v1079
    %v4040 = vunpack.c.h.b16 %v1079
    %v4041 = vunpack.c.l.b16 %v1080
    %v4042 = vunpack.c.h.b16 %v1080
    %v4043 = vunpack.c.l.b16 %v1081
    %v4044 = vunpack.c.h.b16 %v1081
    %v4045 = vunpack.c.l.b16 %v1082
    %v4046 = vunpack.c.h.b16 %v1082
    %v4047 = vunpack.c.l.b16 %v1083
    %v4048 = vunpack.c.h.b16 %v1083
    %v4049 = vunpack.c.l.b16 %v1084
    %v4050 = vunpack.c.h.b16 %v1084
    %v4051 = vunpack.c.l.b16 %v1085
    %v4052 = vunpack.c.h.b16 %v1085
    %v4053 = vunpack.c.l.b16 %v1086
    %v4054 = vunpack.c.h.b16 %v1086
    %v4055 = vunpack.c.l.b16 %v1087
    %v4056 = vunpack.c.h.b16 %v1087
    %v4057 = vunpack.c.l.b16 %v1088
    %v4058 = vunpack.c.h.b16 %v1088
    %v4059 = vunpack.c.l.b16 %v1089
    %v4060 = vunpack.c.h.b16 %v1089
    %v4061 = vunpack.c.l.b16 %v1090
    %v4062 = vunpack.c.h.b16 %v1090
    %v4063 = vunpack.c.l.b16 %v1091
    %v4064 = vunpack.c.h.b16 %v1091
    %v4065 = vunpack.c.l.b16 %v1092
    %v4066 = vunpack.c.h.b16 %v1092
    %v4067 = vunpack.c.l.b16 %v1093
    %v4068 = vunpack.c.h.b16 %v1093
    %v4069 = vunpack.c.l.b16 %v1094
    %v4070 = vunpack.c.h.b16 %v1094
    %v4071 = vunpack.c.l.b16 %v1095
    %v4072 = vunpack.c.h.b16 %v1095
    %v4073 = vunpack.c.l.b16 %v1096
    %v4074 = vunpack.c.h.b16 %v1096
    %v4075 = vunpack.c.l.b16 %v1097
    %v4076 = vunpack.c.h.b16 %v1097
    %v4077 = vunpack.c.l.b16 %v1098
    %v4078 = vunpack.c.h.b16 %v1098
    %v4079 = vunpack.c.l.b16 %v1099
    %v4080 = vunpack.c.h.b16 %v1099
    %v4081 = vunpack.c.l.b16 %v1100
    %v4082 = vunpack.c.h.b16 %v1100
    %v4083 = vunpack.c.l.b16 %v1101
    %v4084 = vunpack.c.h.b16 %v1101
    %v4085 = vunpack.c.l.b16 %v1102
    %v4086 = vunpack.c.h.b16 %v1102
    %v4087 = vunpack.c.l.b16 %v1103
    %v4088 = vunpack.c.h.b16 %v1103
    %v4089 = vunpack.c.l.b16 %v1104
    %v4090 = vunpack.c.h.b16 %v1104
    %v4091 = vunpack.c.l.b16 %v1105
    %v4092 = vunpack.c.h.b16 %v1105
    %v4093 = vunpack.c.l.b16 %v1106
    %v4094 = vunpack.c.h.b16 %v1106
    %v4095 = vunpack.c.l.b16 %v1107
    %v4096 = vunpack.c.h.b16 %v1107
    %v4097 = vunpack.c.l.b16 %v1108
    %v4098 = vunpack.c.h.b16 %v1108
    %v4099 = vunpack.c.l.b16 %v1109
    %v4100 = vunpack.c.h.b16 %v1109
    %v4101 = vunpack.c.l.b16 %v1110
    %v4102 = vunpack.c.h.b16 %v1110
    %v4103 = vunpack.c.l.b16 %v1111
    %v4104 = vunpack.c.h.b16 %v1111
    %v4105 = vunpack.c.l.b16 %v1112
    %v4106 = vunpack.c.h.b16 %v1112
    %v4107 = vunpack.c.l.b16 %v1113
    %v4108 = vunpack.c.h.b16 %v1113
    %v4109 = vunpack.c.l.b16 %v1114
    %v4110 = vunpack.c.h.b16 %v1114
    %v4111 = vunpack.c.l.b16 %v1115
    %v4112 = vunpack.c.h.b16 %v1115
    %v4113 = vunpack.c.l.b16 %v1116
    %v4114 = vunpack.c.h.b16 %v1116
    %v4115 = vunpack.c.l.b16 %v1117
    %v4116 = vunpack.c.h.b16 %v1117
    %v4117 = vunpack.c.l.b16 %v1118
    %v4118 = vunpack.c.h.b16 %v1118
    %v4119 = vunpack.c.l.b16 %v1119
    %v4120 = vunpack.c.h.b16 %v1119
    %v4121 = vunpack.c.l.b16 %v1120
    %v4122 = vunpack.c.h.b16 %v1120
    %v4123 = vunpack.c.l.b16 %v1121
    %v4124 = vunpack.c.h.b16 %v1121
    %v4125 = vunpack.c.l.b16 %v1122
    %v4126 = vunpack.c.h.b16 %v1122
    %v4127 = vunpack.c.l.b16 %v1123
    %v4128 = vunpack.c.h.b16 %v1123
    %v4129 = vunpack.c.l.b16 %v1124
    %v4130 = vunpack.c.h.b16 %v1124
    %v4131 = vunpack.c.l.b16 %v1125
    %v4132 = vunpack.c.h.b16 %v1125
    %v4133 = vunpack.c.l.b16 %v1126
    %v4134 = vunpack.c.h.b16 %v1126
    %v4135 = vunpack.c.l.b16 %v1127
    %v4136 = vunpack.c.h.b16 %v1127
    %v4137 = vunpack.c.l.b16 %v1128
    %v4138 = vunpack.c.h.b16 %v1128
    %v4139 = vunpack.c.l.b16 %v1129
    %v4140 = vunpack.c.h.b16 %v1129
    %v4141 = vunpack.c.l.b16 %v1130
    %v4142 = vunpack.c.h.b16 %v1130
    %v4143 = vunpack.c.l.b16 %v1131
    %v4144 = vunpack.c.h.b16 %v1131
    %v4145 = vunpack.c.l.b16 %v1132
    %v4146 = vunpack.c.h.b16 %v1132
    %v4147 = vunpack.c.l.b16 %v1133
    %v4148 = vunpack.c.h.b16 %v1133
    %v4149 = vunpack.c.l.b16 %v1134
    %v4150 = vunpack.c.h.b16 %v1134
    %v4151 = vunpack.c.l.b16 %v1135
    %v4152 = vunpack.c.h.b16 %v1135
    %v4153 = vunpack.c.l.b16 %v1136
    %v4154 = vunpack.c.h.b16 %v1136
    %v4155 = vunpack.c.l.b16 %v1137
    %v4156 = vunpack.c.h.b16 %v1137
    %v4157 = vunpack.c.l.b16 %v1138
    %v4158 = vunpack.c.h.b16 %v1138
    %v4159 = vunpack.c.l.b16 %v1139
    %v4160 = vunpack.c.h.b16 %v1139
    %v4161 = vunpack.c.l.b16 %v1140
    %v4162 = vunpack.c.h.b16 %v1140
    %v4163 = vunpack.c.l.b16 %v1141
    %v4164 = vunpack.c.h.b16 %v1141
    %v4165 = vunpack.c.l.b16 %v1142
    %v4166 = vunpack.c.h.b16 %v1142
    %v4167 = vunpack.c.l.b16 %v1143
    %v4168 = vunpack.c.h.b16 %v1143
    %v4169 = vunpack.c.l.b16 %v1144
    %v4170 = vunpack.c.h.b16 %v1144
    %v4171 = vunpack.c.l.b16 %v1145
    %v4172 = vunpack.c.h.b16 %v1145
    %v4173 = vunpack.c.l.b16 %v1146
    %v4174 = vunpack.c.h.b16 %v1146
    %v4175 = vunpack.c.l.b16 %v1147
    %v4176 = vunpack.c.h.b16 %v1147
    %v4177 = vunpack.c.l.b16 %v1148
    %v4178 = vunpack.c.h.b16 %v1148
    %v4179 = vunpack.c.l.b16 %v1149
    %v4180 = vunpack.c.h.b16 %v1149
    %v4181 = vunpack.c.l.b16 %v1150
    %v4182 = vunpack.c.h.b16 %v1150
    %v4183 = vunpack.c.l.b16 %v1151
    %v4184 = vunpack.c.h.b16 %v1151
    %v4185 = vunpack.c.l.b16 %v1152
    %v4186 = vunpack.c.h.b16 %v1152
    %v4187 = vunpack.c.l.b16 %v1153
    %v4188 = vunpack.c.h.b16 %v1153
    %v4189 = vunpack.c.l.b16 %v1154
    %v4190 = vunpack.c.h.b16 %v1154
    %v4191 = vunpack.c.l.b16 %v1155
    %v4192 = vunpack.c.h.b16 %v1155
    %v4193 = vunpack.c.l.b16 %v1156
    %v4194 = vunpack.c.h.b16 %v1156
    %v4195 = vunpack.c.l.b16 %v1157
    %v4196 = vunpack.c.h.b16 %v1157
    %v4197 = vunpack.c.l.b16 %v1158
    %v4198 = vunpack.c.h.b16 %v1158
    %v4199 = vunpack.c.l.b16 %v1159
    %v4200 = vunpack.c.h.b16 %v1159
    %v4201 = vunpack.c.l.b16 %v1160
    %v4202 = vunpack.c.h.b16 %v1160
    %v4203 = vunpack.c.l.b16 %v1161
    %v4204 = vunpack.c.h.b16 %v1161
    %v4205 = vunpack.c.l.b16 %v1162
    %v4206 = vunpack.c.h.b16 %v1162
    %v4207 = vunpack.c.l.b16 %v1163
    %v4208 = vunpack.c.h.b16 %v1163
    %v4209 = vunpack.c.l.b16 %v1164
    %v4210 = vunpack.c.h.b16 %v1164
    %v4211 = vunpack.c.l.b16 %v1165
    %v4212 = vunpack.c.h.b16 %v1165
    %v4213 = vunpack.c.l.b16 %v1166
    %v4214 = vunpack.c.h.b16 %v1166
    %v4215 = vunpack.c.l.b16 %v1167
    %v4216 = vunpack.c.h.b16 %v1167
    %v4217 = vunpack.c.l.b16 %v1168
    %v4218 = vunpack.c.h.b16 %v1168
    %v4219 = vunpack.c.l.b16 %v1169
    %v4220 = vunpack.c.h.b16 %v1169
    %v4221 = vunpack.c.l.b16 %v1170
    %v4222 = vunpack.c.h.b16 %v1170
    %v4223 = vunpack.c.l.b16 %v1171
    %v4224 = vunpack.c.h.b16 %v1171
    %v4225 = vunpack.c.l.b16 %v1172
    %v4226 = vunpack.c.h.b16 %v1172
    %v4227 = vunpack.c.l.b16 %v1173
    %v4228 = vunpack.c.h.b16 %v1173
    %v4229 = vunpack.c.l.b16 %v1174
    %v4230 = vunpack.c.h.b16 %v1174
    %v4231 = vunpack.c.l.b16 %v1175
    %v4232 = vunpack.c.h.b16 %v1175
    %v4233 = vunpack.c.l.b16 %v1176
    %v4234 = vunpack.c.h.b16 %v1176
    %v4235 = vunpack.c.l.b16 %v1177
    %v4236 = vunpack.c.h.b16 %v1177
    %v4237 = vunpack.c.l.b16 %v1178
    %v4238 = vunpack.c.h.b16 %v1178
    %v4239 = vunpack.c.l.b16 %v1179
    %v4240 = vunpack.c.h.b16 %v1179
    %v4241 = vunpack.c.l.b16 %v1180
    %v4242 = vunpack.c.h.b16 %v1180
    %v4243 = vunpack.c.l.b16 %v1181
    %v4244 = vunpack.c.h.b16 %v1181
    %v4245 = vunpack.c.l.b16 %v1182
    %v4246 = vunpack.c.h.b16 %v1182
    %v4247 = vunpack.c.l.b16 %v1183
    %v4248 = vunpack.c.h.b16 %v1183
    %v4249 = vunpack.c.l.b16 %v1184
    %v4250 = vunpack.c.h.b16 %v1184
    %v4251 = vunpack.c.l.b16 %v1185
    %v4252 = vunpack.c.h.b16 %v1185
    %v4253 = vunpack.c.l.b16 %v1186
    %v4254 = vunpack.c.h.b16 %v1186
    %v4255 = vunpack.c.l.b16 %v1187
    %v4256 = vunpack.c.h.b16 %v1187
    %v4257 = vunpack.c.l.b16 %v1188
    %v4258 = vunpack.c.h.b16 %v1188
    %v4259 = vunpack.c.l.b16 %v1189
    %v4260 = vunpack.c.h.b16 %v1189
    %v4261 = vunpack.c.l.b16 %v1190
    %v4262 = vunpack.c.h.b16 %v1190
    %v4263 = vpack.c.b16 %v2223, %v2215
    %v4264 = vpack.c.b16 %v2224, %v2216
    %v4265 = vpack.c.b16 %v2225, %v2217
    %v4266 = vpack.c.b16 %v2226, %v2218
    %v4267 = vpack.c.b16 %v2227, %v2219
    %v4268 = vpack.c.b16 %v2228, %v2220
    %v4269 = vpack.c.b16 %v2229, %v2221
    %v4270 = vpack.c.b16 %v2230, %v2222
    %v4271 = vpack.c.b16 %v2239, %v2231
    %v4272 = vpack.c.b16 %v2240, %v2232
    %v4273 = vpack.c.b16 %v2241, %v2233
    %v4274 = vpack.c.b16 %v2242, %v2234
    %v4275 = vpack.c.b16 %v2243, %v2235
    %v4276 = vpack.c.b16 %v2244, %v2236
    %v4277 = vpack.c.b16 %v2245, %v2237
    %v4278 = vpack.c.b16 %v2246, %v2238
    %v4279 = vpack.c.b16 %v2255, %v2247
    %v4280 = vpack.c.b16 %v2256, %v2248
    %v4281 = vpack.c.b16 %v2257, %v2249
    %v4282 = vpack.c.b16 %v2258, %v2250
    %v4283 = vpack.c.b16 %v2259, %v2251
    %v4284 = vpack.c.b16 %v2260, %v2252
    %v4285 = vpack.c.b16 %v2261, %v2253
    %v4286 = vpack.c.b16 %v2262, %v2254
    %v4287 = vpack.c.b16 %v2271, %v2263
    %v4288 = vpack.c.b16 %v2272, %v2264
    %v4289 = vpack.c.b16 %v2273, %v2265
    %v4290 = vpack.c.b16 %v2274, %v2266
    %v4291 = vpack.c.b16 %v2275, %v2267
    %v4292 = vpack.c.b16 %v2276, %v2268
    %v4293 = vpack.c.b16 %v2277, %v2269
    %v4294 = vpack.c.b16 %v2278, %v2270
    %v4295 = vpack.c.b16 %v2287, %v2279
    %v4296 = vpack.c.b16 %v2288, %v2280
    %v4297 = vpack.c.b16 %v2289, %v2281
    %v4298 = vpack.c.b16 %v2290, %v2282
    %v4299 = vpack.c.b16 %v2291, %v2283
    %v4300 = vpack.c.b16 %v2292, %v2284
    %v4301 = vpack.c.b16 %v2293, %v2285
    %v4302 = vpack.c.b16 %v2294, %v2286
    %v4303 = vpack.c.b16 %v2303, %v2295
    %v4304 = vpack.c.b16 %v2304, %v2296
    %v4305 = vpack.c.b16 %v2305, %v2297
    %v4306 = vpack.c.b16 %v2306, %v2298
    %v4307 = vpack.c.b16 %v2307, %v2299
    %v4308 = vpack.c.b16 %v2308, %v2300
    %v4309 = vpack.c.b16 %v2309, %v2301
    %v4310 = vpack.c.b16 %v2310, %v2302
    %v4311 = vpack.c.b16 %v2319, %v2311
    %v4312 = vpack.c.b16 %v2320, %v2312
    %v4313 = vpack.c.b16 %v2321, %v2313
    %v4314 = vpack.c.b16 %v2322, %v2314
    %v4315 = vpack.c.b16 %v2323, %v2315
    %v4316 = vpack.c.b16 %v2324, %v2316
    %v4317 = vpack.c.b16 %v2325, %v2317
    %v4318 = vpack.c.b16 %v2326, %v2318
    %v4319 = vpack.c.b16 %v2335, %v2327
    %v4320 = vpack.c.b16 %v2336, %v2328
    %v4321 = vpack.c.b16 %v2337, %v2329
    %v4322 = vpack.c.b16 %v2338, %v2330
    %v4323 = vpack.c.b16 %v2339, %v2331
    %v4324 = vpack.c.b16 %v2340, %v2332
    %v4325 = vpack.c.b16 %v2341, %v2333
    %v4326 = vpack.c.b16 %v2342, %v2334
    %v4327 = vpack.c.b16 %v2351, %v2343
    %v4328 = vpack.c.b16 %v2352, %v2344
    %v4329 = vpack.c.b16 %v2353, %v2345
    %v4330 = vpack.c.b16 %v2354, %v2346
    %v4331 = vpack.c.b16 %v2355, %v2347
    %v4332 = vpack.c.b16 %v2356, %v2348
    %v4333 = vpack.c.b16 %v2357, %v2349
    %v4334 = vpack.c.b16 %v2358, %v2350
    %v4335 = vpack.c.b16 %v2367, %v2359
    %v4336 = vpack.c.b16 %v2368, %v2360
    %v4337 = vpack.c.b16 %v2369, %v2361
    %v4338 = vpack.c.b16 %v2370, %v2362
    %v4339 = vpack.c.b16 %v2371, %v2363
    %v4340 = vpack.c.b16 %v2372, %v2364
    %v4341 = vpack.c.b16 %v2373, %v2365
    %v4342 = vpack.c.b16 %v2374, %v2366
    %v4343 = vpack.c.b16 %v2383, %v2375
    %v4344 = vpack.c.b16 %v2384, %v2376
    %v4345 = vpack.c.b16 %v2385, %v2377
    %v4346 = vpack.c.b16 %v2386, %v2378
    %v4347 = vpack.c.b16 %v2387, %v2379
    %v4348 = vpack.c.b16 %v2388, %v2380
    %v4349 = vpack.c.b16 %v2389, %v2381
    %v4350 = vpack.c.b16 %v2390, %v2382
    %v4351 = vpack.c.b16 %v2399, %v2391
    %v4352 = vpack.c.b16 %v2400, %v2392
    %v4353 = vpack.c.b16 %v2401, %v2393
    %v4354 = vpack.c.b16 %v2402, %v2394
    %v4355 = vpack.c.b16 %v2403, %v2395
    %v4356 = vpack.c.b16 %v2404, %v2396
    %v4357 = vpack.c.b16 %v2405, %v2397
    %v4358 = vpack.c.b16 %v2406, %v2398
    %v4359 = vpack.c.b16 %v2415, %v2407
    %v4360 = vpack.c.b16 %v2416, %v2408
    %v4361 = vpack.c.b16 %v2417, %v2409
    %v4362 = vpack.c.b16 %v2418, %v2410
    %v4363 = vpack.c.b16 %v2419, %v2411
    %v4364 = vpack.c.b16 %v2420, %v2412
    %v4365 = vpack.c.b16 %v2421, %v2413
    %v4366 = vpack.c.b16 %v2422, %v2414
    %v4367 = vpack.c.b16 %v2431, %v2423
    %v4368 = vpack.c.b16 %v2432, %v2424
    %v4369 = vpack.c.b16 %v2433, %v2425
    %v4370 = vpack.c.b16 %v2434, %v2426
    %v4371 = vpack.c.b16 %v2435, %v2427
    %v4372 = vpack.c.b16 %v2436, %v2428
    %v4373 = vpack.c.b16 %v2437, %v2429
    %v4374 = vpack.c.b16 %v2438, %v2430
    %v4375 = vpack.c.b16 %v2447, %v2439
    %v4376 = vpack.c.b16 %v2448, %v2440
    %v4377 = vpack.c.b16 %v2449, %v2441
    %v4378 = vpack.c.b16 %v2450, %v2442
    %v4379 = vpack.c.b16 %v2451, %v2443
    %v4380 = vpack.c.b16 %v2452, %v2444
    %v4381 = vpack.c.b16 %v2453, %v2445
    %v4382 = vpack.c.b16 %v2454, %v2446
    %v4383 = vpack.c.b16 %v2463, %v2455
    %v4384 = vpack.c.b16 %v2464, %v2456
    %v4385 = vpack.c.b16 %v2465, %v2457
    %v4386 = vpack.c.b16 %v2466, %v2458
    %v4387 = vpack.c.b16 %v2467, %v2459
    %v4388 = vpack.c.b16 %v2468, %v2460
    %v4389 = vpack.c.b16 %v2469, %v2461
    %v4390 = vpack.c.b16 %v2470, %v2462
    %v4391 = vpack.c.b16 %v2479, %v2471
    %v4392 = vpack.c.b16 %v2480, %v2472
    %v4393 = vpack.c.b16 %v2481, %v2473
    %v4394 = vpack.c.b16 %v2482, %v2474
    %v4395 = vpack.c.b16 %v2483, %v2475
    %v4396 = vpack.c.b16 %v2484, %v2476
    %v4397 = vpack.c.b16 %v2485, %v2477
    %v4398 = vpack.c.b16 %v2486, %v2478
    %v4399 = vpack.c.b16 %v2495, %v2487
    %v4400 = vpack.c.b16 %v2496, %v2488
    %v4401 = vpack.c.b16 %v2497, %v2489
    %v4402 = vpack.c.b16 %v2498, %v2490
    %v4403 = vpack.c.b16 %v2499, %v2491
    %v4404 = vpack.c.b16 %v2500, %v2492
    %v4405 = vpack.c.b16 %v2501, %v2493
    %v4406 = vpack.c.b16 %v2502, %v2494
    %v4407 = vpack.c.b16 %v2511, %v2503
    %v4408 = vpack.c.b16 %v2512, %v2504
    %v4409 = vpack.c.b16 %v2513, %v2505
    %v4410 = vpack.c.b16 %v2514, %v2506
    %v4411 = vpack.c.b16 %v2515, %v2507
    %v4412 = vpack.c.b16 %v2516, %v2508
    %v4413 = vpack.c.b16 %v2517, %v2509
    %v4414 = vpack.c.b16 %v2518, %v2510
    %v4415 = vpack.c.b16 %v2527, %v2519
    %v4416 = vpack.c.b16 %v2528, %v2520
    %v4417 = vpack.c.b16 %v2529, %v2521
    %v4418 = vpack.c.b16 %v2530, %v2522
    %v4419 = vpack.c.b16 %v2531, %v2523
    %v4420 = vpack.c.b16 %v2532, %v2524
    %v4421 = vpack.c.b16 %v2533, %v2525
    %v4422 = vpack.c.b16 %v2534, %v2526
    %v4423 = vpack.c.b16 %v2543, %v2535
    %v4424 = vpack.c.b16 %v2544, %v2536
    %v4425 = vpack.c.b16 %v2545, %v2537
    %v4426 = vpack.c.b16 %v2546, %v2538
    %v4427 = vpack.c.b16 %v2547, %v2539
    %v4428 = vpack.c.b16 %v2548, %v2540
    %v4429 = vpack.c.b16 %v2549, %v2541
    %v4430 = vpack.c.b16 %v2550, %v2542
    %v4431 = vpack.c.b16 %v2559, %v2551
    %v4432 = vpack.c.b16 %v2560, %v2552
    %v4433 = vpack.c.b16 %v2561, %v2553
    %v4434 = vpack.c.b16 %v2562, %v2554
    %v4435 = vpack.c.b16 %v2563, %v2555
    %v4436 = vpack.c.b16 %v2564, %v2556
    %v4437 = vpack.c.b16 %v2565, %v2557
    %v4438 = vpack.c.b16 %v2566, %v2558
    %v4439 = vpack.c.b16 %v2575, %v2567
    %v4440 = vpack.c.b16 %v2576, %v2568
    %v4441 = vpack.c.b16 %v2577, %v2569
    %v4442 = vpack.c.b16 %v2578, %v2570
    %v4443 = vpack.c.b16 %v2579, %v2571
    %v4444 = vpack.c.b16 %v2580, %v2572
    %v4445 = vpack.c.b16 %v2581, %v2573
    %v4446 = vpack.c.b16 %v2582, %v2574
    %v4447 = vpack.c.b16 %v2591, %v2583
    %v4448 = vpack.c.b16 %v2592, %v2584
    %v4449 = vpack.c.b16 %v2593, %v2585
    %v4450 = vpack.c.b16 %v2594, %v2586
    %v4451 = vpack.c.b16 %v2595, %v2587
    %v4452 = vpack.c.b16 %v2596, %v2588
    %v4453 = vpack.c.b16 %v2597, %v2589
    %v4454 = vpack.c.b16 %v2598, %v2590
    %v4455 = vpack.c.b16 %v2607, %v2599
    %v4456 = vpack.c.b16 %v2608, %v2600
    %v4457 = vpack.c.b16 %v2609, %v2601
    %v4458 = vpack.c.b16 %v2610, %v2602
    %v4459 = vpack.c.b16 %v2611, %v2603
    %v4460 = vpack.c.b16 %v2612, %v2604
    %v4461 = vpack.c.b16 %v2613, %v2605
    %v4462 = vpack.c.b16 %v2614, %v2606
    %v4463 = vpack.c.b16 %v2623, %v2615
    %v4464 = vpack.c.b16 %v2624, %v2616
    %v4465 = vpack.c.b16 %v2625, %v2617
    %v4466 = vpack.c.b16 %v2626, %v2618
    %v4467 = vpack.c.b16 %v2627, %v2619
    %v4468 = vpack.c.b16 %v2628, %v2620
    %v4469 = vpack.c.b16 %v2629, %v2621
    %v4470 = vpack.c.b16 %v2630, %v2622
    %v4471 = vpack.c.b16 %v2639, %v2631
    %v4472 = vpack.c.b16 %v2640, %v2632
    %v4473 = vpack.c.b16 %v2641, %v2633
    %v4474 = vpack.c.b16 %v2642, %v2634
    %v4475 = vpack.c.b16 %v2643, %v2635
    %v4476 = vpack.c.b16 %v2644, %v2636
    %v4477 = vpack.c.b16 %v2645, %v2637
    %v4478 = vpack.c.b16 %v2646, %v2638
    %v4479 = vpack.c.b16 %v2655, %v2647
    %v4480 = vpack.c.b16 %v2656, %v2648
    %v4481 = vpack.c.b16 %v2657, %v2649
    %v4482 = vpack.c.b16 %v2658, %v2650
    %v4483 = vpack.c.b16 %v2659, %v2651
    %v4484 = vpack.c.b16 %v2660, %v2652
    %v4485 = vpack.c.b16 %v2661, %v2653
    %v4486 = vpack.c.b16 %v2662, %v2654
    %v4487 = vpack.c.b16 %v2671, %v2663
    %v4488 = vpack.c.b16 %v2672, %v2664
    %v4489 = vpack.c.b16 %v2673, %v2665
    %v4490 = vpack.c.b16 %v2674, %v2666
    %v4491 = vpack.c.b16 %v2675, %v2667
    %v4492 = vpack.c.b16 %v2676, %v2668
    %v4493 = vpack.c.b16 %v2677, %v2669
    %v4494 = vpack.c.b16 %v2678, %v2670
    %v4495 = vpack.c.b16 %v2687, %v2679
    %v4496 = vpack.c.b16 %v2688, %v2680
    %v4497 = vpack.c.b16 %v2689, %v2681
    %v4498 = vpack.c.b16 %v2690, %v2682
    %v4499 = vpack.c.b16 %v2691, %v2683
    %v4500 = vpack.c.b16 %v2692, %v2684
    %v4501 = vpack.c.b16 %v2693, %v2685
    %v4502 = vpack.c.b16 %v2694, %v2686
    %v4503 = vpack.c.b16 %v2703, %v2695
    %v4504 = vpack.c.b16 %v2704, %v2696
    %v4505 = vpack.c.b16 %v2705, %v2697
    %v4506 = vpack.c.b16 %v2706, %v2698
    %v4507 = vpack.c.b16 %v2707, %v2699
    %v4508 = vpack.c.b16 %v2708, %v2700
    %v4509 = vpack.c.b16 %v2709, %v2701
    %v4510 = vpack.c.b16 %v2710, %v2702
    %v4511 = vpack.c.b16 %v2719, %v2711
    %v4512 = vpack.c.b16 %v2720, %v2712
    %v4513 = vpack.c.b16 %v2721, %v2713
    %v4514 = vpack.c.b16 %v2722, %v2714
    %v4515 = vpack.c.b16 %v2723, %v2715
    %v4516 = vpack.c.b16 %v2724, %v2716
    %v4517 = vpack.c.b16 %v2725, %v2717
    %v4518 = vpack.c.b16 %v2726, %v2718
    %v4519 = vpack.c.b16 %v2735, %v2727
    %v4520 = vpack.c.b16 %v2736, %v2728
    %v4521 = vpack.c.b16 %v2737, %v2729
    %v4522 = vpack.c.b16 %v2738, %v2730
    %v4523 = vpack.c.b16 %v2739, %v2731
    %v4524 = vpack.c.b16 %v2740, %v2732
    %v4525 = vpack.c.b16 %v2741, %v2733
    %v4526 = vpack.c.b16 %v2742, %v2734
    %v4527 = vpack.c.b16 %v2751, %v2743
    %v4528 = vpack.c.b16 %v2752, %v2744
    %v4529 = vpack.c.b16 %v2753, %v2745
    %v4530 = vpack.c.b16 %v2754, %v2746
    %v4531 = vpack.c.b16 %v2755, %v2747
    %v4532 = vpack.c.b16 %v2756, %v2748
    %v4533 = vpack.c.b16 %v2757, %v2749
    %v4534 = vpack.c.b16 %v2758, %v2750
    %v4535 = vpack.c.b16 %v2767, %v2759
    %v4536 = vpack.c.b16 %v2768, %v2760
    %v4537 = vpack.c.b16 %v2769, %v2761
    %v4538 = vpack.c.b16 %v2770, %v2762
    %v4539 = vpack.c.b16 %v2771, %v2763
    %v4540 = vpack.c.b16 %v2772, %v2764
    %v4541 = vpack.c.b16 %v2773, %v2765
    %v4542 = vpack.c.b16 %v2774, %v2766
    %v4543 = vpack.c.b16 %v2783, %v2775
    %v4544 = vpack.c.b16 %v2784, %v2776
    %v4545 = vpack.c.b16 %v2785, %v2777
    %v4546 = vpack.c.b16 %v2786, %v2778
    %v4547 = vpack.c.b16 %v2787, %v2779
    %v4548 = vpack.c.b16 %v2788, %v2780
    %v4549 = vpack.c.b16 %v2789, %v2781
    %v4550 = vpack.c.b16 %v2790, %v2782
    %v4551 = vpack.c.b16 %v2799, %v2791
    %v4552 = vpack.c.b16 %v2800, %v2792
    %v4553 = vpack.c.b16 %v2801, %v2793
    %v4554 = vpack.c.b16 %v2802, %v2794
    %v4555 = vpack.c.b16 %v2803, %v2795
    %v4556 = vpack.c.b16 %v2804, %v2796
    %v4557 = vpack.c.b16 %v2805, %v2797
    %v4558 = vpack.c.b16 %v2806, %v2798
    %v4559 = vpack.c.b16 %v2815, %v2807
    %v4560 = vpack.c.b16 %v2816, %v2808
    %v4561 = vpack.c.b16 %v2817, %v2809
    %v4562 = vpack.c.b16 %v2818, %v2810
    %v4563 = vpack.c.b16 %v2819, %v2811
    %v4564 = vpack.c.b16 %v2820, %v2812
    %v4565 = vpack.c.b16 %v2821, %v2813
    %v4566 = vpack.c.b16 %v2822, %v2814
    %v4567 = vpack.c.b16 %v2831, %v2823
    %v4568 = vpack.c.b16 %v2832, %v2824
    %v4569 = vpack.c.b16 %v2833, %v2825
    %v4570 = vpack.c.b16 %v2834, %v2826
    %v4571 = vpack.c.b16 %v2835, %v2827
    %v4572 = vpack.c.b16 %v2836, %v2828
    %v4573 = vpack.c.b16 %v2837, %v2829
    %v4574 = vpack.c.b16 %v2838, %v2830
    %v4575 = vpack.c.b16 %v2847, %v2839
    %v4576 = vpack.c.b16 %v2848, %v2840
    %v4577 = vpack.c.b16 %v2849, %v2841
    %v4578 = vpack.c.b16 %v2850, %v2842
    %v4579 = vpack.c.b16 %v2851, %v2843
    %v4580 = vpack.c.b16 %v2852, %v2844
    %v4581 = vpack.c.b16 %v2853, %v2845
    %v4582 = vpack.c.b16 %v2854, %v2846
    %v4583 = vpack.c.b16 %v2863, %v2855
    %v4584 = vpack.c.b16 %v2864, %v2856
    %v4585 = vpack.c.b16 %v2865, %v2857
    %v4586 = vpack.c.b16 %v2866, %v2858
    %v4587 = vpack.c.b16 %v2867, %v2859
    %v4588 = vpack.c.b16 %v2868, %v2860
    %v4589 = vpack.c.b16 %v2869, %v2861
    %v4590 = vpack.c.b16 %v2870, %v2862
    %v4591 = vpack.c.b16 %v2879, %v2871
    %v4592 = vpack.c.b16 %v2880, %v2872
    %v4593 = vpack.c.b16 %v2881, %v2873
    %v4594 = vpack.c.b16 %v2882, %v2874
    %v4595 = vpack.c.b16 %v2883, %v2875
    %v4596 = vpack.c.b16 %v2884, %v2876
    %v4597 = vpack.c.b16 %v2885, %v2877
    %v4598 = vpack.c.b16 %v2886, %v2878
    %v4599 = vpack.c.b16 %v2895, %v2887
    %v4600 = vpack.c.b16 %v2896, %v2888
    %v4601 = vpack.c.b16 %v2897, %v2889
    %v4602 = vpack.c.b16 %v2898, %v2890
    %v4603 = vpack.c.b16 %v2899, %v2891
    %v4604 = vpack.c.b16 %v2900, %v2892
    %v4605 = vpack.c.b16 %v2901, %v2893
    %v4606 = vpack.c.b16 %v2902, %v2894
    %v4607 = vpack.c.b16 %v2911, %v2903
    %v4608 = vpack.c.b16 %v2912, %v2904
    %v4609 = vpack.c.b16 %v2913, %v2905
    %v4610 = vpack.c.b16 %v2914, %v2906
    %v4611 = vpack.c.b16 %v2915, %v2907
    %v4612 = vpack.c.b16 %v2916, %v2908
    %v4613 = vpack.c.b16 %v2917, %v2909
    %v4614 = vpack.c.b16 %v2918, %v2910
    %v4615 = vpack.c.b16 %v2927, %v2919
    %v4616 = vpack.c.b16 %v2928, %v2920
    %v4617 = vpack.c.b16 %v2929, %v2921
    %v4618 = vpack.c.b16 %v2930, %v2922
    %v4619 = vpack.c.b16 %v2931, %v2923
    %v4620 = vpack.c.b16 %v2932, %v2924
    %v4621 = vpack.c.b16 %v2933, %v2925
    %v4622 = vpack.c.b16 %v2934, %v2926
    %v4623 = vpack.c.b16 %v2943, %v2935
    %v4624 = vpack.c.b16 %v2944, %v2936
    %v4625 = vpack.c.b16 %v2945, %v2937
    %v4626 = vpack.c.b16 %v2946, %v2938
    %v4627 = vpack.c.b16 %v2947, %v2939
    %v4628 = vpack.c.b16 %v2948, %v2940
    %v4629 = vpack.c.b16 %v2949, %v2941
    %v4630 = vpack.c.b16 %v2950, %v2942
    %v4631 = vpack.c.b16 %v2959, %v2951
    %v4632 = vpack.c.b16 %v2960, %v2952
    %v4633 = vpack.c.b16 %v2961, %v2953
    %v4634 = vpack.c.b16 %v2962, %v2954
    %v4635 = vpack.c.b16 %v2963, %v2955
    %v4636 = vpack.c.b16 %v2964, %v2956
    %v4637 = vpack.c.b16 %v2965, %v2957
    %v4638 = vpack.c.b16 %v2966, %v2958
    %v4639 = vpack.c.b16 %v2975, %v2967
    %v4640 = vpack.c.b16 %v2976, %v2968
    %v4641 = vpack.c.b16 %v2977, %v2969
    %v4642 = vpack.c.b16 %v2978, %v2970
    %v4643 = vpack.c.b16 %v2979, %v2971
    %v4644 = vpack.c.b16 %v2980, %v2972
    %v4645 = vpack.c.b16 %v2981, %v2973
    %v4646 = vpack.c.b16 %v2982, %v2974
    %v4647 = vpack.c.b16 %v2991, %v2983
    %v4648 = vpack.c.b16 %v2992, %v2984
    %v4649 = vpack.c.b16 %v2993, %v2985
    %v4650 = vpack.c.b16 %v2994, %v2986
    %v4651 = vpack.c.b16 %v2995, %v2987
    %v4652 = vpack.c.b16 %v2996, %v2988
    %v4653 = vpack.c.b16 %v2997, %v2989
    %v4654 = vpack.c.b16 %v2998, %v2990
    %v4655 = vpack.c.b16 %v3007, %v2999
    %v4656 = vpack.c.b16 %v3008, %v3000
    %v4657 = vpack.c.b16 %v3009, %v3001
    %v4658 = vpack.c.b16 %v3010, %v3002
    %v4659 = vpack.c.b16 %v3011, %v3003
    %v4660 = vpack.c.b16 %v3012, %v3004
    %v4661 = vpack.c.b16 %v3013, %v3005
    %v4662 = vpack.c.b16 %v3014, %v3006
    %v4663 = vpack.c.b16 %v3023, %v3015
    %v4664 = vpack.c.b16 %v3024, %v3016
    %v4665 = vpack.c.b16 %v3025, %v3017
    %v4666 = vpack.c.b16 %v3026, %v3018
    %v4667 = vpack.c.b16 %v3027, %v3019
    %v4668 = vpack.c.b16 %v3028, %v3020
    %v4669 = vpack.c.b16 %v3029, %v3021
    %v4670 = vpack.c.b16 %v3030, %v3022
    %v4671 = vpack.c.b16 %v3039, %v3031
    %v4672 = vpack.c.b16 %v3040, %v3032
    %v4673 = vpack.c.b16 %v3041, %v3033
    %v4674 = vpack.c.b16 %v3042, %v3034
    %v4675 = vpack.c.b16 %v3043, %v3035
    %v4676 = vpack.c.b16 %v3044, %v3036
    %v4677 = vpack.c.b16 %v3045, %v3037
    %v4678 = vpack.c.b16 %v3046, %v3038
    %v4679 = vpack.c.b16 %v3055, %v3047
    %v4680 = vpack.c.b16 %v3056, %v3048
    %v4681 = vpack.c.b16 %v3057, %v3049
    %v4682 = vpack.c.b16 %v3058, %v3050
    %v4683 = vpack.c.b16 %v3059, %v3051
    %v4684 = vpack.c.b16 %v3060, %v3052
    %v4685 = vpack.c.b16 %v3061, %v3053
    %v4686 = vpack.c.b16 %v3062, %v3054
    %v4687 = vpack.c.b16 %v3071, %v3063
    %v4688 = vpack.c.b16 %v3072, %v3064
    %v4689 = vpack.c.b16 %v3073, %v3065
    %v4690 = vpack.c.b16 %v3074, %v3066
    %v4691 = vpack.c.b16 %v3075, %v3067
    %v4692 = vpack.c.b16 %v3076, %v3068
    %v4693 = vpack.c.b16 %v3077, %v3069
    %v4694 = vpack.c.b16 %v3078, %v3070
    %v4695 = vpack.c.b16 %v3087, %v3079
    %v4696 = vpack.c.b16 %v3088, %v3080
    %v4697 = vpack.c.b16 %v3089, %v3081
    %v4698 = vpack.c.b16 %v3090, %v3082
    %v4699 = vpack.c.b16 %v3091, %v3083
    %v4700 = vpack.c.b16 %v3092, %v3084
    %v4701 = vpack.c.b16 %v3093, %v3085
    %v4702 = vpack.c.b16 %v3094, %v3086
    %v4703 = vpack.c.b16 %v3103, %v3095
    %v4704 = vpack.c.b16 %v3104, %v3096
    %v4705 = vpack.c.b16 %v3105, %v3097
    %v4706 = vpack.c.b16 %v3106, %v3098
    %v4707 = vpack.c.b16 %v3107, %v3099
    %v4708 = vpack.c.b16 %v3108, %v3100
    %v4709 = vpack.c.b16 %v3109, %v3101
    %v4710 = vpack.c.b16 %v3110, %v3102
    %v4711 = vpack.c.b16 %v3119, %v3111
    %v4712 = vpack.c.b16 %v3120, %v3112
    %v4713 = vpack.c.b16 %v3121, %v3113
    %v4714 = vpack.c.b16 %v3122, %v3114
    %v4715 = vpack.c.b16 %v3123, %v3115
    %v4716 = vpack.c.b16 %v3124, %v3116
    %v4717 = vpack.c.b16 %v3125, %v3117
    %v4718 = vpack.c.b16 %v3126, %v3118
    %v4719 = vpack.c.b16 %v3135, %v3127
    %v4720 = vpack.c.b16 %v3136, %v3128
    %v4721 = vpack.c.b16 %v3137, %v3129
    %v4722 = vpack.c.b16 %v3138, %v3130
    %v4723 = vpack.c.b16 %v3139, %v3131
    %v4724 = vpack.c.b16 %v3140, %v3132
    %v4725 = vpack.c.b16 %v3141, %v3133
    %v4726 = vpack.c.b16 %v3142, %v3134
    %v4727 = vpack.c.b16 %v3151, %v3143
    %v4728 = vpack.c.b16 %v3152, %v3144
    %v4729 = vpack.c.b16 %v3153, %v3145
    %v4730 = vpack.c.b16 %v3154, %v3146
    %v4731 = vpack.c.b16 %v3155, %v3147
    %v4732 = vpack.c.b16 %v3156, %v3148
    %v4733 = vpack.c.b16 %v3157, %v3149
    %v4734 = vpack.c.b16 %v3158, %v3150
    %v4735 = vpack.c.b16 %v3167, %v3159
    %v4736 = vpack.c.b16 %v3168, %v3160
    %v4737 = vpack.c.b16 %v3169, %v3161
    %v4738 = vpack.c.b16 %v3170, %v3162
    %v4739 = vpack.c.b16 %v3171, %v3163
    %v4740 = vpack.c.b16 %v3172, %v3164
    %v4741 = vpack.c.b16 %v3173, %v3165
    %v4742 = vpack.c.b16 %v3174, %v3166
    %v4743 = vpack.c.b16 %v3183, %v3175
    %v4744 = vpack.c.b16 %v3184, %v3176
    %v4745 = vpack.c.b16 %v3185, %v3177
    %v4746 = vpack.c.b16 %v3186, %v3178
    %v4747 = vpack.c.b16 %v3187, %v3179
    %v4748 = vpack.c.b16 %v3188, %v3180
    %v4749 = vpack.c.b16 %v3189, %v3181
    %v4750 = vpack.c.b16 %v3190, %v3182
    %v4751 = vpack.c.b16 %v3199, %v3191
    %v4752 = vpack.c.b16 %v3200, %v3192
    %v4753 = vpack.c.b16 %v3201, %v3193
    %v4754 = vpack.c.b16 %v3202, %v3194
    %v4755 = vpack.c.b16 %v3203, %v3195
    %v4756 = vpack.c.b16 %v3204, %v3196
    %v4757 = vpack.c.b16 %v3205, %v3197
    %v4758 = vpack.c.b16 %v3206, %v3198
    %v4759 = vpack.c.b16 %v3215, %v3207
    %v4760 = vpack.c.b16 %v3216, %v3208
    %v4761 = vpack.c.b16 %v3217, %v3209
    %v4762 = vpack.c.b16 %v3218, %v3210
    %v4763 = vpack.c.b16 %v3219, %v3211
    %v4764 = vpack.c.b16 %v3220, %v3212
    %v4765 = vpack.c.b16 %v3221, %v3213
    %v4766 = vpack.c.b16 %v3222, %v3214
    %v4767 = vpack.c.b16 %v3231, %v3223
    %v4768 = vpack.c.b16 %v3232, %v3224
    %v4769 = vpack.c.b16 %v3233, %v3225
    %v4770 = vpack.c.b16 %v3234, %v3226
    %v4771 = vpack.c.b16 %v3235, %v3227
    %v4772 = vpack.c.b16 %v3236, %v3228
    %v4773 = vpack.c.b16 %v3237, %v3229
    %v4774 = vpack.c.b16 %v3238, %v3230
    %v4775 = vpack.c.b16 %v3247, %v3239
    %v4776 = vpack.c.b16 %v3248, %v3240
    %v4777 = vpack.c.b16 %v3249, %v3241
    %v4778 = vpack.c.b16 %v3250, %v3242
    %v4779 = vpack.c.b16 %v3251, %v3243
    %v4780 = vpack.c.b16 %v3252, %v3244
    %v4781 = vpack.c.b16 %v3253, %v3245
    %v4782 = vpack.c.b16 %v3254, %v3246
    %v4783 = vpack.c.b16 %v3263, %v3255
    %v4784 = vpack.c.b16 %v3264, %v3256
    %v4785 = vpack.c.b16 %v3265, %v3257
    %v4786 = vpack.c.b16 %v3266, %v3258
    %v4787 = vpack.c.b16 %v3267, %v3259
    %v4788 = vpack.c.b16 %v3268, %v3260
    %v4789 = vpack.c.b16 %v3269, %v3261
    %v4790 = vpack.c.b16 %v3270, %v3262
    %v4791 = vpack.c.b16 %v3279, %v3271
    %v4792 = vpack.c.b16 %v3280, %v3272
    %v4793 = vpack.c.b16 %v3281, %v3273
    %v4794 = vpack.c.b16 %v3282, %v3274
    %v4795 = vpack.c.b16 %v3283, %v3275
    %v4796 = vpack.c.b16 %v3284, %v3276
    %v4797 = vpack.c.b16 %v3285, %v3277
    %v4798 = vpack.c.b16 %v3286, %v3278
    %v4799 = vpack.c.b16 %v3295, %v3287
    %v4800 = vpack.c.b16 %v3296, %v3288
    %v4801 = vpack.c.b16 %v3297, %v3289
    %v4802 = vpack.c.b16 %v3298, %v3290
    %v4803 = vpack.c.b16 %v3299, %v3291
    %v4804 = vpack.c.b16 %v3300, %v3292
    %v4805 = vpack.c.b16 %v3301, %v3293
    %v4806 = vpack.c.b16 %v3302, %v3294
    %v4807 = vpack.c.b16 %v3311, %v3303
    %v4808 = vpack.c.b16 %v3312, %v3304
    %v4809 = vpack.c.b16 %v3313, %v3305
    %v4810 = vpack.c.b16 %v3314, %v3306
    %v4811 = vpack.c.b16 %v3315, %v3307
    %v4812 = vpack.c.b16 %v3316, %v3308
    %v4813 = vpack.c.b16 %v3317, %v3309
    %v4814 = vpack.c.b16 %v3318, %v3310
    %v4815 = vpack.c.b16 %v3327, %v3319
    %v4816 = vpack.c.b16 %v3328, %v3320
    %v4817 = vpack.c.b16 %v3329, %v3321
    %v4818 = vpack.c.b16 %v3330, %v3322
    %v4819 = vpack.c.b16 %v3331, %v3323
    %v4820 = vpack.c.b16 %v3332, %v3324
    %v4821 = vpack.c.b16 %v3333, %v3325
    %v4822 = vpack.c.b16 %v3334, %v3326
    %v4823 = vpack.c.b16 %v3343, %v3335
    %v4824 = vpack.c.b16 %v3344, %v3336
    %v4825 = vpack.c.b16 %v3345, %v3337
    %v4826 = vpack.c.b16 %v3346, %v3338
    %v4827 = vpack.c.b16 %v3347, %v3339
    %v4828 = vpack.c.b16 %v3348, %v3340
    %v4829 = vpack.c.b16 %v3349, %v3341
    %v4830 = vpack.c.b16 %v3350, %v3342
    %v4831 = vpack.c.b16 %v3359, %v3351
    %v4832 = vpack.c.b16 %v3360, %v3352
    %v4833 = vpack.c.b16 %v3361, %v3353
    %v4834 = vpack.c.b16 %v3362, %v3354
    %v4835 = vpack.c.b16 %v3363, %v3355
    %v4836 = vpack.c.b16 %v3364, %v3356
    %v4837 = vpack.c.b16 %v3365, %v3357
    %v4838 = vpack.c.b16 %v3366, %v3358
    %v4839 = vpack.c.b16 %v3375, %v3367
    %v4840 = vpack.c.b16 %v3376, %v3368
    %v4841 = vpack.c.b16 %v3377, %v3369
    %v4842 = vpack.c.b16 %v3378, %v3370
    %v4843 = vpack.c.b16 %v3379, %v3371
    %v4844 = vpack.c.b16 %v3380, %v3372
    %v4845 = vpack.c.b16 %v3381, %v3373
    %v4846 = vpack.c.b16 %v3382, %v3374
    %v4847 = vpack.c.b16 %v3391, %v3383
    %v4848 = vpack.c.b16 %v3392, %v3384
    %v4849 = vpack.c.b16 %v3393, %v3385
    %v4850 = vpack.c.b16 %v3394, %v3386
    %v4851 = vpack.c.b16 %v3395, %v3387
    %v4852 = vpack.c.b16 %v3396, %v3388
    %v4853 = vpack.c.b16 %v3397, %v3389
    %v4854 = vpack.c.b16 %v3398, %v3390
    %v4855 = vpack.c.b16 %v3407, %v3399
    %v4856 = vpack.c.b16 %v3408, %v3400
    %v4857 = vpack.c.b16 %v3409, %v3401
    %v4858 = vpack.c.b16 %v3410, %v3402
    %v4859 = vpack.c.b16 %v3411, %v3403
    %v4860 = vpack.c.b16 %v3412, %v3404
    %v4861 = vpack.c.b16 %v3413, %v3405
    %v4862 = vpack.c.b16 %v3414, %v3406
    %v4863 = vpack.c.b16 %v3423, %v3415
    %v4864 = vpack.c.b16 %v3424, %v3416
    %v4865 = vpack.c.b16 %v3425, %v3417
    %v4866 = vpack.c.b16 %v3426, %v3418
    %v4867 = vpack.c.b16 %v3427, %v3419
    %v4868 = vpack.c.b16 %v3428, %v3420
    %v4869 = vpack.c.b16 %v3429, %v3421
    %v4870 = vpack.c.b16 %v3430, %v3422
    %v4871 = vpack.c.b16 %v3439, %v3431
    %v4872 = vpack.c.b16 %v3440, %v3432
    %v4873 = vpack.c.b16 %v3441, %v3433
    %v4874 = vpack.c.b16 %v3442, %v3434
    %v4875 = vpack.c.b16 %v3443, %v3435
    %v4876 = vpack.c.b16 %v3444, %v3436
    %v4877 = vpack.c.b16 %v3445, %v3437
    %v4878 = vpack.c.b16 %v3446, %v3438
    %v4879 = vpack.c.b16 %v3455, %v3447
    %v4880 = vpack.c.b16 %v3456, %v3448
    %v4881 = vpack.c.b16 %v3457, %v3449
    %v4882 = vpack.c.b16 %v3458, %v3450
    %v4883 = vpack.c.b16 %v3459, %v3451
    %v4884 = vpack.c.b16 %v3460, %v3452
    %v4885 = vpack.c.b16 %v3461, %v3453
    %v4886 = vpack.c.b16 %v3462, %v3454
    %v4887 = vpack.c.b16 %v3471, %v3463
    %v4888 = vpack.c.b16 %v3472, %v3464
    %v4889 = vpack.c.b16 %v3473, %v3465
    %v4890 = vpack.c.b16 %v3474, %v3466
    %v4891 = vpack.c.b16 %v3475, %v3467
    %v4892 = vpack.c.b16 %v3476, %v3468
    %v4893 = vpack.c.b16 %v3477, %v3469
    %v4894 = vpack.c.b16 %v3478, %v3470
    %v4895 = vpack.c.b16 %v3487, %v3479
    %v4896 = vpack.c.b16 %v3488, %v3480
    %v4897 = vpack.c.b16 %v3489, %v3481
    %v4898 = vpack.c.b16 %v3490, %v3482
    %v4899 = vpack.c.b16 %v3491, %v3483
    %v4900 = vpack.c.b16 %v3492, %v3484
    %v4901 = vpack.c.b16 %v3493, %v3485
    %v4902 = vpack.c.b16 %v3494, %v3486
    %v4903 = vpack.c.b16 %v3503, %v3495
    %v4904 = vpack.c.b16 %v3504, %v3496
    %v4905 = vpack.c.b16 %v3505, %v3497
    %v4906 = vpack.c.b16 %v3506, %v3498
    %v4907 = vpack.c.b16 %v3507, %v3499
    %v4908 = vpack.c.b16 %v3508, %v3500
    %v4909 = vpack.c.b16 %v3509, %v3501
    %v4910 = vpack.c.b16 %v3510, %v3502
    %v4911 = vpack.c.b16 %v3519, %v3511
    %v4912 = vpack.c.b16 %v3520, %v3512
    %v4913 = vpack.c.b16 %v3521, %v3513
    %v4914 = vpack.c.b16 %v3522, %v3514
    %v4915 = vpack.c.b16 %v3523, %v3515
    %v4916 = vpack.c.b16 %v3524, %v3516
    %v4917 = vpack.c.b16 %v3525, %v3517
    %v4918 = vpack.c.b16 %v3526, %v3518
    %v4919 = vpack.c.b16 %v3535, %v3527
    %v4920 = vpack.c.b16 %v3536, %v3528
    %v4921 = vpack.c.b16 %v3537, %v3529
    %v4922 = vpack.c.b16 %v3538, %v3530
    %v4923 = vpack.c.b16 %v3539, %v3531
    %v4924 = vpack.c.b16 %v3540, %v3532
    %v4925 = vpack.c.b16 %v3541, %v3533
    %v4926 = vpack.c.b16 %v3542, %v3534
    %v4927 = vpack.c.b16 %v3551, %v3543
    %v4928 = vpack.c.b16 %v3552, %v3544
    %v4929 = vpack.c.b16 %v3553, %v3545
    %v4930 = vpack.c.b16 %v3554, %v3546
    %v4931 = vpack.c.b16 %v3555, %v3547
    %v4932 = vpack.c.b16 %v3556, %v3548
    %v4933 = vpack.c.b16 %v3557, %v3549
    %v4934 = vpack.c.b16 %v3558, %v3550
    %v4935 = vpack.c.b16 %v3567, %v3559
    %v4936 = vpack.c.b16 %v3568, %v3560
    %v4937 = vpack.c.b16 %v3569, %v3561
    %v4938 = vpack.c.b16 %v3570, %v3562
    %v4939 = vpack.c.b16 %v3571, %v3563
    %v4940 = vpack.c.b16 %v3572, %v3564
    %v4941 = vpack.c.b16 %v3573, %v3565
    %v4942 = vpack.c.b16 %v3574, %v3566
    %v4943 = vpack.c.b16 %v3583, %v3575
    %v4944 = vpack.c.b16 %v3584, %v3576
    %v4945 = vpack.c.b16 %v3585, %v3577
    %v4946 = vpack.c.b16 %v3586, %v3578
    %v4947 = vpack.c.b16 %v3587, %v3579
    %v4948 = vpack.c.b16 %v3588, %v3580
    %v4949 = vpack.c.b16 %v3589, %v3581
    %v4950 = vpack.c.b16 %v3590, %v3582
    %v4951 = vpack.c.b16 %v3599, %v3591
    %v4952 = vpack.c.b16 %v3600, %v3592
    %v4953 = vpack.c.b16 %v3601, %v3593
    %v4954 = vpack.c.b16 %v3602, %v3594
    %v4955 = vpack.c.b16 %v3603, %v3595
    %v4956 = vpack.c.b16 %v3604, %v3596
    %v4957 = vpack.c.b16 %v3605, %v3597
    %v4958 = vpack.c.b16 %v3606, %v3598
    %v4959 = vpack.c.b16 %v3615, %v3607
    %v4960 = vpack.c.b16 %v3616, %v3608
    %v4961 = vpack.c.b16 %v3617, %v3609
    %v4962 = vpack.c.b16 %v3618, %v3610
    %v4963 = vpack.c.b16 %v3619, %v3611
    %v4964 = vpack.c.b16 %v3620, %v3612
    %v4965 = vpack.c.b16 %v3621, %v3613
    %v4966 = vpack.c.b16 %v3622, %v3614
    %v4967 = vpack.c.b16 %v3631, %v3623
    %v4968 = vpack.c.b16 %v3632, %v3624
    %v4969 = vpack.c.b16 %v3633, %v3625
    %v4970 = vpack.c.b16 %v3634, %v3626
    %v4971 = vpack.c.b16 %v3635, %v3627
    %v4972 = vpack.c.b16 %v3636, %v3628
    %v4973 = vpack.c.b16 %v3637, %v3629
    %v4974 = vpack.c.b16 %v3638, %v3630
    %v4975 = vpack.c.b16 %v3647, %v3639
    %v4976 = vpack.c.b16 %v3648, %v3640
    %v4977 = vpack.c.b16 %v3649, %v3641
    %v4978 = vpack.c.b16 %v3650, %v3642
    %v4979 = vpack.c.b16 %v3651, %v3643
    %v4980 = vpack.c.b16 %v3652, %v3644
    %v4981 = vpack.c.b16 %v3653, %v3645
    %v4982 = vpack.c.b16 %v3654, %v3646
    %v4983 = vpack.c.b16 %v3663, %v3655
    %v4984 = vpack.c.b16 %v3664, %v3656
    %v4985 = vpack.c.b16 %v3665, %v3657
    %v4986 = vpack.c.b16 %v3666, %v3658
    %v4987 = vpack.c.b16 %v3667, %v3659
    %v4988 = vpack.c.b16 %v3668, %v3660
    %v4989 = vpack.c.b16 %v3669, %v3661
    %v4990 = vpack.c.b16 %v3670, %v3662
    %v4991 = vpack.c.b16 %v3679, %v3671
    %v4992 = vpack.c.b16 %v3680, %v3672
    %v4993 = vpack.c.b16 %v3681, %v3673
    %v4994 = vpack.c.b16 %v3682, %v3674
    %v4995 = vpack.c.b16 %v3683, %v3675
    %v4996 = vpack.c.b16 %v3684, %v3676
    %v4997 = vpack.c.b16 %v3685, %v3677
    %v4998 = vpack.c.b16 %v3686, %v3678
    %v4999 = vpack.c.b16 %v3695, %v3687
    %v5000 = vpack.c.b16 %v3696, %v3688
    %v5001 = vpack.c.b16 %v3697, %v3689
    %v5002 = vpack.c.b16 %v3698, %v3690
    %v5003 = vpack.c.b16 %v3699, %v3691
    %v5004 = vpack.c.b16 %v3700, %v3692
    %v5005 = vpack.c.b16 %v3701, %v3693
    %v5006 = vpack.c.b16 %v3702, %v3694
    %v5007 = vpack.c.b16 %v3711, %v3703
    %v5008 = vpack.c.b16 %v3712, %v3704
    %v5009 = vpack.c.b16 %v3713, %v3705
    %v5010 = vpack.c.b16 %v3714, %v3706
    %v5011 = vpack.c.b16 %v3715, %v3707
    %v5012 = vpack.c.b16 %v3716, %v3708
    %v5013 = vpack.c.b16 %v3717, %v3709
    %v5014 = vpack.c.b16 %v3718, %v3710
    %v5015 = vpack.c.b16 %v3727, %v3719
    %v5016 = vpack.c.b16 %v3728, %v3720
    %v5017 = vpack.c.b16 %v3729, %v3721
    %v5018 = vpack.c.b16 %v3730, %v3722
    %v5019 = vpack.c.b16 %v3731, %v3723
    %v5020 = vpack.c.b16 %v3732, %v3724
    %v5021 = vpack.c.b16 %v3733, %v3725
    %v5022 = vpack.c.b16 %v3734, %v3726
    %v5023 = vpack.c.b16 %v3743, %v3735
    %v5024 = vpack.c.b16 %v3744, %v3736
    %v5025 = vpack.c.b16 %v3745, %v3737
    %v5026 = vpack.c.b16 %v3746, %v3738
    %v5027 = vpack.c.b16 %v3747, %v3739
    %v5028 = vpack.c.b16 %v3748, %v3740
    %v5029 = vpack.c.b16 %v3749, %v3741
    %v5030 = vpack.c.b16 %v3750, %v3742
    %v5031 = vpack.c.b16 %v3759, %v3751
    %v5032 = vpack.c.b16 %v3760, %v3752
    %v5033 = vpack.c.b16 %v3761, %v3753
    %v5034 = vpack.c.b16 %v3762, %v3754
    %v5035 = vpack.c.b16 %v3763, %v3755
    %v5036 = vpack.c.b16 %v3764, %v3756
    %v5037 = vpack.c.b16 %v3765, %v3757
    %v5038 = vpack.c.b16 %v3766, %v3758
    %v5039 = vpack.c.b16 %v3775, %v3767
    %v5040 = vpack.c.b16 %v3776, %v3768
    %v5041 = vpack.c.b16 %v3777, %v3769
    %v5042 = vpack.c.b16 %v3778, %v3770
    %v5043 = vpack.c.b16 %v3779, %v3771
    %v5044 = vpack.c.b16 %v3780, %v3772
    %v5045 = vpack.c.b16 %v3781, %v3773
    %v5046 = vpack.c.b16 %v3782, %v3774
    %v5047 = vpack.c.b16 %v3791, %v3783
    %v5048 = vpack.c.b16 %v3792, %v3784
    %v5049 = vpack.c.b16 %v3793, %v3785
    %v5050 = vpack.c.b16 %v3794, %v3786
    %v5051 = vpack.c.b16 %v3795, %v3787
    %v5052 = vpack.c.b16 %v3796, %v3788
    %v5053 = vpack.c.b16 %v3797, %v3789
    %v5054 = vpack.c.b16 %v3798, %v3790
    %v5055 = vpack.c.b16 %v3807, %v3799
    %v5056 = vpack.c.b16 %v3808, %v3800
    %v5057 = vpack.c.b16 %v3809, %v3801
    %v5058 = vpack.c.b16 %v3810, %v3802
    %v5059 = vpack.c.b16 %v3811, %v3803
    %v5060 = vpack.c.b16 %v3812, %v3804
    %v5061 = vpack.c.b16 %v3813, %v3805
    %v5062 = vpack.c.b16 %v3814, %v3806
    %v5063 = vpack.c.b16 %v3823, %v3815
    %v5064 = vpack.c.b16 %v3824, %v3816
    %v5065 = vpack.c.b16 %v3825, %v3817
    %v5066 = vpack.c.b16 %v3826, %v3818
    %v5067 = vpack.c.b16 %v3827, %v3819
    %v5068 = vpack.c.b16 %v3828, %v3820
    %v5069 = vpack.c.b16 %v3829, %v3821
    %v5070 = vpack.c.b16 %v3830, %v3822
    %v5071 = vpack.c.b16 %v3839, %v3831
    %v5072 = vpack.c.b16 %v3840, %v3832
    %v5073 = vpack.c.b16 %v3841, %v3833
    %v5074 = vpack.c.b16 %v3842, %v3834
    %v5075 = vpack.c.b16 %v3843, %v3835
    %v5076 = vpack.c.b16 %v3844, %v3836
    %v5077 = vpack.c.b16 %v3845, %v3837
    %v5078 = vpack.c.b16 %v3846, %v3838
    %v5079 = vpack.c.b16 %v3855, %v3847
    %v5080 = vpack.c.b16 %v3856, %v3848
    %v5081 = vpack.c.b16 %v3857, %v3849
    %v5082 = vpack.c.b16 %v3858, %v3850
    %v5083 = vpack.c.b16 %v3859, %v3851
    %v5084 = vpack.c.b16 %v3860, %v3852
    %v5085 = vpack.c.b16 %v3861, %v3853
    %v5086 = vpack.c.b16 %v3862, %v3854
    %v5087 = vpack.c.b16 %v3871, %v3863
    %v5088 = vpack.c.b16 %v3872, %v3864
    %v5089 = vpack.c.b16 %v3873, %v3865
    %v5090 = vpack.c.b16 %v3874, %v3866
    %v5091 = vpack.c.b16 %v3875, %v3867
    %v5092 = vpack.c.b16 %v3876, %v3868
    %v5093 = vpack.c.b16 %v3877, %v3869
    %v5094 = vpack.c.b16 %v3878, %v3870
    %v5095 = vpack.c.b16 %v3887, %v3879
    %v5096 = vpack.c.b16 %v3888, %v3880
    %v5097 = vpack.c.b16 %v3889, %v3881
    %v5098 = vpack.c.b16 %v3890, %v3882
    %v5099 = vpack.c.b16 %v3891, %v3883
    %v5100 = vpack.c.b16 %v3892, %v3884
    %v5101 = vpack.c.b16 %v3893, %v3885
    %v5102 = vpack.c.b16 %v3894, %v3886
    %v5103 = vpack.c.b16 %v3903, %v3895
    %v5104 = vpack.c.b16 %v3904, %v3896
    %v5105 = vpack.c.b16 %v3905, %v3897
    %v5106 = vpack.c.b16 %v3906, %v3898
    %v5107 = vpack.c.b16 %v3907, %v3899
    %v5108 = vpack.c.b16 %v3908, %v3900
    %v5109 = vpack.c.b16 %v3909, %v3901
    %v5110 = vpack.c.b16 %v3910, %v3902
    %v5111 = vpack.c.b16 %v3919, %v3911
    %v5112 = vpack.c.b16 %v3920, %v3912
    %v5113 = vpack.c.b16 %v3921, %v3913
    %v5114 = vpack.c.b16 %v3922, %v3914
    %v5115 = vpack.c.b16 %v3923, %v3915
    %v5116 = vpack.c.b16 %v3924, %v3916
    %v5117 = vpack.c.b16 %v3925, %v3917
    %v5118 = vpack.c.b16 %v3926, %v3918
    %v5119 = vpack.c.b16 %v3935, %v3927
    %v5120 = vpack.c.b16 %v3936, %v3928
    %v5121 = vpack.c.b16 %v3937, %v3929
    %v5122 = vpack.c.b16 %v3938, %v3930
    %v5123 = vpack.c.b16 %v3939, %v3931
    %v5124 = vpack.c.b16 %v3940, %v3932
    %v5125 = vpack.c.b16 %v3941, %v3933
    %v5126 = vpack.c.b16 %v3942, %v3934
    %v5127 = vpack.c.b16 %v3951, %v3943
    %v5128 = vpack.c.b16 %v3952, %v3944
    %v5129 = vpack.c.b16 %v3953, %v3945
    %v5130 = vpack.c.b16 %v3954, %v3946
    %v5131 = vpack.c.b16 %v3955, %v3947
    %v5132 = vpack.c.b16 %v3956, %v3948
    %v5133 = vpack.c.b16 %v3957, %v3949
    %v5134 = vpack.c.b16 %v3958, %v3950
    %v5135 = vpack.c.b16 %v3967, %v3959
    %v5136 = vpack.c.b16 %v3968, %v3960
    %v5137 = vpack.c.b16 %v3969, %v3961
    %v5138 = vpack.c.b16 %v3970, %v3962
    %v5139 = vpack.c.b16 %v3971, %v3963
    %v5140 = vpack.c.b16 %v3972, %v3964
    %v5141 = vpack.c.b16 %v3973, %v3965
    %v5142 = vpack.c.b16 %v3974, %v3966
    %v5143 = vpack.c.b16 %v3983, %v3975
    %v5144 = vpack.c.b16 %v3984, %v3976
    %v5145 = vpack.c.b16 %v3985, %v3977
    %v5146 = vpack.c.b16 %v3986, %v3978
    %v5147 = vpack.c.b16 %v3987, %v3979
    %v5148 = vpack.c.b16 %v3988, %v3980
    %v5149 = vpack.c.b16 %v3989, %v3981
    %v5150 = vpack.c.b16 %v3990, %v3982
    %v5151 = vpack.c.b16 %v3999, %v3991
    %v5152 = vpack.c.b16 %v4000, %v3992
    %v5153 = vpack.c.b16 %v4001, %v3993
    %v5154 = vpack.c.b16 %v4002, %v3994
    %v5155 = vpack.c.b16 %v4003, %v3995
    %v5156 = vpack.c.b16 %v4004, %v3996
    %v5157 = vpack.c.b16 %v4005, %v3997
    %v5158 = vpack.c.b16 %v4006, %v3998
    %v5159 = vpack.c.b16 %v4015, %v4007
    %v5160 = vpack.c.b16 %v4016, %v4008
    %v5161 = vpack.c.b16 %v4017, %v4009
    %v5162 = vpack.c.b16 %v4018, %v4010
    %v5163 = vpack.c.b16 %v4019, %v4011
    %v5164 = vpack.c.b16 %v4020, %v4012
    %v5165 = vpack.c.b16 %v4021, %v4013
    %v5166 = vpack.c.b16 %v4022, %v4014
    %v5167 = vpack.c.b16 %v4031, %v4023
    %v5168 = vpack.c.b16 %v4032, %v4024
    %v5169 = vpack.c.b16 %v4033, %v4025
    %v5170 = vpack.c.b16 %v4034, %v4026
    %v5171 = vpack.c.b16 %v4035, %v4027
    %v5172 = vpack.c.b16 %v4036, %v4028
    %v5173 = vpack.c.b16 %v4037, %v4029
    %v5174 = vpack.c.b16 %v4038, %v4030
    %v5175 = vpack.c.b16 %v4047, %v4039
    %v5176 = vpack.c.b16 %v4048, %v4040
    %v5177 = vpack.c.b16 %v4049, %v4041
    %v5178 = vpack.c.b16 %v4050, %v4042
    %v5179 = vpack.c.b16 %v4051, %v4043
    %v5180 = vpack.c.b16 %v4052, %v4044
    %v5181 = vpack.c.b16 %v4053, %v4045
    %v5182 = vpack.c.b16 %v4054, %v4046
    %v5183 = vpack.c.b16 %v4063, %v4055
    %v5184 = vpack.c.b16 %v4064, %v4056
    %v5185 = vpack.c.b16 %v4065, %v4057
    %v5186 = vpack.c.b16 %v4066, %v4058
    %v5187 = vpack.c.b16 %v4067, %v4059
    %v5188 = vpack.c.b16 %v4068, %v4060
    %v5189 = vpack.c.b16 %v4069, %v4061
    %v5190 = vpack.c.b16 %v4070, %v4062
    %v5191 = vpack.c.b16 %v4079, %v4071
    %v5192 = vpack.c.b16 %v4080, %v4072
    %v5193 = vpack.c.b16 %v4081, %v4073
    %v5194 = vpack.c.b16 %v4082, %v4074
    %v5195 = vpack.c.b16 %v4083, %v4075
    %v5196 = vpack.c.b16 %v4084, %v4076
    %v5197 = vpack.c.b16 %v4085, %v4077
    %v5198 = vpack.c.b16 %v4086, %v4078
    %v5199 = vpack.c.b16 %v4095, %v4087
    %v5200 = vpack.c.b16 %v4096, %v4088
    %v5201 = vpack.c.b16 %v4097, %v4089
    %v5202 = vpack.c.b16 %v4098, %v4090
    %v5203 = vpack.c.b16 %v4099, %v4091
    %v5204 = vpack.c.b16 %v4100, %v4092
    %v5205 = vpack.c.b16 %v4101, %v4093
    %v5206 = vpack.c.b16 %v4102, %v4094
    %v5207 = vpack.c.b16 %v4111, %v4103
    %v5208 = vpack.c.b16 %v4112, %v4104
    %v5209 = vpack.c.b16 %v4113, %v4105
    %v5210 = vpack.c.b16 %v4114, %v4106
    %v5211 = vpack.c.b16 %v4115, %v4107
    %v5212 = vpack.c.b16 %v4116, %v4108
    %v5213 = vpack.c.b16 %v4117, %v4109
    %v5214 = vpack.c.b16 %v4118, %v4110
    %v5215 = vpack.c.b16 %v4127, %v4119
    %v5216 = vpack.c.b16 %v4128, %v4120
    %v5217 = vpack.c.b16 %v4129, %v4121
    %v5218 = vpack.c.b16 %v4130, %v4122
    %v5219 = vpack.c.b16 %v4131, %v4123
    %v5220 = vpack.c.b16 %v4132, %v4124
    %v5221 = vpack.c.b16 %v4133, %v4125
    %v5222 = vpack.c.b16 %v4134, %v4126
    %v5223 = vpack.c.b16 %v4143, %v4135
    %v5224 = vpack.c.b16 %v4144, %v4136
    %v5225 = vpack.c.b16 %v4145, %v4137
    %v5226 = vpack.c.b16 %v4146, %v4138
    %v5227 = vpack.c.b16 %v4147, %v4139
    %v5228 = vpack.c.b16 %v4148, %v4140
    %v5229 = vpack.c.b16 %v4149, %v4141
    %v5230 = vpack.c.b16 %v4150, %v4142
    %v5231 = vpack.c.b16 %v4159, %v4151
    %v5232 = vpack.c.b16 %v4160, %v4152
    %v5233 = vpack.c.b16 %v4161, %v4153
    %v5234 = vpack.c.b16 %v4162, %v4154
    %v5235 = vpack.c.b16 %v4163, %v4155
    %v5236 = vpack.c.b16 %v4164, %v4156
    %v5237 = vpack.c.b16 %v4165, %v4157
    %v5238 = vpack.c.b16 %v4166, %v4158
    %v5239 = vpack.c.b16 %v4175, %v4167
    %v5240 = vpack.c.b16 %v4176, %v4168
    %v5241 = vpack.c.b16 %v4177, %v4169
    %v5242 = vpack.c.b16 %v4178, %v4170
    %v5243 = vpack.c.b16 %v4179, %v4171
    %v5244 = vpack.c.b16 %v4180, %v4172
    %v5245 = vpack.c.b16 %v4181, %v4173
    %v5246 = vpack.c.b16 %v4182, %v4174
    %v5247 = vpack.c.b16 %v4191, %v4183
    %v5248 = vpack.c.b16 %v4192, %v4184
    %v5249 = vpack.c.b16 %v4193, %v4185
    %v5250 = vpack.c.b16 %v4194, %v4186
    %v5251 = vpack.c.b16 %v4195, %v4187
    %v5252 = vpack.c.b16 %v4196, %v4188
    %v5253 = vpack.c.b16 %v4197, %v4189
    %v5254 = vpack.c.b16 %v4198, %v4190
    %v5255 = vpack.c.b16 %v4207, %v4199
    %v5256 = vpack.c.b16 %v4208, %v4200
    %v5257 = vpack.c.b16 %v4209, %v4201
    %v5258 = vpack.c.b16 %v4210, %v4202
    %v5259 = vpack.c.b16 %v4211, %v4203
    %v5260 = vpack.c.b16 %v4212, %v4204
    %v5261 = vpack.c.b16 %v4213, %v4205
    %v5262 = vpack.c.b16 %v4214, %v4206
    %v5263 = vpack.c.b16 %v4223, %v4215
    %v5264 = vpack.c.b16 %v4224, %v4216
    %v5265 = vpack.c.b16 %v4225, %v4217
    %v5266 = vpack.c.b16 %v4226, %v4218
    %v5267 = vpack.c.b16 %v4227, %v4219
    %v5268 = vpack.c.b16 %v4228, %v4220
    %v5269 = vpack.c.b16 %v4229, %v4221
    %v5270 = vpack.c.b16 %v4230, %v4222
    %v5271 = vpack.c.b16 %v4239, %v4231
    %v5272 = vpack.c.b16 %v4240, %v4232
    %v5273 = vpack.c.b16 %v4241, %v4233
    %v5274 = vpack.c.b16 %v4242, %v4234
    %v5275 = vpack.c.b16 %v4243, %v4235
    %v5276 = vpack.c.b16 %v4244, %v4236
    %v5277 = vpack.c.b16 %v4245, %v4237
    %v5278 = vpack.c.b16 %v4246, %v4238
    %v5279 = vpack.c.b16 %v4255, %v4247
    %v5280 = vpack.c.b16 %v4256, %v4248
    %v5281 = vpack.c.b16 %v4257, %v4249
    %v5282 = vpack.c.b16 %v4258, %v4250
    %v5283 = vpack.c.b16 %v4259, %v4251
    %v5284 = vpack.c.b16 %v4260, %v4252
    %v5285 = vpack.c.b16 %v4261, %v4253
    %v5286 = vpack.c.b16 %v4262, %v4254
    %6311 = vmatprep.subr.bf16.mxu0 %v4264
    %6312 = vmatpush1.bf16.msra.mxu0 %v4263
    %6313 = vmatprep.subr.bf16.mxu0 %v4272
    %6314 = vmatpush1.bf16.msra.mxu0 %v4271
    %6315 = vmatprep.subr.bf16.mxu0 %v4280
    %6316 = vmatpush1.bf16.msra.mxu0 %v4279
    %6317 = vmatprep.subr.bf16.mxu0 %v4288
    %6318 = vmatpush1.bf16.msra.mxu0 %v4287
    %6319 = vmatprep.subr.bf16.mxu0 %v4296
    %6320 = vmatpush1.bf16.msra.mxu0 %v4295
    %6321 = vmatprep.subr.bf16.mxu0 %v4304
    %6322 = vmatpush1.bf16.msra.mxu0 %v4303
    %6323 = vmatprep.subr.bf16.mxu0 %v4312
    %6324 = vmatpush1.bf16.msra.mxu0 %v4311
    %6325 = vmatprep.subr.bf16.mxu0 %v4320
    %6326 = vmatpush1.bf16.msra.mxu0 %v4319
    %6327 = vmatprep.subr.bf16.mxu0 %v4328
    %6328 = vmatpush1.bf16.msra.mxu0 %v4327
    %6329 = vmatprep.subr.bf16.mxu0 %v4336
    %6330 = vmatpush1.bf16.msra.mxu0 %v4335
    %6331 = vmatprep.subr.bf16.mxu0 %v4344
    %6332 = vmatpush1.bf16.msra.mxu0 %v4343
    %6333 = vmatprep.subr.bf16.mxu0 %v4352
    %6334 = vmatpush1.bf16.msra.mxu0 %v4351
    %6335 = vmatprep.subr.bf16.mxu0 %v4360
    %6336 = vmatpush1.bf16.msra.mxu0 %v4359
    %6337 = vmatprep.subr.bf16.mxu0 %v4368
    %6338 = vmatpush1.bf16.msra.mxu0 %v4367
    %6339 = vmatprep.subr.bf16.mxu0 %v4376
    %6340 = vmatpush1.bf16.msra.mxu0 %v4375
    %6341 = vmatprep.subr.bf16.mxu0 %v4384
    %6342 = vmatpush1.bf16.msra.mxu0 %v4383
    %6343 = vmatprep.mubr.bf16.mxu0 %v136
    %6344 = vmatmul.mubr.bf16.gmra.mrb[0].mxu0 %v135
    %v6345 = vpop.f32.mrb[0].mxu0
    %v6346 = vadd.f32 0.0, %v6345
    %v6347 = vpop.f32.mrb[0].mxu0
    %v6348 = vadd.f32 0.0, %v6347
    %v6349 = vpop.f32.mrb[0].mxu0
    %v6350 = vadd.f32 0.0, %v6349
    %v6351 = vpop.f32.mrb[0].mxu0
    %v6352 = vadd.f32 0.0, %v6351
    %6353 = vmatprep.mubr.bf16.mxu0 %v152
    %6354 = vmatmul.mubr.bf16.gmra.mrb[0].mxu0 %v151
    %v6355 = vpop.f32.mrb[0].mxu0
    %v6356 = vadd.f32 0.0, %v6355
    %v6357 = vpop.f32.mrb[0].mxu0
    %v6358 = vadd.f32 0.0, %v6357
    %v6359 = vpop.f32.mrb[0].mxu0
    %v6360 = vadd.f32 0.0, %v6359
    %v6361 = vpop.f32.mrb[0].mxu0
    %v6362 = vadd.f32 0.0, %v6361
    %6363 = vdwg.mxu0
    %6364 = vmatprep.subr.bf16.mxu0 %v4392
    %6365 = vmatpush1.bf16.msra.mxu0 %v4391
    %6366 = vmatprep.subr.bf16.mxu0 %v4400
    %6367 = vmatpush1.bf16.msra.mxu0 %v4399
    %6368 = vmatprep.subr.bf16.mxu0 %v4408
    %6369 = vmatpush1.bf16.msra.mxu0 %v4407
    %6370 = vmatprep.subr.bf16.mxu0 %v4416
    %6371 = vmatpush1.bf16.msra.mxu0 %v4415
    %6372 = vmatprep.subr.bf16.mxu0 %v4424
    %6373 = vmatpush1.bf16.msra.mxu0 %v4423
    %6374 = vmatprep.subr.bf16.mxu0 %v4432
    %6375 = vmatpush1.bf16.msra.mxu0 %v4431
    %6376 = vmatprep.subr.bf16.mxu0 %v4440
    %6377 = vmatpush1.bf16.msra.mxu0 %v4439
    %6378 = vmatprep.subr.bf16.mxu0 %v4448
    %6379 = vmatpush1.bf16.msra.mxu0 %v4447
    %6380 = vmatprep.subr.bf16.mxu0 %v4456
    %6381 = vmatpush1.bf16.msra.mxu0 %v4455
    %6382 = vmatprep.subr.bf16.mxu0 %v4464
    %6383 = vmatpush1.bf16.msra.mxu0 %v4463
    %6384 = vmatprep.subr.bf16.mxu0 %v4472
    %6385 = vmatpush1.bf16.msra.mxu0 %v4471
    %6386 = vmatprep.subr.bf16.mxu0 %v4480
    %6387 = vmatpush1.bf16.msra.mxu0 %v4479
    %6388 = vmatprep.subr.bf16.mxu0 %v4488
    %6389 = vmatpush1.bf16.msra.mxu0 %v4487
    %6390 = vmatprep.subr.bf16.mxu0 %v4496
    %6391 = vmatpush1.bf16.msra.mxu0 %v4495
    %6392 = vmatprep.subr.bf16.mxu0 %v4504
    %6393 = vmatpush1.bf16.msra.mxu0 %v4503
    %6394 = vmatprep.subr.bf16.mxu0 %v4512
    %6395 = vmatpush1.bf16.msra.mxu0 %v4511
    %6396 = vmatprep.mubr.bf16.mxu0 %v138
    %6397 = vmatmul.mubr.bf16.gmra.mrb[0].mxu0 %v137
    %v6398 = vpop.f32.mrb[0].mxu0
    %v6399 = vadd.f32 %v6346, %v6398
    %v6400 = vpop.f32.mrb[0].mxu0
    %v6401 = vadd.f32 %v6348, %v6400
    %v6402 = vpop.f32.mrb[0].mxu0
    %v6403 = vadd.f32 %v6350, %v6402
    %v6404 = vpop.f32.mrb[0].mxu0
    %v6405 = vadd.f32 %v6352, %v6404
    %6406 = vmatprep.mubr.bf16.mxu0 %v154
    %6407 = vmatmul.mubr.bf16.gmra.mrb[0].mxu0 %v153
    %v6408 = vpop.f32.mrb[0].mxu0
    %v6409 = vadd.f32 %v6356, %v6408
    %v6410 = vpop.f32.mrb[0].mxu0
    %v6411 = vadd.f32 %v6358, %v6410
    %v6412 = vpop.f32.mrb[0].mxu0
    %v6413 = vadd.f32 %v6360, %v6412
    %v6414 = vpop.f32.mrb[0].mxu0
    %v6415 = vadd.f32 %v6362, %v6414
    %6416 = vdwg.mxu0
    %6417 = vmatprep.subr.bf16.mxu0 %v4520
    %6418 = vmatpush1.bf16.msra.mxu0 %v4519
    %6419 = vmatprep.subr.bf16.mxu0 %v4528
    %6420 = vmatpush1.bf16.msra.mxu0 %v4527
    %6421 = vmatprep.subr.bf16.mxu0 %v4536
    %6422 = vmatpush1.bf16.msra.mxu0 %v4535
    %6423 = vmatprep.subr.bf16.mxu0 %v4544
    %6424 = vmatpush1.bf16.msra.mxu0 %v4543
    %6425 = vmatprep.subr.bf16.mxu0 %v4552
    %6426 = vmatpush1.bf16.msra.mxu0 %v4551
    %6427 = vmatprep.subr.bf16.mxu0 %v4560
    %6428 = vmatpush1.bf16.msra.mxu0 %v4559
    %6429 = vmatprep.subr.bf16.mxu0 %v4568
    %6430 = vmatpush1.bf16.msra.mxu0 %v4567
    %6431 = vmatprep.subr.bf16.mxu0 %v4576
    %6432 = vmatpush1.bf16.msra.mxu0 %v4575
    %6433 = vmatprep.subr.bf16.mxu0 %v4584
    %6434 = vmatpush1.bf16.msra.mxu0 %v4583
    %6435 = vmatprep.subr.bf16.mxu0 %v4592
    %6436 = vmatpush1.bf16.msra.mxu0 %v4591
    %6437 = vmatprep.subr.bf16.mxu0 %v4600
    %6438 = vmatpush1.bf16.msra.mxu0 %v4599
    %6439 = vmatprep.subr.bf16.mxu0 %v4608
    %6440 = vmatpush1.bf16.msra.mxu0 %v4607
    %6441 = vmatprep.subr.bf16.mxu0 %v4616
    %6442 = vmatpush1.bf16.msra.mxu0 %v4615
    %6443 = vmatprep.subr.bf16.mxu0 %v4624
    %6444 = vmatpush1.bf16.msra.mxu0 %v4623
    %6445 = vmatprep.subr.bf16.mxu0 %v4632
    %6446 = vmatpush1.bf16.msra.mxu0 %v4631
    %6447 = vmatprep.subr.bf16.mxu0 %v4640
    %6448 = vmatpush1.bf16.msra.mxu0 %v4639
    %6449 = vmatprep.mubr.bf16.mxu0 %v140
    %6450 = vmatmul.mubr.bf16.gmra.mrb[0].mxu0 %v139
    %v6451 = vpop.f32.mrb[0].mxu0
    %v6452 = vadd.f32 %v6399, %v6451
    %v6453 = vpop.f32.mrb[0].mxu0
    %v6454 = vadd.f32 %v6401, %v6453
    %v6455 = vpop.f32.mrb[0].mxu0
    %v6456 = vadd.f32 %v6403, %v6455
    %v6457 = vpop.f32.mrb[0].mxu0
    %v6458 = vadd.f32 %v6405, %v6457
    %6459 = vmatprep.mubr.bf16.mxu0 %v156
    %6460 = vmatmul.mubr.bf16.gmra.mrb[0].mxu0 %v155
    %v6461 = vpop.f32.mrb[0].mxu0
    %v6462 = vadd.f32 %v6409, %v6461
    %v6463 = vpop.f32.mrb[0].mxu0
    %v6464 = vadd.f32 %v6411, %v6463
    %v6465 = vpop.f32.mrb[0].mxu0
    %v6466 = vadd.f32 %v6413, %v6465
    %v6467 = vpop.f32.mrb[0].mxu0
    %v6468 = vadd.f32 %v6415, %v6467
    %6469 = vdwg.mxu0
    %6470 = vmatprep.subr.bf16.mxu0 %v4648
    %6471 = vmatpush1.bf16.msra.mxu0 %v4647
    %6472 = vmatprep.subr.bf16.mxu0 %v4656
    %6473 = vmatpush1.bf16.msra.mxu0 %v4655
    %6474 = vmatprep.subr.bf16.mxu0 %v4664
    %6475 = vmatpush1.bf16.msra.mxu0 %v4663
    %6476 = vmatprep.subr.bf16.mxu0 %v4672
    %6477 = vmatpush1.bf16.msra.mxu0 %v4671
    %6478 = vmatprep.subr.bf16.mxu0 %v4680
    %6479 = vmatpush1.bf16.msra.mxu0 %v4679
    %6480 = vmatprep.subr.bf16.mxu0 %v4688
    %6481 = vmatpush1.bf16.msra.mxu0 %v4687
    %6482 = vmatprep.subr.bf16.mxu0 %v4696
    %6483 = vmatpush1.bf16.msra.mxu0 %v4695
    %6484 = vmatprep.subr.bf16.mxu0 %v4704
    %6485 = vmatpush1.bf16.msra.mxu0 %v4703
    %6486 = vmatprep.subr.bf16.mxu0 %v4712
    %6487 = vmatpush1.bf16.msra.mxu0 %v4711
    %6488 = vmatprep.subr.bf16.mxu0 %v4720
    %6489 = vmatpush1.bf16.msra.mxu0 %v4719
    %6490 = vmatprep.subr.bf16.mxu0 %v4728
    %6491 = vmatpush1.bf16.msra.mxu0 %v4727
    %6492 = vmatprep.subr.bf16.mxu0 %v4736
    %6493 = vmatpush1.bf16.msra.mxu0 %v4735
    %6494 = vmatprep.subr.bf16.mxu0 %v4744
    %6495 = vmatpush1.bf16.msra.mxu0 %v4743
    %6496 = vmatprep.subr.bf16.mxu0 %v4752
    %6497 = vmatpush1.bf16.msra.mxu0 %v4751
    %6498 = vmatprep.subr.bf16.mxu0 %v4760
    %6499 = vmatpush1.bf16.msra.mxu0 %v4759
    %6500 = vmatprep.subr.bf16.mxu0 %v4768
    %6501 = vmatpush1.bf16.msra.mxu0 %v4767
    %6502 = vmatprep.mubr.bf16.mxu0 %v142
    %6503 = vmatmul.mubr.bf16.gmra.mrb[0].mxu0 %v141
    %v6504 = vpop.f32.mrb[0].mxu0
    %v6505 = vadd.f32 %v6452, %v6504
    %v6506 = vpop.f32.mrb[0].mxu0
    %v6507 = vadd.f32 %v6454, %v6506
    %v6508 = vpop.f32.mrb[0].mxu0
    %v6509 = vadd.f32 %v6456, %v6508
    %v6510 = vpop.f32.mrb[0].mxu0
    %v6511 = vadd.f32 %v6458, %v6510
    %6512 = vmatprep.mubr.bf16.mxu0 %v158
    %6513 = vmatmul.mubr.bf16.gmra.mrb[0].mxu0 %v157
    %v6514 = vpop.f32.mrb[0].mxu0
    %v6515 = vadd.f32 %v6462, %v6514
    %v6516 = vpop.f32.mrb[0].mxu0
    %v6517 = vadd.f32 %v6464, %v6516
    %v6518 = vpop.f32.mrb[0].mxu0
    %v6519 = vadd.f32 %v6466, %v6518
    %v6520 = vpop.f32.mrb[0].mxu0
    %v6521 = vadd.f32 %v6468, %v6520
    %6522 = vdwg.mxu0
    %6523 = vmatprep.subr.bf16.mxu0 %v4776
    %6524 = vmatpush1.bf16.msra.mxu0 %v4775
    %6525 = vmatprep.subr.bf16.mxu0 %v4784
    %6526 = vmatpush1.bf16.msra.mxu0 %v4783
    %6527 = vmatprep.subr.bf16.mxu0 %v4792
    %6528 = vmatpush1.bf16.msra.mxu0 %v4791
    %6529 = vmatprep.subr.bf16.mxu0 %v4800
    %6530 = vmatpush1.bf16.msra.mxu0 %v4799
    %6531 = vmatprep.subr.bf16.mxu0 %v4808
    %6532 = vmatpush1.bf16.msra.mxu0 %v4807
    %6533 = vmatprep.subr.bf16.mxu0 %v4816
    %6534 = vmatpush1.bf16.msra.mxu0 %v4815
    %6535 = vmatprep.subr.bf16.mxu0 %v4824
    %6536 = vmatpush1.bf16.msra.mxu0 %v4823
    %6537 = vmatprep.subr.bf16.mxu0 %v4832
    %6538 = vmatpush1.bf16.msra.mxu0 %v4831
    %6539 = vmatprep.subr.bf16.mxu0 %v4840
    %6540 = vmatpush1.bf16.msra.mxu0 %v4839
    %6541 = vmatprep.subr.bf16.mxu0 %v4848
    %6542 = vmatpush1.bf16.msra.mxu0 %v4847
    %6543 = vmatprep.subr.bf16.mxu0 %v4856
    %6544 = vmatpush1.bf16.msra.mxu0 %v4855
    %6545 = vmatprep.subr.bf16.mxu0 %v4864
    %6546 = vmatpush1.bf16.msra.mxu0 %v4863
    %6547 = vmatprep.subr.bf16.mxu0 %v4872
    %6548 = vmatpush1.bf16.msra.mxu0 %v4871
    %6549 = vmatprep.subr.bf16.mxu0 %v4880
    %6550 = vmatpush1.bf16.msra.mxu0 %v4879
    %6551 = vmatprep.subr.bf16.mxu0 %v4888
    %6552 = vmatpush1.bf16.msra.mxu0 %v4887
    %6553 = vmatprep.subr.bf16.mxu0 %v4896
    %6554 = vmatpush1.bf16.msra.mxu0 %v4895
    %6555 = vmatprep.mubr.bf16.mxu0 %v144
    %6556 = vmatmul.mubr.bf16.gmra.mrb[0].mxu0 %v143
    %v6557 = vpop.f32.mrb[0].mxu0
    %v6558 = vadd.f32 %v6505, %v6557
    %v6559 = vpop.f32.mrb[0].mxu0
    %v6560 = vadd.f32 %v6507, %v6559
    %v6561 = vpop.f32.mrb[0].mxu0
    %v6562 = vadd.f32 %v6509, %v6561
    %v6563 = vpop.f32.mrb[0].mxu0
    %v6564 = vadd.f32 %v6511, %v6563
    %6565 = vmatprep.mubr.bf16.mxu0 %v160
    %6566 = vmatmul.mubr.bf16.gmra.mrb[0].mxu0 %v159
    %v6567 = vpop.f32.mrb[0].mxu0
    %v6568 = vadd.f32 %v6515, %v6567
    %v6569 = vpop.f32.mrb[0].mxu0
    %v6570 = vadd.f32 %v6517, %v6569
    %v6571 = vpop.f32.mrb[0].mxu0
    %v6572 = vadd.f32 %v6519, %v6571
    %v6573 = vpop.f32.mrb[0].mxu0
    %v6574 = vadd.f32 %v6521, %v6573
    %6575 = vdwg.mxu0
    %6576 = vmatprep.subr.bf16.mxu0 %v4904
    %6577 = vmatpush1.bf16.msra.mxu0 %v4903
    %6578 = vmatprep.subr.bf16.mxu0 %v4912
    %6579 = vmatpush1.bf16.msra.mxu0 %v4911
    %6580 = vmatprep.subr.bf16.mxu0 %v4920
    %6581 = vmatpush1.bf16.msra.mxu0 %v4919
    %6582 = vmatprep.subr.bf16.mxu0 %v4928
    %6583 = vmatpush1.bf16.msra.mxu0 %v4927
    %6584 = vmatprep.subr.bf16.mxu0 %v4936
    %6585 = vmatpush1.bf16.msra.mxu0 %v4935
    %6586 = vmatprep.subr.bf16.mxu0 %v4944
    %6587 = vmatpush1.bf16.msra.mxu0 %v4943
    %6588 = vmatprep.subr.bf16.mxu0 %v4952
    %6589 = vmatpush1.bf16.msra.mxu0 %v4951
    %6590 = vmatprep.subr.bf16.mxu0 %v4960
    %6591 = vmatpush1.bf16.msra.mxu0 %v4959
    %6592 = vmatprep.subr.bf16.mxu0 %v4968
    %6593 = vmatpush1.bf16.msra.mxu0 %v4967
    %6594 = vmatprep.subr.bf16.mxu0 %v4976
    %6595 = vmatpush1.bf16.msra.mxu0 %v4975
    %6596 = vmatprep.subr.bf16.mxu0 %v4984
    %6597 = vmatpush1.bf16.msra.mxu0 %v4983
    %6598 = vmatprep.subr.bf16.mxu0 %v4992
    %6599 = vmatpush1.bf16.msra.mxu0 %v4991
    %6600 = vmatprep.subr.bf16.mxu0 %v5000
    %6601 = vmatpush1.bf16.msra.mxu0 %v4999
    %6602 = vmatprep.subr.bf16.mxu0 %v5008
    %6603 = vmatpush1.bf16.msra.mxu0 %v5007
    %6604 = vmatprep.subr.bf16.mxu0 %v5016
    %6605 = vmatpush1.bf16.msra.mxu0 %v5015
    %6606 = vmatprep.subr.bf16.mxu0 %v5024
    %6607 = vmatpush1.bf16.msra.mxu0 %v5023
    %6608 = vmatprep.mubr.bf16.mxu0 %v146
    %6609 = vmatmul.mubr.bf16.gmra.mrb[0].mxu0 %v145
    %v6610 = vpop.f32.mrb[0].mxu0
    %v6611 = vadd.f32 %v6558, %v6610
    %v6612 = vpop.f32.mrb[0].mxu0
    %v6613 = vadd.f32 %v6560, %v6612
    %v6614 = vpop.f32.mrb[0].mxu0
    %v6615 = vadd.f32 %v6562, %v6614
    %v6616 = vpop.f32.mrb[0].mxu0
    %v6617 = vadd.f32 %v6564, %v6616
    %6618 = vmatprep.mubr.bf16.mxu0 %v162
    %6619 = vmatmul.mubr.bf16.gmra.mrb[0].mxu0 %v161
    %v6620 = vpop.f32.mrb[0].mxu0
    %v6621 = vadd.f32 %v6568, %v6620
    %v6622 = vpop.f32.mrb[0].mxu0
    %v6623 = vadd.f32 %v6570, %v6622
    %v6624 = vpop.f32.mrb[0].mxu0
    %v6625 = vadd.f32 %v6572, %v6624
    %v6626 = vpop.f32.mrb[0].mxu0
    %v6627 = vadd.f32 %v6574, %v6626
    %6628 = vdwg.mxu0
    %6629 = vmatprep.subr.bf16.mxu0 %v5032
    %6630 = vmatpush1.bf16.msra.mxu0 %v5031
    %6631 = vmatprep.subr.bf16.mxu0 %v5040
    %6632 = vmatpush1.bf16.msra.mxu0 %v5039
    %6633 = vmatprep.subr.bf16.mxu0 %v5048
    %6634 = vmatpush1.bf16.msra.mxu0 %v5047
    %6635 = vmatprep.subr.bf16.mxu0 %v5056
    %6636 = vmatpush1.bf16.msra.mxu0 %v5055
    %6637 = vmatprep.subr.bf16.mxu0 %v5064
    %6638 = vmatpush1.bf16.msra.mxu0 %v5063
    %6639 = vmatprep.subr.bf16.mxu0 %v5072
    %6640 = vmatpush1.bf16.msra.mxu0 %v5071
    %6641 = vmatprep.subr.bf16.mxu0 %v5080
    %6642 = vmatpush1.bf16.msra.mxu0 %v5079
    %6643 = vmatprep.subr.bf16.mxu0 %v5088
    %6644 = vmatpush1.bf16.msra.mxu0 %v5087
    %6645 = vmatprep.subr.bf16.mxu0 %v5096
    %6646 = vmatpush1.bf16.msra.mxu0 %v5095
    %6647 = vmatprep.subr.bf16.mxu0 %v5104
    %6648 = vmatpush1.bf16.msra.mxu0 %v5103
    %6649 = vmatprep.subr.bf16.mxu0 %v5112
    %6650 = vmatpush1.bf16.msra.mxu0 %v5111
    %6651 = vmatprep.subr.bf16.mxu0 %v5120
    %6652 = vmatpush1.bf16.msra.mxu0 %v5119
    %6653 = vmatprep.subr.bf16.mxu0 %v5128
    %6654 = vmatpush1.bf16.msra.mxu0 %v5127
    %6655 = vmatprep.subr.bf16.mxu0 %v5136
    %6656 = vmatpush1.bf16.msra.mxu0 %v5135
    %6657 = vmatprep.subr.bf16.mxu0 %v5144
    %6658 = vmatpush1.bf16.msra.mxu0 %v5143
    %6659 = vmatprep.subr.bf16.mxu0 %v5152
    %6660 = vmatpush1.bf16.msra.mxu0 %v5151
    %6661 = vmatprep.mubr.bf16.mxu0 %v148
    %6662 = vmatmul.mubr.bf16.gmra.mrb[0].mxu0 %v147
    %v6663 = vpop.f32.mrb[0].mxu0
    %v6664 = vadd.f32 %v6611, %v6663
    %v6665 = vpop.f32.mrb[0].mxu0
    %v6666 = vadd.f32 %v6613, %v6665
    %v6667 = vpop.f32.mrb[0].mxu0
    %v6668 = vadd.f32 %v6615, %v6667
    %v6669 = vpop.f32.mrb[0].mxu0
    %v6670 = vadd.f32 %v6617, %v6669
    %6671 = vmatprep.mubr.bf16.mxu0 %v164
    %6672 = vmatmul.mubr.bf16.gmra.mrb[0].mxu0 %v163
    %v6673 = vpop.f32.mrb[0].mxu0
    %v6674 = vadd.f32 %v6621, %v6673
    %v6675 = vpop.f32.mrb[0].mxu0
    %v6676 = vadd.f32 %v6623, %v6675
    %v6677 = vpop.f32.mrb[0].mxu0
    %v6678 = vadd.f32 %v6625, %v6677
    %v6679 = vpop.f32.mrb[0].mxu0
    %v6680 = vadd.f32 %v6627, %v6679
    %6681 = vdwg.mxu0
    %6682 = vmatprep.subr.bf16.mxu0 %v5160
    %6683 = vmatpush1.bf16.msra.mxu0 %v5159
    %6684 = vmatprep.subr.bf16.mxu0 %v5168
    %6685 = vmatpush1.bf16.msra.mxu0 %v5167
    %6686 = vmatprep.subr.bf16.mxu0 %v5176
    %6687 = vmatpush1.bf16.msra.mxu0 %v5175
    %6688 = vmatprep.subr.bf16.mxu0 %v5184
    %6689 = vmatpush1.bf16.msra.mxu0 %v5183
    %6690 = vmatprep.subr.bf16.mxu0 %v5192
    %6691 = vmatpush1.bf16.msra.mxu0 %v5191
    %6692 = vmatprep.subr.bf16.mxu0 %v5200
    %6693 = vmatpush1.bf16.msra.mxu0 %v5199
    %6694 = vmatprep.subr.bf16.mxu0 %v5208
    %6695 = vmatpush1.bf16.msra.mxu0 %v5207
    %6696 = vmatprep.subr.bf16.mxu0 %v5216
    %6697 = vmatpush1.bf16.msra.mxu0 %v5215
    %6698 = vmatprep.subr.bf16.mxu0 %v5224
    %6699 = vmatpush1.bf16.msra.mxu0 %v5223
    %6700 = vmatprep.subr.bf16.mxu0 %v5232
    %6701 = vmatpush1.bf16.msra.mxu0 %v5231
    %6702 = vmatprep.subr.bf16.mxu0 %v5240
    %6703 = vmatpush1.bf16.msra.mxu0 %v5239
    %6704 = vmatprep.subr.bf16.mxu0 %v5248
    %6705 = vmatpush1.bf16.msra.mxu0 %v5247
    %6706 = vmatprep.subr.bf16.mxu0 %v5256
    %6707 = vmatpush1.bf16.msra.mxu0 %v5255
    %6708 = vmatprep.subr.bf16.mxu0 %v5264
    %6709 = vmatpush1.bf16.msra.mxu0 %v5263
    %6710 = vmatprep.subr.bf16.mxu0 %v5272
    %6711 = vmatpush1.bf16.msra.mxu0 %v5271
    %6712 = vmatprep.subr.bf16.mxu0 %v5280
    %6713 = vmatpush1.bf16.msra.mxu0 %v5279
    %6714 = vmatprep.mubr.bf16.mxu0 %v150
    %6715 = vmatmul.mubr.bf16.gmra.mrb[0].mxu0 %v149
    %v6716 = vpop.f32.mrb[0].mxu0
    %v6717 = vadd.f32 %v6664, %v6716
    %v6718 = vpop.f32.mrb[0].mxu0
    %v6719 = vadd.f32 %v6666, %v6718
    %v6720 = vpop.f32.mrb[0].mxu0
    %v6721 = vadd.f32 %v6668, %v6720
    %v6722 = vpop.f32.mrb[0].mxu0
    %v6723 = vadd.f32 %v6670, %v6722
    %6724 = vmatprep.mubr.bf16.mxu0 %v166
    %6725 = vmatmul.mubr.bf16.gmra.mrb[0].mxu0 %v165
    %v6726 = vpop.f32.mrb[0].mxu0
    %v6727 = vadd.f32 %v6674, %v6726
    %v6728 = vpop.f32.mrb[0].mxu0
    %v6729 = vadd.f32 %v6676, %v6728
    %v6730 = vpop.f32.mrb[0].mxu0
    %v6731 = vadd.f32 %v6678, %v6730
    %v6732 = vpop.f32.mrb[0].mxu0
    %v6733 = vadd.f32 %v6680, %v6732
    %6734 = vdwg.mxu0
    %6735 = vmatprep.subr.bf16.mxu0 %v4266
    %6736 = vmatpush1.bf16.msra.mxu0 %v4265
    %6737 = vmatprep.subr.bf16.mxu0 %v4274
    %6738 = vmatpush1.bf16.msra.mxu0 %v4273
    %6739 = vmatprep.subr.bf16.mxu0 %v4282
    %6740 = vmatpush1.bf16.msra.mxu0 %v4281
    %6741 = vmatprep.subr.bf16.mxu0 %v4290
    %6742 = vmatpush1.bf16.msra.mxu0 %v4289
    %6743 = vmatprep.subr.bf16.mxu0 %v4298
    %6744 = vmatpush1.bf16.msra.mxu0 %v4297
    %6745 = vmatprep.subr.bf16.mxu0 %v4306
    %6746 = vmatpush1.bf16.msra.mxu0 %v4305
    %6747 = vmatprep.subr.bf16.mxu0 %v4314
    %6748 = vmatpush1.bf16.msra.mxu0 %v4313
    %6749 = vmatprep.subr.bf16.mxu0 %v4322
    %6750 = vmatpush1.bf16.msra.mxu0 %v4321
    %6751 = vmatprep.subr.bf16.mxu0 %v4330
    %6752 = vmatpush1.bf16.msra.mxu0 %v4329
    %6753 = vmatprep.subr.bf16.mxu0 %v4338
    %6754 = vmatpush1.bf16.msra.mxu0 %v4337
    %6755 = vmatprep.subr.bf16.mxu0 %v4346
    %6756 = vmatpush1.bf16.msra.mxu0 %v4345
    %6757 = vmatprep.subr.bf16.mxu0 %v4354
    %6758 = vmatpush1.bf16.msra.mxu0 %v4353
    %6759 = vmatprep.subr.bf16.mxu0 %v4362
    %6760 = vmatpush1.bf16.msra.mxu0 %v4361
    %6761 = vmatprep.subr.bf16.mxu0 %v4370
    %6762 = vmatpush1.bf16.msra.mxu0 %v4369
    %6763 = vmatprep.subr.bf16.mxu0 %v4378
    %6764 = vmatpush1.bf16.msra.mxu0 %v4377
    %6765 = vmatprep.subr.bf16.mxu0 %v4386
    %6766 = vmatpush1.bf16.msra.mxu0 %v4385
    %6767 = vmatprep.mubr.bf16.mxu0 %v136
    %6768 = vmatmul.mubr.bf16.gmra.mrb[0].mxu0 %v135
    %v6769 = vpop.f32.mrb[0].mxu0
    %v6770 = vadd.f32 0.0, %v6769
    %v6771 = vpop.f32.mrb[0].mxu0
    %v6772 = vadd.f32 0.0, %v6771
    %v6773 = vpop.f32.mrb[0].mxu0
    %v6774 = vadd.f32 0.0, %v6773
    %v6775 = vpop.f32.mrb[0].mxu0
    %v6776 = vadd.f32 0.0, %v6775
    %6777 = vmatprep.mubr.bf16.mxu0 %v152
    %6778 = vmatmul.mubr.bf16.gmra.mrb[0].mxu0 %v151
    %v6779 = vpop.f32.mrb[0].mxu0
    %v6780 = vadd.f32 0.0, %v6779
    %v6781 = vpop.f32.mrb[0].mxu0
    %v6782 = vadd.f32 0.0, %v6781
    %v6783 = vpop.f32.mrb[0].mxu0
    %v6784 = vadd.f32 0.0, %v6783
    %v6785 = vpop.f32.mrb[0].mxu0
    %v6786 = vadd.f32 0.0, %v6785
    %6787 = vdwg.mxu0
    %6788 = vmatprep.subr.bf16.mxu0 %v4394
    %6789 = vmatpush1.bf16.msra.mxu0 %v4393
    %6790 = vmatprep.subr.bf16.mxu0 %v4402
    %6791 = vmatpush1.bf16.msra.mxu0 %v4401
    %6792 = vmatprep.subr.bf16.mxu0 %v4410
    %6793 = vmatpush1.bf16.msra.mxu0 %v4409
    %6794 = vmatprep.subr.bf16.mxu0 %v4418
    %6795 = vmatpush1.bf16.msra.mxu0 %v4417
    %6796 = vmatprep.subr.bf16.mxu0 %v4426
    %6797 = vmatpush1.bf16.msra.mxu0 %v4425
    %6798 = vmatprep.subr.bf16.mxu0 %v4434
    %6799 = vmatpush1.bf16.msra.mxu0 %v4433
    %6800 = vmatprep.subr.bf16.mxu0 %v4442
    %6801 = vmatpush1.bf16.msra.mxu0 %v4441
    %6802 = vmatprep.subr.bf16.mxu0 %v4450
    %6803 = vmatpush1.bf16.msra.mxu0 %v4449
    %6804 = vmatprep.subr.bf16.mxu0 %v4458
    %6805 = vmatpush1.bf16.msra.mxu0 %v4457
    %6806 = vmatprep.subr.bf16.mxu0 %v4466
    %6807 = vmatpush1.bf16.msra.mxu0 %v4465
    %6808 = vmatprep.subr.bf16.mxu0 %v4474
    %6809 = vmatpush1.bf16.msra.mxu0 %v4473
    %6810 = vmatprep.subr.bf16.mxu0 %v4482
    %6811 = vmatpush1.bf16.msra.mxu0 %v4481
    %6812 = vmatprep.subr.bf16.mxu0 %v4490
    %6813 = vmatpush1.bf16.msra.mxu0 %v4489
    %6814 = vmatprep.subr.bf16.mxu0 %v4498
    %6815 = vmatpush1.bf16.msra.mxu0 %v4497
    %6816 = vmatprep.subr.bf16.mxu0 %v4506
    %6817 = vmatpush1.bf16.msra.mxu0 %v4505
    %6818 = vmatprep.subr.bf16.mxu0 %v4514
    %6819 = vmatpush1.bf16.msra.mxu0 %v4513
    %6820 = vmatprep.mubr.bf16.mxu0 %v138
    %6821 = vmatmul.mubr.bf16.gmra.mrb[0].mxu0 %v137
    %v6822 = vpop.f32.mrb[0].mxu0
    %v6823 = vadd.f32 %v6770, %v6822
    %v6824 = vpop.f32.mrb[0].mxu0
    %v6825 = vadd.f32 %v6772, %v6824
    %v6826 = vpop.f32.mrb[0].mxu0
    %v6827 = vadd.f32 %v6774, %v6826
    %v6828 = vpop.f32.mrb[0].mxu0
    %v6829 = vadd.f32 %v6776, %v6828
    %6830 = vmatprep.mubr.bf16.mxu0 %v154
    %6831 = vmatmul.mubr.bf16.gmra.mrb[0].mxu0 %v153
    %v6832 = vpop.f32.mrb[0].mxu0
    %v6833 = vadd.f32 %v6780, %v6832
    %v6834 = vpop.f32.mrb[0].mxu0
    %v6835 = vadd.f32 %v6782, %v6834
    %v6836 = vpop.f32.mrb[0].mxu0
    %v6837 = vadd.f32 %v6784, %v6836
    %v6838 = vpop.f32.mrb[0].mxu0
    %v6839 = vadd.f32 %v6786, %v6838
    %6840 = vdwg.mxu0
    %6841 = vmatprep.subr.bf16.mxu0 %v4522
    %6842 = vmatpush1.bf16.msra.mxu0 %v4521
    %6843 = vmatprep.subr.bf16.mxu0 %v4530
    %6844 = vmatpush1.bf16.msra.mxu0 %v4529
    %6845 = vmatprep.subr.bf16.mxu0 %v4538
    %6846 = vmatpush1.bf16.msra.mxu0 %v4537
    %6847 = vmatprep.subr.bf16.mxu0 %v4546
    %6848 = vmatpush1.bf16.msra.mxu0 %v4545
    %6849 = vmatprep.subr.bf16.mxu0 %v4554
    %6850 = vmatpush1.bf16.msra.mxu0 %v4553
    %6851 = vmatprep.subr.bf16.mxu0 %v4562
    %6852 = vmatpush1.bf16.msra.mxu0 %v4561
    %6853 = vmatprep.subr.bf16.mxu0 %v4570
    %6854 = vmatpush1.bf16.msra.mxu0 %v4569
    %6855 = vmatprep.subr.bf16.mxu0 %v4578
    %6856 = vmatpush1.bf16.msra.mxu0 %v4577
    %6857 = vmatprep.subr.bf16.mxu0 %v4586
    %6858 = vmatpush1.bf16.msra.mxu0 %v4585
    %6859 = vmatprep.subr.bf16.mxu0 %v4594
    %6860 = vmatpush1.bf16.msra.mxu0 %v4593
    %6861 = vmatprep.subr.bf16.mxu0 %v4602
    %6862 = vmatpush1.bf16.msra.mxu0 %v4601
    %6863 = vmatprep.subr.bf16.mxu0 %v4610
    %6864 = vmatpush1.bf16.msra.mxu0 %v4609
    %6865 = vmatprep.subr.bf16.mxu0 %v4618
    %6866 = vmatpush1.bf16.msra.mxu0 %v4617
    %6867 = vmatprep.subr.bf16.mxu0 %v4626
    %6868 = vmatpush1.bf16.msra.mxu0 %v4625
    %6869 = vmatprep.subr.bf16.mxu0 %v4634
    %6870 = vmatpush1.bf16.msra.mxu0 %v4633
    %6871 = vmatprep.subr.bf16.mxu0 %v4642
    %6872 = vmatpush1.bf16.msra.mxu0 %v4641
    %6873 = vmatprep.mubr.bf16.mxu0 %v140
    %6874 = vmatmul.mubr.bf16.gmra.mrb[0].mxu0 %v139
    %v6875 = vpop.f32.mrb[0].mxu0
    %v6876 = vadd.f32 %v6823, %v6875
    %v6877 = vpop.f32.mrb[0].mxu0
    %v6878 = vadd.f32 %v6825, %v6877
    %v6879 = vpop.f32.mrb[0].mxu0
    %v6880 = vadd.f32 %v6827, %v6879
    %v6881 = vpop.f32.mrb[0].mxu0
    %v6882 = vadd.f32 %v6829, %v6881
    %6883 = vmatprep.mubr.bf16.mxu0 %v156
    %6884 = vmatmul.mubr.bf16.gmra.mrb[0].mxu0 %v155
    %v6885 = vpop.f32.mrb[0].mxu0
    %v6886 = vadd.f32 %v6833, %v6885
    %v6887 = vpop.f32.mrb[0].mxu0
    %v6888 = vadd.f32 %v6835, %v6887
    %v6889 = vpop.f32.mrb[0].mxu0
    %v6890 = vadd.f32 %v6837, %v6889
    %v6891 = vpop.f32.mrb[0].mxu0
    %v6892 = vadd.f32 %v6839, %v6891
    %6893 = vdwg.mxu0
    %6894 = vmatprep.subr.bf16.mxu0 %v4650
    %6895 = vmatpush1.bf16.msra.mxu0 %v4649
    %6896 = vmatprep.subr.bf16.mxu0 %v4658
    %6897 = vmatpush1.bf16.msra.mxu0 %v4657
    %6898 = vmatprep.subr.bf16.mxu0 %v4666
    %6899 = vmatpush1.bf16.msra.mxu0 %v4665
    %6900 = vmatprep.subr.bf16.mxu0 %v4674
    %6901 = vmatpush1.bf16.msra.mxu0 %v4673
    %6902 = vmatprep.subr.bf16.mxu0 %v4682
    %6903 = vmatpush1.bf16.msra.mxu0 %v4681
    %6904 = vmatprep.subr.bf16.mxu0 %v4690
    %6905 = vmatpush1.bf16.msra.mxu0 %v4689
    %6906 = vmatprep.subr.bf16.mxu0 %v4698
    %6907 = vmatpush1.bf16.msra.mxu0 %v4697
    %6908 = vmatprep.subr.bf16.mxu0 %v4706
    %6909 = vmatpush1.bf16.msra.mxu0 %v4705
    %6910 = vmatprep.subr.bf16.mxu0 %v4714
    %6911 = vmatpush1.bf16.msra.mxu0 %v4713
    %6912 = vmatprep.subr.bf16.mxu0 %v4722
    %6913 = vmatpush1.bf16.msra.mxu0 %v4721
    %6914 = vmatprep.subr.bf16.mxu0 %v4730
    %6915 = vmatpush1.bf16.msra.mxu0 %v4729
    %6916 = vmatprep.subr.bf16.mxu0 %v4738
    %6917 = vmatpush1.bf16.msra.mxu0 %v4737
    %6918 = vmatprep.subr.bf16.mxu0 %v4746
    %6919 = vmatpush1.bf16.msra.mxu0 %v4745
    %6920 = vmatprep.subr.bf16.mxu0 %v4754
    %6921 = vmatpush1.bf16.msra.mxu0 %v4753
    %6922 = vmatprep.subr.bf16.mxu0 %v4762
    %6923 = vmatpush1.bf16.msra.mxu0 %v4761
    %6924 = vmatprep.subr.bf16.mxu0 %v4770
    %6925 = vmatpush1.bf16.msra.mxu0 %v4769
    %6926 = vmatprep.mubr.bf16.mxu0 %v142
    %6927 = vmatmul.mubr.bf16.gmra.mrb[0].mxu0 %v141
    %v6928 = vpop.f32.mrb[0].mxu0
    %v6929 = vadd.f32 %v6876, %v6928
    %v6930 = vpop.f32.mrb[0].mxu0
    %v6931 = vadd.f32 %v6878, %v6930
    %v6932 = vpop.f32.mrb[0].mxu0
    %v6933 = vadd.f32 %v6880, %v6932
    %v6934 = vpop.f32.mrb[0].mxu0
    %v6935 = vadd.f32 %v6882, %v6934
    %6936 = vmatprep.mubr.bf16.mxu0 %v158
    %6937 = vmatmul.mubr.bf16.gmra.mrb[0].mxu0 %v157
    %v6938 = vpop.f32.mrb[0].mxu0
    %v6939 = vadd.f32 %v6886, %v6938
    %v6940 = vpop.f32.mrb[0].mxu0
    %v6941 = vadd.f32 %v6888, %v6940
    %v6942 = vpop.f32.mrb[0].mxu0
    %v6943 = vadd.f32 %v6890, %v6942
    %v6944 = vpop.f32.mrb[0].mxu0
    %v6945 = vadd.f32 %v6892, %v6944
    %6946 = vdwg.mxu0
    %6947 = vmatprep.subr.bf16.mxu0 %v4778
    %6948 = vmatpush1.bf16.msra.mxu0 %v4777
    %6949 = vmatprep.subr.bf16.mxu0 %v4786
    %6950 = vmatpush1.bf16.msra.mxu0 %v4785
    %6951 = vmatprep.subr.bf16.mxu0 %v4794
    %6952 = vmatpush1.bf16.msra.mxu0 %v4793
    %6953 = vmatprep.subr.bf16.mxu0 %v4802
    %6954 = vmatpush1.bf16.msra.mxu0 %v4801
    %6955 = vmatprep.subr.bf16.mxu0 %v4810
    %6956 = vmatpush1.bf16.msra.mxu0 %v4809
    %6957 = vmatprep.subr.bf16.mxu0 %v4818
    %6958 = vmatpush1.bf16.msra.mxu0 %v4817
    %6959 = vmatprep.subr.bf16.mxu0 %v4826
    %6960 = vmatpush1.bf16.msra.mxu0 %v4825
    %6961 = vmatprep.subr.bf16.mxu0 %v4834
    %6962 = vmatpush1.bf16.msra.mxu0 %v4833
    %6963 = vmatprep.subr.bf16.mxu0 %v4842
    %6964 = vmatpush1.bf16.msra.mxu0 %v4841
    %6965 = vmatprep.subr.bf16.mxu0 %v4850
    %6966 = vmatpush1.bf16.msra.mxu0 %v4849
    %6967 = vmatprep.subr.bf16.mxu0 %v4858
    %6968 = vmatpush1.bf16.msra.mxu0 %v4857
    %6969 = vmatprep.subr.bf16.mxu0 %v4866
    %6970 = vmatpush1.bf16.msra.mxu0 %v4865
    %6971 = vmatprep.subr.bf16.mxu0 %v4874
    %6972 = vmatpush1.bf16.msra.mxu0 %v4873
    %6973 = vmatprep.subr.bf16.mxu0 %v4882
    %6974 = vmatpush1.bf16.msra.mxu0 %v4881
    %6975 = vmatprep.subr.bf16.mxu0 %v4890
    %6976 = vmatpush1.bf16.msra.mxu0 %v4889
    %6977 = vmatprep.subr.bf16.mxu0 %v4898
    %6978 = vmatpush1.bf16.msra.mxu0 %v4897
    %6979 = vmatprep.mubr.bf16.mxu0 %v144
    %6980 = vmatmul.mubr.bf16.gmra.mrb[0].mxu0 %v143
    %v6981 = vpop.f32.mrb[0].mxu0
    %v6982 = vadd.f32 %v6929, %v6981
    %v6983 = vpop.f32.mrb[0].mxu0
    %v6984 = vadd.f32 %v6931, %v6983
    %v6985 = vpop.f32.mrb[0].mxu0
    %v6986 = vadd.f32 %v6933, %v6985
    %v6987 = vpop.f32.mrb[0].mxu0
    %v6988 = vadd.f32 %v6935, %v6987
    %6989 = vmatprep.mubr.bf16.mxu0 %v160
    %6990 = vmatmul.mubr.bf16.gmra.mrb[0].mxu0 %v159
    %v6991 = vpop.f32.mrb[0].mxu0
    %v6992 = vadd.f32 %v6939, %v6991
    %v6993 = vpop.f32.mrb[0].mxu0
    %v6994 = vadd.f32 %v6941, %v6993
    %v6995 = vpop.f32.mrb[0].mxu0
    %v6996 = vadd.f32 %v6943, %v6995
    %v6997 = vpop.f32.mrb[0].mxu0
    %v6998 = vadd.f32 %v6945, %v6997
    %6999 = vdwg.mxu0
    %7000 = vmatprep.subr.bf16.mxu0 %v4906
    %7001 = vmatpush1.bf16.msra.mxu0 %v4905
    %7002 = vmatprep.subr.bf16.mxu0 %v4914
    %7003 = vmatpush1.bf16.msra.mxu0 %v4913
    %7004 = vmatprep.subr.bf16.mxu0 %v4922
    %7005 = vmatpush1.bf16.msra.mxu0 %v4921
    %7006 = vmatprep.subr.bf16.mxu0 %v4930
    %7007 = vmatpush1.bf16.msra.mxu0 %v4929
    %7008 = vmatprep.subr.bf16.mxu0 %v4938
    %7009 = vmatpush1.bf16.msra.mxu0 %v4937
    %7010 = vmatprep.subr.bf16.mxu0 %v4946
    %7011 = vmatpush1.bf16.msra.mxu0 %v4945
    %7012 = vmatprep.subr.bf16.mxu0 %v4954
    %7013 = vmatpush1.bf16.msra.mxu0 %v4953
    %7014 = vmatprep.subr.bf16.mxu0 %v4962
    %7015 = vmatpush1.bf16.msra.mxu0 %v4961
    %7016 = vmatprep.subr.bf16.mxu0 %v4970
    %7017 = vmatpush1.bf16.msra.mxu0 %v4969
    %7018 = vmatprep.subr.bf16.mxu0 %v4978
    %7019 = vmatpush1.bf16.msra.mxu0 %v4977
    %7020 = vmatprep.subr.bf16.mxu0 %v4986
    %7021 = vmatpush1.bf16.msra.mxu0 %v4985
    %7022 = vmatprep.subr.bf16.mxu0 %v4994
    %7023 = vmatpush1.bf16.msra.mxu0 %v4993
    %7024 = vmatprep.subr.bf16.mxu0 %v5002
    %7025 = vmatpush1.bf16.msra.mxu0 %v5001
    %7026 = vmatprep.subr.bf16.mxu0 %v5010
    %7027 = vmatpush1.bf16.msra.mxu0 %v5009
    %7028 = vmatprep.subr.bf16.mxu0 %v5018
    %7029 = vmatpush1.bf16.msra.mxu0 %v5017
    %7030 = vmatprep.subr.bf16.mxu0 %v5026
    %7031 = vmatpush1.bf16.msra.mxu0 %v5025
    %7032 = vmatprep.mubr.bf16.mxu0 %v146
    %7033 = vmatmul.mubr.bf16.gmra.mrb[0].mxu0 %v145
    %v7034 = vpop.f32.mrb[0].mxu0
    %v7035 = vadd.f32 %v6982, %v7034
    %v7036 = vpop.f32.mrb[0].mxu0
    %v7037 = vadd.f32 %v6984, %v7036
    %v7038 = vpop.f32.mrb[0].mxu0
    %v7039 = vadd.f32 %v6986, %v7038
    %v7040 = vpop.f32.mrb[0].mxu0
    %v7041 = vadd.f32 %v6988, %v7040
    %7042 = vmatprep.mubr.bf16.mxu0 %v162
    %7043 = vmatmul.mubr.bf16.gmra.mrb[0].mxu0 %v161
    %v7044 = vpop.f32.mrb[0].mxu0
    %v7045 = vadd.f32 %v6992, %v7044
    %v7046 = vpop.f32.mrb[0].mxu0
    %v7047 = vadd.f32 %v6994, %v7046
    %v7048 = vpop.f32.mrb[0].mxu0
    %v7049 = vadd.f32 %v6996, %v7048
    %v7050 = vpop.f32.mrb[0].mxu0
    %v7051 = vadd.f32 %v6998, %v7050
    %7052 = vdwg.mxu0
    %7053 = vmatprep.subr.bf16.mxu0 %v5034
    %7054 = vmatpush1.bf16.msra.mxu0 %v5033
    %7055 = vmatprep.subr.bf16.mxu0 %v5042
    %7056 = vmatpush1.bf16.msra.mxu0 %v5041
    %7057 = vmatprep.subr.bf16.mxu0 %v5050
    %7058 = vmatpush1.bf16.msra.mxu0 %v5049
    %7059 = vmatprep.subr.bf16.mxu0 %v5058
    %7060 = vmatpush1.bf16.msra.mxu0 %v5057
    %7061 = vmatprep.subr.bf16.mxu0 %v5066
    %7062 = vmatpush1.bf16.msra.mxu0 %v5065
    %7063 = vmatprep.subr.bf16.mxu0 %v5074
    %7064 = vmatpush1.bf16.msra.mxu0 %v5073
    %7065 = vmatprep.subr.bf16.mxu0 %v5082
    %7066 = vmatpush1.bf16.msra.mxu0 %v5081
    %7067 = vmatprep.subr.bf16.mxu0 %v5090
    %7068 = vmatpush1.bf16.msra.mxu0 %v5089
    %7069 = vmatprep.subr.bf16.mxu0 %v5098
    %7070 = vmatpush1.bf16.msra.mxu0 %v5097
    %7071 = vmatprep.subr.bf16.mxu0 %v5106
    %7072 = vmatpush1.bf16.msra.mxu0 %v5105
    %7073 = vmatprep.subr.bf16.mxu0 %v5114
    %7074 = vmatpush1.bf16.msra.mxu0 %v5113
    %7075 = vmatprep.subr.bf16.mxu0 %v5122
    %7076 = vmatpush1.bf16.msra.mxu0 %v5121
    %7077 = vmatprep.subr.bf16.mxu0 %v5130
    %7078 = vmatpush1.bf16.msra.mxu0 %v5129
    %7079 = vmatprep.subr.bf16.mxu0 %v5138
    %7080 = vmatpush1.bf16.msra.mxu0 %v5137
    %7081 = vmatprep.subr.bf16.mxu0 %v5146
    %7082 = vmatpush1.bf16.msra.mxu0 %v5145
    %7083 = vmatprep.subr.bf16.mxu0 %v5154
    %7084 = vmatpush1.bf16.msra.mxu0 %v5153
    %7085 = vmatprep.mubr.bf16.mxu0 %v148
    %7086 = vmatmul.mubr.bf16.gmra.mrb[0].mxu0 %v147
    %v7087 = vpop.f32.mrb[0].mxu0
    %v7088 = vadd.f32 %v7035, %v7087
    %v7089 = vpop.f32.mrb[0].mxu0
    %v7090 = vadd.f32 %v7037, %v7089
    %v7091 = vpop.f32.mrb[0].mxu0
    %v7092 = vadd.f32 %v7039, %v7091
    %v7093 = vpop.f32.mrb[0].mxu0
    %v7094 = vadd.f32 %v7041, %v7093
    %7095 = vmatprep.mubr.bf16.mxu0 %v164
    %7096 = vmatmul.mubr.bf16.gmra.mrb[0].mxu0 %v163
    %v7097 = vpop.f32.mrb[0].mxu0
    %v7098 = vadd.f32 %v7045, %v7097
    %v7099 = vpop.f32.mrb[0].mxu0
    %v7100 = vadd.f32 %v7047, %v7099
    %v7101 = vpop.f32.mrb[0].mxu0
    %v7102 = vadd.f32 %v7049, %v7101
    %v7103 = vpop.f32.mrb[0].mxu0
    %v7104 = vadd.f32 %v7051, %v7103
    %7105 = vdwg.mxu0
    %7106 = vmatprep.subr.bf16.mxu0 %v5162
    %7107 = vmatpush1.bf16.msra.mxu0 %v5161
    %7108 = vmatprep.subr.bf16.mxu0 %v5170
    %7109 = vmatpush1.bf16.msra.mxu0 %v5169
    %7110 = vmatprep.subr.bf16.mxu0 %v5178
    %7111 = vmatpush1.bf16.msra.mxu0 %v5177
    %7112 = vmatprep.subr.bf16.mxu0 %v5186
    %7113 = vmatpush1.bf16.msra.mxu0 %v5185
    %7114 = vmatprep.subr.bf16.mxu0 %v5194
    %7115 = vmatpush1.bf16.msra.mxu0 %v5193
    %7116 = vmatprep.subr.bf16.mxu0 %v5202
    %7117 = vmatpush1.bf16.msra.mxu0 %v5201
    %7118 = vmatprep.subr.bf16.mxu0 %v5210
    %7119 = vmatpush1.bf16.msra.mxu0 %v5209
    %7120 = vmatprep.subr.bf16.mxu0 %v5218
    %7121 = vmatpush1.bf16.msra.mxu0 %v5217
    %7122 = vmatprep.subr.bf16.mxu0 %v5226
    %7123 = vmatpush1.bf16.msra.mxu0 %v5225
    %7124 = vmatprep.subr.bf16.mxu0 %v5234
    %7125 = vmatpush1.bf16.msra.mxu0 %v5233
    %7126 = vmatprep.subr.bf16.mxu0 %v5242
    %7127 = vmatpush1.bf16.msra.mxu0 %v5241
    %7128 = vmatprep.subr.bf16.mxu0 %v5250
    %7129 = vmatpush1.bf16.msra.mxu0 %v5249
    %7130 = vmatprep.subr.bf16.mxu0 %v5258
    %7131 = vmatpush1.bf16.msra.mxu0 %v5257
    %7132 = vmatprep.subr.bf16.mxu0 %v5266
    %7133 = vmatpush1.bf16.msra.mxu0 %v5265
    %7134 = vmatprep.subr.bf16.mxu0 %v5274
    %7135 = vmatpush1.bf16.msra.mxu0 %v5273
    %7136 = vmatprep.subr.bf16.mxu0 %v5282
    %7137 = vmatpush1.bf16.msra.mxu0 %v5281
    %7138 = vmatprep.mubr.bf16.mxu0 %v150
    %7139 = vmatmul.mubr.bf16.gmra.mrb[0].mxu0 %v149
    %v7140 = vpop.f32.mrb[0].mxu0
    %v7141 = vadd.f32 %v7088, %v7140
    %v7142 = vpop.f32.mrb[0].mxu0
    %v7143 = vadd.f32 %v7090, %v7142
    %v7144 = vpop.f32.mrb[0].mxu0
    %v7145 = vadd.f32 %v7092, %v7144
    %v7146 = vpop.f32.mrb[0].mxu0
    %v7147 = vadd.f32 %v7094, %v7146
    %7148 = vmatprep.mubr.bf16.mxu0 %v166
    %7149 = vmatmul.mubr.bf16.gmra.mrb[0].mxu0 %v165
    %v7150 = vpop.f32.mrb[0].mxu0
    %v7151 = vadd.f32 %v7098, %v7150
    %v7152 = vpop.f32.mrb[0].mxu0
    %v7153 = vadd.f32 %v7100, %v7152
    %v7154 = vpop.f32.mrb[0].mxu0
    %v7155 = vadd.f32 %v7102, %v7154
    %v7156 = vpop.f32.mrb[0].mxu0
    %v7157 = vadd.f32 %v7104, %v7156
    %7158 = vdwg.mxu0
    %7159 = vmatprep.subr.bf16.mxu0 %v4268
    %7160 = vmatpush1.bf16.msra.mxu0 %v4267
    %7161 = vmatprep.subr.bf16.mxu0 %v4276
    %7162 = vmatpush1.bf16.msra.mxu0 %v4275
    %7163 = vmatprep.subr.bf16.mxu0 %v4284
    %7164 = vmatpush1.bf16.msra.mxu0 %v4283
    %7165 = vmatprep.subr.bf16.mxu0 %v4292
    %7166 = vmatpush1.bf16.msra.mxu0 %v4291
    %7167 = vmatprep.subr.bf16.mxu0 %v4300
    %7168 = vmatpush1.bf16.msra.mxu0 %v4299
    %7169 = vmatprep.subr.bf16.mxu0 %v4308
    %7170 = vmatpush1.bf16.msra.mxu0 %v4307
    %7171 = vmatprep.subr.bf16.mxu0 %v4316
    %7172 = vmatpush1.bf16.msra.mxu0 %v4315
    %7173 = vmatprep.subr.bf16.mxu0 %v4324
    %7174 = vmatpush1.bf16.msra.mxu0 %v4323
    %7175 = vmatprep.subr.bf16.mxu0 %v4332
    %7176 = vmatpush1.bf16.msra.mxu0 %v4331
    %7177 = vmatprep.subr.bf16.mxu0 %v4340
    %7178 = vmatpush1.bf16.msra.mxu0 %v4339
    %7179 = vmatprep.subr.bf16.mxu0 %v4348
    %7180 = vmatpush1.bf16.msra.mxu0 %v4347
    %7181 = vmatprep.subr.bf16.mxu0 %v4356
    %7182 = vmatpush1.bf16.msra.mxu0 %v4355
    %7183 = vmatprep.subr.bf16.mxu0 %v4364
    %7184 = vmatpush1.bf16.msra.mxu0 %v4363
    %7185 = vmatprep.subr.bf16.mxu0 %v4372
    %7186 = vmatpush1.bf16.msra.mxu0 %v4371
    %7187 = vmatprep.subr.bf16.mxu0 %v4380
    %7188 = vmatpush1.bf16.msra.mxu0 %v4379
    %7189 = vmatprep.subr.bf16.mxu0 %v4388
    %7190 = vmatpush1.bf16.msra.mxu0 %v4387
    %7191 = vmatprep.mubr.bf16.mxu0 %v136
    %7192 = vmatmul.mubr.bf16.gmra.mrb[0].mxu0 %v135
    %v7193 = vpop.f32.mrb[0].mxu0
    %v7194 = vadd.f32 0.0, %v7193
    %v7195 = vpop.f32.mrb[0].mxu0
    %v7196 = vadd.f32 0.0, %v7195
    %v7197 = vpop.f32.mrb[0].mxu0
    %v7198 = vadd.f32 0.0, %v7197
    %v7199 = vpop.f32.mrb[0].mxu0
    %v7200 = vadd.f32 0.0, %v7199
    %7201 = vmatprep.mubr.bf16.mxu0 %v152
    %7202 = vmatmul.mubr.bf16.gmra.mrb[0].mxu0 %v151
    %v7203 = vpop.f32.mrb[0].mxu0
    %v7204 = vadd.f32 0.0, %v7203
    %v7205 = vpop.f32.mrb[0].mxu0
    %v7206 = vadd.f32 0.0, %v7205
    %v7207 = vpop.f32.mrb[0].mxu0
    %v7208 = vadd.f32 0.0, %v7207
    %v7209 = vpop.f32.mrb[0].mxu0
    %v7210 = vadd.f32 0.0, %v7209
    %7211 = vdwg.mxu0
    %7212 = vmatprep.subr.bf16.mxu0 %v4396
    %7213 = vmatpush1.bf16.msra.mxu0 %v4395
    %7214 = vmatprep.subr.bf16.mxu0 %v4404
    %7215 = vmatpush1.bf16.msra.mxu0 %v4403
    %7216 = vmatprep.subr.bf16.mxu0 %v4412
    %7217 = vmatpush1.bf16.msra.mxu0 %v4411
    %7218 = vmatprep.subr.bf16.mxu0 %v4420
    %7219 = vmatpush1.bf16.msra.mxu0 %v4419
    %7220 = vmatprep.subr.bf16.mxu0 %v4428
    %7221 = vmatpush1.bf16.msra.mxu0 %v4427
    %7222 = vmatprep.subr.bf16.mxu0 %v4436
    %7223 = vmatpush1.bf16.msra.mxu0 %v4435
    %7224 = vmatprep.subr.bf16.mxu0 %v4444
    %7225 = vmatpush1.bf16.msra.mxu0 %v4443
    %7226 = vmatprep.subr.bf16.mxu0 %v4452
    %7227 = vmatpush1.bf16.msra.mxu0 %v4451
    %7228 = vmatprep.subr.bf16.mxu0 %v4460
    %7229 = vmatpush1.bf16.msra.mxu0 %v4459
    %7230 = vmatprep.subr.bf16.mxu0 %v4468
    %7231 = vmatpush1.bf16.msra.mxu0 %v4467
    %7232 = vmatprep.subr.bf16.mxu0 %v4476
    %7233 = vmatpush1.bf16.msra.mxu0 %v4475
    %7234 = vmatprep.subr.bf16.mxu0 %v4484
    %7235 = vmatpush1.bf16.msra.mxu0 %v4483
    %7236 = vmatprep.subr.bf16.mxu0 %v4492
    %7237 = vmatpush1.bf16.msra.mxu0 %v4491
    %7238 = vmatprep.subr.bf16.mxu0 %v4500
    %7239 = vmatpush1.bf16.msra.mxu0 %v4499
    %7240 = vmatprep.subr.bf16.mxu0 %v4508
    %7241 = vmatpush1.bf16.msra.mxu0 %v4507
    %7242 = vmatprep.subr.bf16.mxu0 %v4516
    %7243 = vmatpush1.bf16.msra.mxu0 %v4515
    %7244 = vmatprep.mubr.bf16.mxu0 %v138
    %7245 = vmatmul.mubr.bf16.gmra.mrb[0].mxu0 %v137
    %v7246 = vpop.f32.mrb[0].mxu0
    %v7247 = vadd.f32 %v7194, %v7246
    %v7248 = vpop.f32.mrb[0].mxu0
    %v7249 = vadd.f32 %v7196, %v7248
    %v7250 = vpop.f32.mrb[0].mxu0
    %v7251 = vadd.f32 %v7198, %v7250
    %v7252 = vpop.f32.mrb[0].mxu0
    %v7253 = vadd.f32 %v7200, %v7252
    %7254 = vmatprep.mubr.bf16.mxu0 %v154
    %7255 = vmatmul.mubr.bf16.gmra.mrb[0].mxu0 %v153
    %v7256 = vpop.f32.mrb[0].mxu0
    %v7257 = vadd.f32 %v7204, %v7256
    %v7258 = vpop.f32.mrb[0].mxu0
    %v7259 = vadd.f32 %v7206, %v7258
    %v7260 = vpop.f32.mrb[0].mxu0
    %v7261 = vadd.f32 %v7208, %v7260
    %v7262 = vpop.f32.mrb[0].mxu0
    %v7263 = vadd.f32 %v7210, %v7262
    %7264 = vdwg.mxu0
    %7265 = vmatprep.subr.bf16.mxu0 %v4524
    %7266 = vmatpush1.bf16.msra.mxu0 %v4523
    %7267 = vmatprep.subr.bf16.mxu0 %v4532
    %7268 = vmatpush1.bf16.msra.mxu0 %v4531
    %7269 = vmatprep.subr.bf16.mxu0 %v4540
    %7270 = vmatpush1.bf16.msra.mxu0 %v4539
    %7271 = vmatprep.subr.bf16.mxu0 %v4548
    %7272 = vmatpush1.bf16.msra.mxu0 %v4547
    %7273 = vmatprep.subr.bf16.mxu0 %v4556
    %7274 = vmatpush1.bf16.msra.mxu0 %v4555
    %7275 = vmatprep.subr.bf16.mxu0 %v4564
    %7276 = vmatpush1.bf16.msra.mxu0 %v4563
    %7277 = vmatprep.subr.bf16.mxu0 %v4572
    %7278 = vmatpush1.bf16.msra.mxu0 %v4571
    %7279 = vmatprep.subr.bf16.mxu0 %v4580
    %7280 = vmatpush1.bf16.msra.mxu0 %v4579
    %7281 = vmatprep.subr.bf16.mxu0 %v4588
    %7282 = vmatpush1.bf16.msra.mxu0 %v4587
    %7283 = vmatprep.subr.bf16.mxu0 %v4596
    %7284 = vmatpush1.bf16.msra.mxu0 %v4595
    %7285 = vmatprep.subr.bf16.mxu0 %v4604
    %7286 = vmatpush1.bf16.msra.mxu0 %v4603
    %7287 = vmatprep.subr.bf16.mxu0 %v4612
    %7288 = vmatpush1.bf16.msra.mxu0 %v4611
    %7289 = vmatprep.subr.bf16.mxu0 %v4620
    %7290 = vmatpush1.bf16.msra.mxu0 %v4619
    %7291 = vmatprep.subr.bf16.mxu0 %v4628
    %7292 = vmatpush1.bf16.msra.mxu0 %v4627
    %7293 = vmatprep.subr.bf16.mxu0 %v4636
    %7294 = vmatpush1.bf16.msra.mxu0 %v4635
    %7295 = vmatprep.subr.bf16.mxu0 %v4644
    %7296 = vmatpush1.bf16.msra.mxu0 %v4643
    %7297 = vmatprep.mubr.bf16.mxu0 %v140
    %7298 = vmatmul.mubr.bf16.gmra.mrb[0].mxu0 %v139
    %v7299 = vpop.f32.mrb[0].mxu0
    %v7300 = vadd.f32 %v7247, %v7299
    %v7301 = vpop.f32.mrb[0].mxu0
    %v7302 = vadd.f32 %v7249, %v7301
    %v7303 = vpop.f32.mrb[0].mxu0
    %v7304 = vadd.f32 %v7251, %v7303
    %v7305 = vpop.f32.mrb[0].mxu0
    %v7306 = vadd.f32 %v7253, %v7305
    %7307 = vmatprep.mubr.bf16.mxu0 %v156
    %7308 = vmatmul.mubr.bf16.gmra.mrb[0].mxu0 %v155
    %v7309 = vpop.f32.mrb[0].mxu0
    %v7310 = vadd.f32 %v7257, %v7309
    %v7311 = vpop.f32.mrb[0].mxu0
    %v7312 = vadd.f32 %v7259, %v7311
    %v7313 = vpop.f32.mrb[0].mxu0
    %v7314 = vadd.f32 %v7261, %v7313
    %v7315 = vpop.f32.mrb[0].mxu0
    %v7316 = vadd.f32 %v7263, %v7315
    %7317 = vdwg.mxu0
    %7318 = vmatprep.subr.bf16.mxu0 %v4652
    %7319 = vmatpush1.bf16.msra.mxu0 %v4651
    %7320 = vmatprep.subr.bf16.mxu0 %v4660
    %7321 = vmatpush1.bf16.msra.mxu0 %v4659
    %7322 = vmatprep.subr.bf16.mxu0 %v4668
    %7323 = vmatpush1.bf16.msra.mxu0 %v4667
    %7324 = vmatprep.subr.bf16.mxu0 %v4676
    %7325 = vmatpush1.bf16.msra.mxu0 %v4675
    %7326 = vmatprep.subr.bf16.mxu0 %v4684
    %7327 = vmatpush1.bf16.msra.mxu0 %v4683
    %7328 = vmatprep.subr.bf16.mxu0 %v4692
    %7329 = vmatpush1.bf16.msra.mxu0 %v4691
    %7330 = vmatprep.subr.bf16.mxu0 %v4700
    %7331 = vmatpush1.bf16.msra.mxu0 %v4699
    %7332 = vmatprep.subr.bf16.mxu0 %v4708
    %7333 = vmatpush1.bf16.msra.mxu0 %v4707
    %7334 = vmatprep.subr.bf16.mxu0 %v4716
    %7335 = vmatpush1.bf16.msra.mxu0 %v4715
    %7336 = vmatprep.subr.bf16.mxu0 %v4724
    %7337 = vmatpush1.bf16.msra.mxu0 %v4723
    %7338 = vmatprep.subr.bf16.mxu0 %v4732
    %7339 = vmatpush1.bf16.msra.mxu0 %v4731
    %7340 = vmatprep.subr.bf16.mxu0 %v4740
    %7341 = vmatpush1.bf16.msra.mxu0 %v4739
    %7342 = vmatprep.subr.bf16.mxu0 %v4748
    %7343 = vmatpush1.bf16.msra.mxu0 %v4747
    %7344 = vmatprep.subr.bf16.mxu0 %v4756
    %7345 = vmatpush1.bf16.msra.mxu0 %v4755
    %7346 = vmatprep.subr.bf16.mxu0 %v4764
    %7347 = vmatpush1.bf16.msra.mxu0 %v4763
    %7348 = vmatprep.subr.bf16.mxu0 %v4772
    %7349 = vmatpush1.bf16.msra.mxu0 %v4771
    %7350 = vmatprep.mubr.bf16.mxu0 %v142
    %7351 = vmatmul.mubr.bf16.gmra.mrb[0].mxu0 %v141
    %v7352 = vpop.f32.mrb[0].mxu0
    %v7353 = vadd.f32 %v7300, %v7352
    %v7354 = vpop.f32.mrb[0].mxu0
    %v7355 = vadd.f32 %v7302, %v7354
    %v7356 = vpop.f32.mrb[0].mxu0
    %v7357 = vadd.f32 %v7304, %v7356
    %v7358 = vpop.f32.mrb[0].mxu0
    %v7359 = vadd.f32 %v7306, %v7358
    %7360 = vmatprep.mubr.bf16.mxu0 %v158
    %7361 = vmatmul.mubr.bf16.gmra.mrb[0].mxu0 %v157
    %v7362 = vpop.f32.mrb[0].mxu0
    %v7363 = vadd.f32 %v7310, %v7362
    %v7364 = vpop.f32.mrb[0].mxu0
    %v7365 = vadd.f32 %v7312, %v7364
    %v7366 = vpop.f32.mrb[0].mxu0
    %v7367 = vadd.f32 %v7314, %v7366
    %v7368 = vpop.f32.mrb[0].mxu0
    %v7369 = vadd.f32 %v7316, %v7368
    %7370 = vdwg.mxu0
    %7371 = vmatprep.subr.bf16.mxu0 %v4780
    %7372 = vmatpush1.bf16.msra.mxu0 %v4779
    %7373 = vmatprep.subr.bf16.mxu0 %v4788
    %7374 = vmatpush1.bf16.msra.mxu0 %v4787
    %7375 = vmatprep.subr.bf16.mxu0 %v4796
    %7376 = vmatpush1.bf16.msra.mxu0 %v4795
    %7377 = vmatprep.subr.bf16.mxu0 %v4804
    %7378 = vmatpush1.bf16.msra.mxu0 %v4803
    %7379 = vmatprep.subr.bf16.mxu0 %v4812
    %7380 = vmatpush1.bf16.msra.mxu0 %v4811
    %7381 = vmatprep.subr.bf16.mxu0 %v4820
    %7382 = vmatpush1.bf16.msra.mxu0 %v4819
    %7383 = vmatprep.subr.bf16.mxu0 %v4828
    %7384 = vmatpush1.bf16.msra.mxu0 %v4827
    %7385 = vmatprep.subr.bf16.mxu0 %v4836
    %7386 = vmatpush1.bf16.msra.mxu0 %v4835
    %7387 = vmatprep.subr.bf16.mxu0 %v4844
    %7388 = vmatpush1.bf16.msra.mxu0 %v4843
    %7389 = vmatprep.subr.bf16.mxu0 %v4852
    %7390 = vmatpush1.bf16.msra.mxu0 %v4851
    %7391 = vmatprep.subr.bf16.mxu0 %v4860
    %7392 = vmatpush1.bf16.msra.mxu0 %v4859
    %7393 = vmatprep.subr.bf16.mxu0 %v4868
    %7394 = vmatpush1.bf16.msra.mxu0 %v4867
    %7395 = vmatprep.subr.bf16.mxu0 %v4876
    %7396 = vmatpush1.bf16.msra.mxu0 %v4875
    %7397 = vmatprep.subr.bf16.mxu0 %v4884
    %7398 = vmatpush1.bf16.msra.mxu0 %v4883
    %7399 = vmatprep.subr.bf16.mxu0 %v4892
    %7400 = vmatpush1.bf16.msra.mxu0 %v4891
    %7401 = vmatprep.subr.bf16.mxu0 %v4900
    %7402 = vmatpush1.bf16.msra.mxu0 %v4899
    %7403 = vmatprep.mubr.bf16.mxu0 %v144
    %7404 = vmatmul.mubr.bf16.gmra.mrb[0].mxu0 %v143
    %v7405 = vpop.f32.mrb[0].mxu0
    %v7406 = vadd.f32 %v7353, %v7405
    %v7407 = vpop.f32.mrb[0].mxu0
    %v7408 = vadd.f32 %v7355, %v7407
    %v7409 = vpop.f32.mrb[0].mxu0
    %v7410 = vadd.f32 %v7357, %v7409
    %v7411 = vpop.f32.mrb[0].mxu0
    %v7412 = vadd.f32 %v7359, %v7411
    %7413 = vmatprep.mubr.bf16.mxu0 %v160
    %7414 = vmatmul.mubr.bf16.gmra.mrb[0].mxu0 %v159
    %v7415 = vpop.f32.mrb[0].mxu0
    %v7416 = vadd.f32 %v7363, %v7415
    %v7417 = vpop.f32.mrb[0].mxu0
    %v7418 = vadd.f32 %v7365, %v7417
    %v7419 = vpop.f32.mrb[0].mxu0
    %v7420 = vadd.f32 %v7367, %v7419
    %v7421 = vpop.f32.mrb[0].mxu0
    %v7422 = vadd.f32 %v7369, %v7421
    %7423 = vdwg.mxu0
    %7424 = vmatprep.subr.bf16.mxu0 %v4908
    %7425 = vmatpush1.bf16.msra.mxu0 %v4907
    %7426 = vmatprep.subr.bf16.mxu0 %v4916
    %7427 = vmatpush1.bf16.msra.mxu0 %v4915
    %7428 = vmatprep.subr.bf16.mxu0 %v4924
    %7429 = vmatpush1.bf16.msra.mxu0 %v4923
    %7430 = vmatprep.subr.bf16.mxu0 %v4932
    %7431 = vmatpush1.bf16.msra.mxu0 %v4931
    %7432 = vmatprep.subr.bf16.mxu0 %v4940
    %7433 = vmatpush1.bf16.msra.mxu0 %v4939
    %7434 = vmatprep.subr.bf16.mxu0 %v4948
    %7435 = vmatpush1.bf16.msra.mxu0 %v4947
    %7436 = vmatprep.subr.bf16.mxu0 %v4956
    %7437 = vmatpush1.bf16.msra.mxu0 %v4955
    %7438 = vmatprep.subr.bf16.mxu0 %v4964
    %7439 = vmatpush1.bf16.msra.mxu0 %v4963
    %7440 = vmatprep.subr.bf16.mxu0 %v4972
    %7441 = vmatpush1.bf16.msra.mxu0 %v4971
    %7442 = vmatprep.subr.bf16.mxu0 %v4980
    %7443 = vmatpush1.bf16.msra.mxu0 %v4979
    %7444 = vmatprep.subr.bf16.mxu0 %v4988
    %7445 = vmatpush1.bf16.msra.mxu0 %v4987
    %7446 = vmatprep.subr.bf16.mxu0 %v4996
    %7447 = vmatpush1.bf16.msra.mxu0 %v4995
    %7448 = vmatprep.subr.bf16.mxu0 %v5004
    %7449 = vmatpush1.bf16.msra.mxu0 %v5003
    %7450 = vmatprep.subr.bf16.mxu0 %v5012
    %7451 = vmatpush1.bf16.msra.mxu0 %v5011
    %7452 = vmatprep.subr.bf16.mxu0 %v5020
    %7453 = vmatpush1.bf16.msra.mxu0 %v5019
    %7454 = vmatprep.subr.bf16.mxu0 %v5028
    %7455 = vmatpush1.bf16.msra.mxu0 %v5027
    %7456 = vmatprep.mubr.bf16.mxu0 %v146
    %7457 = vmatmul.mubr.bf16.gmra.mrb[0].mxu0 %v145
    %v7458 = vpop.f32.mrb[0].mxu0
    %v7459 = vadd.f32 %v7406, %v7458
    %v7460 = vpop.f32.mrb[0].mxu0
    %v7461 = vadd.f32 %v7408, %v7460
    %v7462 = vpop.f32.mrb[0].mxu0
    %v7463 = vadd.f32 %v7410, %v7462
    %v7464 = vpop.f32.mrb[0].mxu0
    %v7465 = vadd.f32 %v7412, %v7464
    %7466 = vmatprep.mubr.bf16.mxu0 %v162
    %7467 = vmatmul.mubr.bf16.gmra.mrb[0].mxu0 %v161
    %v7468 = vpop.f32.mrb[0].mxu0
    %v7469 = vadd.f32 %v7416, %v7468
    %v7470 = vpop.f32.mrb[0].mxu0
    %v7471 = vadd.f32 %v7418, %v7470
    %v7472 = vpop.f32.mrb[0].mxu0
    %v7473 = vadd.f32 %v7420, %v7472
    %v7474 = vpop.f32.mrb[0].mxu0
    %v7475 = vadd.f32 %v7422, %v7474
    %7476 = vdwg.mxu0
    %7477 = vmatprep.subr.bf16.mxu0 %v5036
    %7478 = vmatpush1.bf16.msra.mxu0 %v5035
    %7479 = vmatprep.subr.bf16.mxu0 %v5044
    %7480 = vmatpush1.bf16.msra.mxu0 %v5043
    %7481 = vmatprep.subr.bf16.mxu0 %v5052
    %7482 = vmatpush1.bf16.msra.mxu0 %v5051
    %7483 = vmatprep.subr.bf16.mxu0 %v5060
    %7484 = vmatpush1.bf16.msra.mxu0 %v5059
    %7485 = vmatprep.subr.bf16.mxu0 %v5068
    %7486 = vmatpush1.bf16.msra.mxu0 %v5067
    %7487 = vmatprep.subr.bf16.mxu0 %v5076
    %7488 = vmatpush1.bf16.msra.mxu0 %v5075
    %7489 = vmatprep.subr.bf16.mxu0 %v5084
    %7490 = vmatpush1.bf16.msra.mxu0 %v5083
    %7491 = vmatprep.subr.bf16.mxu0 %v5092
    %7492 = vmatpush1.bf16.msra.mxu0 %v5091
    %7493 = vmatprep.subr.bf16.mxu0 %v5100
    %7494 = vmatpush1.bf16.msra.mxu0 %v5099
    %7495 = vmatprep.subr.bf16.mxu0 %v5108
    %7496 = vmatpush1.bf16.msra.mxu0 %v5107
    %7497 = vmatprep.subr.bf16.mxu0 %v5116
    %7498 = vmatpush1.bf16.msra.mxu0 %v5115
    %7499 = vmatprep.subr.bf16.mxu0 %v5124
    %7500 = vmatpush1.bf16.msra.mxu0 %v5123
    %7501 = vmatprep.subr.bf16.mxu0 %v5132
    %7502 = vmatpush1.bf16.msra.mxu0 %v5131
    %7503 = vmatprep.subr.bf16.mxu0 %v5140
    %7504 = vmatpush1.bf16.msra.mxu0 %v5139
    %7505 = vmatprep.subr.bf16.mxu0 %v5148
    %7506 = vmatpush1.bf16.msra.mxu0 %v5147
    %7507 = vmatprep.subr.bf16.mxu0 %v5156
    %7508 = vmatpush1.bf16.msra.mxu0 %v5155
    %7509 = vmatprep.mubr.bf16.mxu0 %v148
    %7510 = vmatmul.mubr.bf16.gmra.mrb[0].mxu0 %v147
    %v7511 = vpop.f32.mrb[0].mxu0
    %v7512 = vadd.f32 %v7459, %v7511
    %v7513 = vpop.f32.mrb[0].mxu0
    %v7514 = vadd.f32 %v7461, %v7513
    %v7515 = vpop.f32.mrb[0].mxu0
    %v7516 = vadd.f32 %v7463, %v7515
    %v7517 = vpop.f32.mrb[0].mxu0
    %v7518 = vadd.f32 %v7465, %v7517
    %7519 = vmatprep.mubr.bf16.mxu0 %v164
    %7520 = vmatmul.mubr.bf16.gmra.mrb[0].mxu0 %v163
    %v7521 = vpop.f32.mrb[0].mxu0
    %v7522 = vadd.f32 %v7469, %v7521
    %v7523 = vpop.f32.mrb[0].mxu0
    %v7524 = vadd.f32 %v7471, %v7523
    %v7525 = vpop.f32.mrb[0].mxu0
    %v7526 = vadd.f32 %v7473, %v7525
    %v7527 = vpop.f32.mrb[0].mxu0
    %v7528 = vadd.f32 %v7475, %v7527
    %7529 = vdwg.mxu0
    %7530 = vmatprep.subr.bf16.mxu0 %v5164
    %7531 = vmatpush1.bf16.msra.mxu0 %v5163
    %7532 = vmatprep.subr.bf16.mxu0 %v5172
    %7533 = vmatpush1.bf16.msra.mxu0 %v5171
    %7534 = vmatprep.subr.bf16.mxu0 %v5180
    %7535 = vmatpush1.bf16.msra.mxu0 %v5179
    %7536 = vmatprep.subr.bf16.mxu0 %v5188
    %7537 = vmatpush1.bf16.msra.mxu0 %v5187
    %7538 = vmatprep.subr.bf16.mxu0 %v5196
    %7539 = vmatpush1.bf16.msra.mxu0 %v5195
    %7540 = vmatprep.subr.bf16.mxu0 %v5204
    %7541 = vmatpush1.bf16.msra.mxu0 %v5203
    %7542 = vmatprep.subr.bf16.mxu0 %v5212
    %7543 = vmatpush1.bf16.msra.mxu0 %v5211
    %7544 = vmatprep.subr.bf16.mxu0 %v5220
    %7545 = vmatpush1.bf16.msra.mxu0 %v5219
    %7546 = vmatprep.subr.bf16.mxu0 %v5228
    %7547 = vmatpush1.bf16.msra.mxu0 %v5227
    %7548 = vmatprep.subr.bf16.mxu0 %v5236
    %7549 = vmatpush1.bf16.msra.mxu0 %v5235
    %7550 = vmatprep.subr.bf16.mxu0 %v5244
    %7551 = vmatpush1.bf16.msra.mxu0 %v5243
    %7552 = vmatprep.subr.bf16.mxu0 %v5252
    %7553 = vmatpush1.bf16.msra.mxu0 %v5251
    %7554 = vmatprep.subr.bf16.mxu0 %v5260
    %7555 = vmatpush1.bf16.msra.mxu0 %v5259
    %7556 = vmatprep.subr.bf16.mxu0 %v5268
    %7557 = vmatpush1.bf16.msra.mxu0 %v5267
    %7558 = vmatprep.subr.bf16.mxu0 %v5276
    %7559 = vmatpush1.bf16.msra.mxu0 %v5275
    %7560 = vmatprep.subr.bf16.mxu0 %v5284
    %7561 = vmatpush1.bf16.msra.mxu0 %v5283
    %7562 = vmatprep.mubr.bf16.mxu0 %v150
    %7563 = vmatmul.mubr.bf16.gmra.mrb[0].mxu0 %v149
    %v7564 = vpop.f32.mrb[0].mxu0
    %v7565 = vadd.f32 %v7512, %v7564
    %v7566 = vpop.f32.mrb[0].mxu0
    %v7567 = vadd.f32 %v7514, %v7566
    %v7568 = vpop.f32.mrb[0].mxu0
    %v7569 = vadd.f32 %v7516, %v7568
    %v7570 = vpop.f32.mrb[0].mxu0
    %v7571 = vadd.f32 %v7518, %v7570
    %7572 = vmatprep.mubr.bf16.mxu0 %v166
    %7573 = vmatmul.mubr.bf16.gmra.mrb[0].mxu0 %v165
    %v7574 = vpop.f32.mrb[0].mxu0
    %v7575 = vadd.f32 %v7522, %v7574
    %v7576 = vpop.f32.mrb[0].mxu0
    %v7577 = vadd.f32 %v7524, %v7576
    %v7578 = vpop.f32.mrb[0].mxu0
    %v7579 = vadd.f32 %v7526, %v7578
    %v7580 = vpop.f32.mrb[0].mxu0
    %v7581 = vadd.f32 %v7528, %v7580
    %7582 = vdwg.mxu0
    %7583 = vmatprep.subr.bf16.mxu0 %v4270
    %7584 = vmatpush1.bf16.msra.mxu0 %v4269
    %7585 = vmatprep.subr.bf16.mxu0 %v4278
    %7586 = vmatpush1.bf16.msra.mxu0 %v4277
    %7587 = vmatprep.subr.bf16.mxu0 %v4286
    %7588 = vmatpush1.bf16.msra.mxu0 %v4285
    %7589 = vmatprep.subr.bf16.mxu0 %v4294
    %7590 = vmatpush1.bf16.msra.mxu0 %v4293
    %7591 = vmatprep.subr.bf16.mxu0 %v4302
    %7592 = vmatpush1.bf16.msra.mxu0 %v4301
    %7593 = vmatprep.subr.bf16.mxu0 %v4310
    %7594 = vmatpush1.bf16.msra.mxu0 %v4309
    %7595 = vmatprep.subr.bf16.mxu0 %v4318
    %7596 = vmatpush1.bf16.msra.mxu0 %v4317
    %7597 = vmatprep.subr.bf16.mxu0 %v4326
    %7598 = vmatpush1.bf16.msra.mxu0 %v4325
    %7599 = vmatprep.subr.bf16.mxu0 %v4334
    %7600 = vmatpush1.bf16.msra.mxu0 %v4333
    %7601 = vmatprep.subr.bf16.mxu0 %v4342
    %7602 = vmatpush1.bf16.msra.mxu0 %v4341
    %7603 = vmatprep.subr.bf16.mxu0 %v4350
    %7604 = vmatpush1.bf16.msra.mxu0 %v4349
    %7605 = vmatprep.subr.bf16.mxu0 %v4358
    %7606 = vmatpush1.bf16.msra.mxu0 %v4357
    %7607 = vmatprep.subr.bf16.mxu0 %v4366
    %7608 = vmatpush1.bf16.msra.mxu0 %v4365
    %7609 = vmatprep.subr.bf16.mxu0 %v4374
    %7610 = vmatpush1.bf16.msra.mxu0 %v4373
    %7611 = vmatprep.subr.bf16.mxu0 %v4382
    %7612 = vmatpush1.bf16.msra.mxu0 %v4381
    %7613 = vmatprep.subr.bf16.mxu0 %v4390
    %7614 = vmatpush1.bf16.msra.mxu0 %v4389
    %7615 = vmatprep.mubr.bf16.mxu0 %v136
    %7616 = vmatmul.mubr.bf16.gmra.mrb[0].mxu0 %v135
    %v7617 = vpop.f32.mrb[0].mxu0
    %v7618 = vadd.f32 0.0, %v7617
    %v7619 = vpop.f32.mrb[0].mxu0
    %v7620 = vadd.f32 0.0, %v7619
    %v7621 = vpop.f32.mrb[0].mxu0
    %v7622 = vadd.f32 0.0, %v7621
    %v7623 = vpop.f32.mrb[0].mxu0
    %v7624 = vadd.f32 0.0, %v7623
    %7625 = vmatprep.mubr.bf16.mxu0 %v152
    %7626 = vmatmul.mubr.bf16.gmra.mrb[0].mxu0 %v151
    %v7627 = vpop.f32.mrb[0].mxu0
    %v7628 = vadd.f32 0.0, %v7627
    %v7629 = vpop.f32.mrb[0].mxu0
    %v7630 = vadd.f32 0.0, %v7629
    %v7631 = vpop.f32.mrb[0].mxu0
    %v7632 = vadd.f32 0.0, %v7631
    %v7633 = vpop.f32.mrb[0].mxu0
    %v7634 = vadd.f32 0.0, %v7633
    %7635 = vdwg.mxu0
    %7636 = vmatprep.subr.bf16.mxu0 %v4398
    %7637 = vmatpush1.bf16.msra.mxu0 %v4397
    %7638 = vmatprep.subr.bf16.mxu0 %v4406
    %7639 = vmatpush1.bf16.msra.mxu0 %v4405
    %7640 = vmatprep.subr.bf16.mxu0 %v4414
    %7641 = vmatpush1.bf16.msra.mxu0 %v4413
    %7642 = vmatprep.subr.bf16.mxu0 %v4422
    %7643 = vmatpush1.bf16.msra.mxu0 %v4421
    %7644 = vmatprep.subr.bf16.mxu0 %v4430
    %7645 = vmatpush1.bf16.msra.mxu0 %v4429
    %7646 = vmatprep.subr.bf16.mxu0 %v4438
    %7647 = vmatpush1.bf16.msra.mxu0 %v4437
    %7648 = vmatprep.subr.bf16.mxu0 %v4446
    %7649 = vmatpush1.bf16.msra.mxu0 %v4445
    %7650 = vmatprep.subr.bf16.mxu0 %v4454
    %7651 = vmatpush1.bf16.msra.mxu0 %v4453
    %7652 = vmatprep.subr.bf16.mxu0 %v4462
    %7653 = vmatpush1.bf16.msra.mxu0 %v4461
    %7654 = vmatprep.subr.bf16.mxu0 %v4470
    %7655 = vmatpush1.bf16.msra.mxu0 %v4469
    %7656 = vmatprep.subr.bf16.mxu0 %v4478
    %7657 = vmatpush1.bf16.msra.mxu0 %v4477
    %7658 = vmatprep.subr.bf16.mxu0 %v4486
    %7659 = vmatpush1.bf16.msra.mxu0 %v4485
    %7660 = vmatprep.subr.bf16.mxu0 %v4494
    %7661 = vmatpush1.bf16.msra.mxu0 %v4493
    %7662 = vmatprep.subr.bf16.mxu0 %v4502
    %7663 = vmatpush1.bf16.msra.mxu0 %v4501
    %7664 = vmatprep.subr.bf16.mxu0 %v4510
    %7665 = vmatpush1.bf16.msra.mxu0 %v4509
    %7666 = vmatprep.subr.bf16.mxu0 %v4518
    %7667 = vmatpush1.bf16.msra.mxu0 %v4517
    %7668 = vmatprep.mubr.bf16.mxu0 %v138
    %7669 = vmatmul.mubr.bf16.gmra.mrb[0].mxu0 %v137
    %v7670 = vpop.f32.mrb[0].mxu0
    %v7671 = vadd.f32 %v7618, %v7670
    %v7672 = vpop.f32.mrb[0].mxu0
    %v7673 = vadd.f32 %v7620, %v7672
    %v7674 = vpop.f32.mrb[0].mxu0
    %v7675 = vadd.f32 %v7622, %v7674
    %v7676 = vpop.f32.mrb[0].mxu0
    %v7677 = vadd.f32 %v7624, %v7676
    %7678 = vmatprep.mubr.bf16.mxu0 %v154
    %7679 = vmatmul.mubr.bf16.gmra.mrb[0].mxu0 %v153
    %v7680 = vpop.f32.mrb[0].mxu0
    %v7681 = vadd.f32 %v7628, %v7680
    %v7682 = vpop.f32.mrb[0].mxu0
    %v7683 = vadd.f32 %v7630, %v7682
    %v7684 = vpop.f32.mrb[0].mxu0
    %v7685 = vadd.f32 %v7632, %v7684
    %v7686 = vpop.f32.mrb[0].mxu0
    %v7687 = vadd.f32 %v7634, %v7686
    %7688 = vdwg.mxu0
    %7689 = vmatprep.subr.bf16.mxu0 %v4526
    %7690 = vmatpush1.bf16.msra.mxu0 %v4525
    %7691 = vmatprep.subr.bf16.mxu0 %v4534
    %7692 = vmatpush1.bf16.msra.mxu0 %v4533
    %7693 = vmatprep.subr.bf16.mxu0 %v4542
    %7694 = vmatpush1.bf16.msra.mxu0 %v4541
    %7695 = vmatprep.subr.bf16.mxu0 %v4550
    %7696 = vmatpush1.bf16.msra.mxu0 %v4549
    %7697 = vmatprep.subr.bf16.mxu0 %v4558
    %7698 = vmatpush1.bf16.msra.mxu0 %v4557
    %7699 = vmatprep.subr.bf16.mxu0 %v4566
    %7700 = vmatpush1.bf16.msra.mxu0 %v4565
    %7701 = vmatprep.subr.bf16.mxu0 %v4574
    %7702 = vmatpush1.bf16.msra.mxu0 %v4573
    %7703 = vmatprep.subr.bf16.mxu0 %v4582
    %7704 = vmatpush1.bf16.msra.mxu0 %v4581
    %7705 = vmatprep.subr.bf16.mxu0 %v4590
    %7706 = vmatpush1.bf16.msra.mxu0 %v4589
    %7707 = vmatprep.subr.bf16.mxu0 %v4598
    %7708 = vmatpush1.bf16.msra.mxu0 %v4597
    %7709 = vmatprep.subr.bf16.mxu0 %v4606
    %7710 = vmatpush1.bf16.msra.mxu0 %v4605
    %7711 = vmatprep.subr.bf16.mxu0 %v4614
    %7712 = vmatpush1.bf16.msra.mxu0 %v4613
    %7713 = vmatprep.subr.bf16.mxu0 %v4622
    %7714 = vmatpush1.bf16.msra.mxu0 %v4621
    %7715 = vmatprep.subr.bf16.mxu0 %v4630
    %7716 = vmatpush1.bf16.msra.mxu0 %v4629
    %7717 = vmatprep.subr.bf16.mxu0 %v4638
    %7718 = vmatpush1.bf16.msra.mxu0 %v4637
    %7719 = vmatprep.subr.bf16.mxu0 %v4646
    %7720 = vmatpush1.bf16.msra.mxu0 %v4645
    %7721 = vmatprep.mubr.bf16.mxu0 %v140
    %7722 = vmatmul.mubr.bf16.gmra.mrb[0].mxu0 %v139
    %v7723 = vpop.f32.mrb[0].mxu0
    %v7724 = vadd.f32 %v7671, %v7723
    %v7725 = vpop.f32.mrb[0].mxu0
    %v7726 = vadd.f32 %v7673, %v7725
    %v7727 = vpop.f32.mrb[0].mxu0
    %v7728 = vadd.f32 %v7675, %v7727
    %v7729 = vpop.f32.mrb[0].mxu0
    %v7730 = vadd.f32 %v7677, %v7729
    %7731 = vmatprep.mubr.bf16.mxu0 %v156
    %7732 = vmatmul.mubr.bf16.gmra.mrb[0].mxu0 %v155
    %v7733 = vpop.f32.mrb[0].mxu0
    %v7734 = vadd.f32 %v7681, %v7733
    %v7735 = vpop.f32.mrb[0].mxu0
    %v7736 = vadd.f32 %v7683, %v7735
    %v7737 = vpop.f32.mrb[0].mxu0
    %v7738 = vadd.f32 %v7685, %v7737
    %v7739 = vpop.f32.mrb[0].mxu0
    %v7740 = vadd.f32 %v7687, %v7739
    %7741 = vdwg.mxu0
    %7742 = vmatprep.subr.bf16.mxu0 %v4654
    %7743 = vmatpush1.bf16.msra.mxu0 %v4653
    %7744 = vmatprep.subr.bf16.mxu0 %v4662
    %7745 = vmatpush1.bf16.msra.mxu0 %v4661
    %7746 = vmatprep.subr.bf16.mxu0 %v4670
    %7747 = vmatpush1.bf16.msra.mxu0 %v4669
    %7748 = vmatprep.subr.bf16.mxu0 %v4678
    %7749 = vmatpush1.bf16.msra.mxu0 %v4677
    %7750 = vmatprep.subr.bf16.mxu0 %v4686
    %7751 = vmatpush1.bf16.msra.mxu0 %v4685
    %7752 = vmatprep.subr.bf16.mxu0 %v4694
    %7753 = vmatpush1.bf16.msra.mxu0 %v4693
    %7754 = vmatprep.subr.bf16.mxu0 %v4702
    %7755 = vmatpush1.bf16.msra.mxu0 %v4701
    %7756 = vmatprep.subr.bf16.mxu0 %v4710
    %7757 = vmatpush1.bf16.msra.mxu0 %v4709
    %7758 = vmatprep.subr.bf16.mxu0 %v4718
    %7759 = vmatpush1.bf16.msra.mxu0 %v4717
    %7760 = vmatprep.subr.bf16.mxu0 %v4726
    %7761 = vmatpush1.bf16.msra.mxu0 %v4725
    %7762 = vmatprep.subr.bf16.mxu0 %v4734
    %7763 = vmatpush1.bf16.msra.mxu0 %v4733
    %7764 = vmatprep.subr.bf16.mxu0 %v4742
    %7765 = vmatpush1.bf16.msra.mxu0 %v4741
    %7766 = vmatprep.subr.bf16.mxu0 %v4750
    %7767 = vmatpush1.bf16.msra.mxu0 %v4749
    %7768 = vmatprep.subr.bf16.mxu0 %v4758
    %7769 = vmatpush1.bf16.msra.mxu0 %v4757
    %7770 = vmatprep.subr.bf16.mxu0 %v4766
    %7771 = vmatpush1.bf16.msra.mxu0 %v4765
    %7772 = vmatprep.subr.bf16.mxu0 %v4774
    %7773 = vmatpush1.bf16.msra.mxu0 %v4773
    %7774 = vmatprep.mubr.bf16.mxu0 %v142
    %7775 = vmatmul.mubr.bf16.gmra.mrb[0].mxu0 %v141
    %v7776 = vpop.f32.mrb[0].mxu0
    %v7777 = vadd.f32 %v7724, %v7776
    %v7778 = vpop.f32.mrb[0].mxu0
    %v7779 = vadd.f32 %v7726, %v7778
    %v7780 = vpop.f32.mrb[0].mxu0
    %v7781 = vadd.f32 %v7728, %v7780
    %v7782 = vpop.f32.mrb[0].mxu0
    %v7783 = vadd.f32 %v7730, %v7782
    %7784 = vmatprep.mubr.bf16.mxu0 %v158
    %7785 = vmatmul.mubr.bf16.gmra.mrb[0].mxu0 %v157
    %v7786 = vpop.f32.mrb[0].mxu0
    %v7787 = vadd.f32 %v7734, %v7786
    %v7788 = vpop.f32.mrb[0].mxu0
    %v7789 = vadd.f32 %v7736, %v7788
    %v7790 = vpop.f32.mrb[0].mxu0
    %v7791 = vadd.f32 %v7738, %v7790
    %v7792 = vpop.f32.mrb[0].mxu0
    %v7793 = vadd.f32 %v7740, %v7792
    %7794 = vdwg.mxu0
    %7795 = vmatprep.subr.bf16.mxu0 %v4782
    %7796 = vmatpush1.bf16.msra.mxu0 %v4781
    %7797 = vmatprep.subr.bf16.mxu0 %v4790
    %7798 = vmatpush1.bf16.msra.mxu0 %v4789
    %7799 = vmatprep.subr.bf16.mxu0 %v4798
    %7800 = vmatpush1.bf16.msra.mxu0 %v4797
    %7801 = vmatprep.subr.bf16.mxu0 %v4806
    %7802 = vmatpush1.bf16.msra.mxu0 %v4805
    %7803 = vmatprep.subr.bf16.mxu0 %v4814
    %7804 = vmatpush1.bf16.msra.mxu0 %v4813
    %7805 = vmatprep.subr.bf16.mxu0 %v4822
    %7806 = vmatpush1.bf16.msra.mxu0 %v4821
    %7807 = vmatprep.subr.bf16.mxu0 %v4830
    %7808 = vmatpush1.bf16.msra.mxu0 %v4829
    %7809 = vmatprep.subr.bf16.mxu0 %v4838
    %7810 = vmatpush1.bf16.msra.mxu0 %v4837
    %7811 = vmatprep.subr.bf16.mxu0 %v4846
    %7812 = vmatpush1.bf16.msra.mxu0 %v4845
    %7813 = vmatprep.subr.bf16.mxu0 %v4854
    %7814 = vmatpush1.bf16.msra.mxu0 %v4853
    %7815 = vmatprep.subr.bf16.mxu0 %v4862
    %7816 = vmatpush1.bf16.msra.mxu0 %v4861
    %7817 = vmatprep.subr.bf16.mxu0 %v4870
    %7818 = vmatpush1.bf16.msra.mxu0 %v4869
    %7819 = vmatprep.subr.bf16.mxu0 %v4878
    %7820 = vmatpush1.bf16.msra.mxu0 %v4877
    %7821 = vmatprep.subr.bf16.mxu0 %v4886
    %7822 = vmatpush1.bf16.msra.mxu0 %v4885
    %7823 = vmatprep.subr.bf16.mxu0 %v4894
    %7824 = vmatpush1.bf16.msra.mxu0 %v4893
    %7825 = vmatprep.subr.bf16.mxu0 %v4902
    %7826 = vmatpush1.bf16.msra.mxu0 %v4901
    %7827 = vmatprep.mubr.bf16.mxu0 %v144
    %7828 = vmatmul.mubr.bf16.gmra.mrb[0].mxu0 %v143
    %v7829 = vpop.f32.mrb[0].mxu0
    %v7830 = vadd.f32 %v7777, %v7829
    %v7831 = vpop.f32.mrb[0].mxu0
    %v7832 = vadd.f32 %v7779, %v7831
    %v7833 = vpop.f32.mrb[0].mxu0
    %v7834 = vadd.f32 %v7781, %v7833
    %v7835 = vpop.f32.mrb[0].mxu0
    %v7836 = vadd.f32 %v7783, %v7835
    %7837 = vmatprep.mubr.bf16.mxu0 %v160
    %7838 = vmatmul.mubr.bf16.gmra.mrb[0].mxu0 %v159
    %v7839 = vpop.f32.mrb[0].mxu0
    %v7840 = vadd.f32 %v7787, %v7839
    %v7841 = vpop.f32.mrb[0].mxu0
    %v7842 = vadd.f32 %v7789, %v7841
    %v7843 = vpop.f32.mrb[0].mxu0
    %v7844 = vadd.f32 %v7791, %v7843
    %v7845 = vpop.f32.mrb[0].mxu0
    %v7846 = vadd.f32 %v7793, %v7845
    %7847 = vdwg.mxu0
    %7848 = vmatprep.subr.bf16.mxu0 %v4910
    %7849 = vmatpush1.bf16.msra.mxu0 %v4909
    %7850 = vmatprep.subr.bf16.mxu0 %v4918
    %7851 = vmatpush1.bf16.msra.mxu0 %v4917
    %7852 = vmatprep.subr.bf16.mxu0 %v4926
    %7853 = vmatpush1.bf16.msra.mxu0 %v4925
    %7854 = vmatprep.subr.bf16.mxu0 %v4934
    %7855 = vmatpush1.bf16.msra.mxu0 %v4933
    %7856 = vmatprep.subr.bf16.mxu0 %v4942
    %7857 = vmatpush1.bf16.msra.mxu0 %v4941
    %7858 = vmatprep.subr.bf16.mxu0 %v4950
    %7859 = vmatpush1.bf16.msra.mxu0 %v4949
    %7860 = vmatprep.subr.bf16.mxu0 %v4958
    %7861 = vmatpush1.bf16.msra.mxu0 %v4957
    %7862 = vmatprep.subr.bf16.mxu0 %v4966
    %7863 = vmatpush1.bf16.msra.mxu0 %v4965
    %7864 = vmatprep.subr.bf16.mxu0 %v4974
    %7865 = vmatpush1.bf16.msra.mxu0 %v4973
    %7866 = vmatprep.subr.bf16.mxu0 %v4982
    %7867 = vmatpush1.bf16.msra.mxu0 %v4981
    %7868 = vmatprep.subr.bf16.mxu0 %v4990
    %7869 = vmatpush1.bf16.msra.mxu0 %v4989
    %7870 = vmatprep.subr.bf16.mxu0 %v4998
    %7871 = vmatpush1.bf16.msra.mxu0 %v4997
    %7872 = vmatprep.subr.bf16.mxu0 %v5006
    %7873 = vmatpush1.bf16.msra.mxu0 %v5005
    %7874 = vmatprep.subr.bf16.mxu0 %v5014
    %7875 = vmatpush1.bf16.msra.mxu0 %v5013
    %7876 = vmatprep.subr.bf16.mxu0 %v5022
    %7877 = vmatpush1.bf16.msra.mxu0 %v5021
    %7878 = vmatprep.subr.bf16.mxu0 %v5030
    %7879 = vmatpush1.bf16.msra.mxu0 %v5029
    %7880 = vmatprep.mubr.bf16.mxu0 %v146
    %7881 = vmatmul.mubr.bf16.gmra.mrb[0].mxu0 %v145
    %v7882 = vpop.f32.mrb[0].mxu0
    %v7883 = vadd.f32 %v7830, %v7882
    %v7884 = vpop.f32.mrb[0].mxu0
    %v7885 = vadd.f32 %v7832, %v7884
    %v7886 = vpop.f32.mrb[0].mxu0
    %v7887 = vadd.f32 %v7834, %v7886
    %v7888 = vpop.f32.mrb[0].mxu0
    %v7889 = vadd.f32 %v7836, %v7888
    %7890 = vmatprep.mubr.bf16.mxu0 %v162
    %7891 = vmatmul.mubr.bf16.gmra.mrb[0].mxu0 %v161
    %v7892 = vpop.f32.mrb[0].mxu0
    %v7893 = vadd.f32 %v7840, %v7892
    %v7894 = vpop.f32.mrb[0].mxu0
    %v7895 = vadd.f32 %v7842, %v7894
    %v7896 = vpop.f32.mrb[0].mxu0
    %v7897 = vadd.f32 %v7844, %v7896
    %v7898 = vpop.f32.mrb[0].mxu0
    %v7899 = vadd.f32 %v7846, %v7898
    %7900 = vdwg.mxu0
    %7901 = vmatprep.subr.bf16.mxu0 %v5038
    %7902 = vmatpush1.bf16.msra.mxu0 %v5037
    %7903 = vmatprep.subr.bf16.mxu0 %v5046
    %7904 = vmatpush1.bf16.msra.mxu0 %v5045
    %7905 = vmatprep.subr.bf16.mxu0 %v5054
    %7906 = vmatpush1.bf16.msra.mxu0 %v5053
    %7907 = vmatprep.subr.bf16.mxu0 %v5062
    %7908 = vmatpush1.bf16.msra.mxu0 %v5061
    %7909 = vmatprep.subr.bf16.mxu0 %v5070
    %7910 = vmatpush1.bf16.msra.mxu0 %v5069
    %7911 = vmatprep.subr.bf16.mxu0 %v5078
    %7912 = vmatpush1.bf16.msra.mxu0 %v5077
    %7913 = vmatprep.subr.bf16.mxu0 %v5086
    %7914 = vmatpush1.bf16.msra.mxu0 %v5085
    %7915 = vmatprep.subr.bf16.mxu0 %v5094
    %7916 = vmatpush1.bf16.msra.mxu0 %v5093
    %7917 = vmatprep.subr.bf16.mxu0 %v5102
    %7918 = vmatpush1.bf16.msra.mxu0 %v5101
    %7919 = vmatprep.subr.bf16.mxu0 %v5110
    %7920 = vmatpush1.bf16.msra.mxu0 %v5109
    %7921 = vmatprep.subr.bf16.mxu0 %v5118
    %7922 = vmatpush1.bf16.msra.mxu0 %v5117
    %7923 = vmatprep.subr.bf16.mxu0 %v5126
    %7924 = vmatpush1.bf16.msra.mxu0 %v5125
    %7925 = vmatprep.subr.bf16.mxu0 %v5134
    %7926 = vmatpush1.bf16.msra.mxu0 %v5133
    %7927 = vmatprep.subr.bf16.mxu0 %v5142
    %7928 = vmatpush1.bf16.msra.mxu0 %v5141
    %7929 = vmatprep.subr.bf16.mxu0 %v5150
    %7930 = vmatpush1.bf16.msra.mxu0 %v5149
    %7931 = vmatprep.subr.bf16.mxu0 %v5158
    %7932 = vmatpush1.bf16.msra.mxu0 %v5157
    %7933 = vmatprep.mubr.bf16.mxu0 %v148
    %7934 = vmatmul.mubr.bf16.gmra.mrb[0].mxu0 %v147
    %v7935 = vpop.f32.mrb[0].mxu0
    %v7936 = vadd.f32 %v7883, %v7935
    %v7937 = vpop.f32.mrb[0].mxu0
    %v7938 = vadd.f32 %v7885, %v7937
    %v7939 = vpop.f32.mrb[0].mxu0
    %v7940 = vadd.f32 %v7887, %v7939
    %v7941 = vpop.f32.mrb[0].mxu0
    %v7942 = vadd.f32 %v7889, %v7941
    %7943 = vmatprep.mubr.bf16.mxu0 %v164
    %7944 = vmatmul.mubr.bf16.gmra.mrb[0].mxu0 %v163
    %v7945 = vpop.f32.mrb[0].mxu0
    %v7946 = vadd.f32 %v7893, %v7945
    %v7947 = vpop.f32.mrb[0].mxu0
    %v7948 = vadd.f32 %v7895, %v7947
    %v7949 = vpop.f32.mrb[0].mxu0
    %v7950 = vadd.f32 %v7897, %v7949
    %v7951 = vpop.f32.mrb[0].mxu0
    %v7952 = vadd.f32 %v7899, %v7951
    %7953 = vdwg.mxu0
    %7954 = vmatprep.subr.bf16.mxu0 %v5166
    %7955 = vmatpush1.bf16.msra.mxu0 %v5165
    %7956 = vmatprep.subr.bf16.mxu0 %v5174
    %7957 = vmatpush1.bf16.msra.mxu0 %v5173
    %7958 = vmatprep.subr.bf16.mxu0 %v5182
    %7959 = vmatpush1.bf16.msra.mxu0 %v5181
    %7960 = vmatprep.subr.bf16.mxu0 %v5190
    %7961 = vmatpush1.bf16.msra.mxu0 %v5189
    %7962 = vmatprep.subr.bf16.mxu0 %v5198
    %7963 = vmatpush1.bf16.msra.mxu0 %v5197
    %7964 = vmatprep.subr.bf16.mxu0 %v5206
    %7965 = vmatpush1.bf16.msra.mxu0 %v5205
    %7966 = vmatprep.subr.bf16.mxu0 %v5214
    %7967 = vmatpush1.bf16.msra.mxu0 %v5213
    %7968 = vmatprep.subr.bf16.mxu0 %v5222
    %7969 = vmatpush1.bf16.msra.mxu0 %v5221
    %7970 = vmatprep.subr.bf16.mxu0 %v5230
    %7971 = vmatpush1.bf16.msra.mxu0 %v5229
    %7972 = vmatprep.subr.bf16.mxu0 %v5238
    %7973 = vmatpush1.bf16.msra.mxu0 %v5237
    %7974 = vmatprep.subr.bf16.mxu0 %v5246
    %7975 = vmatpush1.bf16.msra.mxu0 %v5245
    %7976 = vmatprep.subr.bf16.mxu0 %v5254
    %7977 = vmatpush1.bf16.msra.mxu0 %v5253
    %7978 = vmatprep.subr.bf16.mxu0 %v5262
    %7979 = vmatpush1.bf16.msra.mxu0 %v5261
    %7980 = vmatprep.subr.bf16.mxu0 %v5270
    %7981 = vmatpush1.bf16.msra.mxu0 %v5269
    %7982 = vmatprep.subr.bf16.mxu0 %v5278
    %7983 = vmatpush1.bf16.msra.mxu0 %v5277
    %7984 = vmatprep.subr.bf16.mxu0 %v5286
    %7985 = vmatpush1.bf16.msra.mxu0 %v5285
    %7986 = vmatprep.mubr.bf16.mxu0 %v150
    %7987 = vmatmul.mubr.bf16.gmra.mrb[0].mxu0 %v149
    %v7988 = vpop.f32.mrb[0].mxu0
    %v7989 = vadd.f32 %v7936, %v7988
    %v7990 = vpop.f32.mrb[0].mxu0
    %v7991 = vadd.f32 %v7938, %v7990
    %v7992 = vpop.f32.mrb[0].mxu0
    %v7993 = vadd.f32 %v7940, %v7992
    %v7994 = vpop.f32.mrb[0].mxu0
    %v7995 = vadd.f32 %v7942, %v7994
    %7996 = vmatprep.mubr.bf16.mxu0 %v166
    %7997 = vmatmul.mubr.bf16.gmra.mrb[0].mxu0 %v165
    %v7998 = vpop.f32.mrb[0].mxu0
    %v7999 = vadd.f32 %v7946, %v7998
    %v8000 = vpop.f32.mrb[0].mxu0
    %v8001 = vadd.f32 %v7948, %v8000
    %v8002 = vpop.f32.mrb[0].mxu0
    %v8003 = vadd.f32 %v7950, %v8002
    %v8004 = vpop.f32.mrb[0].mxu0
    %v8005 = vadd.f32 %v7952, %v8004
    %8006 = vdwg.mxu0
    %v8007 = vmax.f32 %v6717, %v6721
    %v8008 = vrot.slane %v8007, 4
    %v8009 = vmax.f32 %v8007, %v8008
    %v8010 = vrot.slane %v8009, 2
    %v8011 = vmax.f32 %v8009, %v8010
    %v8012 = vrot.slane %v8011, 1
    %v8013 = vmax.f32 %v8011, %v8012
    %v8014 = vmax.f32 %v6719, %v6723
    %v8015 = vrot.slane %v8014, 4
    %v8016 = vmax.f32 %v8014, %v8015
    %v8017 = vrot.slane %v8016, 2
    %v8018 = vmax.f32 %v8016, %v8017
    %v8019 = vrot.slane %v8018, 1
    %v8020 = vmax.f32 %v8018, %v8019
    %v8021 = vmax.f32 %v7141, %v7145
    %v8022 = vrot.slane %v8021, 4
    %v8023 = vmax.f32 %v8021, %v8022
    %v8024 = vrot.slane %v8023, 2
    %v8025 = vmax.f32 %v8023, %v8024
    %v8026 = vrot.slane %v8025, 1
    %v8027 = vmax.f32 %v8025, %v8026
    %v8028 = vmax.f32 %v7143, %v7147
    %v8029 = vrot.slane %v8028, 4
    %v8030 = vmax.f32 %v8028, %v8029
    %v8031 = vrot.slane %v8030, 2
    %v8032 = vmax.f32 %v8030, %v8031
    %v8033 = vrot.slane %v8032, 1
    %v8034 = vmax.f32 %v8032, %v8033
    %v8035 = vmax.f32 %v7565, %v7569
    %v8036 = vrot.slane %v8035, 4
    %v8037 = vmax.f32 %v8035, %v8036
    %v8038 = vrot.slane %v8037, 2
    %v8039 = vmax.f32 %v8037, %v8038
    %v8040 = vrot.slane %v8039, 1
    %v8041 = vmax.f32 %v8039, %v8040
    %v8042 = vmax.f32 %v7567, %v7571
    %v8043 = vrot.slane %v8042, 4
    %v8044 = vmax.f32 %v8042, %v8043
    %v8045 = vrot.slane %v8044, 2
    %v8046 = vmax.f32 %v8044, %v8045
    %v8047 = vrot.slane %v8046, 1
    %v8048 = vmax.f32 %v8046, %v8047
    %v8049 = vmax.f32 %v7989, %v7993
    %v8050 = vrot.slane %v8049, 4
    %v8051 = vmax.f32 %v8049, %v8050
    %v8052 = vrot.slane %v8051, 2
    %v8053 = vmax.f32 %v8051, %v8052
    %v8054 = vrot.slane %v8053, 1
    %v8055 = vmax.f32 %v8053, %v8054
    %v8056 = vmax.f32 %v7991, %v7995
    %v8057 = vrot.slane %v8056, 4
    %v8058 = vmax.f32 %v8056, %v8057
    %v8059 = vrot.slane %v8058, 2
    %v8060 = vmax.f32 %v8058, %v8059
    %v8061 = vrot.slane %v8060, 1
    %v8062 = vmax.f32 %v8060, %v8061
    %v8063 = vmax.f32 %v6727, %v6731
    %v8064 = vrot.slane %v8063, 4
    %v8065 = vmax.f32 %v8063, %v8064
    %v8066 = vrot.slane %v8065, 2
    %v8067 = vmax.f32 %v8065, %v8066
    %v8068 = vrot.slane %v8067, 1
    %v8069 = vmax.f32 %v8067, %v8068
    %v8070 = vmax.f32 %v6729, %v6733
    %v8071 = vrot.slane %v8070, 4
    %v8072 = vmax.f32 %v8070, %v8071
    %v8073 = vrot.slane %v8072, 2
    %v8074 = vmax.f32 %v8072, %v8073
    %v8075 = vrot.slane %v8074, 1
    %v8076 = vmax.f32 %v8074, %v8075
    %v8077 = vmax.f32 %v7151, %v7155
    %v8078 = vrot.slane %v8077, 4
    %v8079 = vmax.f32 %v8077, %v8078
    %v8080 = vrot.slane %v8079, 2
    %v8081 = vmax.f32 %v8079, %v8080
    %v8082 = vrot.slane %v8081, 1
    %v8083 = vmax.f32 %v8081, %v8082
    %v8084 = vmax.f32 %v7153, %v7157
    %v8085 = vrot.slane %v8084, 4
    %v8086 = vmax.f32 %v8084, %v8085
    %v8087 = vrot.slane %v8086, 2
    %v8088 = vmax.f32 %v8086, %v8087
    %v8089 = vrot.slane %v8088, 1
    %v8090 = vmax.f32 %v8088, %v8089
    %v8091 = vmax.f32 %v7575, %v7579
    %v8092 = vrot.slane %v8091, 4
    %v8093 = vmax.f32 %v8091, %v8092
    %v8094 = vrot.slane %v8093, 2
    %v8095 = vmax.f32 %v8093, %v8094
    %v8096 = vrot.slane %v8095, 1
    %v8097 = vmax.f32 %v8095, %v8096
    %v8098 = vmax.f32 %v7577, %v7581
    %v8099 = vrot.slane %v8098, 4
    %v8100 = vmax.f32 %v8098, %v8099
    %v8101 = vrot.slane %v8100, 2
    %v8102 = vmax.f32 %v8100, %v8101
    %v8103 = vrot.slane %v8102, 1
    %v8104 = vmax.f32 %v8102, %v8103
    %v8105 = vmax.f32 %v7999, %v8003
    %v8106 = vrot.slane %v8105, 4
    %v8107 = vmax.f32 %v8105, %v8106
    %v8108 = vrot.slane %v8107, 2
    %v8109 = vmax.f32 %v8107, %v8108
    %v8110 = vrot.slane %v8109, 1
    %v8111 = vmax.f32 %v8109, %v8110
    %v8112 = vmax.f32 %v8001, %v8005
    %v8113 = vrot.slane %v8112, 4
    %v8114 = vmax.f32 %v8112, %v8113
    %v8115 = vrot.slane %v8114, 2
    %v8116 = vmax.f32 %v8114, %v8115
    %v8117 = vrot.slane %v8116, 1
    %v8118 = vmax.f32 %v8116, %v8117
    %v8119 = vsub.f32 %v6717, %v8013
    %v8120 = vsub.f32 %v6719, %v8020
    %v8121 = vsub.f32 %v7141, %v8027
    %v8122 = vsub.f32 %v7143, %v8034
    %v8123 = vsub.f32 %v7565, %v8041
    %v8124 = vsub.f32 %v7567, %v8048
    %v8125 = vsub.f32 %v7989, %v8055
    %v8126 = vsub.f32 %v7991, %v8062
    %v8127 = vsub.f32 %v6721, %v8013
    %v8128 = vsub.f32 %v6723, %v8020
    %v8129 = vsub.f32 %v7145, %v8027
    %v8130 = vsub.f32 %v7147, %v8034
    %v8131 = vsub.f32 %v7569, %v8041
    %v8132 = vsub.f32 %v7571, %v8048
    %v8133 = vsub.f32 %v7993, %v8055
    %v8134 = vsub.f32 %v7995, %v8062
    %v8135 = vsub.f32 %v6727, %v8069
    %v8136 = vsub.f32 %v6729, %v8076
    %v8137 = vsub.f32 %v7151, %v8083
    %v8138 = vsub.f32 %v7153, %v8090
    %v8139 = vsub.f32 %v7575, %v8097
    %v8140 = vsub.f32 %v7577, %v8104
    %v8141 = vsub.f32 %v7999, %v8111
    %v8142 = vsub.f32 %v8001, %v8118
    %v8143 = vsub.f32 %v6731, %v8069
    %v8144 = vsub.f32 %v6733, %v8076
    %v8145 = vsub.f32 %v7155, %v8083
    %v8146 = vsub.f32 %v7157, %v8090
    %v8147 = vsub.f32 %v7579, %v8097
    %v8148 = vsub.f32 %v7581, %v8104
    %v8149 = vsub.f32 %v8003, %v8111
    %v8150 = vsub.f32 %v8005, %v8118
    %v8151 = vmul.f32 %v8119, 1.442695
    %v8152 = vpow.pop %v8151
    %v8153 = vmul.f32 %v8120, 1.442695
    %v8154 = vpow.pop %v8153
    %v8155 = vmul.f32 %v8121, 1.442695
    %v8156 = vpow.pop %v8155
    %v8157 = vmul.f32 %v8122, 1.442695
    %v8158 = vpow.pop %v8157
    %v8159 = vmul.f32 %v8123, 1.442695
    %v8160 = vpow.pop %v8159
    %v8161 = vmul.f32 %v8124, 1.442695
    %v8162 = vpow.pop %v8161
    %v8163 = vmul.f32 %v8125, 1.442695
    %v8164 = vpow.pop %v8163
    %v8165 = vmul.f32 %v8126, 1.442695
    %v8166 = vpow.pop %v8165
    %v8167 = vmul.f32 %v8127, 1.442695
    %v8168 = vpow.pop %v8167
    %v8169 = vmul.f32 %v8128, 1.442695
    %v8170 = vpow.pop %v8169
    %v8171 = vmul.f32 %v8129, 1.442695
    %v8172 = vpow.pop %v8171
    %v8173 = vmul.f32 %v8130, 1.442695
    %v8174 = vpow.pop %v8173
    %v8175 = vmul.f32 %v8131, 1.442695
    %v8176 = vpow.pop %v8175
    %v8177 = vmul.f32 %v8132, 1.442695
    %v8178 = vpow.pop %v8177
    %v8179 = vmul.f32 %v8133, 1.442695
    %v8180 = vpow.pop %v8179
    %v8181 = vmul.f32 %v8134, 1.442695
    %v8182 = vpow.pop %v8181
    %v8183 = vmul.f32 %v8135, 1.442695
    %v8184 = vpow.pop %v8183
    %v8185 = vmul.f32 %v8136, 1.442695
    %v8186 = vpow.pop %v8185
    %v8187 = vmul.f32 %v8137, 1.442695
    %v8188 = vpow.pop %v8187
    %v8189 = vmul.f32 %v8138, 1.442695
    %v8190 = vpow.pop %v8189
    %v8191 = vmul.f32 %v8139, 1.442695
    %v8192 = vpow.pop %v8191
    %v8193 = vmul.f32 %v8140, 1.442695
    %v8194 = vpow.pop %v8193
    %v8195 = vmul.f32 %v8141, 1.442695
    %v8196 = vpow.pop %v8195
    %v8197 = vmul.f32 %v8142, 1.442695
    %v8198 = vpow.pop %v8197
    %v8199 = vmul.f32 %v8143, 1.442695
    %v8200 = vpow.pop %v8199
    %v8201 = vmul.f32 %v8144, 1.442695
    %v8202 = vpow.pop %v8201
    %v8203 = vmul.f32 %v8145, 1.442695
    %v8204 = vpow.pop %v8203
    %v8205 = vmul.f32 %v8146, 1.442695
    %v8206 = vpow.pop %v8205
    %v8207 = vmul.f32 %v8147, 1.442695
    %v8208 = vpow.pop %v8207
    %v8209 = vmul.f32 %v8148, 1.442695
    %v8210 = vpow.pop %v8209
    %v8211 = vmul.f32 %v8149, 1.442695
    %v8212 = vpow.pop %v8211
    %v8213 = vmul.f32 %v8150, 1.442695
    %v8214 = vpow.pop %v8213
    %v8215 = vadd.f32 %v8152, %v8168
    %v8216 = vrot.slane %v8215, 4
    %v8217 = vadd.f32 %v8215, %v8216
    %v8218 = vrot.slane %v8217, 2
    %v8219 = vadd.f32 %v8217, %v8218
    %v8220 = vrot.slane %v8219, 1
    %v8221 = vadd.f32 %v8219, %v8220
    %v8222 = vadd.f32 %v8154, %v8170
    %v8223 = vrot.slane %v8222, 4
    %v8224 = vadd.f32 %v8222, %v8223
    %v8225 = vrot.slane %v8224, 2
    %v8226 = vadd.f32 %v8224, %v8225
    %v8227 = vrot.slane %v8226, 1
    %v8228 = vadd.f32 %v8226, %v8227
    %v8229 = vadd.f32 %v8156, %v8172
    %v8230 = vrot.slane %v8229, 4
    %v8231 = vadd.f32 %v8229, %v8230
    %v8232 = vrot.slane %v8231, 2
    %v8233 = vadd.f32 %v8231, %v8232
    %v8234 = vrot.slane %v8233, 1
    %v8235 = vadd.f32 %v8233, %v8234
    %v8236 = vadd.f32 %v8158, %v8174
    %v8237 = vrot.slane %v8236, 4
    %v8238 = vadd.f32 %v8236, %v8237
    %v8239 = vrot.slane %v8238, 2
    %v8240 = vadd.f32 %v8238, %v8239
    %v8241 = vrot.slane %v8240, 1
    %v8242 = vadd.f32 %v8240, %v8241
    %v8243 = vadd.f32 %v8160, %v8176
    %v8244 = vrot.slane %v8243, 4
    %v8245 = vadd.f32 %v8243, %v8244
    %v8246 = vrot.slane %v8245, 2
    %v8247 = vadd.f32 %v8245, %v8246
    %v8248 = vrot.slane %v8247, 1
    %v8249 = vadd.f32 %v8247, %v8248
    %v8250 = vadd.f32 %v8162, %v8178
    %v8251 = vrot.slane %v8250, 4
    %v8252 = vadd.f32 %v8250, %v8251
    %v8253 = vrot.slane %v8252, 2
    %v8254 = vadd.f32 %v8252, %v8253
    %v8255 = vrot.slane %v8254, 1
    %v8256 = vadd.f32 %v8254, %v8255
    %v8257 = vadd.f32 %v8164, %v8180
    %v8258 = vrot.slane %v8257, 4
    %v8259 = vadd.f32 %v8257, %v8258
    %v8260 = vrot.slane %v8259, 2
    %v8261 = vadd.f32 %v8259, %v8260
    %v8262 = vrot.slane %v8261, 1
    %v8263 = vadd.f32 %v8261, %v8262
    %v8264 = vadd.f32 %v8166, %v8182
    %v8265 = vrot.slane %v8264, 4
    %v8266 = vadd.f32 %v8264, %v8265
    %v8267 = vrot.slane %v8266, 2
    %v8268 = vadd.f32 %v8266, %v8267
    %v8269 = vrot.slane %v8268, 1
    %v8270 = vadd.f32 %v8268, %v8269
    %v8271 = vadd.f32 %v8184, %v8200
    %v8272 = vrot.slane %v8271, 4
    %v8273 = vadd.f32 %v8271, %v8272
    %v8274 = vrot.slane %v8273, 2
    %v8275 = vadd.f32 %v8273, %v8274
    %v8276 = vrot.slane %v8275, 1
    %v8277 = vadd.f32 %v8275, %v8276
    %v8278 = vadd.f32 %v8186, %v8202
    %v8279 = vrot.slane %v8278, 4
    %v8280 = vadd.f32 %v8278, %v8279
    %v8281 = vrot.slane %v8280, 2
    %v8282 = vadd.f32 %v8280, %v8281
    %v8283 = vrot.slane %v8282, 1
    %v8284 = vadd.f32 %v8282, %v8283
    %v8285 = vadd.f32 %v8188, %v8204
    %v8286 = vrot.slane %v8285, 4
    %v8287 = vadd.f32 %v8285, %v8286
    %v8288 = vrot.slane %v8287, 2
    %v8289 = vadd.f32 %v8287, %v8288
    %v8290 = vrot.slane %v8289, 1
    %v8291 = vadd.f32 %v8289, %v8290
    %v8292 = vadd.f32 %v8190, %v8206
    %v8293 = vrot.slane %v8292, 4
    %v8294 = vadd.f32 %v8292, %v8293
    %v8295 = vrot.slane %v8294, 2
    %v8296 = vadd.f32 %v8294, %v8295
    %v8297 = vrot.slane %v8296, 1
    %v8298 = vadd.f32 %v8296, %v8297
    %v8299 = vadd.f32 %v8192, %v8208
    %v8300 = vrot.slane %v8299, 4
    %v8301 = vadd.f32 %v8299, %v8300
    %v8302 = vrot.slane %v8301, 2
    %v8303 = vadd.f32 %v8301, %v8302
    %v8304 = vrot.slane %v8303, 1
    %v8305 = vadd.f32 %v8303, %v8304
    %v8306 = vadd.f32 %v8194, %v8210
    %v8307 = vrot.slane %v8306, 4
    %v8308 = vadd.f32 %v8306, %v8307
    %v8309 = vrot.slane %v8308, 2
    %v8310 = vadd.f32 %v8308, %v8309
    %v8311 = vrot.slane %v8310, 1
    %v8312 = vadd.f32 %v8310, %v8311
    %v8313 = vadd.f32 %v8196, %v8212
    %v8314 = vrot.slane %v8313, 4
    %v8315 = vadd.f32 %v8313, %v8314
    %v8316 = vrot.slane %v8315, 2
    %v8317 = vadd.f32 %v8315, %v8316
    %v8318 = vrot.slane %v8317, 1
    %v8319 = vadd.f32 %v8317, %v8318
    %v8320 = vadd.f32 %v8198, %v8214
    %v8321 = vrot.slane %v8320, 4
    %v8322 = vadd.f32 %v8320, %v8321
    %v8323 = vrot.slane %v8322, 2
    %v8324 = vadd.f32 %v8322, %v8323
    %v8325 = vrot.slane %v8324, 1
    %v8326 = vadd.f32 %v8324, %v8325
    %v8327 = vrcp.pop 16.0
    %v8328 = vmul.f32 %v8221, %v8327
    %v8329 = vmul.f32 %v8228, %v8327
    %v8330 = vmul.f32 %v8235, %v8327
    %v8331 = vmul.f32 %v8242, %v8327
    %v8332 = vmul.f32 %v8249, %v8327
    %v8333 = vmul.f32 %v8256, %v8327
    %v8334 = vmul.f32 %v8263, %v8327
    %v8335 = vmul.f32 %v8270, %v8327
    %v8336 = vmul.f32 %v8277, %v8327
    %v8337 = vmul.f32 %v8284, %v8327
    %v8338 = vmul.f32 %v8291, %v8327
    %v8339 = vmul.f32 %v8298, %v8327
    %v8340 = vmul.f32 %v8305, %v8327
    %v8341 = vmul.f32 %v8312, %v8327
    %v8342 = vmul.f32 %v8319, %v8327
    %v8343 = vmul.f32 %v8326, %v8327
    %v8344 = vadd.f32 %v8328, 1e-06
    %v8345 = vadd.f32 %v8329, 1e-06
    %v8346 = vadd.f32 %v8330, 1e-06
    %v8347 = vadd.f32 %v8331, 1e-06
    %v8348 = vadd.f32 %v8332, 1e-06
    %v8349 = vadd.f32 %v8333, 1e-06
    %v8350 = vadd.f32 %v8334, 1e-06
    %v8351 = vadd.f32 %v8335, 1e-06
    %v8352 = vadd.f32 %v8336, 1e-06
    %v8353 = vadd.f32 %v8337, 1e-06
    %v8354 = vadd.f32 %v8338, 1e-06
    %v8355 = vadd.f32 %v8339, 1e-06
    %v8356 = vadd.f32 %v8340, 1e-06
    %v8357 = vadd.f32 %v8341, 1e-06
    %v8358 = vadd.f32 %v8342, 1e-06
    %v8359 = vadd.f32 %v8343, 1e-06
    %v8360 = vlog2.pop %v8344
    %v8361 = vmul.f32 %v8360, 0.6931472
    %v8362 = vlog2.pop %v8345
    %v8363 = vmul.f32 %v8362, 0.6931472
    %v8364 = vlog2.pop %v8346
    %v8365 = vmul.f32 %v8364, 0.6931472
    %v8366 = vlog2.pop %v8347
    %v8367 = vmul.f32 %v8366, 0.6931472
    %v8368 = vlog2.pop %v8348
    %v8369 = vmul.f32 %v8368, 0.6931472
    %v8370 = vlog2.pop %v8349
    %v8371 = vmul.f32 %v8370, 0.6931472
    %v8372 = vlog2.pop %v8350
    %v8373 = vmul.f32 %v8372, 0.6931472
    %v8374 = vlog2.pop %v8351
    %v8375 = vmul.f32 %v8374, 0.6931472
    %v8376 = vlog2.pop %v8352
    %v8377 = vmul.f32 %v8376, 0.6931472
    %v8378 = vlog2.pop %v8353
    %v8379 = vmul.f32 %v8378, 0.6931472
    %v8380 = vlog2.pop %v8354
    %v8381 = vmul.f32 %v8380, 0.6931472
    %v8382 = vlog2.pop %v8355
    %v8383 = vmul.f32 %v8382, 0.6931472
    %v8384 = vlog2.pop %v8356
    %v8385 = vmul.f32 %v8384, 0.6931472
    %v8386 = vlog2.pop %v8357
    %v8387 = vmul.f32 %v8386, 0.6931472
    %v8388 = vlog2.pop %v8358
    %v8389 = vmul.f32 %v8388, 0.6931472
    %v8390 = vlog2.pop %v8359
    %v8391 = vmul.f32 %v8390, 0.6931472
    %v8392 = vadd.f32 %v8013, %v8361
    %v8393 = vadd.f32 %v8020, %v8363
    %v8394 = vadd.f32 %v8027, %v8365
    %v8395 = vadd.f32 %v8034, %v8367
    %v8396 = vadd.f32 %v8041, %v8369
    %v8397 = vadd.f32 %v8048, %v8371
    %v8398 = vadd.f32 %v8055, %v8373
    %v8399 = vadd.f32 %v8062, %v8375
    %v8400 = vadd.f32 %v8069, %v8377
    %v8401 = vadd.f32 %v8076, %v8379
    %v8402 = vadd.f32 %v8083, %v8381
    %v8403 = vadd.f32 %v8090, %v8383
    %v8404 = vadd.f32 %v8097, %v8385
    %v8405 = vadd.f32 %v8104, %v8387
    %v8406 = vadd.f32 %v8111, %v8389
    %v8407 = vadd.f32 %v8118, %v8391
    %v8408 = vmul.f32 %v8392, 0.1
    %v8409 = vmul.f32 %v8393, 0.1
    %v8410 = vmul.f32 %v8394, 0.1
    %v8411 = vmul.f32 %v8395, 0.1
    %v8412 = vmul.f32 %v8396, 0.1
    %v8413 = vmul.f32 %v8397, 0.1
    %v8414 = vmul.f32 %v8398, 0.1
    %v8415 = vmul.f32 %v8399, 0.1
    %v8416 = vmul.f32 %v8400, 0.1
    %v8417 = vmul.f32 %v8401, 0.1
    %v8418 = vmul.f32 %v8402, 0.1
    %v8419 = vmul.f32 %v8403, 0.1
    %v8420 = vmul.f32 %v8404, 0.1
    %v8421 = vmul.f32 %v8405, 0.1
    %v8422 = vmul.f32 %v8406, 0.1
    %v8423 = vmul.f32 %v8407, 0.1
    %v8424 = vld [vmem:[#allocation7] sm:$0xff]
    %v8425 = vld [vmem:[#allocation7 + $0x8] sm:$0xff]
    %v8426 = vld [vmem:[#allocation7 + $0x10] sm:$0xff]
    %v8427 = vld [vmem:[#allocation7 + $0x18] sm:$0xff]
    %v8428 = vld [vmem:[#allocation7 + $0x20] sm:$0xff]
    %v8429 = vld [vmem:[#allocation7 + $0x28] sm:$0xff]
    %v8430 = vld [vmem:[#allocation7 + $0x30] sm:$0xff]
    %v8431 = vld [vmem:[#allocation7 + $0x38] sm:$0xff]
    %v8432 = vld [vmem:[#allocation7 + $0x40] sm:$0xff]
    %v8433 = vld [vmem:[#allocation7 + $0x48] sm:$0xff]
    %v8434 = vld [vmem:[#allocation7 + $0x50] sm:$0xff]
    %v8435 = vld [vmem:[#allocation7 + $0x58] sm:$0xff]
    %v8436 = vld [vmem:[#allocation7 + $0x60] sm:$0xff]
    %v8437 = vld [vmem:[#allocation7 + $0x68] sm:$0xff]
    %v8438 = vld [vmem:[#allocation7 + $0x70] sm:$0xff]
    %v8439 = vld [vmem:[#allocation7 + $0x78] sm:$0xff]
    %v8440 = vld [vmem:[#allocation7 + $0x80] sm:$0xff]
    %v8441 = vld [vmem:[#allocation7 + $0x88] sm:$0xff]
    %v8442 = vld [vmem:[#allocation7 + $0x90] sm:$0xff]
    %v8443 = vld [vmem:[#allocation7 + $0x98] sm:$0xff]
    %v8444 = vld [vmem:[#allocation7 + $0xa0] sm:$0xff]
    %v8445 = vld [vmem:[#allocation7 + $0xa8] sm:$0xff]
    %v8446 = vld [vmem:[#allocation7 + $0xb0] sm:$0xff]
    %v8447 = vld [vmem:[#allocation7 + $0xb8] sm:$0xff]
    %v8448 = vld [vmem:[#allocation7 + $0xc0] sm:$0xff]
    %v8449 = vld [vmem:[#allocation7 + $0xc8] sm:$0xff]
    %v8450 = vld [vmem:[#allocation7 + $0xd0] sm:$0xff]
    %v8451 = vld [vmem:[#allocation7 + $0xd8] sm:$0xff]
    %v8452 = vld [vmem:[#allocation7 + $0xe0] sm:$0xff]
    %v8453 = vld [vmem:[#allocation7 + $0xe8] sm:$0xff]
    %v8454 = vld [vmem:[#allocation7 + $0xf0] sm:$0xff]
    %v8455 = vld [vmem:[#allocation7 + $0xf8] sm:$0xff]
    %v8456 = vld [vmem:[#allocation7 + $0x100] sm:$0xff]
    %v8457 = vld [vmem:[#allocation7 + $0x108] sm:$0xff]
    %v8458 = vld [vmem:[#allocation7 + $0x110] sm:$0xff]
    %v8459 = vld [vmem:[#allocation7 + $0x118] sm:$0xff]
    %v8460 = vld [vmem:[#allocation7 + $0x120] sm:$0xff]
    %v8461 = vld [vmem:[#allocation7 + $0x128] sm:$0xff]
    %v8462 = vld [vmem:[#allocation7 + $0x130] sm:$0xff]
    %v8463 = vld [vmem:[#allocation7 + $0x138] sm:$0xff]
    %v8464 = vld [vmem:[#allocation7 + $0x140] sm:$0xff]
    %v8465 = vld [vmem:[#allocation7 + $0x148] sm:$0xff]
    %v8466 = vld [vmem:[#allocation7 + $0x150] sm:$0xff]
    %v8467 = vld [vmem:[#allocation7 + $0x158] sm:$0xff]
    %v8468 = vld [vmem:[#allocation7 + $0x160] sm:$0xff]
    %v8469 = vld [vmem:[#allocation7 + $0x168] sm:$0xff]
    %v8470 = vld [vmem:[#allocation7 + $0x170] sm:$0xff]
    %v8471 = vld [vmem:[#allocation7 + $0x178] sm:$0xff]
    %v8472 = vld [vmem:[#allocation7 + $0x180] sm:$0xff]
    %v8473 = vld [vmem:[#allocation7 + $0x188] sm:$0xff]
    %v8474 = vld [vmem:[#allocation7 + $0x190] sm:$0xff]
    %v8475 = vld [vmem:[#allocation7 + $0x198] sm:$0xff]
    %v8476 = vld [vmem:[#allocation7 + $0x1a0] sm:$0xff]
    %v8477 = vld [vmem:[#allocation7 + $0x1a8] sm:$0xff]
    %v8478 = vld [vmem:[#allocation7 + $0x1b0] sm:$0xff]
    %v8479 = vld [vmem:[#allocation7 + $0x1b8] sm:$0xff]
    %v8480 = vld [vmem:[#allocation7 + $0x1c0] sm:$0xff]
    %v8481 = vld [vmem:[#allocation7 + $0x1c8] sm:$0xff]
    %v8482 = vld [vmem:[#allocation7 + $0x1d0] sm:$0xff]
    %v8483 = vld [vmem:[#allocation7 + $0x1d8] sm:$0xff]
    %v8484 = vld [vmem:[#allocation7 + $0x1e0] sm:$0xff]
    %v8485 = vld [vmem:[#allocation7 + $0x1e8] sm:$0xff]
    %v8486 = vld [vmem:[#allocation7 + $0x1f0] sm:$0xff]
    %v8487 = vld [vmem:[#allocation7 + $0x1f8] sm:$0xff]
    %v8488 = vld [vmem:[#allocation7 + $0x200] sm:$0xff]
    %v8489 = vld [vmem:[#allocation7 + $0x208] sm:$0xff]
    %v8490 = vld [vmem:[#allocation7 + $0x210] sm:$0xff]
    %v8491 = vld [vmem:[#allocation7 + $0x218] sm:$0xff]
    %v8492 = vld [vmem:[#allocation7 + $0x220] sm:$0xff]
    %v8493 = vld [vmem:[#allocation7 + $0x228] sm:$0xff]
    %v8494 = vld [vmem:[#allocation7 + $0x230] sm:$0xff]
    %v8495 = vld [vmem:[#allocation7 + $0x238] sm:$0xff]
    %v8496 = vld [vmem:[#allocation7 + $0x240] sm:$0xff]
    %v8497 = vld [vmem:[#allocation7 + $0x248] sm:$0xff]
    %v8498 = vld [vmem:[#allocation7 + $0x250] sm:$0xff]
    %v8499 = vld [vmem:[#allocation7 + $0x258] sm:$0xff]
    %v8500 = vld [vmem:[#allocation7 + $0x260] sm:$0xff]
    %v8501 = vld [vmem:[#allocation7 + $0x268] sm:$0xff]
    %v8502 = vld [vmem:[#allocation7 + $0x270] sm:$0xff]
    %v8503 = vld [vmem:[#allocation7 + $0x278] sm:$0xff]
    %v8504 = vld [vmem:[#allocation7 + $0x280] sm:$0xff]
    %v8505 = vld [vmem:[#allocation7 + $0x288] sm:$0xff]
    %v8506 = vld [vmem:[#allocation7 + $0x290] sm:$0xff]
    %v8507 = vld [vmem:[#allocation7 + $0x298] sm:$0xff]
    %v8508 = vld [vmem:[#allocation7 + $0x2a0] sm:$0xff]
    %v8509 = vld [vmem:[#allocation7 + $0x2a8] sm:$0xff]
    %v8510 = vld [vmem:[#allocation7 + $0x2b0] sm:$0xff]
    %v8511 = vld [vmem:[#allocation7 + $0x2b8] sm:$0xff]
    %v8512 = vld [vmem:[#allocation7 + $0x2c0] sm:$0xff]
    %v8513 = vld [vmem:[#allocation7 + $0x2c8] sm:$0xff]
    %v8514 = vld [vmem:[#allocation7 + $0x2d0] sm:$0xff]
    %v8515 = vld [vmem:[#allocation7 + $0x2d8] sm:$0xff]
    %v8516 = vld [vmem:[#allocation7 + $0x2e0] sm:$0xff]
    %v8517 = vld [vmem:[#allocation7 + $0x2e8] sm:$0xff]
    %v8518 = vld [vmem:[#allocation7 + $0x2f0] sm:$0xff]
    %v8519 = vld [vmem:[#allocation7 + $0x2f8] sm:$0xff]
    %v8520 = vld [vmem:[#allocation7 + $0x300] sm:$0xff]
    %v8521 = vld [vmem:[#allocation7 + $0x308] sm:$0xff]
    %v8522 = vld [vmem:[#allocation7 + $0x310] sm:$0xff]
    %v8523 = vld [vmem:[#allocation7 + $0x318] sm:$0xff]
    %v8524 = vld [vmem:[#allocation7 + $0x320] sm:$0xff]
    %v8525 = vld [vmem:[#allocation7 + $0x328] sm:$0xff]
    %v8526 = vld [vmem:[#allocation7 + $0x330] sm:$0xff]
    %v8527 = vld [vmem:[#allocation7 + $0x338] sm:$0xff]
    %v8528 = vld [vmem:[#allocation7 + $0x340] sm:$0xff]
    %v8529 = vld [vmem:[#allocation7 + $0x348] sm:$0xff]
    %v8530 = vld [vmem:[#allocation7 + $0x350] sm:$0xff]
    %v8531 = vld [vmem:[#allocation7 + $0x358] sm:$0xff]
    %v8532 = vld [vmem:[#allocation7 + $0x360] sm:$0xff]
    %v8533 = vld [vmem:[#allocation7 + $0x368] sm:$0xff]
    %v8534 = vld [vmem:[#allocation7 + $0x370] sm:$0xff]
    %v8535 = vld [vmem:[#allocation7 + $0x378] sm:$0xff]
    %v8536 = vld [vmem:[#allocation7 + $0x380] sm:$0xff]
    %v8537 = vld [vmem:[#allocation7 + $0x388] sm:$0xff]
    %v8538 = vld [vmem:[#allocation7 + $0x390] sm:$0xff]
    %v8539 = vld [vmem:[#allocation7 + $0x398] sm:$0xff]
    %v8540 = vld [vmem:[#allocation7 + $0x3a0] sm:$0xff]
    %v8541 = vld [vmem:[#allocation7 + $0x3a8] sm:$0xff]
    %v8542 = vld [vmem:[#allocation7 + $0x3b0] sm:$0xff]
    %v8543 = vld [vmem:[#allocation7 + $0x3b8] sm:$0xff]
    %v8544 = vld [vmem:[#allocation7 + $0x3c0] sm:$0xff]
    %v8545 = vld [vmem:[#allocation7 + $0x3c8] sm:$0xff]
    %v8546 = vld [vmem:[#allocation7 + $0x3d0] sm:$0xff]
    %v8547 = vld [vmem:[#allocation7 + $0x3d8] sm:$0xff]
    %v8548 = vld [vmem:[#allocation7 + $0x3e0] sm:$0xff]
    %v8549 = vld [vmem:[#allocation7 + $0x3e8] sm:$0xff]
    %v8550 = vld [vmem:[#allocation7 + $0x3f0] sm:$0xff]
    %v8551 = vld [vmem:[#allocation7 + $0x3f8] sm:$0xff]
    %v8552 = vld [vmem:[#allocation8] sm:$0x1]
    %v8554 = vlaneseq
    %v8555 = vshrl.u32 %v8554, 7
    %v8556 = vsub.s32 0, %v8555
    %v8557 = vrot.slane %v8552, %v8556
    %vm8575 = vcmask 1041409
    %v8576 = vsel %vm8575, %v8416, %v8408
    %v8577 = vsel %vm8575, %v8417, %v8409
    %v8578 = vsel %vm8575, %v8418, %v8410
    %v8579 = vsel %vm8575, %v8419, %v8411
    %v8580 = vsel %vm8575, %v8420, %v8412
    %v8581 = vsel %vm8575, %v8421, %v8413
    %v8582 = vsel %vm8575, %v8422, %v8414
    %v8583 = vsel %vm8575, %v8423, %v8415
    %8592 = vmatprep.subr.mxu0 0.0
    %8593 = vmatpush1.msra.mxu0 %v8424
    %8594 = vmatprep.subr.mxu0 0.0
    %8595 = vmatpush1.msra.mxu0 %v8425
    %8596 = vmatprep.subr.mxu0 0.0
    %8597 = vmatpush1.msra.mxu0 %v8426
    %8598 = vmatprep.subr.mxu0 0.0
    %8599 = vmatpush1.msra.mxu0 %v8427
    %8600 = vmatprep.subr.mxu0 0.0
    %8601 = vmatpush1.msra.mxu0 %v8428
    %8602 = vmatprep.subr.mxu0 0.0
    %8603 = vmatpush1.msra.mxu0 %v8429
    %8604 = vmatprep.subr.mxu0 0.0
    %8605 = vmatpush1.msra.mxu0 %v8430
    %8606 = vmatprep.subr.mxu0 0.0
    %8607 = vmatpush1.msra.mxu0 %v8431
    %8608 = vmatprep.subr.mxu0 0.0
    %8609 = vmatpush1.msra.mxu0 %v8432
    %8610 = vmatprep.subr.mxu0 0.0
    %8611 = vmatpush1.msra.mxu0 %v8433
    %8612 = vmatprep.subr.mxu0 0.0
    %8613 = vmatpush1.msra.mxu0 %v8434
    %8614 = vmatprep.subr.mxu0 0.0
    %8615 = vmatpush1.msra.mxu0 %v8435
    %8616 = vmatprep.subr.mxu0 0.0
    %8617 = vmatpush1.msra.mxu0 %v8436
    %8618 = vmatprep.subr.mxu0 0.0
    %8619 = vmatpush1.msra.mxu0 %v8437
    %8620 = vmatprep.subr.mxu0 0.0
    %8621 = vmatpush1.msra.mxu0 %v8438
    %8622 = vmatprep.subr.mxu0 0.0
    %8623 = vmatpush1.msra.mxu0 %v8439
    %8624 = vmatprep.subr.mxu0 0.0
    %8625 = vmatpush1.msra.mxu0 %v8440
    %8626 = vmatprep.subr.mxu0 0.0
    %8627 = vmatpush1.msra.mxu0 %v8441
    %8628 = vmatprep.subr.mxu0 0.0
    %8629 = vmatpush1.msra.mxu0 %v8442
    %8630 = vmatprep.subr.mxu0 0.0
    %8631 = vmatpush1.msra.mxu0 %v8443
    %8632 = vmatprep.subr.mxu0 0.0
    %8633 = vmatpush1.msra.mxu0 %v8444
    %8634 = vmatprep.subr.mxu0 0.0
    %8635 = vmatpush1.msra.mxu0 %v8445
    %8636 = vmatprep.subr.mxu0 0.0
    %8637 = vmatpush1.msra.mxu0 %v8446
    %8638 = vmatprep.subr.mxu0 0.0
    %8639 = vmatpush1.msra.mxu0 %v8447
    %8640 = vmatprep.subr.mxu0 0.0
    %8641 = vmatpush1.msra.mxu0 %v8448
    %8642 = vmatprep.subr.mxu0 0.0
    %8643 = vmatpush1.msra.mxu0 %v8449
    %8644 = vmatprep.subr.mxu0 0.0
    %8645 = vmatpush1.msra.mxu0 %v8450
    %8646 = vmatprep.subr.mxu0 0.0
    %8647 = vmatpush1.msra.mxu0 %v8451
    %8648 = vmatprep.subr.mxu0 0.0
    %8649 = vmatpush1.msra.mxu0 %v8452
    %8650 = vmatprep.subr.mxu0 0.0
    %8651 = vmatpush1.msra.mxu0 %v8453
    %8652 = vmatprep.subr.mxu0 0.0
    %8653 = vmatpush1.msra.mxu0 %v8454
    %8654 = vmatprep.subr.mxu0 0.0
    %8655 = vmatpush1.msra.mxu0 %v8455
    %8656 = vmatprep.mubr.f32.mxu0 %v8577
    %8657 = vmatmul.mubr.f32.gmra.mrb[0].mxu0 %v8576
    %v8658 = vpop.f32.mrb[0].mxu0
    %v8659 = vadd.f32 %v8557, %v8658
    %v8660 = vpop.f32.mrb[0].mxu0
    %8661 = vdwg.mxu0
    %8662 = vmatprep.subr.mxu0 0.0
    %8663 = vmatpush1.msra.mxu0 %v8456
    %8664 = vmatprep.subr.mxu0 0.0
    %8665 = vmatpush1.msra.mxu0 %v8457
    %8666 = vmatprep.subr.mxu0 0.0
    %8667 = vmatpush1.msra.mxu0 %v8458
    %8668 = vmatprep.subr.mxu0 0.0
    %8669 = vmatpush1.msra.mxu0 %v8459
    %8670 = vmatprep.subr.mxu0 0.0
    %8671 = vmatpush1.msra.mxu0 %v8460
    %8672 = vmatprep.subr.mxu0 0.0
    %8673 = vmatpush1.msra.mxu0 %v8461
    %8674 = vmatprep.subr.mxu0 0.0
    %8675 = vmatpush1.msra.mxu0 %v8462
    %8676 = vmatprep.subr.mxu0 0.0
    %8677 = vmatpush1.msra.mxu0 %v8463
    %8678 = vmatprep.subr.mxu0 0.0
    %8679 = vmatpush1.msra.mxu0 %v8464
    %8680 = vmatprep.subr.mxu0 0.0
    %8681 = vmatpush1.msra.mxu0 %v8465
    %8682 = vmatprep.subr.mxu0 0.0
    %8683 = vmatpush1.msra.mxu0 %v8466
    %8684 = vmatprep.subr.mxu0 0.0
    %8685 = vmatpush1.msra.mxu0 %v8467
    %8686 = vmatprep.subr.mxu0 0.0
    %8687 = vmatpush1.msra.mxu0 %v8468
    %8688 = vmatprep.subr.mxu0 0.0
    %8689 = vmatpush1.msra.mxu0 %v8469
    %8690 = vmatprep.subr.mxu0 0.0
    %8691 = vmatpush1.msra.mxu0 %v8470
    %8692 = vmatprep.subr.mxu0 0.0
    %8693 = vmatpush1.msra.mxu0 %v8471
    %8694 = vmatprep.subr.mxu0 0.0
    %8695 = vmatpush1.msra.mxu0 %v8472
    %8696 = vmatprep.subr.mxu0 0.0
    %8697 = vmatpush1.msra.mxu0 %v8473
    %8698 = vmatprep.subr.mxu0 0.0
    %8699 = vmatpush1.msra.mxu0 %v8474
    %8700 = vmatprep.subr.mxu0 0.0
    %8701 = vmatpush1.msra.mxu0 %v8475
    %8702 = vmatprep.subr.mxu0 0.0
    %8703 = vmatpush1.msra.mxu0 %v8476
    %8704 = vmatprep.subr.mxu0 0.0
    %8705 = vmatpush1.msra.mxu0 %v8477
    %8706 = vmatprep.subr.mxu0 0.0
    %8707 = vmatpush1.msra.mxu0 %v8478
    %8708 = vmatprep.subr.mxu0 0.0
    %8709 = vmatpush1.msra.mxu0 %v8479
    %8710 = vmatprep.subr.mxu0 0.0
    %8711 = vmatpush1.msra.mxu0 %v8480
    %8712 = vmatprep.subr.mxu0 0.0
    %8713 = vmatpush1.msra.mxu0 %v8481
    %8714 = vmatprep.subr.mxu0 0.0
    %8715 = vmatpush1.msra.mxu0 %v8482
    %8716 = vmatprep.subr.mxu0 0.0
    %8717 = vmatpush1.msra.mxu0 %v8483
    %8718 = vmatprep.subr.mxu0 0.0
    %8719 = vmatpush1.msra.mxu0 %v8484
    %8720 = vmatprep.subr.mxu0 0.0
    %8721 = vmatpush1.msra.mxu0 %v8485
    %8722 = vmatprep.subr.mxu0 0.0
    %8723 = vmatpush1.msra.mxu0 %v8486
    %8724 = vmatprep.subr.mxu0 0.0
    %8725 = vmatpush1.msra.mxu0 %v8487
    %8726 = vmatprep.mubr.f32.mxu0 %v8579
    %8727 = vmatmul.mubr.f32.gmra.mrb[0].mxu0 %v8578
    %v8728 = vpop.f32.mrb[0].mxu0
    %v8729 = vadd.f32 %v8659, %v8728
    %v8730 = vpop.f32.mrb[0].mxu0
    %8731 = vdwg.mxu0
    %8732 = vmatprep.subr.mxu0 0.0
    %8733 = vmatpush1.msra.mxu0 %v8488
    %8734 = vmatprep.subr.mxu0 0.0
    %8735 = vmatpush1.msra.mxu0 %v8489
    %8736 = vmatprep.subr.mxu0 0.0
    %8737 = vmatpush1.msra.mxu0 %v8490
    %8738 = vmatprep.subr.mxu0 0.0
    %8739 = vmatpush1.msra.mxu0 %v8491
    %8740 = vmatprep.subr.mxu0 0.0
    %8741 = vmatpush1.msra.mxu0 %v8492
    %8742 = vmatprep.subr.mxu0 0.0
    %8743 = vmatpush1.msra.mxu0 %v8493
    %8744 = vmatprep.subr.mxu0 0.0
    %8745 = vmatpush1.msra.mxu0 %v8494
    %8746 = vmatprep.subr.mxu0 0.0
    %8747 = vmatpush1.msra.mxu0 %v8495
    %8748 = vmatprep.subr.mxu0 0.0
    %8749 = vmatpush1.msra.mxu0 %v8496
    %8750 = vmatprep.subr.mxu0 0.0
    %8751 = vmatpush1.msra.mxu0 %v8497
    %8752 = vmatprep.subr.mxu0 0.0
    %8753 = vmatpush1.msra.mxu0 %v8498
    %8754 = vmatprep.subr.mxu0 0.0
    %8755 = vmatpush1.msra.mxu0 %v8499
    %8756 = vmatprep.subr.mxu0 0.0
    %8757 = vmatpush1.msra.mxu0 %v8500
    %8758 = vmatprep.subr.mxu0 0.0
    %8759 = vmatpush1.msra.mxu0 %v8501
    %8760 = vmatprep.subr.mxu0 0.0
    %8761 = vmatpush1.msra.mxu0 %v8502
    %8762 = vmatprep.subr.mxu0 0.0
    %8763 = vmatpush1.msra.mxu0 %v8503
    %8764 = vmatprep.subr.mxu0 0.0
    %8765 = vmatpush1.msra.mxu0 %v8504
    %8766 = vmatprep.subr.mxu0 0.0
    %8767 = vmatpush1.msra.mxu0 %v8505
    %8768 = vmatprep.subr.mxu0 0.0
    %8769 = vmatpush1.msra.mxu0 %v8506
    %8770 = vmatprep.subr.mxu0 0.0
    %8771 = vmatpush1.msra.mxu0 %v8507
    %8772 = vmatprep.subr.mxu0 0.0
    %8773 = vmatpush1.msra.mxu0 %v8508
    %8774 = vmatprep.subr.mxu0 0.0
    %8775 = vmatpush1.msra.mxu0 %v8509
    %8776 = vmatprep.subr.mxu0 0.0
    %8777 = vmatpush1.msra.mxu0 %v8510
    %8778 = vmatprep.subr.mxu0 0.0
    %8779 = vmatpush1.msra.mxu0 %v8511
    %8780 = vmatprep.subr.mxu0 0.0
    %8781 = vmatpush1.msra.mxu0 %v8512
    %8782 = vmatprep.subr.mxu0 0.0
    %8783 = vmatpush1.msra.mxu0 %v8513
    %8784 = vmatprep.subr.mxu0 0.0
    %8785 = vmatpush1.msra.mxu0 %v8514
    %8786 = vmatprep.subr.mxu0 0.0
    %8787 = vmatpush1.msra.mxu0 %v8515
    %8788 = vmatprep.subr.mxu0 0.0
    %8789 = vmatpush1.msra.mxu0 %v8516
    %8790 = vmatprep.subr.mxu0 0.0
    %8791 = vmatpush1.msra.mxu0 %v8517
    %8792 = vmatprep.subr.mxu0 0.0
    %8793 = vmatpush1.msra.mxu0 %v8518
    %8794 = vmatprep.subr.mxu0 0.0
    %8795 = vmatpush1.msra.mxu0 %v8519
    %8796 = vmatprep.mubr.f32.mxu0 %v8581
    %8797 = vmatmul.mubr.f32.gmra.mrb[0].mxu0 %v8580
    %v8798 = vpop.f32.mrb[0].mxu0
    %v8799 = vadd.f32 %v8729, %v8798
    %v8800 = vpop.f32.mrb[0].mxu0
    %8801 = vdwg.mxu0
    %8802 = vmatprep.subr.mxu0 0.0
    %8803 = vmatpush1.msra.mxu0 %v8520
    %8804 = vmatprep.subr.mxu0 0.0
    %8805 = vmatpush1.msra.mxu0 %v8521
    %8806 = vmatprep.subr.mxu0 0.0
    %8807 = vmatpush1.msra.mxu0 %v8522
    %8808 = vmatprep.subr.mxu0 0.0
    %8809 = vmatpush1.msra.mxu0 %v8523
    %8810 = vmatprep.subr.mxu0 0.0
    %8811 = vmatpush1.msra.mxu0 %v8524
    %8812 = vmatprep.subr.mxu0 0.0
    %8813 = vmatpush1.msra.mxu0 %v8525
    %8814 = vmatprep.subr.mxu0 0.0
    %8815 = vmatpush1.msra.mxu0 %v8526
    %8816 = vmatprep.subr.mxu0 0.0
    %8817 = vmatpush1.msra.mxu0 %v8527
    %8818 = vmatprep.subr.mxu0 0.0
    %8819 = vmatpush1.msra.mxu0 %v8528
    %8820 = vmatprep.subr.mxu0 0.0
    %8821 = vmatpush1.msra.mxu0 %v8529
    %8822 = vmatprep.subr.mxu0 0.0
    %8823 = vmatpush1.msra.mxu0 %v8530
    %8824 = vmatprep.subr.mxu0 0.0
    %8825 = vmatpush1.msra.mxu0 %v8531
    %8826 = vmatprep.subr.mxu0 0.0
    %8827 = vmatpush1.msra.mxu0 %v8532
    %8828 = vmatprep.subr.mxu0 0.0
    %8829 = vmatpush1.msra.mxu0 %v8533
    %8830 = vmatprep.subr.mxu0 0.0
    %8831 = vmatpush1.msra.mxu0 %v8534
    %8832 = vmatprep.subr.mxu0 0.0
    %8833 = vmatpush1.msra.mxu0 %v8535
    %8834 = vmatprep.subr.mxu0 0.0
    %8835 = vmatpush1.msra.mxu0 %v8536
    %8836 = vmatprep.subr.mxu0 0.0
    %8837 = vmatpush1.msra.mxu0 %v8537
    %8838 = vmatprep.subr.mxu0 0.0
    %8839 = vmatpush1.msra.mxu0 %v8538
    %8840 = vmatprep.subr.mxu0 0.0
    %8841 = vmatpush1.msra.mxu0 %v8539
    %8842 = vmatprep.subr.mxu0 0.0
    %8843 = vmatpush1.msra.mxu0 %v8540
    %8844 = vmatprep.subr.mxu0 0.0
    %8845 = vmatpush1.msra.mxu0 %v8541
    %8846 = vmatprep.subr.mxu0 0.0
    %8847 = vmatpush1.msra.mxu0 %v8542
    %8848 = vmatprep.subr.mxu0 0.0
    %8849 = vmatpush1.msra.mxu0 %v8543
    %8850 = vmatprep.subr.mxu0 0.0
    %8851 = vmatpush1.msra.mxu0 %v8544
    %8852 = vmatprep.subr.mxu0 0.0
    %8853 = vmatpush1.msra.mxu0 %v8545
    %8854 = vmatprep.subr.mxu0 0.0
    %8855 = vmatpush1.msra.mxu0 %v8546
    %8856 = vmatprep.subr.mxu0 0.0
    %8857 = vmatpush1.msra.mxu0 %v8547
    %8858 = vmatprep.subr.mxu0 0.0
    %8859 = vmatpush1.msra.mxu0 %v8548
    %8860 = vmatprep.subr.mxu0 0.0
    %8861 = vmatpush1.msra.mxu0 %v8549
    %8862 = vmatprep.subr.mxu0 0.0
    %8863 = vmatpush1.msra.mxu0 %v8550
    %8864 = vmatprep.subr.mxu0 0.0
    %8865 = vmatpush1.msra.mxu0 %v8551
    %8866 = vmatprep.mubr.f32.mxu0 %v8583
    %8867 = vmatmul.mubr.f32.gmra.mrb[0].mxu0 %v8582
    %v8868 = vpop.f32.mrb[0].mxu0
    %v8869 = vadd.f32 %v8799, %v8868
    %v8870 = vpop.f32.mrb[0].mxu0
    %8871 = vdwg.mxu0
    %v8872 = vxor.u32 %v8869, 2147483648
    %v8873 = vmul.f32 %v8872, 1.442695
    %v8874 = vpow.pop %v8873
    %v8875 = vadd.f32 %v8874, 1.0
    %v8876 = vrcp.pop %v8875
    %v8877 = vmul.f32 1.0, %v8876
    %8878 = vst [vmem:[#allocation10] sm:$0x3] %v8877
    // Predicated region
    $region34: #{tpu_custom_call.1} parent=1 // pred_check
      _
    $region35: #{tpu_custom_call.1} parent=1 // pred_check_branch
      %8880 = sbr.rel (0) target = $region37
    $region36: #{tpu_custom_call.1} parent=1 // pred_region
      %s8882 = ssub.s32 32, 32
      %8883 = vsyncadd [#allocation4], %s8882
      %s8885 = sshll.u32 [#allocation10], 4
      %s8886 = int_to_ptr.vmem [resolvable:$true] %s8885
      %8888 = dma.vmem_to_hbm [thread:$0]  %s8886, 32, %s4, [#allocation4]
    $region37: #{tpu_custom_call.1} parent=1 // pred_fallthru
      _
    // Predicated region
    $region38: #{tpu_custom_call.1} parent=1 // pred_check
      _
    $region39: #{tpu_custom_call.1} parent=1 // pred_check_branch
      %8890 = sbr.rel (0) target = $region41
    $region40: #{tpu_custom_call.1} parent=1 // pred_region
      %8891 = dma.done [#allocation4], 32
    $region41: #{tpu_custom_call.1} parent=1 // pred_fallthru
      _
    %8892 = vsyncpa [#allocation3], 1
    %8893 = vsyncpa [#allocation6], 1
    %8894 = vsyncpa [#allocation9], 1
    %8895 = vsyncpa [#allocation4], 1

</llo_original>
